<compile_context>
chip_gen: v6e
topology: v6e:2x2x1
jax: 0.10.0
libtpu: 0.0.40
codegen_flags: <defaults>
</compile_context>

<pallas_src>
import math
from functools import partial

import jax
import jax.numpy as jnp
from jax.experimental import pallas as pl
from jax.experimental.pallas import tpu as pltpu

NEG_INF = -1e9


# ----------------------------------------------------------------------------
# In-kernel building blocks
# ----------------------------------------------------------------------------
def _ln(x, g, b, eps=1e-5):
    mu = jnp.mean(x, axis=-1, keepdims=True)
    var = jnp.mean((x - mu) ** 2, axis=-1, keepdims=True)
    return (x - mu) * jax.lax.rsqrt(var + eps) * g + b


def _bf16(x):
    return x.astype(jnp.bfloat16)


def _mm(x, w):
    """bf16 MXU matmul with f32 accumulation (weights already bf16)."""
    return jnp.dot(_bf16(x), w, preferred_element_type=jnp.float32)


def _softmax(s):
    s = s - jnp.max(s, axis=-1, keepdims=True)
    p = jnp.exp(s)
    return p * pl.reciprocal(jnp.sum(p, axis=-1, keepdims=True), approx=True)


def _mha(q3, k3, v3, bias, nh):
    """Multi-head attention batched over the leading dim.
    q3: (TB, Sq, d), k3/v3: (TB, Sk, d), bias: (TB, 1|Sq, Sk) additive f32.
    1/sqrt(head_dim) is pre-folded into the Q projection weights.
    Kept as a per-head loop of single-batch-dim 3-D einsums (Mosaic-safe);
    q/k/v are cast to bf16 once, not per head slice."""
    TB, Sq, d = q3.shape
    hd = d // nh
    qb, kb, vb = _bf16(q3), _bf16(k3), _bf16(v3)
    outs = []
    for h in range(nh):
        sl = slice(h * hd, (h + 1) * hd)
        s = jnp.einsum('bqd,bkd->bqk', qb[:, :, sl], kb[:, :, sl],
                       preferred_element_type=jnp.float32) + bias
        p = _softmax(s)
        outs.append(jnp.einsum('bqk,bkd->bqd', _bf16(p), vb[:, :, sl],
                               preferred_element_type=jnp.float32))
    return jnp.concatenate(outs, axis=-1)          # (TB, Sq, d) f32


# ----------------------------------------------------------------------------
# Fused Block kernel: social encoder stack + agent-cross decoder layer +
# map/route-cross decoder layer, all with the traj activation resident in VMEM.
# One grid step processes a (TB, Np, d) chunk of the batch.
# ----------------------------------------------------------------------------
def _block_kernel(nh, n_enc, x_ref, tkb_ref, ag_ref, akb_ref,
                  mem_ref, mcb_ref, *rest):
    o_ref = rest[-1]
    w = rest[:-1]

    x3 = x_ref[...]                    # (TB, Np, d)
    tkb = tkb_ref[...]                 # (TB, 1, Np)  additive key bias (traj mask)
    ag3 = ag_ref[...]                  # (TB, Nap, d)
    akb = akb_ref[...]                 # (TB, 1, Nap) additive key bias (agent mask)
    TB, Np, d = x3.shape
    Nap = ag3.shape[1]
    xf = x3.reshape(TB * Np, d)
    idx = 0

    # ---- social self-attention encoder stack (all n_enc layers fused) ----
    for _ in range(n_enc):
        (wqkv, bqkv, wo, bo, g1, be1, g2, be2, w1, bf1, w2, bf2) = w[idx:idx + 12]
        idx += 12
        xn = _ln(xf, g1[...], be1[...])
        qkv = (_mm(xn, wqkv[...]) + bqkv[...]).reshape(TB, Np, 3 * d)
        att = _mha(qkv[:, :, :d], qkv[:, :, d:2 * d], qkv[:, :, 2 * d:], tkb, nh)
        xf = xf + _mm(att.reshape(TB * Np, d), wo[...]) + bo[...]
        xn = _ln(xf, g2[...], be2[...])
        h1 = jnp.maximum(_mm(xn, w1[...]) + bf1[...], 0.0)
        xf = xf + _mm(h1, w2[...]) + bf2[...]

    # ---- agent cross-attention decoder layer (reference uses only the last) ----
    (s_wqkv, s_bqkv, s_wo, s_bo, c_wq, c_bq, c_wkv, c_bkv, c_wo, c_bo,
     g1, be1, g2, be2, g3, be3, w1, bf1, w2, bf2) = w[idx:idx + 20]
    idx += 20
    # self attention over the traj sequence (tgt_key_padding_mask == traj mask)
    xn = _ln(xf, g1[...], be1[...])
    qkv = (_mm(xn, s_wqkv[...]) + s_bqkv[...]).reshape(TB, Np, 3 * d)
    att = _mha(qkv[:, :, :d], qkv[:, :, d:2 * d], qkv[:, :, 2 * d:], tkb, nh)
    xf = xf + _mm(att.reshape(TB * Np, d), s_wo[...]) + s_bo[...]
    # cross attention over agents_emb (fused KV projection)
    xn = _ln(xf, g2[...], be2[...])
    q3 = (_mm(xn, c_wq[...]) + c_bq[...]).reshape(TB, Np, d)
    kv = (_mm(ag3.reshape(TB * Nap, d), c_wkv[...]) + c_bkv[...]).reshape(TB, Nap, 2 * d)
    att = _mha(q3, kv[:, :, :d], kv[:, :, d:], akb, nh)
    xf = xf + _mm(att.reshape(TB * Np, d), c_wo[...]) + c_bo[...]
    # feed forward
    xn = _ln(xf, g3[...], be3[...])
    h1 = jnp.maximum(_mm(xn, w1[...]) + bf1[...], 0.0)
    xf = xf + _mm(h1, w2[...]) + bf2[...]

    # ---- map(+route) cross-attention decoder layer (target length == 1) ----
    (m_wv, m_bv, m_swo, m_sbo, m_cwq, m_cbq, m_cwkv, m_cbkv, m_cwo, m_cbo,
     mg1, mbe1, mg2, mbe2, mg3, mbe3, mw1, mbf1, mw2, mbf2) = w[idx:idx + 20]
    idx += 20
    mem = mem_ref[...]                 # (Kt, d): [all map rows | all ego-route rows]
    mcb = mcb_ref[...]                 # (TB*Np, Kt): %B selection + padding masks
    # length-1 self-attention == out_proj(v_proj(norm1(x)))  (softmax of 1 key = 1)
    xn = _ln(xf, mg1[...], mbe1[...])
    xf = xf + _mm(_mm(xn, m_wv[...]) + m_bv[...], m_swo[...]) + m_sbo[...]
    # cross attention: map/route K,V projected ONCE per block (not per agent row)
    xn = _ln(xf, mg2[...], mbe2[...])
    q = _mm(xn, m_cwq[...]) + m_cbq[...]                      # (TB*Np, d)
    kv = _mm(mem, m_cwkv[...]) + m_cbkv[...]                  # (Kt, 2d)
    att = _mha(q[None], kv[None, :, :d], kv[None, :, d:], mcb[None], nh)[0]
    xf = xf + _mm(att, m_cwo[...]) + m_cbo[...]
    # feed forward
    xn = _ln(xf, mg3[...], mbe3[...])
    h1 = jnp.maximum(_mm(xn, mw1[...]) + mbf1[...], 0.0)
    xf = xf + _mm(h1, mw2[...]) + mbf2[...]

    o_ref[...] = xf.reshape(TB, Np, d)


# ----------------------------------------------------------------------------
# pallas_call wrapper
# ----------------------------------------------------------------------------
def _grid_chunks(batch, rows_per_elem):
    """Split across TensorCores only on 2-TC chips (v7x) and only when each
    chunk still keeps >=256 flattened rows for the MXU; otherwise the grid is
    a serial loop on one TC and splitting just doubles per-step overhead."""
    dev = jax.devices()[0]
    kind = (getattr(dev, "device_kind", "") or "").lower()
    n_tc = getattr(dev, "num_cores", 1) or 1
    two_tc = (n_tc >= 2) or ("v7" in kind) or ("7x" in kind)
    if two_tc and batch % 2 == 0 and (batch // 2) * rows_per_elem >= 256:
        return 2
    return 1


_ENC_NAMES = ['wqkv', 'bqkv', 'wo', 'bo', 'g1', 'be1', 'g2', 'be2',
              'w1', 'bf1', 'w2', 'bf2']
_DEC_NAMES = ['s_wqkv', 's_bqkv', 's_wo', 's_bo', 'c_wq', 'c_bq', 'c_wkv',
              'c_bkv', 'c_wo', 'c_bo', 'g1', 'be1', 'g2', 'be2', 'g3', 'be3',
              'w1', 'bf1', 'w2', 'bf2']


def block_pallas(bp, traj, traj_kbias, agents, agents_kbias, mem_keys, mc_bias, nh):
    B, Np, d = traj.shape
    Nap = agents.shape[1]
    Kt = mem_keys.shape[0]
    n_enc = len(bp['social'])

    weights = [lp[n] for lp in bp['social'] for n in _ENC_NAMES]
    ac = bp['agent_cross'][-1]          # reference applies only the LAST cross layers
    weights += [ac[n] for n in _DEC_NAMES]
    mc = bp['map_cross'][-1]
    weights += [mc['s_wqkv'][:, 2 * d:], mc['s_bqkv'][:, 2 * d:],   # V-only self path (len-1 tgt)
                mc['s_wo'], mc['s_bo'],
                mc['c_wq'], mc['c_bq'], mc['c_wkv'], mc['c_bkv'],
                mc['c_wo'], mc['c_bo'],
                mc['g1'], mc['be1'], mc['g2'], mc['be2'], mc['g3'], mc['be3'],
                mc['w1'], mc['bf1'], mc['w2'], mc['bf2']]

    G = _grid_chunks(B, Np)
    TB = B // G

    act_specs = [
        pl.BlockSpec((TB, Np, d), lambda g: (g, 0, 0)),      # traj
        pl.BlockSpec((TB, 1, Np), lambda g: (g, 0, 0)),      # traj key bias
        pl.BlockSpec((TB, Nap, d), lambda g: (g, 0, 0)),     # agents
        pl.BlockSpec((TB, 1, Nap), lambda g: (g, 0, 0)),     # agents key bias
        pl.BlockSpec((Kt, d), lambda g: (0, 0)),             # map+route keys (global, %B)
        pl.BlockSpec((TB * Np, Kt), lambda g: (g, 0)),       # map-cross additive bias
    ]
    w_specs = [pl.BlockSpec(w.shape, lambda g: (0, 0)) for w in weights]

    return pl.pallas_call(
        partial(_block_kernel, nh, n_enc),
        grid=(G,),
        in_specs=act_specs + w_specs,
        out_specs=pl.BlockSpec((TB, Np, d), lambda g: (g, 0, 0)),
        out_shape=jax.ShapeDtypeStruct((B, Np, d), jnp.float32),
        compiler_params=pltpu.CompilerParams(dimension_semantics=("parallel",)),
    )(traj, traj_kbias, agents, agents_kbias, mem_keys, mc_bias, *weights)


# ----------------------------------------------------------------------------
# Mask / bias helpers (JAX glue, computed once per forward)
# ----------------------------------------------------------------------------
def _fix_pad_mask(m):
    return jnp.where(jnp.all(m, axis=-1, keepdims=True), jnp.zeros_like(m), m)


def _key_bias(m):      # (B, S) bool (True == padded) -> (B, 1, S) additive f32
    return jnp.where(m, NEG_INF, 0.0).astype(jnp.float32)[:, None, :]


def _pad_to(x, axis, mult, value=0.0):
    pad = (-x.shape[axis]) % mult
    if pad == 0:
        return x
    widths = [(0, 0)] * x.ndim
    widths[axis] = (0, pad)
    return jnp.pad(x, widths, constant_values=value)


def _map_cross_bias(B, N, Np, map_masks_fixed, route_masks):
    """Additive bias (B*Np, B*(P+R)) for the map(+route) cross attention.
    Key layout: [map rows of all batches (b',p)] ++ [route rows of all batches
    (b',r)].  Target row t = b*Np + n selects map batch (b*N + n) % B — faithful
    to the reference's `repeat` tiling — and, only for n == 0 (ego row), the
    route block of batch b (other rows see route fully masked)."""
    P = map_masks_fixed.shape[1]
    R = route_masks.shape[1]
    t = jnp.arange(B * Np)
    b = t // Np
    n = t % Np
    real = n < N
    mb = jnp.where(real, (b * N + n) % B, b)
    bsel = jnp.arange(B)[None, :] == mb[:, None]                   # (rows, B)
    map_bias = jnp.where(bsel[:, :, None] & (~map_masks_fixed)[None, :, :],
                         0.0, NEG_INF)
    ego = real & (n == 0)
    rsel = ego[:, None] & (jnp.arange(B)[None, :] == b[:, None])
    route_bias = jnp.where(rsel[:, :, None] & (~route_masks)[None, :, :],
                           0.0, NEG_INF)
    return jnp.concatenate([map_bias.reshape(B * Np, B * P),
                            route_bias.reshape(B * Np, B * R)],
                           axis=1).astype(jnp.float32)


def _layer_norm_jax(x, g, b, eps=1e-5):
    mu = jnp.mean(x, axis=-1, keepdims=True)
    var = jnp.mean((x - mu) ** 2, axis=-1, keepdims=True)
    return (x - mu) / jnp.sqrt(var + eps) * g + b


# ----------------------------------------------------------------------------
# Parameter init (deterministic, synthetic — no checkpoint load).
# NOTE: if real PyTorch checkpoints are loaded, nn.MultiheadAttention stores
# in_proj as (3d, d) acting as x @ W^T; transpose/fuse accordingly and also
# fold the 1/sqrt(head_dim) scale into the Q weights AND the Q bias.
# ----------------------------------------------------------------------------
def _w_init(key, shape, scale=0.02):
    return scale * jax.random.normal(key, shape, dtype=jnp.float32)


def init_enc_layer(key, d, hid, nh):
    qs = 1.0 / math.sqrt(d // nh)
    ks = jax.random.split(key, 4)
    z = lambda *s: jnp.zeros(s, jnp.float32)
    o = lambda *s: jnp.ones(s, jnp.float32)
    wqkv = _w_init(ks[0], (d, 3 * d)).at[:, :d].multiply(qs)   # fold 1/sqrt(hd) into Q
    return dict(
        wqkv=wqkv.astype(jnp.bfloat16), bqkv=z(1, 3 * d),
        wo=_w_init(ks[1], (d, d)).astype(jnp.bfloat16), bo=z(1, d),
        g1=o(1, d), be1=z(1, d), g2=o(1, d), be2=z(1, d),
        w1=_w_init(ks[2], (d, hid)).astype(jnp.bfloat16), bf1=z(1, hid),
        w2=_w_init(ks[3], (hid, d)).astype(jnp.bfloat16), bf2=z(1, d),
    )


def init_dec_layer(key, d, hid, nh):
    qs = 1.0 / math.sqrt(d // nh)
    ks = jax.random.split(key, 7)
    z = lambda *s: jnp.zeros(s, jnp.float32)
    o = lambda *s: jnp.ones(s, jnp.float32)
    s_wqkv = _w_init(ks[0], (d, 3 * d)).at[:, :d].multiply(qs)  # fold scale into Q
    c_wq = _w_init(ks[2], (d, d)) * qs                          # fold scale into cross Q
    return dict(
        s_wqkv=s_wqkv.astype(jnp.bfloat16), s_bqkv=z(1, 3 * d),
        s_wo=_w_init(ks[1], (d, d)).astype(jnp.bfloat16), s_bo=z(1, d),
        c_wq=c_wq.astype(jnp.bfloat16), c_bq=z(1, d),
        c_wkv=_w_init(ks[3], (d, 2 * d)).astype(jnp.bfloat16), c_bkv=z(1, 2 * d),
        c_wo=_w_init(ks[4], (d, d)).astype(jnp.bfloat16), c_bo=z(1, d),
        g1=o(1, d), be1=z(1, d), g2=o(1, d), be2=z(1, d), g3=o(1, d), be3=z(1, d),
        w1=_w_init(ks[5], (d, hid)).astype(jnp.bfloat16), bf1=z(1, hid),
        w2=_w_init(ks[6], (hid, d)).astype(jnp.bfloat16), bf2=z(1, d),
    )


def init_params(key, cfg):
    d, hid, nh = cfg['emb_dim'], cfg['tx_hidden'], cfg['num_heads']
    ne = cfg['num_enc_layers']
    keys = jax.random.split(key, 8)
    blocks = []
    kb = keys[0]
    for _ in range(cfg['n_layer']):
        kb, k1 = jax.random.split(kb)
        ks = jax.random.split(k1, 3 * ne)
        blocks.append(dict(
            social=[init_enc_layer(ks[i], d, hid, nh) for i in range(ne)],
            agent_cross=[init_dec_layer(ks[ne + i], d, hid, nh) for i in range(ne)],
            map_cross=[init_dec_layer(ks[2 * ne + i], d, hid, nh) for i in range(ne)],
        ))
    z = lambda *s: jnp.zeros(s, jnp.float32)
    o = lambda *s: jnp.ones(s, jnp.float32)
    return dict(
        blocks=blocks,
        agent_emb_w=_w_init(keys[1], (cfg['agent_dim'], d)).astype(jnp.bfloat16),
        agent_emb_b=z(1, d),
        map_emb_w=_w_init(keys[2], (cfg['map_dim'], d)).astype(jnp.bfloat16),
        map_emb_b=z(1, d),
        route_emb_w=_w_init(keys[3], (cfg['route_dim'], d)).astype(jnp.bfloat16),
        route_emb_b=z(1, d),
        route_ln_g=o(d), route_ln_b=z(d),
        agent_ln_g=o(d), agent_ln_b=z(d),
        final_w=_w_init(keys[4], (d, cfg['k'])).astype(jnp.bfloat16),
        final_b=z(1, cfg['k']),
    )


# ----------------------------------------------------------------------------
# Mlp_motion_diffuser.forward
# ----------------------------------------------------------------------------
def mlp_motion_diffuser_forward(params, traj_emb, traj_mask, obs, cfg):
    B, H, N, _ = traj_emb.shape
    nh, d, T, wp = cfg['num_heads'], cfg['emb_dim'], cfg['T'], cfg['wp_dim']
    assert d % nh == 0
    assert H == 1, "skip_temporal_attn path (H == 1) only"

    # ---- process_observations ----
    # TODO(synk): CarlaMap.get_model_features / MapEncoder / Embedder(expand_theta)
    # have no reference implementation; features enter as precomputed tensors and
    # are projected with simple linear stubs.
    agents_features = obs['vehicle_features']
    agents_masks = ~obs['vehicle_masks']
    map_features = obs['map_features']
    map_masks = ~obs['map_masks']
    route_features = obs['route_features']
    route_masks = ~obs['route_masks']
    route_masks = route_masks | (jnp.linalg.norm(route_features[..., :2], axis=-1) > 1.0)
    route_masks = route_masks | (jnp.cumsum((~route_masks).astype(jnp.int32), axis=-1)
                                 > cfg['num_route_pts'])

    Ba, Ha, Na, _ = agents_features.shape
    assert Ha == 1, "agent history Ha == 1 only"  # TODO(synk): Ha > 1 needs the tiled agent-cross path

    # ---- embedders: tiny K=8 projections, left to XLA (launch-bound otherwise) ----
    agents_emb = jnp.dot(agents_features, params['agent_emb_w'].astype(jnp.float32)) \
                 + params['agent_emb_b']
    map_emb = jnp.dot(map_features, params['map_emb_w'].astype(jnp.float32)) \
              + params['map_emb_b']
    route_emb = jnp.dot(route_features, params['route_emb_w'].astype(jnp.float32)) \
                + params['route_emb_b']
    route_emb = _layer_norm_jax(route_emb, params['route_ln_g'], params['route_ln_b'])
    agents_emb = _layer_norm_jax(agents_emb, params['agent_ln_g'], params['agent_ln_b'])
    # Reference prunes route columns unused across the whole batch via a host
    # round-trip; keeping them and neutralising with the -1e9 key bias is
    # numerically equivalent and jit-friendly, so the pruning is dropped.
    # (training-mode path: the eval-time repeat_interleave(32, 0) is skipped)

    P = map_emb.shape[1]
    R = route_emb.shape[1]

    # ---- masks / biases: computed once, constant across all blocks ----
    tm = _fix_pad_mask(traj_mask.reshape(B * H, N))
    tm_p = _pad_to(tm, 1, 8, value=True)
    traj_kbias = _key_bias(tm_p)
    am = _fix_pad_mask(agents_masks.reshape(Ba * Ha, Na))
    am_p = _pad_to(am, 1, 8, value=True)
    agents_kbias = _key_bias(am_p)
    mm_fixed = _fix_pad_mask(map_masks)

    traj = _pad_to(traj_emb.reshape(B * H, N, d), 1, 8)
    Np = traj.shape[1]
    agents = _pad_to(agents_emb.reshape(Ba * Ha, Na, d), 1, 8)

    mem_keys = jnp.concatenate([map_emb.reshape(B * P, d),
                                route_emb.reshape(B * R, d)], axis=0)
    mc_bias = _map_cross_bias(B, N, Np, mm_fixed, route_masks)

    # ---- transformer blocks: one fused Pallas kernel per block ----
    for bp in params['blocks']:
        traj = block_pallas(bp, traj, traj_kbias, agents, agents_kbias,
                            mem_keys, mc_bias, nh)

    traj = traj[:, :N].reshape(B, H, N, d)

    # ---- final projection: 16 rows x (128 -> 32) — left to XLA (launch-bound) ----
    out = jnp.dot(traj, params['final_w'].astype(jnp.float32)) + params['final_b']
    out = out.reshape(B, H, N, T, wp)
    # TODO(synk): ResOutputModel.get_std has no reference implementation; pass-through.
    out = jnp.transpose(out, (0, 1, 3, 2, 4))     # (B, H, T, N, wp_dim)
    return out, None


# ----------------------------------------------------------------------------
if __name__ == "__main__":
    cfg = dict(emb_dim=128, num_heads=4, tx_hidden=256, n_layer=1, num_enc_layers=2,
               T=8, wp_dim=4, k=32, num_route_pts=4,
               agent_dim=8, map_dim=8, route_dim=8)

    key = jax.random.PRNGKey(0)
    kp, kd = jax.random.split(key)
    params = init_params(kp, cfg)

    B, H, N = 2, 1, 8        # batch, traj time, traj agents
    Ha, Na = 1, 8            # agent-history time, num agents
    P, R = 8, 8              # map points, route points
    ks = jax.random.split(kd, 8)
    traj_emb = jax.random.normal(ks[0], (B, H, N, cfg['emb_dim']), jnp.float32)
    traj_mask = jax.random.uniform(ks[1], (B, H, N)) < 0.2          # True == padded
    obs = dict(
        vehicle_features=jax.random.normal(ks[2], (B, Ha, Na, cfg['agent_dim']), jnp.float32),
        vehicle_masks=jax.random.uniform(ks[3], (B, Ha, Na)) > 0.2,  # True == valid
        map_features=jax.random.normal(ks[4], (B, P, cfg['map_dim']), jnp.float32),
        map_masks=jax.random.uniform(ks[5], (B, P)) > 0.2,
        route_features=0.5 * jax.random.normal(ks[6], (B, R, cfg['route_dim']), jnp.float32),
        route_masks=jax.random.uniform(ks[7], (B, R)) > 0.2,
    )

    fwd = jax.jit(lambda p, te, tm, o: mlp_motion_diffuser_forward(p, te, tm, o, cfg))
    out, _ = fwd(params, traj_emb, traj_mask, obs)
    out = jax.block_until_ready(out)
    assert out.shape == (B, H, cfg['T'], N, cfg['wp_dim']), out.shape
    assert bool(jnp.all(jnp.isfinite(out)))
    print("KERNEL_OK")
</pallas_src>

<mosaic_0001>
module attributes {stable_mosaic.version = 11 : i64} {
  func.func @_block_kernel(%arg0: i32, %arg1: memref<2x8x128xf32, #tpu.memory_space<vmem>>, %arg2: memref<2x1x8xf32, #tpu.memory_space<vmem>>, %arg3: memref<2x8x128xf32, #tpu.memory_space<vmem>>, %arg4: memref<2x1x8xf32, #tpu.memory_space<vmem>>, %arg5: memref<32x128xf32, #tpu.memory_space<vmem>>, %arg6: memref<16x32xf32, #tpu.memory_space<vmem>>, %arg7: memref<128x384xbf16, #tpu.memory_space<vmem>>, %arg8: memref<1x384xf32, #tpu.memory_space<vmem>>, %arg9: memref<128x128xbf16, #tpu.memory_space<vmem>>, %arg10: memref<1x128xf32, #tpu.memory_space<vmem>>, %arg11: memref<1x128xf32, #tpu.memory_space<vmem>>, %arg12: memref<1x128xf32, #tpu.memory_space<vmem>>, %arg13: memref<1x128xf32, #tpu.memory_space<vmem>>, %arg14: memref<1x128xf32, #tpu.memory_space<vmem>>, %arg15: memref<128x256xbf16, #tpu.memory_space<vmem>>, %arg16: memref<1x256xf32, #tpu.memory_space<vmem>>, %arg17: memref<256x128xbf16, #tpu.memory_space<vmem>>, %arg18: memref<1x128xf32, #tpu.memory_space<vmem>>, %arg19: memref<128x384xbf16, #tpu.memory_space<vmem>>, %arg20: memref<1x384xf32, #tpu.memory_space<vmem>>, %arg21: memref<128x128xbf16, #tpu.memory_space<vmem>>, %arg22: memref<1x128xf32, #tpu.memory_space<vmem>>, %arg23: memref<1x128xf32, #tpu.memory_space<vmem>>, %arg24: memref<1x128xf32, #tpu.memory_space<vmem>>, %arg25: memref<1x128xf32, #tpu.memory_space<vmem>>, %arg26: memref<1x128xf32, #tpu.memory_space<vmem>>, %arg27: memref<128x256xbf16, #tpu.memory_space<vmem>>, %arg28: memref<1x256xf32, #tpu.memory_space<vmem>>, %arg29: memref<256x128xbf16, #tpu.memory_space<vmem>>, %arg30: memref<1x128xf32, #tpu.memory_space<vmem>>, %arg31: memref<128x384xbf16, #tpu.memory_space<vmem>>, %arg32: memref<1x384xf32, #tpu.memory_space<vmem>>, %arg33: memref<128x128xbf16, #tpu.memory_space<vmem>>, %arg34: memref<1x128xf32, #tpu.memory_space<vmem>>, %arg35: memref<128x128xbf16, #tpu.memory_space<vmem>>, %arg36: memref<1x128xf32, #tpu.memory_space<vmem>>, %arg37: memref<128x256xbf16, #tpu.memory_space<vmem>>, %arg38: memref<1x256xf32, #tpu.memory_space<vmem>>, %arg39: memref<128x128xbf16, #tpu.memory_space<vmem>>, %arg40: memref<1x128xf32, #tpu.memory_space<vmem>>, %arg41: memref<1x128xf32, #tpu.memory_space<vmem>>, %arg42: memref<1x128xf32, #tpu.memory_space<vmem>>, %arg43: memref<1x128xf32, #tpu.memory_space<vmem>>, %arg44: memref<1x128xf32, #tpu.memory_space<vmem>>, %arg45: memref<1x128xf32, #tpu.memory_space<vmem>>, %arg46: memref<1x128xf32, #tpu.memory_space<vmem>>, %arg47: memref<128x256xbf16, #tpu.memory_space<vmem>>, %arg48: memref<1x256xf32, #tpu.memory_space<vmem>>, %arg49: memref<256x128xbf16, #tpu.memory_space<vmem>>, %arg50: memref<1x128xf32, #tpu.memory_space<vmem>>, %arg51: memref<128x128xbf16, #tpu.memory_space<vmem>>, %arg52: memref<1x128xf32, #tpu.memory_space<vmem>>, %arg53: memref<128x128xbf16, #tpu.memory_space<vmem>>, %arg54: memref<1x128xf32, #tpu.memory_space<vmem>>, %arg55: memref<128x128xbf16, #tpu.memory_space<vmem>>, %arg56: memref<1x128xf32, #tpu.memory_space<vmem>>, %arg57: memref<128x256xbf16, #tpu.memory_space<vmem>>, %arg58: memref<1x256xf32, #tpu.memory_space<vmem>>, %arg59: memref<128x128xbf16, #tpu.memory_space<vmem>>, %arg60: memref<1x128xf32, #tpu.memory_space<vmem>>, %arg61: memref<1x128xf32, #tpu.memory_space<vmem>>, %arg62: memref<1x128xf32, #tpu.memory_space<vmem>>, %arg63: memref<1x128xf32, #tpu.memory_space<vmem>>, %arg64: memref<1x128xf32, #tpu.memory_space<vmem>>, %arg65: memref<1x128xf32, #tpu.memory_space<vmem>>, %arg66: memref<1x128xf32, #tpu.memory_space<vmem>>, %arg67: memref<128x256xbf16, #tpu.memory_space<vmem>>, %arg68: memref<1x256xf32, #tpu.memory_space<vmem>>, %arg69: memref<256x128xbf16, #tpu.memory_space<vmem>>, %arg70: memref<1x128xf32, #tpu.memory_space<vmem>>, %arg71: memref<2x8x128xf32, #tpu.memory_space<vmem>>) attributes {dimension_semantics = [#tpu.dimension_semantics<parallel>], iteration_bounds = array<i64: 1>, scalar_prefetch = 0 : i64, scratch_operands = 0 : i64, tpu.core_type = #tpu.core_type<tc>, window_params = [{transform_indices = @transform_0, window_bounds = array<i64: 2, 8, 128>}, {transform_indices = @transform_1, window_bounds = array<i64: 2, 1, 8>}, {transform_indices = @transform_2, window_bounds = array<i64: 2, 8, 128>}, {transform_indices = @transform_3, window_bounds = array<i64: 2, 1, 8>}, {pipeline_mode = #tpu.pipeline_mode<synchronous>, transform_indices = @transform_4, window_bounds = array<i64: 32, 128>}, {transform_indices = @transform_5, window_bounds = array<i64: 16, 32>}, {pipeline_mode = #tpu.pipeline_mode<synchronous>, transform_indices = @transform_6, window_bounds = array<i64: 128, 384>}, {pipeline_mode = #tpu.pipeline_mode<synchronous>, transform_indices = @transform_7, window_bounds = array<i64: 1, 384>}, {pipeline_mode = #tpu.pipeline_mode<synchronous>, transform_indices = @transform_8, window_bounds = array<i64: 128, 128>}, {pipeline_mode = #tpu.pipeline_mode<synchronous>, transform_indices = @transform_9, window_bounds = array<i64: 1, 128>}, {pipeline_mode = #tpu.pipeline_mode<synchronous>, transform_indices = @transform_10, window_bounds = array<i64: 1, 128>}, {pipeline_mode = #tpu.pipeline_mode<synchronous>, transform_indices = @transform_11, window_bounds = array<i64: 1, 128>}, {pipeline_mode = #tpu.pipeline_mode<synchronous>, transform_indices = @transform_12, window_bounds = array<i64: 1, 128>}, {pipeline_mode = #tpu.pipeline_mode<synchronous>, transform_indices = @transform_13, window_bounds = array<i64: 1, 128>}, {pipeline_mode = #tpu.pipeline_mode<synchronous>, transform_indices = @transform_14, window_bounds = array<i64: 128, 256>}, {pipeline_mode = #tpu.pipeline_mode<synchronous>, transform_indices = @transform_15, window_bounds = array<i64: 1, 256>}, {pipeline_mode = #tpu.pipeline_mode<synchronous>, transform_indices = @transform_16, window_bounds = array<i64: 256, 128>}, {pipeline_mode = #tpu.pipeline_mode<synchronous>, transform_indices = @transform_17, window_bounds = array<i64: 1, 128>}, {pipeline_mode = #tpu.pipeline_mode<synchronous>, transform_indices = @transform_18, window_bounds = array<i64: 128, 384>}, {pipeline_mode = #tpu.pipeline_mode<synchronous>, transform_indices = @transform_19, window_bounds = array<i64: 1, 384>}, {pipeline_mode = #tpu.pipeline_mode<synchronous>, transform_indices = @transform_20, window_bounds = array<i64: 128, 128>}, {pipeline_mode = #tpu.pipeline_mode<synchronous>, transform_indices = @transform_21, window_bounds = array<i64: 1, 128>}, {pipeline_mode = #tpu.pipeline_mode<synchronous>, transform_indices = @transform_22, window_bounds = array<i64: 1, 128>}, {pipeline_mode = #tpu.pipeline_mode<synchronous>, transform_indices = @transform_23, window_bounds = array<i64: 1, 128>}, {pipeline_mode = #tpu.pipeline_mode<synchronous>, transform_indices = @transform_24, window_bounds = array<i64: 1, 128>}, {pipeline_mode = #tpu.pipeline_mode<synchronous>, transform_indices = @transform_25, window_bounds = array<i64: 1, 128>}, {pipeline_mode = #tpu.pipeline_mode<synchronous>, transform_indices = @transform_26, window_bounds = array<i64: 128, 256>}, {pipeline_mode = #tpu.pipeline_mode<synchronous>, transform_indices = @transform_27, window_bounds = array<i64: 1, 256>}, {pipeline_mode = #tpu.pipeline_mode<synchronous>, transform_indices = @transform_28, window_bounds = array<i64: 256, 128>}, {pipeline_mode = #tpu.pipeline_mode<synchronous>, transform_indices = @transform_29, window_bounds = array<i64: 1, 128>}, {pipeline_mode = #tpu.pipeline_mode<synchronous>, transform_indices = @transform_30, window_bounds = array<i64: 128, 384>}, {pipeline_mode = #tpu.pipeline_mode<synchronous>, transform_indices = @transform_31, window_bounds = array<i64: 1, 384>}, {pipeline_mode = #tpu.pipeline_mode<synchronous>, transform_indices = @transform_32, window_bounds = array<i64: 128, 128>}, {pipeline_mode = #tpu.pipeline_mode<synchronous>, transform_indices = @transform_33, window_bounds = array<i64: 1, 128>}, {pipeline_mode = #tpu.pipeline_mode<synchronous>, transform_indices = @transform_34, window_bounds = array<i64: 128, 128>}, {pipeline_mode = #tpu.pipeline_mode<synchronous>, transform_indices = @transform_35, window_bounds = array<i64: 1, 128>}, {pipeline_mode = #tpu.pipeline_mode<synchronous>, transform_indices = @transform_36, window_bounds = array<i64: 128, 256>}, {pipeline_mode = #tpu.pipeline_mode<synchronous>, transform_indices = @transform_37, window_bounds = array<i64: 1, 256>}, {pipeline_mode = #tpu.pipeline_mode<synchronous>, transform_indices = @transform_38, window_bounds = array<i64: 128, 128>}, {pipeline_mode = #tpu.pipeline_mode<synchronous>, transform_indices = @transform_39, window_bounds = array<i64: 1, 128>}, {pipeline_mode = #tpu.pipeline_mode<synchronous>, transform_indices = @transform_40, window_bounds = array<i64: 1, 128>}, {pipeline_mode = #tpu.pipeline_mode<synchronous>, transform_indices = @transform_41, window_bounds = array<i64: 1, 128>}, {pipeline_mode = #tpu.pipeline_mode<synchronous>, transform_indices = @transform_42, window_bounds = array<i64: 1, 128>}, {pipeline_mode = #tpu.pipeline_mode<synchronous>, transform_indices = @transform_43, window_bounds = array<i64: 1, 128>}, {pipeline_mode = #tpu.pipeline_mode<synchronous>, transform_indices = @transform_44, window_bounds = array<i64: 1, 128>}, {pipeline_mode = #tpu.pipeline_mode<synchronous>, transform_indices = @transform_45, window_bounds = array<i64: 1, 128>}, {pipeline_mode = #tpu.pipeline_mode<synchronous>, transform_indices = @transform_46, window_bounds = array<i64: 128, 256>}, {pipeline_mode = #tpu.pipeline_mode<synchronous>, transform_indices = @transform_47, window_bounds = array<i64: 1, 256>}, {pipeline_mode = #tpu.pipeline_mode<synchronous>, transform_indices = @transform_48, window_bounds = array<i64: 256, 128>}, {pipeline_mode = #tpu.pipeline_mode<synchronous>, transform_indices = @transform_49, window_bounds = array<i64: 1, 128>}, {pipeline_mode = #tpu.pipeline_mode<synchronous>, transform_indices = @transform_50, window_bounds = array<i64: 128, 128>}, {pipeline_mode = #tpu.pipeline_mode<synchronous>, transform_indices = @transform_51, window_bounds = array<i64: 1, 128>}, {pipeline_mode = #tpu.pipeline_mode<synchronous>, transform_indices = @transform_52, window_bounds = array<i64: 128, 128>}, {pipeline_mode = #tpu.pipeline_mode<synchronous>, transform_indices = @transform_53, window_bounds = array<i64: 1, 128>}, {pipeline_mode = #tpu.pipeline_mode<synchronous>, transform_indices = @transform_54, window_bounds = array<i64: 128, 128>}, {pipeline_mode = #tpu.pipeline_mode<synchronous>, transform_indices = @transform_55, window_bounds = array<i64: 1, 128>}, {pipeline_mode = #tpu.pipeline_mode<synchronous>, transform_indices = @transform_56, window_bounds = array<i64: 128, 256>}, {pipeline_mode = #tpu.pipeline_mode<synchronous>, transform_indices = @transform_57, window_bounds = array<i64: 1, 256>}, {pipeline_mode = #tpu.pipeline_mode<synchronous>, transform_indices = @transform_58, window_bounds = array<i64: 128, 128>}, {pipeline_mode = #tpu.pipeline_mode<synchronous>, transform_indices = @transform_59, window_bounds = array<i64: 1, 128>}, {pipeline_mode = #tpu.pipeline_mode<synchronous>, transform_indices = @transform_60, window_bounds = array<i64: 1, 128>}, {pipeline_mode = #tpu.pipeline_mode<synchronous>, transform_indices = @transform_61, window_bounds = array<i64: 1, 128>}, {pipeline_mode = #tpu.pipeline_mode<synchronous>, transform_indices = @transform_62, window_bounds = array<i64: 1, 128>}, {pipeline_mode = #tpu.pipeline_mode<synchronous>, transform_indices = @transform_63, window_bounds = array<i64: 1, 128>}, {pipeline_mode = #tpu.pipeline_mode<synchronous>, transform_indices = @transform_64, window_bounds = array<i64: 1, 128>}, {pipeline_mode = #tpu.pipeline_mode<synchronous>, transform_indices = @transform_65, window_bounds = array<i64: 1, 128>}, {pipeline_mode = #tpu.pipeline_mode<synchronous>, transform_indices = @transform_66, window_bounds = array<i64: 128, 256>}, {pipeline_mode = #tpu.pipeline_mode<synchronous>, transform_indices = @transform_67, window_bounds = array<i64: 1, 256>}, {pipeline_mode = #tpu.pipeline_mode<synchronous>, transform_indices = @transform_68, window_bounds = array<i64: 256, 128>}, {pipeline_mode = #tpu.pipeline_mode<synchronous>, transform_indices = @transform_69, window_bounds = array<i64: 1, 128>}, {transform_indices = @transform_70, window_bounds = array<i64: 2, 8, 128>}]} {
    %c0 = arith.constant 0 : index
    %c0_0 = arith.constant 0 : index
    %c0_1 = arith.constant 0 : index
    %0 = vector.load %arg1[%c0, %c0_0, %c0_1] : memref<2x8x128xf32, #tpu.memory_space<vmem>>, vector<2x8x128xf32>
    %c0_2 = arith.constant 0 : index
    %c0_3 = arith.constant 0 : index
    %c0_4 = arith.constant 0 : index
    %1 = vector.load %arg2[%c0_2, %c0_3, %c0_4] : memref<2x1x8xf32, #tpu.memory_space<vmem>>, vector<2x1x8xf32>
    %c0_5 = arith.constant 0 : index
    %c0_6 = arith.constant 0 : index
    %c0_7 = arith.constant 0 : index
    %2 = vector.load %arg3[%c0_5, %c0_6, %c0_7] : memref<2x8x128xf32, #tpu.memory_space<vmem>>, vector<2x8x128xf32>
    %c0_8 = arith.constant 0 : index
    %c0_9 = arith.constant 0 : index
    %c0_10 = arith.constant 0 : index
    %3 = vector.load %arg4[%c0_8, %c0_9, %c0_10] : memref<2x1x8xf32, #tpu.memory_space<vmem>>, vector<2x1x8xf32>
    %4 = vector.shape_cast %0 : vector<2x8x128xf32> to vector<16x128xf32>
    %c0_11 = arith.constant 0 : index
    %c0_12 = arith.constant 0 : index
    %5 = vector.load %arg11[%c0_11, %c0_12] : memref<1x128xf32, #tpu.memory_space<vmem>>, vector<1x128xf32>
    %c0_13 = arith.constant 0 : index
    %c0_14 = arith.constant 0 : index
    %6 = vector.load %arg12[%c0_13, %c0_14] : memref<1x128xf32, #tpu.memory_space<vmem>>, vector<1x128xf32>
    %cst = arith.constant dense<0.000000e+00> : vector<16xf32>
    %7 = vector.multi_reduction <add>, %4, %cst [1] : vector<16x128xf32> to vector<16xf32>
    %8 = vector.shape_cast %7 : vector<16xf32> to vector<16x1xf32>
    %cst_15 = arith.constant 1.280000e+02 : f32
    %9 = vector.broadcast %cst_15 : f32 to vector<16x1xf32>
    %10 = arith.divf %8, %9 : vector<16x1xf32>
    %11 = vector.broadcast %10 : vector<16x1xf32> to vector<16x128xf32>
    %12 = arith.subf %4, %11 : vector<16x128xf32>
    %13 = arith.mulf %12, %12 : vector<16x128xf32>
    %cst_16 = arith.constant dense<0.000000e+00> : vector<16xf32>
    %14 = vector.multi_reduction <add>, %13, %cst_16 [1] : vector<16x128xf32> to vector<16xf32>
    %15 = vector.shape_cast %14 : vector<16xf32> to vector<16x1xf32>
    %cst_17 = arith.constant 1.280000e+02 : f32
    %16 = vector.broadcast %cst_17 : f32 to vector<16x1xf32>
    %17 = arith.divf %15, %16 : vector<16x1xf32>
    %18 = vector.broadcast %10 : vector<16x1xf32> to vector<16x128xf32>
    %19 = arith.subf %4, %18 : vector<16x128xf32>
    %cst_18 = arith.constant 9.99999974E-6 : f32
    %20 = vector.broadcast %cst_18 : f32 to vector<16x1xf32>
    %21 = arith.addf %17, %20 : vector<16x1xf32>
    %22 = math.rsqrt %21 : vector<16x1xf32>
    %23 = vector.broadcast %22 : vector<16x1xf32> to vector<16x128xf32>
    %24 = arith.mulf %19, %23 : vector<16x128xf32>
    %25 = vector.broadcast %5 : vector<1x128xf32> to vector<16x128xf32>
    %26 = arith.mulf %24, %25 : vector<16x128xf32>
    %27 = vector.broadcast %6 : vector<1x128xf32> to vector<16x128xf32>
    %28 = arith.addf %26, %27 : vector<16x128xf32>
    %c0_19 = arith.constant 0 : index
    %c0_20 = arith.constant 0 : index
    %29 = vector.load %arg7[%c0_19, %c0_20] : memref<128x384xbf16, #tpu.memory_space<vmem>>, vector<128x384xbf16>
    %30 = arith.truncf %28 : vector<16x128xf32> to vector<16x128xbf16>
    %cst_21 = arith.constant dense<0.000000e+00> : vector<16x384xf32>
    %31 = tpu.matmul %30, %29, %cst_21 {dimension_numbers = #tpu.dot_dimension_numbers<[1], [0], [0], [1], [0, 0, 1, 1], [], []>} : vector<16x128xbf16>, vector<128x384xbf16>, vector<16x384xf32> -> vector<16x384xf32>
    %c0_22 = arith.constant 0 : index
    %c0_23 = arith.constant 0 : index
    %32 = vector.load %arg8[%c0_22, %c0_23] : memref<1x384xf32, #tpu.memory_space<vmem>>, vector<1x384xf32>
    %33 = vector.broadcast %32 : vector<1x384xf32> to vector<16x384xf32>
    %34 = arith.addf %31, %33 : vector<16x384xf32>
    %35 = vector.shape_cast %34 : vector<16x384xf32> to vector<2x8x384xf32>
    %36 = vector.extract_strided_slice %35 {offsets = [0, 0, 0], sizes = [2, 8, 128], strides = [1, 1, 1]} : vector<2x8x384xf32> to vector<2x8x128xf32>
    %37 = vector.extract_strided_slice %35 {offsets = [0, 0, 128], sizes = [2, 8, 128], strides = [1, 1, 1]} : vector<2x8x384xf32> to vector<2x8x128xf32>
    %38 = vector.extract_strided_slice %35 {offsets = [0, 0, 256], sizes = [2, 8, 128], strides = [1, 1, 1]} : vector<2x8x384xf32> to vector<2x8x128xf32>
    %39 = arith.truncf %36 : vector<2x8x128xf32> to vector<2x8x128xbf16>
    %40 = arith.truncf %37 : vector<2x8x128xf32> to vector<2x8x128xbf16>
    %41 = arith.truncf %38 : vector<2x8x128xf32> to vector<2x8x128xbf16>
    %42 = vector.extract_strided_slice %39 {offsets = [0, 0, 0], sizes = [2, 8, 32], strides = [1, 1, 1]} : vector<2x8x128xbf16> to vector<2x8x32xbf16>
    %43 = vector.extract_strided_slice %40 {offsets = [0, 0, 0], sizes = [2, 8, 32], strides = [1, 1, 1]} : vector<2x8x128xbf16> to vector<2x8x32xbf16>
    "tpu.trace_start"() <{level = 10 : i32, message = "bqd,bkd->bqk"}> : () -> ()
    %cst_24 = arith.constant dense<0.000000e+00> : vector<2x8x8xf32>
    %44 = tpu.matmul %42, %43, %cst_24 {dimension_numbers = #tpu.dot_dimension_numbers<[2], [2], [1], [1], [0, 0, 0, 1, 1, 1], [0], [0]>} : vector<2x8x32xbf16>, vector<2x8x32xbf16>, vector<2x8x8xf32> -> vector<2x8x8xf32>
    "tpu.trace_stop"() : () -> ()
    %45 = vector.broadcast %1 : vector<2x1x8xf32> to vector<2x8x8xf32>
    %46 = arith.addf %44, %45 : vector<2x8x8xf32>
    %cst_25 = arith.constant dense<0xFF800000> : vector<2x8xf32>
    %47 = vector.multi_reduction <maximumf>, %46, %cst_25 [2] : vector<2x8x8xf32> to vector<2x8xf32>
    %48 = vector.shape_cast %47 : vector<2x8xf32> to vector<2x8x1xf32>
    %49 = vector.broadcast %48 : vector<2x8x1xf32> to vector<2x8x8xf32>
    %50 = arith.subf %46, %49 : vector<2x8x8xf32>
    %51 = math.exp %50 : vector<2x8x8xf32>
    %cst_26 = arith.constant dense<0.000000e+00> : vector<2x8xf32>
    %52 = vector.multi_reduction <add>, %51, %cst_26 [2] : vector<2x8x8xf32> to vector<2x8xf32>
    %53 = vector.shape_cast %52 : vector<2x8xf32> to vector<2x8x1xf32>
    %54 = tpu.reciprocal %53 {approx = true} : vector<2x8x1xf32> -> vector<2x8x1xf32>
    %55 = vector.broadcast %54 : vector<2x8x1xf32> to vector<2x8x8xf32>
    %56 = arith.mulf %51, %55 : vector<2x8x8xf32>
    %57 = arith.truncf %56 : vector<2x8x8xf32> to vector<2x8x8xbf16>
    %58 = vector.extract_strided_slice %41 {offsets = [0, 0, 0], sizes = [2, 8, 32], strides = [1, 1, 1]} : vector<2x8x128xbf16> to vector<2x8x32xbf16>
    "tpu.trace_start"() <{level = 10 : i32, message = "bqk,bkd->bqd"}> : () -> ()
    %cst_27 = arith.constant dense<0.000000e+00> : vector<2x8x32xf32>
    %59 = tpu.matmul %57, %58, %cst_27 {dimension_numbers = #tpu.dot_dimension_numbers<[2], [1], [1], [2], [0, 0, 0, 1, 1, 2], [0], [0]>} : vector<2x8x8xbf16>, vector<2x8x32xbf16>, vector<2x8x32xf32> -> vector<2x8x32xf32>
    "tpu.trace_stop"() : () -> ()
    %60 = vector.extract_strided_slice %39 {offsets = [0, 0, 32], sizes = [2, 8, 32], strides = [1, 1, 1]} : vector<2x8x128xbf16> to vector<2x8x32xbf16>
    %61 = vector.extract_strided_slice %40 {offsets = [0, 0, 32], sizes = [2, 8, 32], strides = [1, 1, 1]} : vector<2x8x128xbf16> to vector<2x8x32xbf16>
    "tpu.trace_start"() <{level = 10 : i32, message = "bqd,bkd->bqk"}> : () -> ()
    %cst_28 = arith.constant dense<0.000000e+00> : vector<2x8x8xf32>
    %62 = tpu.matmul %60, %61, %cst_28 {dimension_numbers = #tpu.dot_dimension_numbers<[2], [2], [1], [1], [0, 0, 0, 1, 1, 1], [0], [0]>} : vector<2x8x32xbf16>, vector<2x8x32xbf16>, vector<2x8x8xf32> -> vector<2x8x8xf32>
    "tpu.trace_stop"() : () -> ()
    %63 = vector.broadcast %1 : vector<2x1x8xf32> to vector<2x8x8xf32>
    %64 = arith.addf %62, %63 : vector<2x8x8xf32>
    %cst_29 = arith.constant dense<0xFF800000> : vector<2x8xf32>
    %65 = vector.multi_reduction <maximumf>, %64, %cst_29 [2] : vector<2x8x8xf32> to vector<2x8xf32>
    %66 = vector.shape_cast %65 : vector<2x8xf32> to vector<2x8x1xf32>
    %67 = vector.broadcast %66 : vector<2x8x1xf32> to vector<2x8x8xf32>
    %68 = arith.subf %64, %67 : vector<2x8x8xf32>
    %69 = math.exp %68 : vector<2x8x8xf32>
    %cst_30 = arith.constant dense<0.000000e+00> : vector<2x8xf32>
    %70 = vector.multi_reduction <add>, %69, %cst_30 [2] : vector<2x8x8xf32> to vector<2x8xf32>
    %71 = vector.shape_cast %70 : vector<2x8xf32> to vector<2x8x1xf32>
    %72 = tpu.reciprocal %71 {approx = true} : vector<2x8x1xf32> -> vector<2x8x1xf32>
    %73 = vector.broadcast %72 : vector<2x8x1xf32> to vector<2x8x8xf32>
    %74 = arith.mulf %69, %73 : vector<2x8x8xf32>
    %75 = arith.truncf %74 : vector<2x8x8xf32> to vector<2x8x8xbf16>
    %76 = vector.extract_strided_slice %41 {offsets = [0, 0, 32], sizes = [2, 8, 32], strides = [1, 1, 1]} : vector<2x8x128xbf16> to vector<2x8x32xbf16>
    "tpu.trace_start"() <{level = 10 : i32, message = "bqk,bkd->bqd"}> : () -> ()
    %cst_31 = arith.constant dense<0.000000e+00> : vector<2x8x32xf32>
    %77 = tpu.matmul %75, %76, %cst_31 {dimension_numbers = #tpu.dot_dimension_numbers<[2], [1], [1], [2], [0, 0, 0, 1, 1, 2], [0], [0]>} : vector<2x8x8xbf16>, vector<2x8x32xbf16>, vector<2x8x32xf32> -> vector<2x8x32xf32>
    "tpu.trace_stop"() : () -> ()
    %78 = vector.extract_strided_slice %39 {offsets = [0, 0, 64], sizes = [2, 8, 32], strides = [1, 1, 1]} : vector<2x8x128xbf16> to vector<2x8x32xbf16>
    %79 = vector.extract_strided_slice %40 {offsets = [0, 0, 64], sizes = [2, 8, 32], strides = [1, 1, 1]} : vector<2x8x128xbf16> to vector<2x8x32xbf16>
    "tpu.trace_start"() <{level = 10 : i32, message = "bqd,bkd->bqk"}> : () -> ()
    %cst_32 = arith.constant dense<0.000000e+00> : vector<2x8x8xf32>
    %80 = tpu.matmul %78, %79, %cst_32 {dimension_numbers = #tpu.dot_dimension_numbers<[2], [2], [1], [1], [0, 0, 0, 1, 1, 1], [0], [0]>} : vector<2x8x32xbf16>, vector<2x8x32xbf16>, vector<2x8x8xf32> -> vector<2x8x8xf32>
    "tpu.trace_stop"() : () -> ()
    %81 = vector.broadcast %1 : vector<2x1x8xf32> to vector<2x8x8xf32>
    %82 = arith.addf %80, %81 : vector<2x8x8xf32>
    %cst_33 = arith.constant dense<0xFF800000> : vector<2x8xf32>
    %83 = vector.multi_reduction <maximumf>, %82, %cst_33 [2] : vector<2x8x8xf32> to vector<2x8xf32>
    %84 = vector.shape_cast %83 : vector<2x8xf32> to vector<2x8x1xf32>
    %85 = vector.broadcast %84 : vector<2x8x1xf32> to vector<2x8x8xf32>
    %86 = arith.subf %82, %85 : vector<2x8x8xf32>
    %87 = math.exp %86 : vector<2x8x8xf32>
    %cst_34 = arith.constant dense<0.000000e+00> : vector<2x8xf32>
    %88 = vector.multi_reduction <add>, %87, %cst_34 [2] : vector<2x8x8xf32> to vector<2x8xf32>
    %89 = vector.shape_cast %88 : vector<2x8xf32> to vector<2x8x1xf32>
    %90 = tpu.reciprocal %89 {approx = true} : vector<2x8x1xf32> -> vector<2x8x1xf32>
    %91 = vector.broadcast %90 : vector<2x8x1xf32> to vector<2x8x8xf32>
    %92 = arith.mulf %87, %91 : vector<2x8x8xf32>
    %93 = arith.truncf %92 : vector<2x8x8xf32> to vector<2x8x8xbf16>
    %94 = vector.extract_strided_slice %41 {offsets = [0, 0, 64], sizes = [2, 8, 32], strides = [1, 1, 1]} : vector<2x8x128xbf16> to vector<2x8x32xbf16>
    "tpu.trace_start"() <{level = 10 : i32, message = "bqk,bkd->bqd"}> : () -> ()
    %cst_35 = arith.constant dense<0.000000e+00> : vector<2x8x32xf32>
    %95 = tpu.matmul %93, %94, %cst_35 {dimension_numbers = #tpu.dot_dimension_numbers<[2], [1], [1], [2], [0, 0, 0, 1, 1, 2], [0], [0]>} : vector<2x8x8xbf16>, vector<2x8x32xbf16>, vector<2x8x32xf32> -> vector<2x8x32xf32>
    "tpu.trace_stop"() : () -> ()
    %96 = vector.extract_strided_slice %39 {offsets = [0, 0, 96], sizes = [2, 8, 32], strides = [1, 1, 1]} : vector<2x8x128xbf16> to vector<2x8x32xbf16>
    %97 = vector.extract_strided_slice %40 {offsets = [0, 0, 96], sizes = [2, 8, 32], strides = [1, 1, 1]} : vector<2x8x128xbf16> to vector<2x8x32xbf16>
    "tpu.trace_start"() <{level = 10 : i32, message = "bqd,bkd->bqk"}> : () -> ()
    %cst_36 = arith.constant dense<0.000000e+00> : vector<2x8x8xf32>
    %98 = tpu.matmul %96, %97, %cst_36 {dimension_numbers = #tpu.dot_dimension_numbers<[2], [2], [1], [1], [0, 0, 0, 1, 1, 1], [0], [0]>} : vector<2x8x32xbf16>, vector<2x8x32xbf16>, vector<2x8x8xf32> -> vector<2x8x8xf32>
    "tpu.trace_stop"() : () -> ()
    %99 = vector.broadcast %1 : vector<2x1x8xf32> to vector<2x8x8xf32>
    %100 = arith.addf %98, %99 : vector<2x8x8xf32>
    %cst_37 = arith.constant dense<0xFF800000> : vector<2x8xf32>
    %101 = vector.multi_reduction <maximumf>, %100, %cst_37 [2] : vector<2x8x8xf32> to vector<2x8xf32>
    %102 = vector.shape_cast %101 : vector<2x8xf32> to vector<2x8x1xf32>
    %103 = vector.broadcast %102 : vector<2x8x1xf32> to vector<2x8x8xf32>
    %104 = arith.subf %100, %103 : vector<2x8x8xf32>
    %105 = math.exp %104 : vector<2x8x8xf32>
    %cst_38 = arith.constant dense<0.000000e+00> : vector<2x8xf32>
    %106 = vector.multi_reduction <add>, %105, %cst_38 [2] : vector<2x8x8xf32> to vector<2x8xf32>
    %107 = vector.shape_cast %106 : vector<2x8xf32> to vector<2x8x1xf32>
    %108 = tpu.reciprocal %107 {approx = true} : vector<2x8x1xf32> -> vector<2x8x1xf32>
    %109 = vector.broadcast %108 : vector<2x8x1xf32> to vector<2x8x8xf32>
    %110 = arith.mulf %105, %109 : vector<2x8x8xf32>
    %111 = arith.truncf %110 : vector<2x8x8xf32> to vector<2x8x8xbf16>
    %112 = vector.extract_strided_slice %41 {offsets = [0, 0, 96], sizes = [2, 8, 32], strides = [1, 1, 1]} : vector<2x8x128xbf16> to vector<2x8x32xbf16>
    "tpu.trace_start"() <{level = 10 : i32, message = "bqk,bkd->bqd"}> : () -> ()
    %cst_39 = arith.constant dense<0.000000e+00> : vector<2x8x32xf32>
    %113 = tpu.matmul %111, %112, %cst_39 {dimension_numbers = #tpu.dot_dimension_numbers<[2], [1], [1], [2], [0, 0, 0, 1, 1, 2], [0], [0]>} : vector<2x8x8xbf16>, vector<2x8x32xbf16>, vector<2x8x32xf32> -> vector<2x8x32xf32>
    "tpu.trace_stop"() : () -> ()
    %114 = tpu.concatenate %59, %77, %95, %113 in 2 : vector<2x8x32xf32>, vector<2x8x32xf32>, vector<2x8x32xf32>, vector<2x8x32xf32> -> vector<2x8x128xf32>
    %115 = vector.shape_cast %114 : vector<2x8x128xf32> to vector<16x128xf32>
    %c0_40 = arith.constant 0 : index
    %c0_41 = arith.constant 0 : index
    %116 = vector.load %arg9[%c0_40, %c0_41] : memref<128x128xbf16, #tpu.memory_space<vmem>>, vector<128x128xbf16>
    %117 = arith.truncf %115 : vector<16x128xf32> to vector<16x128xbf16>
    %cst_42 = arith.constant dense<0.000000e+00> : vector<16x128xf32>
    %118 = tpu.matmul %117, %116, %cst_42 {dimension_numbers = #tpu.dot_dimension_numbers<[1], [0], [0], [1], [0, 0, 1, 1], [], []>} : vector<16x128xbf16>, vector<128x128xbf16>, vector<16x128xf32> -> vector<16x128xf32>
    %119 = arith.addf %4, %118 : vector<16x128xf32>
    %c0_43 = arith.constant 0 : index
    %c0_44 = arith.constant 0 : index
    %120 = vector.load %arg10[%c0_43, %c0_44] : memref<1x128xf32, #tpu.memory_space<vmem>>, vector<1x128xf32>
    %121 = vector.broadcast %120 : vector<1x128xf32> to vector<16x128xf32>
    %122 = arith.addf %119, %121 : vector<16x128xf32>
    %c0_45 = arith.constant 0 : index
    %c0_46 = arith.constant 0 : index
    %123 = vector.load %arg13[%c0_45, %c0_46] : memref<1x128xf32, #tpu.memory_space<vmem>>, vector<1x128xf32>
    %c0_47 = arith.constant 0 : index
    %c0_48 = arith.constant 0 : index
    %124 = vector.load %arg14[%c0_47, %c0_48] : memref<1x128xf32, #tpu.memory_space<vmem>>, vector<1x128xf32>
    %cst_49 = arith.constant dense<0.000000e+00> : vector<16xf32>
    %125 = vector.multi_reduction <add>, %122, %cst_49 [1] : vector<16x128xf32> to vector<16xf32>
    %126 = vector.shape_cast %125 : vector<16xf32> to vector<16x1xf32>
    %cst_50 = arith.constant 1.280000e+02 : f32
    %127 = vector.broadcast %cst_50 : f32 to vector<16x1xf32>
    %128 = arith.divf %126, %127 : vector<16x1xf32>
    %129 = vector.broadcast %128 : vector<16x1xf32> to vector<16x128xf32>
    %130 = arith.subf %122, %129 : vector<16x128xf32>
    %131 = arith.mulf %130, %130 : vector<16x128xf32>
    %cst_51 = arith.constant dense<0.000000e+00> : vector<16xf32>
    %132 = vector.multi_reduction <add>, %131, %cst_51 [1] : vector<16x128xf32> to vector<16xf32>
    %133 = vector.shape_cast %132 : vector<16xf32> to vector<16x1xf32>
    %cst_52 = arith.constant 1.280000e+02 : f32
    %134 = vector.broadcast %cst_52 : f32 to vector<16x1xf32>
    %135 = arith.divf %133, %134 : vector<16x1xf32>
    %136 = vector.broadcast %128 : vector<16x1xf32> to vector<16x128xf32>
    %137 = arith.subf %122, %136 : vector<16x128xf32>
    %cst_53 = arith.constant 9.99999974E-6 : f32
    %138 = vector.broadcast %cst_53 : f32 to vector<16x1xf32>
    %139 = arith.addf %135, %138 : vector<16x1xf32>
    %140 = math.rsqrt %139 : vector<16x1xf32>
    %141 = vector.broadcast %140 : vector<16x1xf32> to vector<16x128xf32>
    %142 = arith.mulf %137, %141 : vector<16x128xf32>
    %143 = vector.broadcast %123 : vector<1x128xf32> to vector<16x128xf32>
    %144 = arith.mulf %142, %143 : vector<16x128xf32>
    %145 = vector.broadcast %124 : vector<1x128xf32> to vector<16x128xf32>
    %146 = arith.addf %144, %145 : vector<16x128xf32>
    %c0_54 = arith.constant 0 : index
    %c0_55 = arith.constant 0 : index
    %147 = vector.load %arg15[%c0_54, %c0_55] : memref<128x256xbf16, #tpu.memory_space<vmem>>, vector<128x256xbf16>
    %148 = arith.truncf %146 : vector<16x128xf32> to vector<16x128xbf16>
    %cst_56 = arith.constant dense<0.000000e+00> : vector<16x256xf32>
    %149 = tpu.matmul %148, %147, %cst_56 {dimension_numbers = #tpu.dot_dimension_numbers<[1], [0], [0], [1], [0, 0, 1, 1], [], []>} : vector<16x128xbf16>, vector<128x256xbf16>, vector<16x256xf32> -> vector<16x256xf32>
    %c0_57 = arith.constant 0 : index
    %c0_58 = arith.constant 0 : index
    %150 = vector.load %arg16[%c0_57, %c0_58] : memref<1x256xf32, #tpu.memory_space<vmem>>, vector<1x256xf32>
    %151 = vector.broadcast %150 : vector<1x256xf32> to vector<16x256xf32>
    %152 = arith.addf %149, %151 : vector<16x256xf32>
    %cst_59 = arith.constant 0.000000e+00 : f32
    %153 = vector.broadcast %cst_59 : f32 to vector<16x256xf32>
    %154 = arith.maximumf %152, %153 : vector<16x256xf32>
    %c0_60 = arith.constant 0 : index
    %c0_61 = arith.constant 0 : index
    %155 = vector.load %arg17[%c0_60, %c0_61] : memref<256x128xbf16, #tpu.memory_space<vmem>>, vector<256x128xbf16>
    %156 = arith.truncf %154 : vector<16x256xf32> to vector<16x256xbf16>
    %cst_62 = arith.constant dense<0.000000e+00> : vector<16x128xf32>
    %157 = tpu.matmul %156, %155, %cst_62 {dimension_numbers = #tpu.dot_dimension_numbers<[1], [0], [0], [1], [0, 0, 1, 1], [], []>} : vector<16x256xbf16>, vector<256x128xbf16>, vector<16x128xf32> -> vector<16x128xf32>
    %158 = arith.addf %122, %157 : vector<16x128xf32>
    %c0_63 = arith.constant 0 : index
    %c0_64 = arith.constant 0 : index
    %159 = vector.load %arg18[%c0_63, %c0_64] : memref<1x128xf32, #tpu.memory_space<vmem>>, vector<1x128xf32>
    %160 = vector.broadcast %159 : vector<1x128xf32> to vector<16x128xf32>
    %161 = arith.addf %158, %160 : vector<16x128xf32>
    %c0_65 = arith.constant 0 : index
    %c0_66 = arith.constant 0 : index
    %162 = vector.load %arg23[%c0_65, %c0_66] : memref<1x128xf32, #tpu.memory_space<vmem>>, vector<1x128xf32>
    %c0_67 = arith.constant 0 : index
    %c0_68 = arith.constant 0 : index
    %163 = vector.load %arg24[%c0_67, %c0_68] : memref<1x128xf32, #tpu.memory_space<vmem>>, vector<1x128xf32>
    %cst_69 = arith.constant dense<0.000000e+00> : vector<16xf32>
    %164 = vector.multi_reduction <add>, %161, %cst_69 [1] : vector<16x128xf32> to vector<16xf32>
    %165 = vector.shape_cast %164 : vector<16xf32> to vector<16x1xf32>
    %cst_70 = arith.constant 1.280000e+02 : f32
    %166 = vector.broadcast %cst_70 : f32 to vector<16x1xf32>
    %167 = arith.divf %165, %166 : vector<16x1xf32>
    %168 = vector.broadcast %167 : vector<16x1xf32> to vector<16x128xf32>
    %169 = arith.subf %161, %168 : vector<16x128xf32>
    %170 = arith.mulf %169, %169 : vector<16x128xf32>
    %cst_71 = arith.constant dense<0.000000e+00> : vector<16xf32>
    %171 = vector.multi_reduction <add>, %170, %cst_71 [1] : vector<16x128xf32> to vector<16xf32>
    %172 = vector.shape_cast %171 : vector<16xf32> to vector<16x1xf32>
    %cst_72 = arith.constant 1.280000e+02 : f32
    %173 = vector.broadcast %cst_72 : f32 to vector<16x1xf32>
    %174 = arith.divf %172, %173 : vector<16x1xf32>
    %175 = vector.broadcast %167 : vector<16x1xf32> to vector<16x128xf32>
    %176 = arith.subf %161, %175 : vector<16x128xf32>
    %cst_73 = arith.constant 9.99999974E-6 : f32
    %177 = vector.broadcast %cst_73 : f32 to vector<16x1xf32>
    %178 = arith.addf %174, %177 : vector<16x1xf32>
    %179 = math.rsqrt %178 : vector<16x1xf32>
    %180 = vector.broadcast %179 : vector<16x1xf32> to vector<16x128xf32>
    %181 = arith.mulf %176, %180 : vector<16x128xf32>
    %182 = vector.broadcast %162 : vector<1x128xf32> to vector<16x128xf32>
    %183 = arith.mulf %181, %182 : vector<16x128xf32>
    %184 = vector.broadcast %163 : vector<1x128xf32> to vector<16x128xf32>
    %185 = arith.addf %183, %184 : vector<16x128xf32>
    %c0_74 = arith.constant 0 : index
    %c0_75 = arith.constant 0 : index
    %186 = vector.load %arg19[%c0_74, %c0_75] : memref<128x384xbf16, #tpu.memory_space<vmem>>, vector<128x384xbf16>
    %187 = arith.truncf %185 : vector<16x128xf32> to vector<16x128xbf16>
    %cst_76 = arith.constant dense<0.000000e+00> : vector<16x384xf32>
    %188 = tpu.matmul %187, %186, %cst_76 {dimension_numbers = #tpu.dot_dimension_numbers<[1], [0], [0], [1], [0, 0, 1, 1], [], []>} : vector<16x128xbf16>, vector<128x384xbf16>, vector<16x384xf32> -> vector<16x384xf32>
    %c0_77 = arith.constant 0 : index
    %c0_78 = arith.constant 0 : index
    %189 = vector.load %arg20[%c0_77, %c0_78] : memref<1x384xf32, #tpu.memory_space<vmem>>, vector<1x384xf32>
    %190 = vector.broadcast %189 : vector<1x384xf32> to vector<16x384xf32>
    %191 = arith.addf %188, %190 : vector<16x384xf32>
    %192 = vector.shape_cast %191 : vector<16x384xf32> to vector<2x8x384xf32>
    %193 = vector.extract_strided_slice %192 {offsets = [0, 0, 0], sizes = [2, 8, 128], strides = [1, 1, 1]} : vector<2x8x384xf32> to vector<2x8x128xf32>
    %194 = vector.extract_strided_slice %192 {offsets = [0, 0, 128], sizes = [2, 8, 128], strides = [1, 1, 1]} : vector<2x8x384xf32> to vector<2x8x128xf32>
    %195 = vector.extract_strided_slice %192 {offsets = [0, 0, 256], sizes = [2, 8, 128], strides = [1, 1, 1]} : vector<2x8x384xf32> to vector<2x8x128xf32>
    %196 = arith.truncf %193 : vector<2x8x128xf32> to vector<2x8x128xbf16>
    %197 = arith.truncf %194 : vector<2x8x128xf32> to vector<2x8x128xbf16>
    %198 = arith.truncf %195 : vector<2x8x128xf32> to vector<2x8x128xbf16>
    %199 = vector.extract_strided_slice %196 {offsets = [0, 0, 0], sizes = [2, 8, 32], strides = [1, 1, 1]} : vector<2x8x128xbf16> to vector<2x8x32xbf16>
    %200 = vector.extract_strided_slice %197 {offsets = [0, 0, 0], sizes = [2, 8, 32], strides = [1, 1, 1]} : vector<2x8x128xbf16> to vector<2x8x32xbf16>
    "tpu.trace_start"() <{level = 10 : i32, message = "bqd,bkd->bqk"}> : () -> ()
    %cst_79 = arith.constant dense<0.000000e+00> : vector<2x8x8xf32>
    %201 = tpu.matmul %199, %200, %cst_79 {dimension_numbers = #tpu.dot_dimension_numbers<[2], [2], [1], [1], [0, 0, 0, 1, 1, 1], [0], [0]>} : vector<2x8x32xbf16>, vector<2x8x32xbf16>, vector<2x8x8xf32> -> vector<2x8x8xf32>
    "tpu.trace_stop"() : () -> ()
    %202 = vector.broadcast %1 : vector<2x1x8xf32> to vector<2x8x8xf32>
    %203 = arith.addf %201, %202 : vector<2x8x8xf32>
    %cst_80 = arith.constant dense<0xFF800000> : vector<2x8xf32>
    %204 = vector.multi_reduction <maximumf>, %203, %cst_80 [2] : vector<2x8x8xf32> to vector<2x8xf32>
    %205 = vector.shape_cast %204 : vector<2x8xf32> to vector<2x8x1xf32>
    %206 = vector.broadcast %205 : vector<2x8x1xf32> to vector<2x8x8xf32>
    %207 = arith.subf %203, %206 : vector<2x8x8xf32>
    %208 = math.exp %207 : vector<2x8x8xf32>
    %cst_81 = arith.constant dense<0.000000e+00> : vector<2x8xf32>
    %209 = vector.multi_reduction <add>, %208, %cst_81 [2] : vector<2x8x8xf32> to vector<2x8xf32>
    %210 = vector.shape_cast %209 : vector<2x8xf32> to vector<2x8x1xf32>
    %211 = tpu.reciprocal %210 {approx = true} : vector<2x8x1xf32> -> vector<2x8x1xf32>
    %212 = vector.broadcast %211 : vector<2x8x1xf32> to vector<2x8x8xf32>
    %213 = arith.mulf %208, %212 : vector<2x8x8xf32>
    %214 = arith.truncf %213 : vector<2x8x8xf32> to vector<2x8x8xbf16>
    %215 = vector.extract_strided_slice %198 {offsets = [0, 0, 0], sizes = [2, 8, 32], strides = [1, 1, 1]} : vector<2x8x128xbf16> to vector<2x8x32xbf16>
    "tpu.trace_start"() <{level = 10 : i32, message = "bqk,bkd->bqd"}> : () -> ()
    %cst_82 = arith.constant dense<0.000000e+00> : vector<2x8x32xf32>
    %216 = tpu.matmul %214, %215, %cst_82 {dimension_numbers = #tpu.dot_dimension_numbers<[2], [1], [1], [2], [0, 0, 0, 1, 1, 2], [0], [0]>} : vector<2x8x8xbf16>, vector<2x8x32xbf16>, vector<2x8x32xf32> -> vector<2x8x32xf32>
    "tpu.trace_stop"() : () -> ()
    %217 = vector.extract_strided_slice %196 {offsets = [0, 0, 32], sizes = [2, 8, 32], strides = [1, 1, 1]} : vector<2x8x128xbf16> to vector<2x8x32xbf16>
    %218 = vector.extract_strided_slice %197 {offsets = [0, 0, 32], sizes = [2, 8, 32], strides = [1, 1, 1]} : vector<2x8x128xbf16> to vector<2x8x32xbf16>
    "tpu.trace_start"() <{level = 10 : i32, message = "bqd,bkd->bqk"}> : () -> ()
    %cst_83 = arith.constant dense<0.000000e+00> : vector<2x8x8xf32>
    %219 = tpu.matmul %217, %218, %cst_83 {dimension_numbers = #tpu.dot_dimension_numbers<[2], [2], [1], [1], [0, 0, 0, 1, 1, 1], [0], [0]>} : vector<2x8x32xbf16>, vector<2x8x32xbf16>, vector<2x8x8xf32> -> vector<2x8x8xf32>
    "tpu.trace_stop"() : () -> ()
    %220 = vector.broadcast %1 : vector<2x1x8xf32> to vector<2x8x8xf32>
    %221 = arith.addf %219, %220 : vector<2x8x8xf32>
    %cst_84 = arith.constant dense<0xFF800000> : vector<2x8xf32>
    %222 = vector.multi_reduction <maximumf>, %221, %cst_84 [2] : vector<2x8x8xf32> to vector<2x8xf32>
    %223 = vector.shape_cast %222 : vector<2x8xf32> to vector<2x8x1xf32>
    %224 = vector.broadcast %223 : vector<2x8x1xf32> to vector<2x8x8xf32>
    %225 = arith.subf %221, %224 : vector<2x8x8xf32>
    %226 = math.exp %225 : vector<2x8x8xf32>
    %cst_85 = arith.constant dense<0.000000e+00> : vector<2x8xf32>
    %227 = vector.multi_reduction <add>, %226, %cst_85 [2] : vector<2x8x8xf32> to vector<2x8xf32>
    %228 = vector.shape_cast %227 : vector<2x8xf32> to vector<2x8x1xf32>
    %229 = tpu.reciprocal %228 {approx = true} : vector<2x8x1xf32> -> vector<2x8x1xf32>
    %230 = vector.broadcast %229 : vector<2x8x1xf32> to vector<2x8x8xf32>
    %231 = arith.mulf %226, %230 : vector<2x8x8xf32>
    %232 = arith.truncf %231 : vector<2x8x8xf32> to vector<2x8x8xbf16>
    %233 = vector.extract_strided_slice %198 {offsets = [0, 0, 32], sizes = [2, 8, 32], strides = [1, 1, 1]} : vector<2x8x128xbf16> to vector<2x8x32xbf16>
    "tpu.trace_start"() <{level = 10 : i32, message = "bqk,bkd->bqd"}> : () -> ()
    %cst_86 = arith.constant dense<0.000000e+00> : vector<2x8x32xf32>
    %234 = tpu.matmul %232, %233, %cst_86 {dimension_numbers = #tpu.dot_dimension_numbers<[2], [1], [1], [2], [0, 0, 0, 1, 1, 2], [0], [0]>} : vector<2x8x8xbf16>, vector<2x8x32xbf16>, vector<2x8x32xf32> -> vector<2x8x32xf32>
    "tpu.trace_stop"() : () -> ()
    %235 = vector.extract_strided_slice %196 {offsets = [0, 0, 64], sizes = [2, 8, 32], strides = [1, 1, 1]} : vector<2x8x128xbf16> to vector<2x8x32xbf16>
    %236 = vector.extract_strided_slice %197 {offsets = [0, 0, 64], sizes = [2, 8, 32], strides = [1, 1, 1]} : vector<2x8x128xbf16> to vector<2x8x32xbf16>
    "tpu.trace_start"() <{level = 10 : i32, message = "bqd,bkd->bqk"}> : () -> ()
    %cst_87 = arith.constant dense<0.000000e+00> : vector<2x8x8xf32>
    %237 = tpu.matmul %235, %236, %cst_87 {dimension_numbers = #tpu.dot_dimension_numbers<[2], [2], [1], [1], [0, 0, 0, 1, 1, 1], [0], [0]>} : vector<2x8x32xbf16>, vector<2x8x32xbf16>, vector<2x8x8xf32> -> vector<2x8x8xf32>
    "tpu.trace_stop"() : () -> ()
    %238 = vector.broadcast %1 : vector<2x1x8xf32> to vector<2x8x8xf32>
    %239 = arith.addf %237, %238 : vector<2x8x8xf32>
    %cst_88 = arith.constant dense<0xFF800000> : vector<2x8xf32>
    %240 = vector.multi_reduction <maximumf>, %239, %cst_88 [2] : vector<2x8x8xf32> to vector<2x8xf32>
    %241 = vector.shape_cast %240 : vector<2x8xf32> to vector<2x8x1xf32>
    %242 = vector.broadcast %241 : vector<2x8x1xf32> to vector<2x8x8xf32>
    %243 = arith.subf %239, %242 : vector<2x8x8xf32>
    %244 = math.exp %243 : vector<2x8x8xf32>
    %cst_89 = arith.constant dense<0.000000e+00> : vector<2x8xf32>
    %245 = vector.multi_reduction <add>, %244, %cst_89 [2] : vector<2x8x8xf32> to vector<2x8xf32>
    %246 = vector.shape_cast %245 : vector<2x8xf32> to vector<2x8x1xf32>
    %247 = tpu.reciprocal %246 {approx = true} : vector<2x8x1xf32> -> vector<2x8x1xf32>
    %248 = vector.broadcast %247 : vector<2x8x1xf32> to vector<2x8x8xf32>
    %249 = arith.mulf %244, %248 : vector<2x8x8xf32>
    %250 = arith.truncf %249 : vector<2x8x8xf32> to vector<2x8x8xbf16>
    %251 = vector.extract_strided_slice %198 {offsets = [0, 0, 64], sizes = [2, 8, 32], strides = [1, 1, 1]} : vector<2x8x128xbf16> to vector<2x8x32xbf16>
    "tpu.trace_start"() <{level = 10 : i32, message = "bqk,bkd->bqd"}> : () -> ()
    %cst_90 = arith.constant dense<0.000000e+00> : vector<2x8x32xf32>
    %252 = tpu.matmul %250, %251, %cst_90 {dimension_numbers = #tpu.dot_dimension_numbers<[2], [1], [1], [2], [0, 0, 0, 1, 1, 2], [0], [0]>} : vector<2x8x8xbf16>, vector<2x8x32xbf16>, vector<2x8x32xf32> -> vector<2x8x32xf32>
    "tpu.trace_stop"() : () -> ()
    %253 = vector.extract_strided_slice %196 {offsets = [0, 0, 96], sizes = [2, 8, 32], strides = [1, 1, 1]} : vector<2x8x128xbf16> to vector<2x8x32xbf16>
    %254 = vector.extract_strided_slice %197 {offsets = [0, 0, 96], sizes = [2, 8, 32], strides = [1, 1, 1]} : vector<2x8x128xbf16> to vector<2x8x32xbf16>
    "tpu.trace_start"() <{level = 10 : i32, message = "bqd,bkd->bqk"}> : () -> ()
    %cst_91 = arith.constant dense<0.000000e+00> : vector<2x8x8xf32>
    %255 = tpu.matmul %253, %254, %cst_91 {dimension_numbers = #tpu.dot_dimension_numbers<[2], [2], [1], [1], [0, 0, 0, 1, 1, 1], [0], [0]>} : vector<2x8x32xbf16>, vector<2x8x32xbf16>, vector<2x8x8xf32> -> vector<2x8x8xf32>
    "tpu.trace_stop"() : () -> ()
    %256 = vector.broadcast %1 : vector<2x1x8xf32> to vector<2x8x8xf32>
    %257 = arith.addf %255, %256 : vector<2x8x8xf32>
    %cst_92 = arith.constant dense<0xFF800000> : vector<2x8xf32>
    %258 = vector.multi_reduction <maximumf>, %257, %cst_92 [2] : vector<2x8x8xf32> to vector<2x8xf32>
    %259 = vector.shape_cast %258 : vector<2x8xf32> to vector<2x8x1xf32>
    %260 = vector.broadcast %259 : vector<2x8x1xf32> to vector<2x8x8xf32>
    %261 = arith.subf %257, %260 : vector<2x8x8xf32>
    %262 = math.exp %261 : vector<2x8x8xf32>
    %cst_93 = arith.constant dense<0.000000e+00> : vector<2x8xf32>
    %263 = vector.multi_reduction <add>, %262, %cst_93 [2] : vector<2x8x8xf32> to vector<2x8xf32>
    %264 = vector.shape_cast %263 : vector<2x8xf32> to vector<2x8x1xf32>
    %265 = tpu.reciprocal %264 {approx = true} : vector<2x8x1xf32> -> vector<2x8x1xf32>
    %266 = vector.broadcast %265 : vector<2x8x1xf32> to vector<2x8x8xf32>
    %267 = arith.mulf %262, %266 : vector<2x8x8xf32>
    %268 = arith.truncf %267 : vector<2x8x8xf32> to vector<2x8x8xbf16>
    %269 = vector.extract_strided_slice %198 {offsets = [0, 0, 96], sizes = [2, 8, 32], strides = [1, 1, 1]} : vector<2x8x128xbf16> to vector<2x8x32xbf16>
    "tpu.trace_start"() <{level = 10 : i32, message = "bqk,bkd->bqd"}> : () -> ()
    %cst_94 = arith.constant dense<0.000000e+00> : vector<2x8x32xf32>
    %270 = tpu.matmul %268, %269, %cst_94 {dimension_numbers = #tpu.dot_dimension_numbers<[2], [1], [1], [2], [0, 0, 0, 1, 1, 2], [0], [0]>} : vector<2x8x8xbf16>, vector<2x8x32xbf16>, vector<2x8x32xf32> -> vector<2x8x32xf32>
    "tpu.trace_stop"() : () -> ()
    %271 = tpu.concatenate %216, %234, %252, %270 in 2 : vector<2x8x32xf32>, vector<2x8x32xf32>, vector<2x8x32xf32>, vector<2x8x32xf32> -> vector<2x8x128xf32>
    %272 = vector.shape_cast %271 : vector<2x8x128xf32> to vector<16x128xf32>
    %c0_95 = arith.constant 0 : index
    %c0_96 = arith.constant 0 : index
    %273 = vector.load %arg21[%c0_95, %c0_96] : memref<128x128xbf16, #tpu.memory_space<vmem>>, vector<128x128xbf16>
    %274 = arith.truncf %272 : vector<16x128xf32> to vector<16x128xbf16>
    %cst_97 = arith.constant dense<0.000000e+00> : vector<16x128xf32>
    %275 = tpu.matmul %274, %273, %cst_97 {dimension_numbers = #tpu.dot_dimension_numbers<[1], [0], [0], [1], [0, 0, 1, 1], [], []>} : vector<16x128xbf16>, vector<128x128xbf16>, vector<16x128xf32> -> vector<16x128xf32>
    %276 = arith.addf %161, %275 : vector<16x128xf32>
    %c0_98 = arith.constant 0 : index
    %c0_99 = arith.constant 0 : index
    %277 = vector.load %arg22[%c0_98, %c0_99] : memref<1x128xf32, #tpu.memory_space<vmem>>, vector<1x128xf32>
    %278 = vector.broadcast %277 : vector<1x128xf32> to vector<16x128xf32>
    %279 = arith.addf %276, %278 : vector<16x128xf32>
    %c0_100 = arith.constant 0 : index
    %c0_101 = arith.constant 0 : index
    %280 = vector.load %arg25[%c0_100, %c0_101] : memref<1x128xf32, #tpu.memory_space<vmem>>, vector<1x128xf32>
    %c0_102 = arith.constant 0 : index
    %c0_103 = arith.constant 0 : index
    %281 = vector.load %arg26[%c0_102, %c0_103] : memref<1x128xf32, #tpu.memory_space<vmem>>, vector<1x128xf32>
    %cst_104 = arith.constant dense<0.000000e+00> : vector<16xf32>
    %282 = vector.multi_reduction <add>, %279, %cst_104 [1] : vector<16x128xf32> to vector<16xf32>
    %283 = vector.shape_cast %282 : vector<16xf32> to vector<16x1xf32>
    %cst_105 = arith.constant 1.280000e+02 : f32
    %284 = vector.broadcast %cst_105 : f32 to vector<16x1xf32>
    %285 = arith.divf %283, %284 : vector<16x1xf32>
    %286 = vector.broadcast %285 : vector<16x1xf32> to vector<16x128xf32>
    %287 = arith.subf %279, %286 : vector<16x128xf32>
    %288 = arith.mulf %287, %287 : vector<16x128xf32>
    %cst_106 = arith.constant dense<0.000000e+00> : vector<16xf32>
    %289 = vector.multi_reduction <add>, %288, %cst_106 [1] : vector<16x128xf32> to vector<16xf32>
    %290 = vector.shape_cast %289 : vector<16xf32> to vector<16x1xf32>
    %cst_107 = arith.constant 1.280000e+02 : f32
    %291 = vector.broadcast %cst_107 : f32 to vector<16x1xf32>
    %292 = arith.divf %290, %291 : vector<16x1xf32>
    %293 = vector.broadcast %285 : vector<16x1xf32> to vector<16x128xf32>
    %294 = arith.subf %279, %293 : vector<16x128xf32>
    %cst_108 = arith.constant 9.99999974E-6 : f32
    %295 = vector.broadcast %cst_108 : f32 to vector<16x1xf32>
    %296 = arith.addf %292, %295 : vector<16x1xf32>
    %297 = math.rsqrt %296 : vector<16x1xf32>
    %298 = vector.broadcast %297 : vector<16x1xf32> to vector<16x128xf32>
    %299 = arith.mulf %294, %298 : vector<16x128xf32>
    %300 = vector.broadcast %280 : vector<1x128xf32> to vector<16x128xf32>
    %301 = arith.mulf %299, %300 : vector<16x128xf32>
    %302 = vector.broadcast %281 : vector<1x128xf32> to vector<16x128xf32>
    %303 = arith.addf %301, %302 : vector<16x128xf32>
    %c0_109 = arith.constant 0 : index
    %c0_110 = arith.constant 0 : index
    %304 = vector.load %arg27[%c0_109, %c0_110] : memref<128x256xbf16, #tpu.memory_space<vmem>>, vector<128x256xbf16>
    %305 = arith.truncf %303 : vector<16x128xf32> to vector<16x128xbf16>
    %cst_111 = arith.constant dense<0.000000e+00> : vector<16x256xf32>
    %306 = tpu.matmul %305, %304, %cst_111 {dimension_numbers = #tpu.dot_dimension_numbers<[1], [0], [0], [1], [0, 0, 1, 1], [], []>} : vector<16x128xbf16>, vector<128x256xbf16>, vector<16x256xf32> -> vector<16x256xf32>
    %c0_112 = arith.constant 0 : index
    %c0_113 = arith.constant 0 : index
    %307 = vector.load %arg28[%c0_112, %c0_113] : memref<1x256xf32, #tpu.memory_space<vmem>>, vector<1x256xf32>
    %308 = vector.broadcast %307 : vector<1x256xf32> to vector<16x256xf32>
    %309 = arith.addf %306, %308 : vector<16x256xf32>
    %cst_114 = arith.constant 0.000000e+00 : f32
    %310 = vector.broadcast %cst_114 : f32 to vector<16x256xf32>
    %311 = arith.maximumf %309, %310 : vector<16x256xf32>
    %c0_115 = arith.constant 0 : index
    %c0_116 = arith.constant 0 : index
    %312 = vector.load %arg29[%c0_115, %c0_116] : memref<256x128xbf16, #tpu.memory_space<vmem>>, vector<256x128xbf16>
    %313 = arith.truncf %311 : vector<16x256xf32> to vector<16x256xbf16>
    %cst_117 = arith.constant dense<0.000000e+00> : vector<16x128xf32>
    %314 = tpu.matmul %313, %312, %cst_117 {dimension_numbers = #tpu.dot_dimension_numbers<[1], [0], [0], [1], [0, 0, 1, 1], [], []>} : vector<16x256xbf16>, vector<256x128xbf16>, vector<16x128xf32> -> vector<16x128xf32>
    %315 = arith.addf %279, %314 : vector<16x128xf32>
    %c0_118 = arith.constant 0 : index
    %c0_119 = arith.constant 0 : index
    %316 = vector.load %arg30[%c0_118, %c0_119] : memref<1x128xf32, #tpu.memory_space<vmem>>, vector<1x128xf32>
    %317 = vector.broadcast %316 : vector<1x128xf32> to vector<16x128xf32>
    %318 = arith.addf %315, %317 : vector<16x128xf32>
    %c0_120 = arith.constant 0 : index
    %c0_121 = arith.constant 0 : index
    %319 = vector.load %arg41[%c0_120, %c0_121] : memref<1x128xf32, #tpu.memory_space<vmem>>, vector<1x128xf32>
    %c0_122 = arith.constant 0 : index
    %c0_123 = arith.constant 0 : index
    %320 = vector.load %arg42[%c0_122, %c0_123] : memref<1x128xf32, #tpu.memory_space<vmem>>, vector<1x128xf32>
    %cst_124 = arith.constant dense<0.000000e+00> : vector<16xf32>
    %321 = vector.multi_reduction <add>, %318, %cst_124 [1] : vector<16x128xf32> to vector<16xf32>
    %322 = vector.shape_cast %321 : vector<16xf32> to vector<16x1xf32>
    %cst_125 = arith.constant 1.280000e+02 : f32
    %323 = vector.broadcast %cst_125 : f32 to vector<16x1xf32>
    %324 = arith.divf %322, %323 : vector<16x1xf32>
    %325 = vector.broadcast %324 : vector<16x1xf32> to vector<16x128xf32>
    %326 = arith.subf %318, %325 : vector<16x128xf32>
    %327 = arith.mulf %326, %326 : vector<16x128xf32>
    %cst_126 = arith.constant dense<0.000000e+00> : vector<16xf32>
    %328 = vector.multi_reduction <add>, %327, %cst_126 [1] : vector<16x128xf32> to vector<16xf32>
    %329 = vector.shape_cast %328 : vector<16xf32> to vector<16x1xf32>
    %cst_127 = arith.constant 1.280000e+02 : f32
    %330 = vector.broadcast %cst_127 : f32 to vector<16x1xf32>
    %331 = arith.divf %329, %330 : vector<16x1xf32>
    %332 = vector.broadcast %324 : vector<16x1xf32> to vector<16x128xf32>
    %333 = arith.subf %318, %332 : vector<16x128xf32>
    %cst_128 = arith.constant 9.99999974E-6 : f32
    %334 = vector.broadcast %cst_128 : f32 to vector<16x1xf32>
    %335 = arith.addf %331, %334 : vector<16x1xf32>
    %336 = math.rsqrt %335 : vector<16x1xf32>
    %337 = vector.broadcast %336 : vector<16x1xf32> to vector<16x128xf32>
    %338 = arith.mulf %333, %337 : vector<16x128xf32>
    %339 = vector.broadcast %319 : vector<1x128xf32> to vector<16x128xf32>
    %340 = arith.mulf %338, %339 : vector<16x128xf32>
    %341 = vector.broadcast %320 : vector<1x128xf32> to vector<16x128xf32>
    %342 = arith.addf %340, %341 : vector<16x128xf32>
    %c0_129 = arith.constant 0 : index
    %c0_130 = arith.constant 0 : index
    %343 = vector.load %arg31[%c0_129, %c0_130] : memref<128x384xbf16, #tpu.memory_space<vmem>>, vector<128x384xbf16>
    %344 = arith.truncf %342 : vector<16x128xf32> to vector<16x128xbf16>
    %cst_131 = arith.constant dense<0.000000e+00> : vector<16x384xf32>
    %345 = tpu.matmul %344, %343, %cst_131 {dimension_numbers = #tpu.dot_dimension_numbers<[1], [0], [0], [1], [0, 0, 1, 1], [], []>} : vector<16x128xbf16>, vector<128x384xbf16>, vector<16x384xf32> -> vector<16x384xf32>
    %c0_132 = arith.constant 0 : index
    %c0_133 = arith.constant 0 : index
    %346 = vector.load %arg32[%c0_132, %c0_133] : memref<1x384xf32, #tpu.memory_space<vmem>>, vector<1x384xf32>
    %347 = vector.broadcast %346 : vector<1x384xf32> to vector<16x384xf32>
    %348 = arith.addf %345, %347 : vector<16x384xf32>
    %349 = vector.shape_cast %348 : vector<16x384xf32> to vector<2x8x384xf32>
    %350 = vector.extract_strided_slice %349 {offsets = [0, 0, 0], sizes = [2, 8, 128], strides = [1, 1, 1]} : vector<2x8x384xf32> to vector<2x8x128xf32>
    %351 = vector.extract_strided_slice %349 {offsets = [0, 0, 128], sizes = [2, 8, 128], strides = [1, 1, 1]} : vector<2x8x384xf32> to vector<2x8x128xf32>
    %352 = vector.extract_strided_slice %349 {offsets = [0, 0, 256], sizes = [2, 8, 128], strides = [1, 1, 1]} : vector<2x8x384xf32> to vector<2x8x128xf32>
    %353 = arith.truncf %350 : vector<2x8x128xf32> to vector<2x8x128xbf16>
    %354 = arith.truncf %351 : vector<2x8x128xf32> to vector<2x8x128xbf16>
    %355 = arith.truncf %352 : vector<2x8x128xf32> to vector<2x8x128xbf16>
    %356 = vector.extract_strided_slice %353 {offsets = [0, 0, 0], sizes = [2, 8, 32], strides = [1, 1, 1]} : vector<2x8x128xbf16> to vector<2x8x32xbf16>
    %357 = vector.extract_strided_slice %354 {offsets = [0, 0, 0], sizes = [2, 8, 32], strides = [1, 1, 1]} : vector<2x8x128xbf16> to vector<2x8x32xbf16>
    "tpu.trace_start"() <{level = 10 : i32, message = "bqd,bkd->bqk"}> : () -> ()
    %cst_134 = arith.constant dense<0.000000e+00> : vector<2x8x8xf32>
    %358 = tpu.matmul %356, %357, %cst_134 {dimension_numbers = #tpu.dot_dimension_numbers<[2], [2], [1], [1], [0, 0, 0, 1, 1, 1], [0], [0]>} : vector<2x8x32xbf16>, vector<2x8x32xbf16>, vector<2x8x8xf32> -> vector<2x8x8xf32>
    "tpu.trace_stop"() : () -> ()
    %359 = vector.broadcast %1 : vector<2x1x8xf32> to vector<2x8x8xf32>
    %360 = arith.addf %358, %359 : vector<2x8x8xf32>
    %cst_135 = arith.constant dense<0xFF800000> : vector<2x8xf32>
    %361 = vector.multi_reduction <maximumf>, %360, %cst_135 [2] : vector<2x8x8xf32> to vector<2x8xf32>
    %362 = vector.shape_cast %361 : vector<2x8xf32> to vector<2x8x1xf32>
    %363 = vector.broadcast %362 : vector<2x8x1xf32> to vector<2x8x8xf32>
    %364 = arith.subf %360, %363 : vector<2x8x8xf32>
    %365 = math.exp %364 : vector<2x8x8xf32>
    %cst_136 = arith.constant dense<0.000000e+00> : vector<2x8xf32>
    %366 = vector.multi_reduction <add>, %365, %cst_136 [2] : vector<2x8x8xf32> to vector<2x8xf32>
    %367 = vector.shape_cast %366 : vector<2x8xf32> to vector<2x8x1xf32>
    %368 = tpu.reciprocal %367 {approx = true} : vector<2x8x1xf32> -> vector<2x8x1xf32>
    %369 = vector.broadcast %368 : vector<2x8x1xf32> to vector<2x8x8xf32>
    %370 = arith.mulf %365, %369 : vector<2x8x8xf32>
    %371 = arith.truncf %370 : vector<2x8x8xf32> to vector<2x8x8xbf16>
    %372 = vector.extract_strided_slice %355 {offsets = [0, 0, 0], sizes = [2, 8, 32], strides = [1, 1, 1]} : vector<2x8x128xbf16> to vector<2x8x32xbf16>
    "tpu.trace_start"() <{level = 10 : i32, message = "bqk,bkd->bqd"}> : () -> ()
    %cst_137 = arith.constant dense<0.000000e+00> : vector<2x8x32xf32>
    %373 = tpu.matmul %371, %372, %cst_137 {dimension_numbers = #tpu.dot_dimension_numbers<[2], [1], [1], [2], [0, 0, 0, 1, 1, 2], [0], [0]>} : vector<2x8x8xbf16>, vector<2x8x32xbf16>, vector<2x8x32xf32> -> vector<2x8x32xf32>
    "tpu.trace_stop"() : () -> ()
    %374 = vector.extract_strided_slice %353 {offsets = [0, 0, 32], sizes = [2, 8, 32], strides = [1, 1, 1]} : vector<2x8x128xbf16> to vector<2x8x32xbf16>
    %375 = vector.extract_strided_slice %354 {offsets = [0, 0, 32], sizes = [2, 8, 32], strides = [1, 1, 1]} : vector<2x8x128xbf16> to vector<2x8x32xbf16>
    "tpu.trace_start"() <{level = 10 : i32, message = "bqd,bkd->bqk"}> : () -> ()
    %cst_138 = arith.constant dense<0.000000e+00> : vector<2x8x8xf32>
    %376 = tpu.matmul %374, %375, %cst_138 {dimension_numbers = #tpu.dot_dimension_numbers<[2], [2], [1], [1], [0, 0, 0, 1, 1, 1], [0], [0]>} : vector<2x8x32xbf16>, vector<2x8x32xbf16>, vector<2x8x8xf32> -> vector<2x8x8xf32>
    "tpu.trace_stop"() : () -> ()
    %377 = vector.broadcast %1 : vector<2x1x8xf32> to vector<2x8x8xf32>
    %378 = arith.addf %376, %377 : vector<2x8x8xf32>
    %cst_139 = arith.constant dense<0xFF800000> : vector<2x8xf32>
    %379 = vector.multi_reduction <maximumf>, %378, %cst_139 [2] : vector<2x8x8xf32> to vector<2x8xf32>
    %380 = vector.shape_cast %379 : vector<2x8xf32> to vector<2x8x1xf32>
    %381 = vector.broadcast %380 : vector<2x8x1xf32> to vector<2x8x8xf32>
    %382 = arith.subf %378, %381 : vector<2x8x8xf32>
    %383 = math.exp %382 : vector<2x8x8xf32>
    %cst_140 = arith.constant dense<0.000000e+00> : vector<2x8xf32>
    %384 = vector.multi_reduction <add>, %383, %cst_140 [2] : vector<2x8x8xf32> to vector<2x8xf32>
    %385 = vector.shape_cast %384 : vector<2x8xf32> to vector<2x8x1xf32>
    %386 = tpu.reciprocal %385 {approx = true} : vector<2x8x1xf32> -> vector<2x8x1xf32>
    %387 = vector.broadcast %386 : vector<2x8x1xf32> to vector<2x8x8xf32>
    %388 = arith.mulf %383, %387 : vector<2x8x8xf32>
    %389 = arith.truncf %388 : vector<2x8x8xf32> to vector<2x8x8xbf16>
    %390 = vector.extract_strided_slice %355 {offsets = [0, 0, 32], sizes = [2, 8, 32], strides = [1, 1, 1]} : vector<2x8x128xbf16> to vector<2x8x32xbf16>
    "tpu.trace_start"() <{level = 10 : i32, message = "bqk,bkd->bqd"}> : () -> ()
    %cst_141 = arith.constant dense<0.000000e+00> : vector<2x8x32xf32>
    %391 = tpu.matmul %389, %390, %cst_141 {dimension_numbers = #tpu.dot_dimension_numbers<[2], [1], [1], [2], [0, 0, 0, 1, 1, 2], [0], [0]>} : vector<2x8x8xbf16>, vector<2x8x32xbf16>, vector<2x8x32xf32> -> vector<2x8x32xf32>
    "tpu.trace_stop"() : () -> ()
    %392 = vector.extract_strided_slice %353 {offsets = [0, 0, 64], sizes = [2, 8, 32], strides = [1, 1, 1]} : vector<2x8x128xbf16> to vector<2x8x32xbf16>
    %393 = vector.extract_strided_slice %354 {offsets = [0, 0, 64], sizes = [2, 8, 32], strides = [1, 1, 1]} : vector<2x8x128xbf16> to vector<2x8x32xbf16>
    "tpu.trace_start"() <{level = 10 : i32, message = "bqd,bkd->bqk"}> : () -> ()
    %cst_142 = arith.constant dense<0.000000e+00> : vector<2x8x8xf32>
    %394 = tpu.matmul %392, %393, %cst_142 {dimension_numbers = #tpu.dot_dimension_numbers<[2], [2], [1], [1], [0, 0, 0, 1, 1, 1], [0], [0]>} : vector<2x8x32xbf16>, vector<2x8x32xbf16>, vector<2x8x8xf32> -> vector<2x8x8xf32>
    "tpu.trace_stop"() : () -> ()
    %395 = vector.broadcast %1 : vector<2x1x8xf32> to vector<2x8x8xf32>
    %396 = arith.addf %394, %395 : vector<2x8x8xf32>
    %cst_143 = arith.constant dense<0xFF800000> : vector<2x8xf32>
    %397 = vector.multi_reduction <maximumf>, %396, %cst_143 [2] : vector<2x8x8xf32> to vector<2x8xf32>
    %398 = vector.shape_cast %397 : vector<2x8xf32> to vector<2x8x1xf32>
    %399 = vector.broadcast %398 : vector<2x8x1xf32> to vector<2x8x8xf32>
    %400 = arith.subf %396, %399 : vector<2x8x8xf32>
    %401 = math.exp %400 : vector<2x8x8xf32>
    %cst_144 = arith.constant dense<0.000000e+00> : vector<2x8xf32>
    %402 = vector.multi_reduction <add>, %401, %cst_144 [2] : vector<2x8x8xf32> to vector<2x8xf32>
    %403 = vector.shape_cast %402 : vector<2x8xf32> to vector<2x8x1xf32>
    %404 = tpu.reciprocal %403 {approx = true} : vector<2x8x1xf32> -> vector<2x8x1xf32>
    %405 = vector.broadcast %404 : vector<2x8x1xf32> to vector<2x8x8xf32>
    %406 = arith.mulf %401, %405 : vector<2x8x8xf32>
    %407 = arith.truncf %406 : vector<2x8x8xf32> to vector<2x8x8xbf16>
    %408 = vector.extract_strided_slice %355 {offsets = [0, 0, 64], sizes = [2, 8, 32], strides = [1, 1, 1]} : vector<2x8x128xbf16> to vector<2x8x32xbf16>
    "tpu.trace_start"() <{level = 10 : i32, message = "bqk,bkd->bqd"}> : () -> ()
    %cst_145 = arith.constant dense<0.000000e+00> : vector<2x8x32xf32>
    %409 = tpu.matmul %407, %408, %cst_145 {dimension_numbers = #tpu.dot_dimension_numbers<[2], [1], [1], [2], [0, 0, 0, 1, 1, 2], [0], [0]>} : vector<2x8x8xbf16>, vector<2x8x32xbf16>, vector<2x8x32xf32> -> vector<2x8x32xf32>
    "tpu.trace_stop"() : () -> ()
    %410 = vector.extract_strided_slice %353 {offsets = [0, 0, 96], sizes = [2, 8, 32], strides = [1, 1, 1]} : vector<2x8x128xbf16> to vector<2x8x32xbf16>
    %411 = vector.extract_strided_slice %354 {offsets = [0, 0, 96], sizes = [2, 8, 32], strides = [1, 1, 1]} : vector<2x8x128xbf16> to vector<2x8x32xbf16>
    "tpu.trace_start"() <{level = 10 : i32, message = "bqd,bkd->bqk"}> : () -> ()
    %cst_146 = arith.constant dense<0.000000e+00> : vector<2x8x8xf32>
    %412 = tpu.matmul %410, %411, %cst_146 {dimension_numbers = #tpu.dot_dimension_numbers<[2], [2], [1], [1], [0, 0, 0, 1, 1, 1], [0], [0]>} : vector<2x8x32xbf16>, vector<2x8x32xbf16>, vector<2x8x8xf32> -> vector<2x8x8xf32>
    "tpu.trace_stop"() : () -> ()
    %413 = vector.broadcast %1 : vector<2x1x8xf32> to vector<2x8x8xf32>
    %414 = arith.addf %412, %413 : vector<2x8x8xf32>
    %cst_147 = arith.constant dense<0xFF800000> : vector<2x8xf32>
    %415 = vector.multi_reduction <maximumf>, %414, %cst_147 [2] : vector<2x8x8xf32> to vector<2x8xf32>
    %416 = vector.shape_cast %415 : vector<2x8xf32> to vector<2x8x1xf32>
    %417 = vector.broadcast %416 : vector<2x8x1xf32> to vector<2x8x8xf32>
    %418 = arith.subf %414, %417 : vector<2x8x8xf32>
    %419 = math.exp %418 : vector<2x8x8xf32>
    %cst_148 = arith.constant dense<0.000000e+00> : vector<2x8xf32>
    %420 = vector.multi_reduction <add>, %419, %cst_148 [2] : vector<2x8x8xf32> to vector<2x8xf32>
    %421 = vector.shape_cast %420 : vector<2x8xf32> to vector<2x8x1xf32>
    %422 = tpu.reciprocal %421 {approx = true} : vector<2x8x1xf32> -> vector<2x8x1xf32>
    %423 = vector.broadcast %422 : vector<2x8x1xf32> to vector<2x8x8xf32>
    %424 = arith.mulf %419, %423 : vector<2x8x8xf32>
    %425 = arith.truncf %424 : vector<2x8x8xf32> to vector<2x8x8xbf16>
    %426 = vector.extract_strided_slice %355 {offsets = [0, 0, 96], sizes = [2, 8, 32], strides = [1, 1, 1]} : vector<2x8x128xbf16> to vector<2x8x32xbf16>
    "tpu.trace_start"() <{level = 10 : i32, message = "bqk,bkd->bqd"}> : () -> ()
    %cst_149 = arith.constant dense<0.000000e+00> : vector<2x8x32xf32>
    %427 = tpu.matmul %425, %426, %cst_149 {dimension_numbers = #tpu.dot_dimension_numbers<[2], [1], [1], [2], [0, 0, 0, 1, 1, 2], [0], [0]>} : vector<2x8x8xbf16>, vector<2x8x32xbf16>, vector<2x8x32xf32> -> vector<2x8x32xf32>
    "tpu.trace_stop"() : () -> ()
    %428 = tpu.concatenate %373, %391, %409, %427 in 2 : vector<2x8x32xf32>, vector<2x8x32xf32>, vector<2x8x32xf32>, vector<2x8x32xf32> -> vector<2x8x128xf32>
    %429 = vector.shape_cast %428 : vector<2x8x128xf32> to vector<16x128xf32>
    %c0_150 = arith.constant 0 : index
    %c0_151 = arith.constant 0 : index
    %430 = vector.load %arg33[%c0_150, %c0_151] : memref<128x128xbf16, #tpu.memory_space<vmem>>, vector<128x128xbf16>
    %431 = arith.truncf %429 : vector<16x128xf32> to vector<16x128xbf16>
    %cst_152 = arith.constant dense<0.000000e+00> : vector<16x128xf32>
    %432 = tpu.matmul %431, %430, %cst_152 {dimension_numbers = #tpu.dot_dimension_numbers<[1], [0], [0], [1], [0, 0, 1, 1], [], []>} : vector<16x128xbf16>, vector<128x128xbf16>, vector<16x128xf32> -> vector<16x128xf32>
    %433 = arith.addf %318, %432 : vector<16x128xf32>
    %c0_153 = arith.constant 0 : index
    %c0_154 = arith.constant 0 : index
    %434 = vector.load %arg34[%c0_153, %c0_154] : memref<1x128xf32, #tpu.memory_space<vmem>>, vector<1x128xf32>
    %435 = vector.broadcast %434 : vector<1x128xf32> to vector<16x128xf32>
    %436 = arith.addf %433, %435 : vector<16x128xf32>
    %c0_155 = arith.constant 0 : index
    %c0_156 = arith.constant 0 : index
    %437 = vector.load %arg43[%c0_155, %c0_156] : memref<1x128xf32, #tpu.memory_space<vmem>>, vector<1x128xf32>
    %c0_157 = arith.constant 0 : index
    %c0_158 = arith.constant 0 : index
    %438 = vector.load %arg44[%c0_157, %c0_158] : memref<1x128xf32, #tpu.memory_space<vmem>>, vector<1x128xf32>
    %cst_159 = arith.constant dense<0.000000e+00> : vector<16xf32>
    %439 = vector.multi_reduction <add>, %436, %cst_159 [1] : vector<16x128xf32> to vector<16xf32>
    %440 = vector.shape_cast %439 : vector<16xf32> to vector<16x1xf32>
    %cst_160 = arith.constant 1.280000e+02 : f32
    %441 = vector.broadcast %cst_160 : f32 to vector<16x1xf32>
    %442 = arith.divf %440, %441 : vector<16x1xf32>
    %443 = vector.broadcast %442 : vector<16x1xf32> to vector<16x128xf32>
    %444 = arith.subf %436, %443 : vector<16x128xf32>
    %445 = arith.mulf %444, %444 : vector<16x128xf32>
    %cst_161 = arith.constant dense<0.000000e+00> : vector<16xf32>
    %446 = vector.multi_reduction <add>, %445, %cst_161 [1] : vector<16x128xf32> to vector<16xf32>
    %447 = vector.shape_cast %446 : vector<16xf32> to vector<16x1xf32>
    %cst_162 = arith.constant 1.280000e+02 : f32
    %448 = vector.broadcast %cst_162 : f32 to vector<16x1xf32>
    %449 = arith.divf %447, %448 : vector<16x1xf32>
    %450 = vector.broadcast %442 : vector<16x1xf32> to vector<16x128xf32>
    %451 = arith.subf %436, %450 : vector<16x128xf32>
    %cst_163 = arith.constant 9.99999974E-6 : f32
    %452 = vector.broadcast %cst_163 : f32 to vector<16x1xf32>
    %453 = arith.addf %449, %452 : vector<16x1xf32>
    %454 = math.rsqrt %453 : vector<16x1xf32>
    %455 = vector.broadcast %454 : vector<16x1xf32> to vector<16x128xf32>
    %456 = arith.mulf %451, %455 : vector<16x128xf32>
    %457 = vector.broadcast %437 : vector<1x128xf32> to vector<16x128xf32>
    %458 = arith.mulf %456, %457 : vector<16x128xf32>
    %459 = vector.broadcast %438 : vector<1x128xf32> to vector<16x128xf32>
    %460 = arith.addf %458, %459 : vector<16x128xf32>
    %c0_164 = arith.constant 0 : index
    %c0_165 = arith.constant 0 : index
    %461 = vector.load %arg35[%c0_164, %c0_165] : memref<128x128xbf16, #tpu.memory_space<vmem>>, vector<128x128xbf16>
    %462 = arith.truncf %460 : vector<16x128xf32> to vector<16x128xbf16>
    %cst_166 = arith.constant dense<0.000000e+00> : vector<16x128xf32>
    %463 = tpu.matmul %462, %461, %cst_166 {dimension_numbers = #tpu.dot_dimension_numbers<[1], [0], [0], [1], [0, 0, 1, 1], [], []>} : vector<16x128xbf16>, vector<128x128xbf16>, vector<16x128xf32> -> vector<16x128xf32>
    %c0_167 = arith.constant 0 : index
    %c0_168 = arith.constant 0 : index
    %464 = vector.load %arg36[%c0_167, %c0_168] : memref<1x128xf32, #tpu.memory_space<vmem>>, vector<1x128xf32>
    %465 = vector.broadcast %464 : vector<1x128xf32> to vector<16x128xf32>
    %466 = arith.addf %463, %465 : vector<16x128xf32>
    %467 = vector.shape_cast %466 : vector<16x128xf32> to vector<2x8x128xf32>
    %468 = vector.shape_cast %2 : vector<2x8x128xf32> to vector<16x128xf32>
    %c0_169 = arith.constant 0 : index
    %c0_170 = arith.constant 0 : index
    %469 = vector.load %arg37[%c0_169, %c0_170] : memref<128x256xbf16, #tpu.memory_space<vmem>>, vector<128x256xbf16>
    %470 = arith.truncf %468 : vector<16x128xf32> to vector<16x128xbf16>
    %cst_171 = arith.constant dense<0.000000e+00> : vector<16x256xf32>
    %471 = tpu.matmul %470, %469, %cst_171 {dimension_numbers = #tpu.dot_dimension_numbers<[1], [0], [0], [1], [0, 0, 1, 1], [], []>} : vector<16x128xbf16>, vector<128x256xbf16>, vector<16x256xf32> -> vector<16x256xf32>
    %c0_172 = arith.constant 0 : index
    %c0_173 = arith.constant 0 : index
    %472 = vector.load %arg38[%c0_172, %c0_173] : memref<1x256xf32, #tpu.memory_space<vmem>>, vector<1x256xf32>
    %473 = vector.broadcast %472 : vector<1x256xf32> to vector<16x256xf32>
    %474 = arith.addf %471, %473 : vector<16x256xf32>
    %475 = vector.shape_cast %474 : vector<16x256xf32> to vector<2x8x256xf32>
    %476 = vector.extract_strided_slice %475 {offsets = [0, 0, 0], sizes = [2, 8, 128], strides = [1, 1, 1]} : vector<2x8x256xf32> to vector<2x8x128xf32>
    %477 = vector.extract_strided_slice %475 {offsets = [0, 0, 128], sizes = [2, 8, 128], strides = [1, 1, 1]} : vector<2x8x256xf32> to vector<2x8x128xf32>
    %478 = arith.truncf %467 : vector<2x8x128xf32> to vector<2x8x128xbf16>
    %479 = arith.truncf %476 : vector<2x8x128xf32> to vector<2x8x128xbf16>
    %480 = arith.truncf %477 : vector<2x8x128xf32> to vector<2x8x128xbf16>
    %481 = vector.extract_strided_slice %478 {offsets = [0, 0, 0], sizes = [2, 8, 32], strides = [1, 1, 1]} : vector<2x8x128xbf16> to vector<2x8x32xbf16>
    %482 = vector.extract_strided_slice %479 {offsets = [0, 0, 0], sizes = [2, 8, 32], strides = [1, 1, 1]} : vector<2x8x128xbf16> to vector<2x8x32xbf16>
    "tpu.trace_start"() <{level = 10 : i32, message = "bqd,bkd->bqk"}> : () -> ()
    %cst_174 = arith.constant dense<0.000000e+00> : vector<2x8x8xf32>
    %483 = tpu.matmul %481, %482, %cst_174 {dimension_numbers = #tpu.dot_dimension_numbers<[2], [2], [1], [1], [0, 0, 0, 1, 1, 1], [0], [0]>} : vector<2x8x32xbf16>, vector<2x8x32xbf16>, vector<2x8x8xf32> -> vector<2x8x8xf32>
    "tpu.trace_stop"() : () -> ()
    %484 = vector.broadcast %3 : vector<2x1x8xf32> to vector<2x8x8xf32>
    %485 = arith.addf %483, %484 : vector<2x8x8xf32>
    %cst_175 = arith.constant dense<0xFF800000> : vector<2x8xf32>
    %486 = vector.multi_reduction <maximumf>, %485, %cst_175 [2] : vector<2x8x8xf32> to vector<2x8xf32>
    %487 = vector.shape_cast %486 : vector<2x8xf32> to vector<2x8x1xf32>
    %488 = vector.broadcast %487 : vector<2x8x1xf32> to vector<2x8x8xf32>
    %489 = arith.subf %485, %488 : vector<2x8x8xf32>
    %490 = math.exp %489 : vector<2x8x8xf32>
    %cst_176 = arith.constant dense<0.000000e+00> : vector<2x8xf32>
    %491 = vector.multi_reduction <add>, %490, %cst_176 [2] : vector<2x8x8xf32> to vector<2x8xf32>
    %492 = vector.shape_cast %491 : vector<2x8xf32> to vector<2x8x1xf32>
    %493 = tpu.reciprocal %492 {approx = true} : vector<2x8x1xf32> -> vector<2x8x1xf32>
    %494 = vector.broadcast %493 : vector<2x8x1xf32> to vector<2x8x8xf32>
    %495 = arith.mulf %490, %494 : vector<2x8x8xf32>
    %496 = arith.truncf %495 : vector<2x8x8xf32> to vector<2x8x8xbf16>
    %497 = vector.extract_strided_slice %480 {offsets = [0, 0, 0], sizes = [2, 8, 32], strides = [1, 1, 1]} : vector<2x8x128xbf16> to vector<2x8x32xbf16>
    "tpu.trace_start"() <{level = 10 : i32, message = "bqk,bkd->bqd"}> : () -> ()
    %cst_177 = arith.constant dense<0.000000e+00> : vector<2x8x32xf32>
    %498 = tpu.matmul %496, %497, %cst_177 {dimension_numbers = #tpu.dot_dimension_numbers<[2], [1], [1], [2], [0, 0, 0, 1, 1, 2], [0], [0]>} : vector<2x8x8xbf16>, vector<2x8x32xbf16>, vector<2x8x32xf32> -> vector<2x8x32xf32>
    "tpu.trace_stop"() : () -> ()
    %499 = vector.extract_strided_slice %478 {offsets = [0, 0, 32], sizes = [2, 8, 32], strides = [1, 1, 1]} : vector<2x8x128xbf16> to vector<2x8x32xbf16>
    %500 = vector.extract_strided_slice %479 {offsets = [0, 0, 32], sizes = [2, 8, 32], strides = [1, 1, 1]} : vector<2x8x128xbf16> to vector<2x8x32xbf16>
    "tpu.trace_start"() <{level = 10 : i32, message = "bqd,bkd->bqk"}> : () -> ()
    %cst_178 = arith.constant dense<0.000000e+00> : vector<2x8x8xf32>
    %501 = tpu.matmul %499, %500, %cst_178 {dimension_numbers = #tpu.dot_dimension_numbers<[2], [2], [1], [1], [0, 0, 0, 1, 1, 1], [0], [0]>} : vector<2x8x32xbf16>, vector<2x8x32xbf16>, vector<2x8x8xf32> -> vector<2x8x8xf32>
    "tpu.trace_stop"() : () -> ()
    %502 = vector.broadcast %3 : vector<2x1x8xf32> to vector<2x8x8xf32>
    %503 = arith.addf %501, %502 : vector<2x8x8xf32>
    %cst_179 = arith.constant dense<0xFF800000> : vector<2x8xf32>
    %504 = vector.multi_reduction <maximumf>, %503, %cst_179 [2] : vector<2x8x8xf32> to vector<2x8xf32>
    %505 = vector.shape_cast %504 : vector<2x8xf32> to vector<2x8x1xf32>
    %506 = vector.broadcast %505 : vector<2x8x1xf32> to vector<2x8x8xf32>
    %507 = arith.subf %503, %506 : vector<2x8x8xf32>
    %508 = math.exp %507 : vector<2x8x8xf32>
    %cst_180 = arith.constant dense<0.000000e+00> : vector<2x8xf32>
    %509 = vector.multi_reduction <add>, %508, %cst_180 [2] : vector<2x8x8xf32> to vector<2x8xf32>
    %510 = vector.shape_cast %509 : vector<2x8xf32> to vector<2x8x1xf32>
    %511 = tpu.reciprocal %510 {approx = true} : vector<2x8x1xf32> -> vector<2x8x1xf32>
    %512 = vector.broadcast %511 : vector<2x8x1xf32> to vector<2x8x8xf32>
    %513 = arith.mulf %508, %512 : vector<2x8x8xf32>
    %514 = arith.truncf %513 : vector<2x8x8xf32> to vector<2x8x8xbf16>
    %515 = vector.extract_strided_slice %480 {offsets = [0, 0, 32], sizes = [2, 8, 32], strides = [1, 1, 1]} : vector<2x8x128xbf16> to vector<2x8x32xbf16>
    "tpu.trace_start"() <{level = 10 : i32, message = "bqk,bkd->bqd"}> : () -> ()
    %cst_181 = arith.constant dense<0.000000e+00> : vector<2x8x32xf32>
    %516 = tpu.matmul %514, %515, %cst_181 {dimension_numbers = #tpu.dot_dimension_numbers<[2], [1], [1], [2], [0, 0, 0, 1, 1, 2], [0], [0]>} : vector<2x8x8xbf16>, vector<2x8x32xbf16>, vector<2x8x32xf32> -> vector<2x8x32xf32>
    "tpu.trace_stop"() : () -> ()
    %517 = vector.extract_strided_slice %478 {offsets = [0, 0, 64], sizes = [2, 8, 32], strides = [1, 1, 1]} : vector<2x8x128xbf16> to vector<2x8x32xbf16>
    %518 = vector.extract_strided_slice %479 {offsets = [0, 0, 64], sizes = [2, 8, 32], strides = [1, 1, 1]} : vector<2x8x128xbf16> to vector<2x8x32xbf16>
    "tpu.trace_start"() <{level = 10 : i32, message = "bqd,bkd->bqk"}> : () -> ()
    %cst_182 = arith.constant dense<0.000000e+00> : vector<2x8x8xf32>
    %519 = tpu.matmul %517, %518, %cst_182 {dimension_numbers = #tpu.dot_dimension_numbers<[2], [2], [1], [1], [0, 0, 0, 1, 1, 1], [0], [0]>} : vector<2x8x32xbf16>, vector<2x8x32xbf16>, vector<2x8x8xf32> -> vector<2x8x8xf32>
    "tpu.trace_stop"() : () -> ()
    %520 = vector.broadcast %3 : vector<2x1x8xf32> to vector<2x8x8xf32>
    %521 = arith.addf %519, %520 : vector<2x8x8xf32>
    %cst_183 = arith.constant dense<0xFF800000> : vector<2x8xf32>
    %522 = vector.multi_reduction <maximumf>, %521, %cst_183 [2] : vector<2x8x8xf32> to vector<2x8xf32>
    %523 = vector.shape_cast %522 : vector<2x8xf32> to vector<2x8x1xf32>
    %524 = vector.broadcast %523 : vector<2x8x1xf32> to vector<2x8x8xf32>
    %525 = arith.subf %521, %524 : vector<2x8x8xf32>
    %526 = math.exp %525 : vector<2x8x8xf32>
    %cst_184 = arith.constant dense<0.000000e+00> : vector<2x8xf32>
    %527 = vector.multi_reduction <add>, %526, %cst_184 [2] : vector<2x8x8xf32> to vector<2x8xf32>
    %528 = vector.shape_cast %527 : vector<2x8xf32> to vector<2x8x1xf32>
    %529 = tpu.reciprocal %528 {approx = true} : vector<2x8x1xf32> -> vector<2x8x1xf32>
    %530 = vector.broadcast %529 : vector<2x8x1xf32> to vector<2x8x8xf32>
    %531 = arith.mulf %526, %530 : vector<2x8x8xf32>
    %532 = arith.truncf %531 : vector<2x8x8xf32> to vector<2x8x8xbf16>
    %533 = vector.extract_strided_slice %480 {offsets = [0, 0, 64], sizes = [2, 8, 32], strides = [1, 1, 1]} : vector<2x8x128xbf16> to vector<2x8x32xbf16>
    "tpu.trace_start"() <{level = 10 : i32, message = "bqk,bkd->bqd"}> : () -> ()
    %cst_185 = arith.constant dense<0.000000e+00> : vector<2x8x32xf32>
    %534 = tpu.matmul %532, %533, %cst_185 {dimension_numbers = #tpu.dot_dimension_numbers<[2], [1], [1], [2], [0, 0, 0, 1, 1, 2], [0], [0]>} : vector<2x8x8xbf16>, vector<2x8x32xbf16>, vector<2x8x32xf32> -> vector<2x8x32xf32>
    "tpu.trace_stop"() : () -> ()
    %535 = vector.extract_strided_slice %478 {offsets = [0, 0, 96], sizes = [2, 8, 32], strides = [1, 1, 1]} : vector<2x8x128xbf16> to vector<2x8x32xbf16>
    %536 = vector.extract_strided_slice %479 {offsets = [0, 0, 96], sizes = [2, 8, 32], strides = [1, 1, 1]} : vector<2x8x128xbf16> to vector<2x8x32xbf16>
    "tpu.trace_start"() <{level = 10 : i32, message = "bqd,bkd->bqk"}> : () -> ()
    %cst_186 = arith.constant dense<0.000000e+00> : vector<2x8x8xf32>
    %537 = tpu.matmul %535, %536, %cst_186 {dimension_numbers = #tpu.dot_dimension_numbers<[2], [2], [1], [1], [0, 0, 0, 1, 1, 1], [0], [0]>} : vector<2x8x32xbf16>, vector<2x8x32xbf16>, vector<2x8x8xf32> -> vector<2x8x8xf32>
    "tpu.trace_stop"() : () -> ()
    %538 = vector.broadcast %3 : vector<2x1x8xf32> to vector<2x8x8xf32>
    %539 = arith.addf %537, %538 : vector<2x8x8xf32>
    %cst_187 = arith.constant dense<0xFF800000> : vector<2x8xf32>
    %540 = vector.multi_reduction <maximumf>, %539, %cst_187 [2] : vector<2x8x8xf32> to vector<2x8xf32>
    %541 = vector.shape_cast %540 : vector<2x8xf32> to vector<2x8x1xf32>
    %542 = vector.broadcast %541 : vector<2x8x1xf32> to vector<2x8x8xf32>
    %543 = arith.subf %539, %542 : vector<2x8x8xf32>
    %544 = math.exp %543 : vector<2x8x8xf32>
    %cst_188 = arith.constant dense<0.000000e+00> : vector<2x8xf32>
    %545 = vector.multi_reduction <add>, %544, %cst_188 [2] : vector<2x8x8xf32> to vector<2x8xf32>
    %546 = vector.shape_cast %545 : vector<2x8xf32> to vector<2x8x1xf32>
    %547 = tpu.reciprocal %546 {approx = true} : vector<2x8x1xf32> -> vector<2x8x1xf32>
    %548 = vector.broadcast %547 : vector<2x8x1xf32> to vector<2x8x8xf32>
    %549 = arith.mulf %544, %548 : vector<2x8x8xf32>
    %550 = arith.truncf %549 : vector<2x8x8xf32> to vector<2x8x8xbf16>
    %551 = vector.extract_strided_slice %480 {offsets = [0, 0, 96], sizes = [2, 8, 32], strides = [1, 1, 1]} : vector<2x8x128xbf16> to vector<2x8x32xbf16>
    "tpu.trace_start"() <{level = 10 : i32, message = "bqk,bkd->bqd"}> : () -> ()
    %cst_189 = arith.constant dense<0.000000e+00> : vector<2x8x32xf32>
    %552 = tpu.matmul %550, %551, %cst_189 {dimension_numbers = #tpu.dot_dimension_numbers<[2], [1], [1], [2], [0, 0, 0, 1, 1, 2], [0], [0]>} : vector<2x8x8xbf16>, vector<2x8x32xbf16>, vector<2x8x32xf32> -> vector<2x8x32xf32>
    "tpu.trace_stop"() : () -> ()
    %553 = tpu.concatenate %498, %516, %534, %552 in 2 : vector<2x8x32xf32>, vector<2x8x32xf32>, vector<2x8x32xf32>, vector<2x8x32xf32> -> vector<2x8x128xf32>
    %554 = vector.shape_cast %553 : vector<2x8x128xf32> to vector<16x128xf32>
    %c0_190 = arith.constant 0 : index
    %c0_191 = arith.constant 0 : index
    %555 = vector.load %arg39[%c0_190, %c0_191] : memref<128x128xbf16, #tpu.memory_space<vmem>>, vector<128x128xbf16>
    %556 = arith.truncf %554 : vector<16x128xf32> to vector<16x128xbf16>
    %cst_192 = arith.constant dense<0.000000e+00> : vector<16x128xf32>
    %557 = tpu.matmul %556, %555, %cst_192 {dimension_numbers = #tpu.dot_dimension_numbers<[1], [0], [0], [1], [0, 0, 1, 1], [], []>} : vector<16x128xbf16>, vector<128x128xbf16>, vector<16x128xf32> -> vector<16x128xf32>
    %558 = arith.addf %436, %557 : vector<16x128xf32>
    %c0_193 = arith.constant 0 : index
    %c0_194 = arith.constant 0 : index
    %559 = vector.load %arg40[%c0_193, %c0_194] : memref<1x128xf32, #tpu.memory_space<vmem>>, vector<1x128xf32>
    %560 = vector.broadcast %559 : vector<1x128xf32> to vector<16x128xf32>
    %561 = arith.addf %558, %560 : vector<16x128xf32>
    %c0_195 = arith.constant 0 : index
    %c0_196 = arith.constant 0 : index
    %562 = vector.load %arg45[%c0_195, %c0_196] : memref<1x128xf32, #tpu.memory_space<vmem>>, vector<1x128xf32>
    %c0_197 = arith.constant 0 : index
    %c0_198 = arith.constant 0 : index
    %563 = vector.load %arg46[%c0_197, %c0_198] : memref<1x128xf32, #tpu.memory_space<vmem>>, vector<1x128xf32>
    %cst_199 = arith.constant dense<0.000000e+00> : vector<16xf32>
    %564 = vector.multi_reduction <add>, %561, %cst_199 [1] : vector<16x128xf32> to vector<16xf32>
    %565 = vector.shape_cast %564 : vector<16xf32> to vector<16x1xf32>
    %cst_200 = arith.constant 1.280000e+02 : f32
    %566 = vector.broadcast %cst_200 : f32 to vector<16x1xf32>
    %567 = arith.divf %565, %566 : vector<16x1xf32>
    %568 = vector.broadcast %567 : vector<16x1xf32> to vector<16x128xf32>
    %569 = arith.subf %561, %568 : vector<16x128xf32>
    %570 = arith.mulf %569, %569 : vector<16x128xf32>
    %cst_201 = arith.constant dense<0.000000e+00> : vector<16xf32>
    %571 = vector.multi_reduction <add>, %570, %cst_201 [1] : vector<16x128xf32> to vector<16xf32>
    %572 = vector.shape_cast %571 : vector<16xf32> to vector<16x1xf32>
    %cst_202 = arith.constant 1.280000e+02 : f32
    %573 = vector.broadcast %cst_202 : f32 to vector<16x1xf32>
    %574 = arith.divf %572, %573 : vector<16x1xf32>
    %575 = vector.broadcast %567 : vector<16x1xf32> to vector<16x128xf32>
    %576 = arith.subf %561, %575 : vector<16x128xf32>
    %cst_203 = arith.constant 9.99999974E-6 : f32
    %577 = vector.broadcast %cst_203 : f32 to vector<16x1xf32>
    %578 = arith.addf %574, %577 : vector<16x1xf32>
    %579 = math.rsqrt %578 : vector<16x1xf32>
    %580 = vector.broadcast %579 : vector<16x1xf32> to vector<16x128xf32>
    %581 = arith.mulf %576, %580 : vector<16x128xf32>
    %582 = vector.broadcast %562 : vector<1x128xf32> to vector<16x128xf32>
    %583 = arith.mulf %581, %582 : vector<16x128xf32>
    %584 = vector.broadcast %563 : vector<1x128xf32> to vector<16x128xf32>
    %585 = arith.addf %583, %584 : vector<16x128xf32>
    %c0_204 = arith.constant 0 : index
    %c0_205 = arith.constant 0 : index
    %586 = vector.load %arg47[%c0_204, %c0_205] : memref<128x256xbf16, #tpu.memory_space<vmem>>, vector<128x256xbf16>
    %587 = arith.truncf %585 : vector<16x128xf32> to vector<16x128xbf16>
    %cst_206 = arith.constant dense<0.000000e+00> : vector<16x256xf32>
    %588 = tpu.matmul %587, %586, %cst_206 {dimension_numbers = #tpu.dot_dimension_numbers<[1], [0], [0], [1], [0, 0, 1, 1], [], []>} : vector<16x128xbf16>, vector<128x256xbf16>, vector<16x256xf32> -> vector<16x256xf32>
    %c0_207 = arith.constant 0 : index
    %c0_208 = arith.constant 0 : index
    %589 = vector.load %arg48[%c0_207, %c0_208] : memref<1x256xf32, #tpu.memory_space<vmem>>, vector<1x256xf32>
    %590 = vector.broadcast %589 : vector<1x256xf32> to vector<16x256xf32>
    %591 = arith.addf %588, %590 : vector<16x256xf32>
    %cst_209 = arith.constant 0.000000e+00 : f32
    %592 = vector.broadcast %cst_209 : f32 to vector<16x256xf32>
    %593 = arith.maximumf %591, %592 : vector<16x256xf32>
    %c0_210 = arith.constant 0 : index
    %c0_211 = arith.constant 0 : index
    %594 = vector.load %arg49[%c0_210, %c0_211] : memref<256x128xbf16, #tpu.memory_space<vmem>>, vector<256x128xbf16>
    %595 = arith.truncf %593 : vector<16x256xf32> to vector<16x256xbf16>
    %cst_212 = arith.constant dense<0.000000e+00> : vector<16x128xf32>
    %596 = tpu.matmul %595, %594, %cst_212 {dimension_numbers = #tpu.dot_dimension_numbers<[1], [0], [0], [1], [0, 0, 1, 1], [], []>} : vector<16x256xbf16>, vector<256x128xbf16>, vector<16x128xf32> -> vector<16x128xf32>
    %597 = arith.addf %561, %596 : vector<16x128xf32>
    %c0_213 = arith.constant 0 : index
    %c0_214 = arith.constant 0 : index
    %598 = vector.load %arg50[%c0_213, %c0_214] : memref<1x128xf32, #tpu.memory_space<vmem>>, vector<1x128xf32>
    %599 = vector.broadcast %598 : vector<1x128xf32> to vector<16x128xf32>
    %600 = arith.addf %597, %599 : vector<16x128xf32>
    %c0_215 = arith.constant 0 : index
    %c0_216 = arith.constant 0 : index
    %601 = vector.load %arg5[%c0_215, %c0_216] : memref<32x128xf32, #tpu.memory_space<vmem>>, vector<32x128xf32>
    %c0_217 = arith.constant 0 : index
    %c0_218 = arith.constant 0 : index
    %602 = vector.load %arg6[%c0_217, %c0_218] : memref<16x32xf32, #tpu.memory_space<vmem>>, vector<16x32xf32>
    %c0_219 = arith.constant 0 : index
    %c0_220 = arith.constant 0 : index
    %603 = vector.load %arg61[%c0_219, %c0_220] : memref<1x128xf32, #tpu.memory_space<vmem>>, vector<1x128xf32>
    %c0_221 = arith.constant 0 : index
    %c0_222 = arith.constant 0 : index
    %604 = vector.load %arg62[%c0_221, %c0_222] : memref<1x128xf32, #tpu.memory_space<vmem>>, vector<1x128xf32>
    %cst_223 = arith.constant dense<0.000000e+00> : vector<16xf32>
    %605 = vector.multi_reduction <add>, %600, %cst_223 [1] : vector<16x128xf32> to vector<16xf32>
    %606 = vector.shape_cast %605 : vector<16xf32> to vector<16x1xf32>
    %cst_224 = arith.constant 1.280000e+02 : f32
    %607 = vector.broadcast %cst_224 : f32 to vector<16x1xf32>
    %608 = arith.divf %606, %607 : vector<16x1xf32>
    %609 = vector.broadcast %608 : vector<16x1xf32> to vector<16x128xf32>
    %610 = arith.subf %600, %609 : vector<16x128xf32>
    %611 = arith.mulf %610, %610 : vector<16x128xf32>
    %cst_225 = arith.constant dense<0.000000e+00> : vector<16xf32>
    %612 = vector.multi_reduction <add>, %611, %cst_225 [1] : vector<16x128xf32> to vector<16xf32>
    %613 = vector.shape_cast %612 : vector<16xf32> to vector<16x1xf32>
    %cst_226 = arith.constant 1.280000e+02 : f32
    %614 = vector.broadcast %cst_226 : f32 to vector<16x1xf32>
    %615 = arith.divf %613, %614 : vector<16x1xf32>
    %616 = vector.broadcast %608 : vector<16x1xf32> to vector<16x128xf32>
    %617 = arith.subf %600, %616 : vector<16x128xf32>
    %cst_227 = arith.constant 9.99999974E-6 : f32
    %618 = vector.broadcast %cst_227 : f32 to vector<16x1xf32>
    %619 = arith.addf %615, %618 : vector<16x1xf32>
    %620 = math.rsqrt %619 : vector<16x1xf32>
    %621 = vector.broadcast %620 : vector<16x1xf32> to vector<16x128xf32>
    %622 = arith.mulf %617, %621 : vector<16x128xf32>
    %623 = vector.broadcast %603 : vector<1x128xf32> to vector<16x128xf32>
    %624 = arith.mulf %622, %623 : vector<16x128xf32>
    %625 = vector.broadcast %604 : vector<1x128xf32> to vector<16x128xf32>
    %626 = arith.addf %624, %625 : vector<16x128xf32>
    %c0_228 = arith.constant 0 : index
    %c0_229 = arith.constant 0 : index
    %627 = vector.load %arg51[%c0_228, %c0_229] : memref<128x128xbf16, #tpu.memory_space<vmem>>, vector<128x128xbf16>
    %628 = arith.truncf %626 : vector<16x128xf32> to vector<16x128xbf16>
    %cst_230 = arith.constant dense<0.000000e+00> : vector<16x128xf32>
    %629 = tpu.matmul %628, %627, %cst_230 {dimension_numbers = #tpu.dot_dimension_numbers<[1], [0], [0], [1], [0, 0, 1, 1], [], []>} : vector<16x128xbf16>, vector<128x128xbf16>, vector<16x128xf32> -> vector<16x128xf32>
    %c0_231 = arith.constant 0 : index
    %c0_232 = arith.constant 0 : index
    %630 = vector.load %arg52[%c0_231, %c0_232] : memref<1x128xf32, #tpu.memory_space<vmem>>, vector<1x128xf32>
    %631 = vector.broadcast %630 : vector<1x128xf32> to vector<16x128xf32>
    %632 = arith.addf %629, %631 : vector<16x128xf32>
    %c0_233 = arith.constant 0 : index
    %c0_234 = arith.constant 0 : index
    %633 = vector.load %arg53[%c0_233, %c0_234] : memref<128x128xbf16, #tpu.memory_space<vmem>>, vector<128x128xbf16>
    %634 = arith.truncf %632 : vector<16x128xf32> to vector<16x128xbf16>
    %cst_235 = arith.constant dense<0.000000e+00> : vector<16x128xf32>
    %635 = tpu.matmul %634, %633, %cst_235 {dimension_numbers = #tpu.dot_dimension_numbers<[1], [0], [0], [1], [0, 0, 1, 1], [], []>} : vector<16x128xbf16>, vector<128x128xbf16>, vector<16x128xf32> -> vector<16x128xf32>
    %636 = arith.addf %600, %635 : vector<16x128xf32>
    %c0_236 = arith.constant 0 : index
    %c0_237 = arith.constant 0 : index
    %637 = vector.load %arg54[%c0_236, %c0_237] : memref<1x128xf32, #tpu.memory_space<vmem>>, vector<1x128xf32>
    %638 = vector.broadcast %637 : vector<1x128xf32> to vector<16x128xf32>
    %639 = arith.addf %636, %638 : vector<16x128xf32>
    %c0_238 = arith.constant 0 : index
    %c0_239 = arith.constant 0 : index
    %640 = vector.load %arg63[%c0_238, %c0_239] : memref<1x128xf32, #tpu.memory_space<vmem>>, vector<1x128xf32>
    %c0_240 = arith.constant 0 : index
    %c0_241 = arith.constant 0 : index
    %641 = vector.load %arg64[%c0_240, %c0_241] : memref<1x128xf32, #tpu.memory_space<vmem>>, vector<1x128xf32>
    %cst_242 = arith.constant dense<0.000000e+00> : vector<16xf32>
    %642 = vector.multi_reduction <add>, %639, %cst_242 [1] : vector<16x128xf32> to vector<16xf32>
    %643 = vector.shape_cast %642 : vector<16xf32> to vector<16x1xf32>
    %cst_243 = arith.constant 1.280000e+02 : f32
    %644 = vector.broadcast %cst_243 : f32 to vector<16x1xf32>
    %645 = arith.divf %643, %644 : vector<16x1xf32>
    %646 = vector.broadcast %645 : vector<16x1xf32> to vector<16x128xf32>
    %647 = arith.subf %639, %646 : vector<16x128xf32>
    %648 = arith.mulf %647, %647 : vector<16x128xf32>
    %cst_244 = arith.constant dense<0.000000e+00> : vector<16xf32>
    %649 = vector.multi_reduction <add>, %648, %cst_244 [1] : vector<16x128xf32> to vector<16xf32>
    %650 = vector.shape_cast %649 : vector<16xf32> to vector<16x1xf32>
    %cst_245 = arith.constant 1.280000e+02 : f32
    %651 = vector.broadcast %cst_245 : f32 to vector<16x1xf32>
    %652 = arith.divf %650, %651 : vector<16x1xf32>
    %653 = vector.broadcast %645 : vector<16x1xf32> to vector<16x128xf32>
    %654 = arith.subf %639, %653 : vector<16x128xf32>
    %cst_246 = arith.constant 9.99999974E-6 : f32
    %655 = vector.broadcast %cst_246 : f32 to vector<16x1xf32>
    %656 = arith.addf %652, %655 : vector<16x1xf32>
    %657 = math.rsqrt %656 : vector<16x1xf32>
    %658 = vector.broadcast %657 : vector<16x1xf32> to vector<16x128xf32>
    %659 = arith.mulf %654, %658 : vector<16x128xf32>
    %660 = vector.broadcast %640 : vector<1x128xf32> to vector<16x128xf32>
    %661 = arith.mulf %659, %660 : vector<16x128xf32>
    %662 = vector.broadcast %641 : vector<1x128xf32> to vector<16x128xf32>
    %663 = arith.addf %661, %662 : vector<16x128xf32>
    %c0_247 = arith.constant 0 : index
    %c0_248 = arith.constant 0 : index
    %664 = vector.load %arg55[%c0_247, %c0_248] : memref<128x128xbf16, #tpu.memory_space<vmem>>, vector<128x128xbf16>
    %665 = arith.truncf %663 : vector<16x128xf32> to vector<16x128xbf16>
    %cst_249 = arith.constant dense<0.000000e+00> : vector<16x128xf32>
    %666 = tpu.matmul %665, %664, %cst_249 {dimension_numbers = #tpu.dot_dimension_numbers<[1], [0], [0], [1], [0, 0, 1, 1], [], []>} : vector<16x128xbf16>, vector<128x128xbf16>, vector<16x128xf32> -> vector<16x128xf32>
    %c0_250 = arith.constant 0 : index
    %c0_251 = arith.constant 0 : index
    %667 = vector.load %arg56[%c0_250, %c0_251] : memref<1x128xf32, #tpu.memory_space<vmem>>, vector<1x128xf32>
    %668 = vector.broadcast %667 : vector<1x128xf32> to vector<16x128xf32>
    %669 = arith.addf %666, %668 : vector<16x128xf32>
    %c0_252 = arith.constant 0 : index
    %c0_253 = arith.constant 0 : index
    %670 = vector.load %arg57[%c0_252, %c0_253] : memref<128x256xbf16, #tpu.memory_space<vmem>>, vector<128x256xbf16>
    %671 = arith.truncf %601 : vector<32x128xf32> to vector<32x128xbf16>
    %cst_254 = arith.constant dense<0.000000e+00> : vector<32x256xf32>
    %672 = tpu.matmul %671, %670, %cst_254 {dimension_numbers = #tpu.dot_dimension_numbers<[1], [0], [0], [1], [0, 0, 1, 1], [], []>} : vector<32x128xbf16>, vector<128x256xbf16>, vector<32x256xf32> -> vector<32x256xf32>
    %c0_255 = arith.constant 0 : index
    %c0_256 = arith.constant 0 : index
    %673 = vector.load %arg58[%c0_255, %c0_256] : memref<1x256xf32, #tpu.memory_space<vmem>>, vector<1x256xf32>
    %674 = vector.broadcast %673 : vector<1x256xf32> to vector<32x256xf32>
    %675 = arith.addf %672, %674 : vector<32x256xf32>
    %676 = vector.shape_cast %669 : vector<16x128xf32> to vector<1x16x128xf32>
    %677 = vector.extract_strided_slice %675 {offsets = [0, 0], sizes = [32, 128], strides = [1, 1]} : vector<32x256xf32> to vector<32x128xf32>
    %678 = vector.shape_cast %677 : vector<32x128xf32> to vector<1x32x128xf32>
    %679 = vector.extract_strided_slice %675 {offsets = [0, 128], sizes = [32, 128], strides = [1, 1]} : vector<32x256xf32> to vector<32x128xf32>
    %680 = vector.shape_cast %679 : vector<32x128xf32> to vector<1x32x128xf32>
    %681 = vector.shape_cast %602 : vector<16x32xf32> to vector<1x16x32xf32>
    %682 = arith.truncf %676 : vector<1x16x128xf32> to vector<1x16x128xbf16>
    %683 = arith.truncf %678 : vector<1x32x128xf32> to vector<1x32x128xbf16>
    %684 = arith.truncf %680 : vector<1x32x128xf32> to vector<1x32x128xbf16>
    %685 = vector.extract_strided_slice %682 {offsets = [0, 0, 0], sizes = [1, 16, 32], strides = [1, 1, 1]} : vector<1x16x128xbf16> to vector<1x16x32xbf16>
    %686 = vector.extract_strided_slice %683 {offsets = [0, 0, 0], sizes = [1, 32, 32], strides = [1, 1, 1]} : vector<1x32x128xbf16> to vector<1x32x32xbf16>
    "tpu.trace_start"() <{level = 10 : i32, message = "bqd,bkd->bqk"}> : () -> ()
    %cst_257 = arith.constant dense<0.000000e+00> : vector<1x16x32xf32>
    %687 = tpu.matmul %685, %686, %cst_257 {dimension_numbers = #tpu.dot_dimension_numbers<[2], [2], [1], [1], [0, 0, 0, 1, 1, 1], [0], [0]>} : vector<1x16x32xbf16>, vector<1x32x32xbf16>, vector<1x16x32xf32> -> vector<1x16x32xf32>
    "tpu.trace_stop"() : () -> ()
    %688 = arith.addf %687, %681 : vector<1x16x32xf32>
    %cst_258 = arith.constant dense<0xFF800000> : vector<1x16xf32>
    %689 = vector.multi_reduction <maximumf>, %688, %cst_258 [2] : vector<1x16x32xf32> to vector<1x16xf32>
    %690 = vector.shape_cast %689 : vector<1x16xf32> to vector<1x16x1xf32>
    %691 = vector.broadcast %690 : vector<1x16x1xf32> to vector<1x16x32xf32>
    %692 = arith.subf %688, %691 : vector<1x16x32xf32>
    %693 = math.exp %692 : vector<1x16x32xf32>
    %cst_259 = arith.constant dense<0.000000e+00> : vector<1x16xf32>
    %694 = vector.multi_reduction <add>, %693, %cst_259 [2] : vector<1x16x32xf32> to vector<1x16xf32>
    %695 = vector.shape_cast %694 : vector<1x16xf32> to vector<1x16x1xf32>
    %696 = tpu.reciprocal %695 {approx = true} : vector<1x16x1xf32> -> vector<1x16x1xf32>
    %697 = vector.broadcast %696 : vector<1x16x1xf32> to vector<1x16x32xf32>
    %698 = arith.mulf %693, %697 : vector<1x16x32xf32>
    %699 = arith.truncf %698 : vector<1x16x32xf32> to vector<1x16x32xbf16>
    %700 = vector.extract_strided_slice %684 {offsets = [0, 0, 0], sizes = [1, 32, 32], strides = [1, 1, 1]} : vector<1x32x128xbf16> to vector<1x32x32xbf16>
    "tpu.trace_start"() <{level = 10 : i32, message = "bqk,bkd->bqd"}> : () -> ()
    %cst_260 = arith.constant dense<0.000000e+00> : vector<1x16x32xf32>
    %701 = tpu.matmul %699, %700, %cst_260 {dimension_numbers = #tpu.dot_dimension_numbers<[2], [1], [1], [2], [0, 0, 0, 1, 1, 2], [0], [0]>} : vector<1x16x32xbf16>, vector<1x32x32xbf16>, vector<1x16x32xf32> -> vector<1x16x32xf32>
    "tpu.trace_stop"() : () -> ()
    %702 = vector.extract_strided_slice %682 {offsets = [0, 0, 32], sizes = [1, 16, 32], strides = [1, 1, 1]} : vector<1x16x128xbf16> to vector<1x16x32xbf16>
    %703 = vector.extract_strided_slice %683 {offsets = [0, 0, 32], sizes = [1, 32, 32], strides = [1, 1, 1]} : vector<1x32x128xbf16> to vector<1x32x32xbf16>
    "tpu.trace_start"() <{level = 10 : i32, message = "bqd,bkd->bqk"}> : () -> ()
    %cst_261 = arith.constant dense<0.000000e+00> : vector<1x16x32xf32>
    %704 = tpu.matmul %702, %703, %cst_261 {dimension_numbers = #tpu.dot_dimension_numbers<[2], [2], [1], [1], [0, 0, 0, 1, 1, 1], [0], [0]>} : vector<1x16x32xbf16>, vector<1x32x32xbf16>, vector<1x16x32xf32> -> vector<1x16x32xf32>
    "tpu.trace_stop"() : () -> ()
    %705 = arith.addf %704, %681 : vector<1x16x32xf32>
    %cst_262 = arith.constant dense<0xFF800000> : vector<1x16xf32>
    %706 = vector.multi_reduction <maximumf>, %705, %cst_262 [2] : vector<1x16x32xf32> to vector<1x16xf32>
    %707 = vector.shape_cast %706 : vector<1x16xf32> to vector<1x16x1xf32>
    %708 = vector.broadcast %707 : vector<1x16x1xf32> to vector<1x16x32xf32>
    %709 = arith.subf %705, %708 : vector<1x16x32xf32>
    %710 = math.exp %709 : vector<1x16x32xf32>
    %cst_263 = arith.constant dense<0.000000e+00> : vector<1x16xf32>
    %711 = vector.multi_reduction <add>, %710, %cst_263 [2] : vector<1x16x32xf32> to vector<1x16xf32>
    %712 = vector.shape_cast %711 : vector<1x16xf32> to vector<1x16x1xf32>
    %713 = tpu.reciprocal %712 {approx = true} : vector<1x16x1xf32> -> vector<1x16x1xf32>
    %714 = vector.broadcast %713 : vector<1x16x1xf32> to vector<1x16x32xf32>
    %715 = arith.mulf %710, %714 : vector<1x16x32xf32>
    %716 = arith.truncf %715 : vector<1x16x32xf32> to vector<1x16x32xbf16>
    %717 = vector.extract_strided_slice %684 {offsets = [0, 0, 32], sizes = [1, 32, 32], strides = [1, 1, 1]} : vector<1x32x128xbf16> to vector<1x32x32xbf16>
    "tpu.trace_start"() <{level = 10 : i32, message = "bqk,bkd->bqd"}> : () -> ()
    %cst_264 = arith.constant dense<0.000000e+00> : vector<1x16x32xf32>
    %718 = tpu.matmul %716, %717, %cst_264 {dimension_numbers = #tpu.dot_dimension_numbers<[2], [1], [1], [2], [0, 0, 0, 1, 1, 2], [0], [0]>} : vector<1x16x32xbf16>, vector<1x32x32xbf16>, vector<1x16x32xf32> -> vector<1x16x32xf32>
    "tpu.trace_stop"() : () -> ()
    %719 = vector.extract_strided_slice %682 {offsets = [0, 0, 64], sizes = [1, 16, 32], strides = [1, 1, 1]} : vector<1x16x128xbf16> to vector<1x16x32xbf16>
    %720 = vector.extract_strided_slice %683 {offsets = [0, 0, 64], sizes = [1, 32, 32], strides = [1, 1, 1]} : vector<1x32x128xbf16> to vector<1x32x32xbf16>
    "tpu.trace_start"() <{level = 10 : i32, message = "bqd,bkd->bqk"}> : () -> ()
    %cst_265 = arith.constant dense<0.000000e+00> : vector<1x16x32xf32>
    %721 = tpu.matmul %719, %720, %cst_265 {dimension_numbers = #tpu.dot_dimension_numbers<[2], [2], [1], [1], [0, 0, 0, 1, 1, 1], [0], [0]>} : vector<1x16x32xbf16>, vector<1x32x32xbf16>, vector<1x16x32xf32> -> vector<1x16x32xf32>
    "tpu.trace_stop"() : () -> ()
    %722 = arith.addf %721, %681 : vector<1x16x32xf32>
    %cst_266 = arith.constant dense<0xFF800000> : vector<1x16xf32>
    %723 = vector.multi_reduction <maximumf>, %722, %cst_266 [2] : vector<1x16x32xf32> to vector<1x16xf32>
    %724 = vector.shape_cast %723 : vector<1x16xf32> to vector<1x16x1xf32>
    %725 = vector.broadcast %724 : vector<1x16x1xf32> to vector<1x16x32xf32>
    %726 = arith.subf %722, %725 : vector<1x16x32xf32>
    %727 = math.exp %726 : vector<1x16x32xf32>
    %cst_267 = arith.constant dense<0.000000e+00> : vector<1x16xf32>
    %728 = vector.multi_reduction <add>, %727, %cst_267 [2] : vector<1x16x32xf32> to vector<1x16xf32>
    %729 = vector.shape_cast %728 : vector<1x16xf32> to vector<1x16x1xf32>
    %730 = tpu.reciprocal %729 {approx = true} : vector<1x16x1xf32> -> vector<1x16x1xf32>
    %731 = vector.broadcast %730 : vector<1x16x1xf32> to vector<1x16x32xf32>
    %732 = arith.mulf %727, %731 : vector<1x16x32xf32>
    %733 = arith.truncf %732 : vector<1x16x32xf32> to vector<1x16x32xbf16>
    %734 = vector.extract_strided_slice %684 {offsets = [0, 0, 64], sizes = [1, 32, 32], strides = [1, 1, 1]} : vector<1x32x128xbf16> to vector<1x32x32xbf16>
    "tpu.trace_start"() <{level = 10 : i32, message = "bqk,bkd->bqd"}> : () -> ()
    %cst_268 = arith.constant dense<0.000000e+00> : vector<1x16x32xf32>
    %735 = tpu.matmul %733, %734, %cst_268 {dimension_numbers = #tpu.dot_dimension_numbers<[2], [1], [1], [2], [0, 0, 0, 1, 1, 2], [0], [0]>} : vector<1x16x32xbf16>, vector<1x32x32xbf16>, vector<1x16x32xf32> -> vector<1x16x32xf32>
    "tpu.trace_stop"() : () -> ()
    %736 = vector.extract_strided_slice %682 {offsets = [0, 0, 96], sizes = [1, 16, 32], strides = [1, 1, 1]} : vector<1x16x128xbf16> to vector<1x16x32xbf16>
    %737 = vector.extract_strided_slice %683 {offsets = [0, 0, 96], sizes = [1, 32, 32], strides = [1, 1, 1]} : vector<1x32x128xbf16> to vector<1x32x32xbf16>
    "tpu.trace_start"() <{level = 10 : i32, message = "bqd,bkd->bqk"}> : () -> ()
    %cst_269 = arith.constant dense<0.000000e+00> : vector<1x16x32xf32>
    %738 = tpu.matmul %736, %737, %cst_269 {dimension_numbers = #tpu.dot_dimension_numbers<[2], [2], [1], [1], [0, 0, 0, 1, 1, 1], [0], [0]>} : vector<1x16x32xbf16>, vector<1x32x32xbf16>, vector<1x16x32xf32> -> vector<1x16x32xf32>
    "tpu.trace_stop"() : () -> ()
    %739 = arith.addf %738, %681 : vector<1x16x32xf32>
    %cst_270 = arith.constant dense<0xFF800000> : vector<1x16xf32>
    %740 = vector.multi_reduction <maximumf>, %739, %cst_270 [2] : vector<1x16x32xf32> to vector<1x16xf32>
    %741 = vector.shape_cast %740 : vector<1x16xf32> to vector<1x16x1xf32>
    %742 = vector.broadcast %741 : vector<1x16x1xf32> to vector<1x16x32xf32>
    %743 = arith.subf %739, %742 : vector<1x16x32xf32>
    %744 = math.exp %743 : vector<1x16x32xf32>
    %cst_271 = arith.constant dense<0.000000e+00> : vector<1x16xf32>
    %745 = vector.multi_reduction <add>, %744, %cst_271 [2] : vector<1x16x32xf32> to vector<1x16xf32>
    %746 = vector.shape_cast %745 : vector<1x16xf32> to vector<1x16x1xf32>
    %747 = tpu.reciprocal %746 {approx = true} : vector<1x16x1xf32> -> vector<1x16x1xf32>
    %748 = vector.broadcast %747 : vector<1x16x1xf32> to vector<1x16x32xf32>
    %749 = arith.mulf %744, %748 : vector<1x16x32xf32>
    %750 = arith.truncf %749 : vector<1x16x32xf32> to vector<1x16x32xbf16>
    %751 = vector.extract_strided_slice %684 {offsets = [0, 0, 96], sizes = [1, 32, 32], strides = [1, 1, 1]} : vector<1x32x128xbf16> to vector<1x32x32xbf16>
    "tpu.trace_start"() <{level = 10 : i32, message = "bqk,bkd->bqd"}> : () -> ()
    %cst_272 = arith.constant dense<0.000000e+00> : vector<1x16x32xf32>
    %752 = tpu.matmul %750, %751, %cst_272 {dimension_numbers = #tpu.dot_dimension_numbers<[2], [1], [1], [2], [0, 0, 0, 1, 1, 2], [0], [0]>} : vector<1x16x32xbf16>, vector<1x32x32xbf16>, vector<1x16x32xf32> -> vector<1x16x32xf32>
    "tpu.trace_stop"() : () -> ()
    %753 = tpu.concatenate %701, %718, %735, %752 in 2 : vector<1x16x32xf32>, vector<1x16x32xf32>, vector<1x16x32xf32>, vector<1x16x32xf32> -> vector<1x16x128xf32>
    %754 = vector.shape_cast %753 : vector<1x16x128xf32> to vector<16x128xf32>
    %c0_273 = arith.constant 0 : index
    %c0_274 = arith.constant 0 : index
    %755 = vector.load %arg59[%c0_273, %c0_274] : memref<128x128xbf16, #tpu.memory_space<vmem>>, vector<128x128xbf16>
    %756 = arith.truncf %754 : vector<16x128xf32> to vector<16x128xbf16>
    %cst_275 = arith.constant dense<0.000000e+00> : vector<16x128xf32>
    %757 = tpu.matmul %756, %755, %cst_275 {dimension_numbers = #tpu.dot_dimension_numbers<[1], [0], [0], [1], [0, 0, 1, 1], [], []>} : vector<16x128xbf16>, vector<128x128xbf16>, vector<16x128xf32> -> vector<16x128xf32>
    %758 = arith.addf %639, %757 : vector<16x128xf32>
    %c0_276 = arith.constant 0 : index
    %c0_277 = arith.constant 0 : index
    %759 = vector.load %arg60[%c0_276, %c0_277] : memref<1x128xf32, #tpu.memory_space<vmem>>, vector<1x128xf32>
    %760 = vector.broadcast %759 : vector<1x128xf32> to vector<16x128xf32>
    %761 = arith.addf %758, %760 : vector<16x128xf32>
    %c0_278 = arith.constant 0 : index
    %c0_279 = arith.constant 0 : index
    %762 = vector.load %arg65[%c0_278, %c0_279] : memref<1x128xf32, #tpu.memory_space<vmem>>, vector<1x128xf32>
    %c0_280 = arith.constant 0 : index
    %c0_281 = arith.constant 0 : index
    %763 = vector.load %arg66[%c0_280, %c0_281] : memref<1x128xf32, #tpu.memory_space<vmem>>, vector<1x128xf32>
    %cst_282 = arith.constant dense<0.000000e+00> : vector<16xf32>
    %764 = vector.multi_reduction <add>, %761, %cst_282 [1] : vector<16x128xf32> to vector<16xf32>
    %765 = vector.shape_cast %764 : vector<16xf32> to vector<16x1xf32>
    %cst_283 = arith.constant 1.280000e+02 : f32
    %766 = vector.broadcast %cst_283 : f32 to vector<16x1xf32>
    %767 = arith.divf %765, %766 : vector<16x1xf32>
    %768 = vector.broadcast %767 : vector<16x1xf32> to vector<16x128xf32>
    %769 = arith.subf %761, %768 : vector<16x128xf32>
    %770 = arith.mulf %769, %769 : vector<16x128xf32>
    %cst_284 = arith.constant dense<0.000000e+00> : vector<16xf32>
    %771 = vector.multi_reduction <add>, %770, %cst_284 [1] : vector<16x128xf32> to vector<16xf32>
    %772 = vector.shape_cast %771 : vector<16xf32> to vector<16x1xf32>
    %cst_285 = arith.constant 1.280000e+02 : f32
    %773 = vector.broadcast %cst_285 : f32 to vector<16x1xf32>
    %774 = arith.divf %772, %773 : vector<16x1xf32>
    %775 = vector.broadcast %767 : vector<16x1xf32> to vector<16x128xf32>
    %776 = arith.subf %761, %775 : vector<16x128xf32>
    %cst_286 = arith.constant 9.99999974E-6 : f32
    %777 = vector.broadcast %cst_286 : f32 to vector<16x1xf32>
    %778 = arith.addf %774, %777 : vector<16x1xf32>
    %779 = math.rsqrt %778 : vector<16x1xf32>
    %780 = vector.broadcast %779 : vector<16x1xf32> to vector<16x128xf32>
    %781 = arith.mulf %776, %780 : vector<16x128xf32>
    %782 = vector.broadcast %762 : vector<1x128xf32> to vector<16x128xf32>
    %783 = arith.mulf %781, %782 : vector<16x128xf32>
    %784 = vector.broadcast %763 : vector<1x128xf32> to vector<16x128xf32>
    %785 = arith.addf %783, %784 : vector<16x128xf32>
    %c0_287 = arith.constant 0 : index
    %c0_288 = arith.constant 0 : index
    %786 = vector.load %arg67[%c0_287, %c0_288] : memref<128x256xbf16, #tpu.memory_space<vmem>>, vector<128x256xbf16>
    %787 = arith.truncf %785 : vector<16x128xf32> to vector<16x128xbf16>
    %cst_289 = arith.constant dense<0.000000e+00> : vector<16x256xf32>
    %788 = tpu.matmul %787, %786, %cst_289 {dimension_numbers = #tpu.dot_dimension_numbers<[1], [0], [0], [1], [0, 0, 1, 1], [], []>} : vector<16x128xbf16>, vector<128x256xbf16>, vector<16x256xf32> -> vector<16x256xf32>
    %c0_290 = arith.constant 0 : index
    %c0_291 = arith.constant 0 : index
    %789 = vector.load %arg68[%c0_290, %c0_291] : memref<1x256xf32, #tpu.memory_space<vmem>>, vector<1x256xf32>
    %790 = vector.broadcast %789 : vector<1x256xf32> to vector<16x256xf32>
    %791 = arith.addf %788, %790 : vector<16x256xf32>
    %cst_292 = arith.constant 0.000000e+00 : f32
    %792 = vector.broadcast %cst_292 : f32 to vector<16x256xf32>
    %793 = arith.maximumf %791, %792 : vector<16x256xf32>
    %c0_293 = arith.constant 0 : index
    %c0_294 = arith.constant 0 : index
    %794 = vector.load %arg69[%c0_293, %c0_294] : memref<256x128xbf16, #tpu.memory_space<vmem>>, vector<256x128xbf16>
    %795 = arith.truncf %793 : vector<16x256xf32> to vector<16x256xbf16>
    %cst_295 = arith.constant dense<0.000000e+00> : vector<16x128xf32>
    %796 = tpu.matmul %795, %794, %cst_295 {dimension_numbers = #tpu.dot_dimension_numbers<[1], [0], [0], [1], [0, 0, 1, 1], [], []>} : vector<16x256xbf16>, vector<256x128xbf16>, vector<16x128xf32> -> vector<16x128xf32>
    %797 = arith.addf %761, %796 : vector<16x128xf32>
    %c0_296 = arith.constant 0 : index
    %c0_297 = arith.constant 0 : index
    %798 = vector.load %arg70[%c0_296, %c0_297] : memref<1x128xf32, #tpu.memory_space<vmem>>, vector<1x128xf32>
    %799 = vector.broadcast %798 : vector<1x128xf32> to vector<16x128xf32>
    %800 = arith.addf %797, %799 : vector<16x128xf32>
    %801 = vector.shape_cast %800 : vector<16x128xf32> to vector<2x8x128xf32>
    %c0_298 = arith.constant 0 : index
    %c0_299 = arith.constant 0 : index
    %c0_300 = arith.constant 0 : index
    %802 = vector.load %arg71[%c0_298, %c0_299, %c0_300] : memref<2x8x128xf32, #tpu.memory_space<vmem>>, vector<2x8x128xf32>
    tpu.vector_store %arg71[%c0_298, %c0_299, %c0_300], %801 {strides = array<i32>} : memref<2x8x128xf32, #tpu.memory_space<vmem>>, vector<2x8x128xf32>,
    return
  }
  func.func @transform_0(%arg0: i32) -> (i32, i32, i32) {
    %c0_i32 = arith.constant 0 : i32
    %c0_i32_0 = arith.constant 0 : i32
    %c0_i32_1 = arith.constant 0 : i32
    return %arg0, %c0_i32, %c0_i32_0 : i32, i32, i32
  }
  func.func @transform_1(%arg0: i32) -> (i32, i32, i32) {
    %c0_i32 = arith.constant 0 : i32
    %c0_i32_0 = arith.constant 0 : i32
    %c0_i32_1 = arith.constant 0 : i32
    return %arg0, %c0_i32, %c0_i32_0 : i32, i32, i32
  }
  func.func @transform_2(%arg0: i32) -> (i32, i32, i32) {
    %c0_i32 = arith.constant 0 : i32
    %c0_i32_0 = arith.constant 0 : i32
    %c0_i32_1 = arith.constant 0 : i32
    return %arg0, %c0_i32, %c0_i32_0 : i32, i32, i32
  }
  func.func @transform_3(%arg0: i32) -> (i32, i32, i32) {
    %c0_i32 = arith.constant 0 : i32
    %c0_i32_0 = arith.constant 0 : i32
    %c0_i32_1 = arith.constant 0 : i32
    return %arg0, %c0_i32, %c0_i32_0 : i32, i32, i32
  }
  func.func @transform_4(%arg0: i32) -> (i32, i32) {
    %c0_i32 = arith.constant 0 : i32
    %c0_i32_0 = arith.constant 0 : i32
    %c0_i32_1 = arith.constant 0 : i32
    return %c0_i32, %c0_i32_0 : i32, i32
  }
  func.func @transform_5(%arg0: i32) -> (i32, i32) {
    %c0_i32 = arith.constant 0 : i32
    %c0_i32_0 = arith.constant 0 : i32
    return %arg0, %c0_i32 : i32, i32
  }
  func.func @transform_6(%arg0: i32) -> (i32, i32) {
    %c0_i32 = arith.constant 0 : i32
    %c0_i32_0 = arith.constant 0 : i32
    %c0_i32_1 = arith.constant 0 : i32
    return %c0_i32, %c0_i32_0 : i32, i32
  }
  func.func @transform_7(%arg0: i32) -> (i32, i32) {
    %c0_i32 = arith.constant 0 : i32
    %c0_i32_0 = arith.constant 0 : i32
    %c0_i32_1 = arith.constant 0 : i32
    return %c0_i32, %c0_i32_0 : i32, i32
  }
  func.func @transform_8(%arg0: i32) -> (i32, i32) {
    %c0_i32 = arith.constant 0 : i32
    %c0_i32_0 = arith.constant 0 : i32
    %c0_i32_1 = arith.constant 0 : i32
    return %c0_i32, %c0_i32_0 : i32, i32
  }
  func.func @transform_9(%arg0: i32) -> (i32, i32) {
    %c0_i32 = arith.constant 0 : i32
    %c0_i32_0 = arith.constant 0 : i32
    %c0_i32_1 = arith.constant 0 : i32
    return %c0_i32, %c0_i32_0 : i32, i32
  }
  func.func @transform_10(%arg0: i32) -> (i32, i32) {
    %c0_i32 = arith.constant 0 : i32
    %c0_i32_0 = arith.constant 0 : i32
    %c0_i32_1 = arith.constant 0 : i32
    return %c0_i32, %c0_i32_0 : i32, i32
  }
  func.func @transform_11(%arg0: i32) -> (i32, i32) {
    %c0_i32 = arith.constant 0 : i32
    %c0_i32_0 = arith.constant 0 : i32
    %c0_i32_1 = arith.constant 0 : i32
    return %c0_i32, %c0_i32_0 : i32, i32
  }
  func.func @transform_12(%arg0: i32) -> (i32, i32) {
    %c0_i32 = arith.constant 0 : i32
    %c0_i32_0 = arith.constant 0 : i32
    %c0_i32_1 = arith.constant 0 : i32
    return %c0_i32, %c0_i32_0 : i32, i32
  }
  func.func @transform_13(%arg0: i32) -> (i32, i32) {
    %c0_i32 = arith.constant 0 : i32
    %c0_i32_0 = arith.constant 0 : i32
    %c0_i32_1 = arith.constant 0 : i32
    return %c0_i32, %c0_i32_0 : i32, i32
  }
  func.func @transform_14(%arg0: i32) -> (i32, i32) {
    %c0_i32 = arith.constant 0 : i32
    %c0_i32_0 = arith.constant 0 : i32
    %c0_i32_1 = arith.constant 0 : i32
    return %c0_i32, %c0_i32_0 : i32, i32
  }
  func.func @transform_15(%arg0: i32) -> (i32, i32) {
    %c0_i32 = arith.constant 0 : i32
    %c0_i32_0 = arith.constant 0 : i32
    %c0_i32_1 = arith.constant 0 : i32
    return %c0_i32, %c0_i32_0 : i32, i32
  }
  func.func @transform_16(%arg0: i32) -> (i32, i32) {
    %c0_i32 = arith.constant 0 : i32
    %c0_i32_0 = arith.constant 0 : i32
    %c0_i32_1 = arith.constant 0 : i32
    return %c0_i32, %c0_i32_0 : i32, i32
  }
  func.func @transform_17(%arg0: i32) -> (i32, i32) {
    %c0_i32 = arith.constant 0 : i32
    %c0_i32_0 = arith.constant 0 : i32
    %c0_i32_1 = arith.constant 0 : i32
    return %c0_i32, %c0_i32_0 : i32, i32
  }
  func.func @transform_18(%arg0: i32) -> (i32, i32) {
    %c0_i32 = arith.constant 0 : i32
    %c0_i32_0 = arith.constant 0 : i32
    %c0_i32_1 = arith.constant 0 : i32
    return %c0_i32, %c0_i32_0 : i32, i32
  }
  func.func @transform_19(%arg0: i32) -> (i32, i32) {
    %c0_i32 = arith.constant 0 : i32
    %c0_i32_0 = arith.constant 0 : i32
    %c0_i32_1 = arith.constant 0 : i32
    return %c0_i32, %c0_i32_0 : i32, i32
  }
  func.func @transform_20(%arg0: i32) -> (i32, i32) {
    %c0_i32 = arith.constant 0 : i32
    %c0_i32_0 = arith.constant 0 : i32
    %c0_i32_1 = arith.constant 0 : i32
    return %c0_i32, %c0_i32_0 : i32, i32
  }
  func.func @transform_21(%arg0: i32) -> (i32, i32) {
    %c0_i32 = arith.constant 0 : i32
    %c0_i32_0 = arith.constant 0 : i32
    %c0_i32_1 = arith.constant 0 : i32
    return %c0_i32, %c0_i32_0 : i32, i32
  }
  func.func @transform_22(%arg0: i32) -> (i32, i32) {
    %c0_i32 = arith.constant 0 : i32
    %c0_i32_0 = arith.constant 0 : i32
    %c0_i32_1 = arith.constant 0 : i32
    return %c0_i32, %c0_i32_0 : i32, i32
  }
  func.func @transform_23(%arg0: i32) -> (i32, i32) {
    %c0_i32 = arith.constant 0 : i32
    %c0_i32_0 = arith.constant 0 : i32
    %c0_i32_1 = arith.constant 0 : i32
    return %c0_i32, %c0_i32_0 : i32, i32
  }
  func.func @transform_24(%arg0: i32) -> (i32, i32) {
    %c0_i32 = arith.constant 0 : i32
    %c0_i32_0 = arith.constant 0 : i32
    %c0_i32_1 = arith.constant 0 : i32
    return %c0_i32, %c0_i32_0 : i32, i32
  }
  func.func @transform_25(%arg0: i32) -> (i32, i32) {
    %c0_i32 = arith.constant 0 : i32
    %c0_i32_0 = arith.constant 0 : i32
    %c0_i32_1 = arith.constant 0 : i32
    return %c0_i32, %c0_i32_0 : i32, i32
  }
  func.func @transform_26(%arg0: i32) -> (i32, i32) {
    %c0_i32 = arith.constant 0 : i32
    %c0_i32_0 = arith.constant 0 : i32
    %c0_i32_1 = arith.constant 0 : i32
    return %c0_i32, %c0_i32_0 : i32, i32
  }
  func.func @transform_27(%arg0: i32) -> (i32, i32) {
    %c0_i32 = arith.constant 0 : i32
    %c0_i32_0 = arith.constant 0 : i32
    %c0_i32_1 = arith.constant 0 : i32
    return %c0_i32, %c0_i32_0 : i32, i32
  }
  func.func @transform_28(%arg0: i32) -> (i32, i32) {
    %c0_i32 = arith.constant 0 : i32
    %c0_i32_0 = arith.constant 0 : i32
    %c0_i32_1 = arith.constant 0 : i32
    return %c0_i32, %c0_i32_0 : i32, i32
  }
  func.func @transform_29(%arg0: i32) -> (i32, i32) {
    %c0_i32 = arith.constant 0 : i32
    %c0_i32_0 = arith.constant 0 : i32
    %c0_i32_1 = arith.constant 0 : i32
    return %c0_i32, %c0_i32_0 : i32, i32
  }
  func.func @transform_30(%arg0: i32) -> (i32, i32) {
    %c0_i32 = arith.constant 0 : i32
    %c0_i32_0 = arith.constant 0 : i32
    %c0_i32_1 = arith.constant 0 : i32
    return %c0_i32, %c0_i32_0 : i32, i32
  }
  func.func @transform_31(%arg0: i32) -> (i32, i32) {
    %c0_i32 = arith.constant 0 : i32
    %c0_i32_0 = arith.constant 0 : i32
    %c0_i32_1 = arith.constant 0 : i32
    return %c0_i32, %c0_i32_0 : i32, i32
  }
  func.func @transform_32(%arg0: i32) -> (i32, i32) {
    %c0_i32 = arith.constant 0 : i32
    %c0_i32_0 = arith.constant 0 : i32
    %c0_i32_1 = arith.constant 0 : i32
    return %c0_i32, %c0_i32_0 : i32, i32
  }
  func.func @transform_33(%arg0: i32) -> (i32, i32) {
    %c0_i32 = arith.constant 0 : i32
    %c0_i32_0 = arith.constant 0 : i32
    %c0_i32_1 = arith.constant 0 : i32
    return %c0_i32, %c0_i32_0 : i32, i32
  }
  func.func @transform_34(%arg0: i32) -> (i32, i32) {
    %c0_i32 = arith.constant 0 : i32
    %c0_i32_0 = arith.constant 0 : i32
    %c0_i32_1 = arith.constant 0 : i32
    return %c0_i32, %c0_i32_0 : i32, i32
  }
  func.func @transform_35(%arg0: i32) -> (i32, i32) {
    %c0_i32 = arith.constant 0 : i32
    %c0_i32_0 = arith.constant 0 : i32
    %c0_i32_1 = arith.constant 0 : i32
    return %c0_i32, %c0_i32_0 : i32, i32
  }
  func.func @transform_36(%arg0: i32) -> (i32, i32) {
    %c0_i32 = arith.constant 0 : i32
    %c0_i32_0 = arith.constant 0 : i32
    %c0_i32_1 = arith.constant 0 : i32
    return %c0_i32, %c0_i32_0 : i32, i32
  }
  func.func @transform_37(%arg0: i32) -> (i32, i32) {
    %c0_i32 = arith.constant 0 : i32
    %c0_i32_0 = arith.constant 0 : i32
    %c0_i32_1 = arith.constant 0 : i32
    return %c0_i32, %c0_i32_0 : i32, i32
  }
  func.func @transform_38(%arg0: i32) -> (i32, i32) {
    %c0_i32 = arith.constant 0 : i32
    %c0_i32_0 = arith.constant 0 : i32
    %c0_i32_1 = arith.constant 0 : i32
    return %c0_i32, %c0_i32_0 : i32, i32
  }
  func.func @transform_39(%arg0: i32) -> (i32, i32) {
    %c0_i32 = arith.constant 0 : i32
    %c0_i32_0 = arith.constant 0 : i32
    %c0_i32_1 = arith.constant 0 : i32
    return %c0_i32, %c0_i32_0 : i32, i32
  }
  func.func @transform_40(%arg0: i32) -> (i32, i32) {
    %c0_i32 = arith.constant 0 : i32
    %c0_i32_0 = arith.constant 0 : i32
    %c0_i32_1 = arith.constant 0 : i32
    return %c0_i32, %c0_i32_0 : i32, i32
  }
  func.func @transform_41(%arg0: i32) -> (i32, i32) {
    %c0_i32 = arith.constant 0 : i32
    %c0_i32_0 = arith.constant 0 : i32
    %c0_i32_1 = arith.constant 0 : i32
    return %c0_i32, %c0_i32_0 : i32, i32
  }
  func.func @transform_42(%arg0: i32) -> (i32, i32) {
    %c0_i32 = arith.constant 0 : i32
    %c0_i32_0 = arith.constant 0 : i32
    %c0_i32_1 = arith.constant 0 : i32
    return %c0_i32, %c0_i32_0 : i32, i32
  }
  func.func @transform_43(%arg0: i32) -> (i32, i32) {
    %c0_i32 = arith.constant 0 : i32
    %c0_i32_0 = arith.constant 0 : i32
    %c0_i32_1 = arith.constant 0 : i32
    return %c0_i32, %c0_i32_0 : i32, i32
  }
  func.func @transform_44(%arg0: i32) -> (i32, i32) {
    %c0_i32 = arith.constant 0 : i32
    %c0_i32_0 = arith.constant 0 : i32
    %c0_i32_1 = arith.constant 0 : i32
    return %c0_i32, %c0_i32_0 : i32, i32
  }
  func.func @transform_45(%arg0: i32) -> (i32, i32) {
    %c0_i32 = arith.constant 0 : i32
    %c0_i32_0 = arith.constant 0 : i32
    %c0_i32_1 = arith.constant 0 : i32
    return %c0_i32, %c0_i32_0 : i32, i32
  }
  func.func @transform_46(%arg0: i32) -> (i32, i32) {
    %c0_i32 = arith.constant 0 : i32
    %c0_i32_0 = arith.constant 0 : i32
    %c0_i32_1 = arith.constant 0 : i32
    return %c0_i32, %c0_i32_0 : i32, i32
  }
  func.func @transform_47(%arg0: i32) -> (i32, i32) {
    %c0_i32 = arith.constant 0 : i32
    %c0_i32_0 = arith.constant 0 : i32
    %c0_i32_1 = arith.constant 0 : i32
    return %c0_i32, %c0_i32_0 : i32, i32
  }
  func.func @transform_48(%arg0: i32) -> (i32, i32) {
    %c0_i32 = arith.constant 0 : i32
    %c0_i32_0 = arith.constant 0 : i32
    %c0_i32_1 = arith.constant 0 : i32
    return %c0_i32, %c0_i32_0 : i32, i32
  }
  func.func @transform_49(%arg0: i32) -> (i32, i32) {
    %c0_i32 = arith.constant 0 : i32
    %c0_i32_0 = arith.constant 0 : i32
    %c0_i32_1 = arith.constant 0 : i32
    return %c0_i32, %c0_i32_0 : i32, i32
  }
  func.func @transform_50(%arg0: i32) -> (i32, i32) {
    %c0_i32 = arith.constant 0 : i32
    %c0_i32_0 = arith.constant 0 : i32
    %c0_i32_1 = arith.constant 0 : i32
    return %c0_i32, %c0_i32_0 : i32, i32
  }
  func.func @transform_51(%arg0: i32) -> (i32, i32) {
    %c0_i32 = arith.constant 0 : i32
    %c0_i32_0 = arith.constant 0 : i32
    %c0_i32_1 = arith.constant 0 : i32
    return %c0_i32, %c0_i32_0 : i32, i32
  }
  func.func @transform_52(%arg0: i32) -> (i32, i32) {
    %c0_i32 = arith.constant 0 : i32
    %c0_i32_0 = arith.constant 0 : i32
    %c0_i32_1 = arith.constant 0 : i32
    return %c0_i32, %c0_i32_0 : i32, i32
  }
  func.func @transform_53(%arg0: i32) -> (i32, i32) {
    %c0_i32 = arith.constant 0 : i32
    %c0_i32_0 = arith.constant 0 : i32
    %c0_i32_1 = arith.constant 0 : i32
    return %c0_i32, %c0_i32_0 : i32, i32
  }
  func.func @transform_54(%arg0: i32) -> (i32, i32) {
    %c0_i32 = arith.constant 0 : i32
    %c0_i32_0 = arith.constant 0 : i32
    %c0_i32_1 = arith.constant 0 : i32
    return %c0_i32, %c0_i32_0 : i32, i32
  }
  func.func @transform_55(%arg0: i32) -> (i32, i32) {
    %c0_i32 = arith.constant 0 : i32
    %c0_i32_0 = arith.constant 0 : i32
    %c0_i32_1 = arith.constant 0 : i32
    return %c0_i32, %c0_i32_0 : i32, i32
  }
  func.func @transform_56(%arg0: i32) -> (i32, i32) {
    %c0_i32 = arith.constant 0 : i32
    %c0_i32_0 = arith.constant 0 : i32
    %c0_i32_1 = arith.constant 0 : i32
    return %c0_i32, %c0_i32_0 : i32, i32
  }
  func.func @transform_57(%arg0: i32) -> (i32, i32) {
    %c0_i32 = arith.constant 0 : i32
    %c0_i32_0 = arith.constant 0 : i32
    %c0_i32_1 = arith.constant 0 : i32
    return %c0_i32, %c0_i32_0 : i32, i32
  }
  func.func @transform_58(%arg0: i32) -> (i32, i32) {
    %c0_i32 = arith.constant 0 : i32
    %c0_i32_0 = arith.constant 0 : i32
    %c0_i32_1 = arith.constant 0 : i32
    return %c0_i32, %c0_i32_0 : i32, i32
  }
  func.func @transform_59(%arg0: i32) -> (i32, i32) {
    %c0_i32 = arith.constant 0 : i32
    %c0_i32_0 = arith.constant 0 : i32
    %c0_i32_1 = arith.constant 0 : i32
    return %c0_i32, %c0_i32_0 : i32, i32
  }
  func.func @transform_60(%arg0: i32) -> (i32, i32) {
    %c0_i32 = arith.constant 0 : i32
    %c0_i32_0 = arith.constant 0 : i32
    %c0_i32_1 = arith.constant 0 : i32
    return %c0_i32, %c0_i32_0 : i32, i32
  }
  func.func @transform_61(%arg0: i32) -> (i32, i32) {
    %c0_i32 = arith.constant 0 : i32
    %c0_i32_0 = arith.constant 0 : i32
    %c0_i32_1 = arith.constant 0 : i32
    return %c0_i32, %c0_i32_0 : i32, i32
  }
  func.func @transform_62(%arg0: i32) -> (i32, i32) {
    %c0_i32 = arith.constant 0 : i32
    %c0_i32_0 = arith.constant 0 : i32
    %c0_i32_1 = arith.constant 0 : i32
    return %c0_i32, %c0_i32_0 : i32, i32
  }
  func.func @transform_63(%arg0: i32) -> (i32, i32) {
    %c0_i32 = arith.constant 0 : i32
    %c0_i32_0 = arith.constant 0 : i32
    %c0_i32_1 = arith.constant 0 : i32
    return %c0_i32, %c0_i32_0 : i32, i32
  }
  func.func @transform_64(%arg0: i32) -> (i32, i32) {
    %c0_i32 = arith.constant 0 : i32
    %c0_i32_0 = arith.constant 0 : i32
    %c0_i32_1 = arith.constant 0 : i32
    return %c0_i32, %c0_i32_0 : i32, i32
  }
  func.func @transform_65(%arg0: i32) -> (i32, i32) {
    %c0_i32 = arith.constant 0 : i32
    %c0_i32_0 = arith.constant 0 : i32
    %c0_i32_1 = arith.constant 0 : i32
    return %c0_i32, %c0_i32_0 : i32, i32
  }
  func.func @transform_66(%arg0: i32) -> (i32, i32) {
    %c0_i32 = arith.constant 0 : i32
    %c0_i32_0 = arith.constant 0 : i32
    %c0_i32_1 = arith.constant 0 : i32
    return %c0_i32, %c0_i32_0 : i32, i32
  }
  func.func @transform_67(%arg0: i32) -> (i32, i32) {
    %c0_i32 = arith.constant 0 : i32
    %c0_i32_0 = arith.constant 0 : i32
    %c0_i32_1 = arith.constant 0 : i32
    return %c0_i32, %c0_i32_0 : i32, i32
  }
  func.func @transform_68(%arg0: i32) -> (i32, i32) {
    %c0_i32 = arith.constant 0 : i32
    %c0_i32_0 = arith.constant 0 : i32
    %c0_i32_1 = arith.constant 0 : i32
    return %c0_i32, %c0_i32_0 : i32, i32
  }
  func.func @transform_69(%arg0: i32) -> (i32, i32) {
    %c0_i32 = arith.constant 0 : i32
    %c0_i32_0 = arith.constant 0 : i32
    %c0_i32_1 = arith.constant 0 : i32
    return %c0_i32, %c0_i32_0 : i32, i32
  }
  func.func @transform_70(%arg0: i32) -> (i32, i32, i32) {
    %c0_i32 = arith.constant 0 : i32
    %c0_i32_0 = arith.constant 0 : i32
    %c0_i32_1 = arith.constant 0 : i32
    return %arg0, %c0_i32, %c0_i32_0 : i32, i32, i32
  }
}

</mosaic_0001>

<llo_original>
// kernel: _lambda_.1
$region0: #{_lambda_.1}
  #allocation0 [shape = 'u32[]', space=smem, size = 0x4, offset = 0x4, fixed_abs, tag = 'smem constant byte address 0x4 - core index']
  #allocation1 [shape = 'u32[144,128]{1,0:T(1,128)}', space=vmem, size = 0x12000, scoped, tag = 'internal scratch']
  %s0 = inlined_call_operand.smem [shape: u32[71], index: -1, kind: input, shape index: {}]
  %s1 = sld [smem:[%s0]]
  %s2 = scalar_lea.smem %s0, 1
  %s3 = sld [smem:[%s2]]
  %s4 = scalar_lea.smem %s0, 2
  %s5 = sld [smem:[%s4]]
  %s6 = scalar_lea.smem %s0, 3
  %s7 = sld [smem:[%s6]]
  %s8 = scalar_lea.smem %s0, 4
  %s9 = sld [smem:[%s8]]
  %s10 = scalar_lea.smem %s0, 5
  %s11 = sld [smem:[%s10]]
  %s12 = scalar_lea.smem %s0, 6
  %s13 = sld [smem:[%s12]]
  %s14 = scalar_lea.smem %s0, 7
  %s15 = sld [smem:[%s14]]
  %s16 = scalar_lea.smem %s0, 8
  %s17 = sld [smem:[%s16]]
  %s18 = scalar_lea.smem %s0, 9
  %s19 = sld [smem:[%s18]]
  %s20 = scalar_lea.smem %s0, 10
  %s21 = sld [smem:[%s20]]
  %s22 = scalar_lea.smem %s0, 11
  %s23 = sld [smem:[%s22]]
  %s24 = scalar_lea.smem %s0, 12
  %s25 = sld [smem:[%s24]]
  %s26 = scalar_lea.smem %s0, 13
  %s27 = sld [smem:[%s26]]
  %s28 = scalar_lea.smem %s0, 14
  %s29 = sld [smem:[%s28]]
  %s30 = scalar_lea.smem %s0, 15
  %s31 = sld [smem:[%s30]]
  %s32 = scalar_lea.smem %s0, 16
  %s33 = sld [smem:[%s32]]
  %s34 = scalar_lea.smem %s0, 17
  %s35 = sld [smem:[%s34]]
  %s36 = scalar_lea.smem %s0, 18
  %s37 = sld [smem:[%s36]]
  %s38 = scalar_lea.smem %s0, 19
  %s39 = sld [smem:[%s38]]
  %s40 = scalar_lea.smem %s0, 20
  %s41 = sld [smem:[%s40]]
  %s42 = scalar_lea.smem %s0, 21
  %s43 = sld [smem:[%s42]]
  %s44 = scalar_lea.smem %s0, 22
  %s45 = sld [smem:[%s44]]
  %s46 = scalar_lea.smem %s0, 23
  %s47 = sld [smem:[%s46]]
  %s48 = scalar_lea.smem %s0, 24
  %s49 = sld [smem:[%s48]]
  %s50 = scalar_lea.smem %s0, 25
  %s51 = sld [smem:[%s50]]
  %s52 = scalar_lea.smem %s0, 26
  %s53 = sld [smem:[%s52]]
  %s54 = scalar_lea.smem %s0, 27
  %s55 = sld [smem:[%s54]]
  %s56 = scalar_lea.smem %s0, 28
  %s57 = sld [smem:[%s56]]
  %s58 = scalar_lea.smem %s0, 29
  %s59 = sld [smem:[%s58]]
  %s60 = scalar_lea.smem %s0, 30
  %s61 = sld [smem:[%s60]]
  %s62 = scalar_lea.smem %s0, 31
  %s63 = sld [smem:[%s62]]
  %s64 = scalar_lea.smem %s0, 32
  %s65 = sld [smem:[%s64]]
  %s66 = scalar_lea.smem %s0, 33
  %s67 = sld [smem:[%s66]]
  %s68 = scalar_lea.smem %s0, 34
  %s69 = sld [smem:[%s68]]
  %s70 = scalar_lea.smem %s0, 35
  %s71 = sld [smem:[%s70]]
  %s72 = scalar_lea.smem %s0, 36
  %s73 = sld [smem:[%s72]]
  %s74 = scalar_lea.smem %s0, 37
  %s75 = sld [smem:[%s74]]
  %s76 = scalar_lea.smem %s0, 38
  %s77 = sld [smem:[%s76]]
  %s78 = scalar_lea.smem %s0, 39
  %s79 = sld [smem:[%s78]]
  %s80 = scalar_lea.smem %s0, 40
  %s81 = sld [smem:[%s80]]
  %s82 = scalar_lea.smem %s0, 41
  %s83 = sld [smem:[%s82]]
  %s84 = scalar_lea.smem %s0, 42
  %s85 = sld [smem:[%s84]]
  %s86 = scalar_lea.smem %s0, 43
  %s87 = sld [smem:[%s86]]
  %s88 = scalar_lea.smem %s0, 44
  %s89 = sld [smem:[%s88]]
  %s90 = scalar_lea.smem %s0, 45
  %s91 = sld [smem:[%s90]]
  %s92 = scalar_lea.smem %s0, 46
  %s93 = sld [smem:[%s92]]
  %s94 = scalar_lea.smem %s0, 47
  %s95 = sld [smem:[%s94]]
  %s96 = scalar_lea.smem %s0, 48
  %s97 = sld [smem:[%s96]]
  %s98 = scalar_lea.smem %s0, 49
  %s99 = sld [smem:[%s98]]
  %s100 = scalar_lea.smem %s0, 50
  %s101 = sld [smem:[%s100]]
  %s102 = scalar_lea.smem %s0, 51
  %s103 = sld [smem:[%s102]]
  %s104 = scalar_lea.smem %s0, 52
  %s105 = sld [smem:[%s104]]
  %s106 = scalar_lea.smem %s0, 53
  %s107 = sld [smem:[%s106]]
  %s108 = scalar_lea.smem %s0, 54
  %s109 = sld [smem:[%s108]]
  %s110 = scalar_lea.smem %s0, 55
  %s111 = sld [smem:[%s110]]
  %s112 = scalar_lea.smem %s0, 56
  %s113 = sld [smem:[%s112]]
  %s114 = scalar_lea.smem %s0, 57
  %s115 = sld [smem:[%s114]]
  %s116 = scalar_lea.smem %s0, 58
  %s117 = sld [smem:[%s116]]
  %s118 = scalar_lea.smem %s0, 59
  %s119 = sld [smem:[%s118]]
  %s120 = scalar_lea.smem %s0, 60
  %s121 = sld [smem:[%s120]]
  %s122 = scalar_lea.smem %s0, 61
  %s123 = sld [smem:[%s122]]
  %s124 = scalar_lea.smem %s0, 62
  %s125 = sld [smem:[%s124]]
  %s126 = scalar_lea.smem %s0, 63
  %s127 = sld [smem:[%s126]]
  %s128 = scalar_lea.smem %s0, 64
  %s129 = sld [smem:[%s128]]
  %s130 = scalar_lea.smem %s0, 65
  %s131 = sld [smem:[%s130]]
  %s132 = scalar_lea.smem %s0, 66
  %s133 = sld [smem:[%s132]]
  %s134 = scalar_lea.smem %s0, 67
  %s135 = sld [smem:[%s134]]
  %s136 = scalar_lea.smem %s0, 68
  %s137 = sld [smem:[%s136]]
  %s138 = scalar_lea.smem %s0, 69
  %s139 = sld [smem:[%s138]]
  %s140 = scalar_lea.smem %s0, 70
  %s141 = sld [smem:[%s140]]
  %s142 = sld [smem:[#allocation0]]
  $region522: #{_lambda_.1} parent=0
    _
  %s144 = ssub.s32 1, %s142
  %s145 = scalar_select 0, %s144, %s142
  $region1: #{_lambda_.1} parent=0
    #allocation2 [shape = 'u8[1536]{0}', space=vmem, size = 0x800, scoped, tag = 'input window, operand 7, single buffered']
    #allocation3 [shape = 's32[1]{0}', space=sflag, size = 0x4, scoped, tag = 'scoped memory for _lambda_.1']
    #allocation4 [shape = 'u8[512]{0}', space=vmem, size = 0x400, scoped, tag = 'input window, operand 9, single buffered']
    #allocation5 [shape = 's32[1]{0}', space=sflag, size = 0x4, scoped, tag = 'scoped memory for _lambda_.1']
    #allocation6 [shape = 'u8[512]{0}', space=vmem, size = 0x400, scoped, tag = 'input window, operand 10, single buffered']
    #allocation7 [shape = 'u8[512]{0}', space=vmem, size = 0x400, scoped, tag = 'input window, operand 11, single buffered']
    #allocation8 [shape = 's32[1]{0}', space=sflag, size = 0x4, scoped, tag = 'scoped memory for _lambda_.1']
    #allocation9 [shape = 'u8[512]{0}', space=vmem, size = 0x400, scoped, tag = 'input window, operand 12, single buffered']
    #allocation10 [shape = 'u8[512]{0}', space=vmem, size = 0x400, scoped, tag = 'input window, operand 13, single buffered']
    #allocation11 [shape = 's32[1]{0}', space=sflag, size = 0x4, scoped, tag = 'scoped memory for _lambda_.1']
    #allocation12 [shape = 'u8[65536]{0}', space=vmem, size = 0x10000, scoped, tag = 'input window, operand 14, single buffered']
    #allocation13 [shape = 'u8[1024]{0}', space=vmem, size = 0x400, scoped, tag = 'input window, operand 15, single buffered']
    #allocation14 [shape = 's32[1]{0}', space=sflag, size = 0x4, scoped, tag = 'scoped memory for _lambda_.1']
    #allocation15 [shape = 'u8[65536]{0}', space=vmem, size = 0x10000, scoped, tag = 'input window, operand 16, single buffered']
    #allocation16 [shape = 'u8[512]{0}', space=vmem, size = 0x400, scoped, tag = 'input window, operand 17, single buffered']
    #allocation17 [shape = 's32[1]{0}', space=sflag, size = 0x4, scoped, tag = 'scoped memory for _lambda_.1']
    #allocation18 [shape = 'u8[1536]{0}', space=vmem, size = 0x800, scoped, tag = 'input window, operand 19, single buffered']
    #allocation19 [shape = 'u8[32768]{0}', space=vmem, size = 0x8000, scoped, tag = 'input window, operand 20, single buffered']
    #allocation20 [shape = 's32[1]{0}', space=sflag, size = 0x4, scoped, tag = 'scoped memory for _lambda_.1']
    #allocation21 [shape = 'u8[512]{0}', space=vmem, size = 0x400, scoped, tag = 'input window, operand 21, single buffered']
    #allocation22 [shape = 'u8[512]{0}', space=vmem, size = 0x400, scoped, tag = 'input window, operand 22, single buffered']
    #allocation23 [shape = 's32[1]{0}', space=sflag, size = 0x4, scoped, tag = 'scoped memory for _lambda_.1']
    #allocation24 [shape = 'u8[512]{0}', space=vmem, size = 0x400, scoped, tag = 'input window, operand 23, single buffered']
    #allocation25 [shape = 'u8[512]{0}', space=vmem, size = 0x400, scoped, tag = 'input window, operand 24, single buffered']
    #allocation26 [shape = 's32[1]{0}', space=sflag, size = 0x4, scoped, tag = 'scoped memory for _lambda_.1']
    #allocation27 [shape = 'u8[512]{0}', space=vmem, size = 0x400, scoped, tag = 'input window, operand 25, single buffered']
    #allocation28 [shape = 'u8[65536]{0}', space=vmem, size = 0x10000, scoped, tag = 'input window, operand 26, single buffered']
    #allocation29 [shape = 's32[1]{0}', space=sflag, size = 0x4, scoped, tag = 'scoped memory for _lambda_.1']
    #allocation30 [shape = 'u8[1024]{0}', space=vmem, size = 0x400, scoped, tag = 'input window, operand 27, single buffered']
    #allocation31 [shape = 'u8[65536]{0}', space=vmem, size = 0x10000, scoped, tag = 'input window, operand 28, single buffered']
    #allocation32 [shape = 's32[1]{0}', space=sflag, size = 0x4, scoped, tag = 'scoped memory for _lambda_.1']
    #allocation33 [shape = 'u8[512]{0}', space=vmem, size = 0x400, scoped, tag = 'input window, operand 29, single buffered']
    #allocation34 [shape = 'u8[1536]{0}', space=vmem, size = 0x800, scoped, tag = 'input window, operand 31, single buffered']
    #allocation35 [shape = 's32[1]{0}', space=sflag, size = 0x4, scoped, tag = 'scoped memory for _lambda_.1']
    #allocation36 [shape = 'u8[32768]{0}', space=vmem, size = 0x8000, scoped, tag = 'input window, operand 32, single buffered']
    #allocation37 [shape = 'u8[512]{0}', space=vmem, size = 0x400, scoped, tag = 'input window, operand 33, single buffered']
    #allocation38 [shape = 's32[1]{0}', space=sflag, size = 0x4, scoped, tag = 'scoped memory for _lambda_.1']
    #allocation39 [shape = 'u8[32768]{0}', space=vmem, size = 0x8000, scoped, tag = 'input window, operand 34, single buffered']
    #allocation40 [shape = 'u8[512]{0}', space=vmem, size = 0x400, scoped, tag = 'input window, operand 35, single buffered']
    #allocation41 [shape = 's32[1]{0}', space=sflag, size = 0x4, scoped, tag = 'scoped memory for _lambda_.1']
    #allocation42 [shape = 'u8[65536]{0}', space=vmem, size = 0x10000, scoped, tag = 'input window, operand 36, single buffered']
    #allocation43 [shape = 'u8[1024]{0}', space=vmem, size = 0x400, scoped, tag = 'input window, operand 37, single buffered']
    #allocation44 [shape = 's32[1]{0}', space=sflag, size = 0x4, scoped, tag = 'scoped memory for _lambda_.1']
    #allocation45 [shape = 'u8[32768]{0}', space=vmem, size = 0x8000, scoped, tag = 'input window, operand 38, single buffered']
    #allocation46 [shape = 'u8[512]{0}', space=vmem, size = 0x400, scoped, tag = 'input window, operand 39, single buffered']
    #allocation47 [shape = 's32[1]{0}', space=sflag, size = 0x4, scoped, tag = 'scoped memory for _lambda_.1']
    #allocation48 [shape = 'u8[512]{0}', space=vmem, size = 0x400, scoped, tag = 'input window, operand 40, single buffered']
    #allocation49 [shape = 'u8[512]{0}', space=vmem, size = 0x400, scoped, tag = 'input window, operand 41, single buffered']
    #allocation50 [shape = 's32[1]{0}', space=sflag, size = 0x4, scoped, tag = 'scoped memory for _lambda_.1']
    #allocation51 [shape = 'u8[512]{0}', space=vmem, size = 0x400, scoped, tag = 'input window, operand 42, single buffered']
    #allocation52 [shape = 'u8[512]{0}', space=vmem, size = 0x400, scoped, tag = 'input window, operand 43, single buffered']
    #allocation53 [shape = 's32[1]{0}', space=sflag, size = 0x4, scoped, tag = 'scoped memory for _lambda_.1']
    #allocation54 [shape = 'u8[512]{0}', space=vmem, size = 0x400, scoped, tag = 'input window, operand 44, single buffered']
    #allocation55 [shape = 'u8[512]{0}', space=vmem, size = 0x400, scoped, tag = 'input window, operand 45, single buffered']
    #allocation56 [shape = 's32[1]{0}', space=sflag, size = 0x4, scoped, tag = 'scoped memory for _lambda_.1']
    #allocation57 [shape = 'u8[65536]{0}', space=vmem, size = 0x10000, scoped, tag = 'input window, operand 46, single buffered']
    #allocation58 [shape = 'u8[1024]{0}', space=vmem, size = 0x400, scoped, tag = 'input window, operand 47, single buffered']
    #allocation59 [shape = 's32[1]{0}', space=sflag, size = 0x4, scoped, tag = 'scoped memory for _lambda_.1']
    #allocation60 [shape = 'u8[65536]{0}', space=vmem, size = 0x10000, scoped, tag = 'input window, operand 48, single buffered']
    #allocation61 [shape = 'u8[512]{0}', space=vmem, size = 0x400, scoped, tag = 'input window, operand 49, single buffered']
    #allocation62 [shape = 's32[1]{0}', space=sflag, size = 0x4, scoped, tag = 'scoped memory for _lambda_.1']
    #allocation63 [shape = 'u8[32768]{0}', space=vmem, size = 0x8000, scoped, tag = 'input window, operand 52, single buffered']
    #allocation64 [shape = 'u8[512]{0}', space=vmem, size = 0x400, scoped, tag = 'input window, operand 53, single buffered']
    #allocation65 [shape = 's32[1]{0}', space=sflag, size = 0x4, scoped, tag = 'scoped memory for _lambda_.1']
    #allocation66 [shape = 'u8[32768]{0}', space=vmem, size = 0x8000, scoped, tag = 'input window, operand 54, single buffered']
    #allocation67 [shape = 'u8[512]{0}', space=vmem, size = 0x400, scoped, tag = 'input window, operand 55, single buffered']
    #allocation68 [shape = 's32[1]{0}', space=sflag, size = 0x4, scoped, tag = 'scoped memory for _lambda_.1']
    #allocation69 [shape = 'u8[65536]{0}', space=vmem, size = 0x10000, scoped, tag = 'input window, operand 56, single buffered']
    #allocation70 [shape = 'u8[1024]{0}', space=vmem, size = 0x400, scoped, tag = 'input window, operand 57, single buffered']
    #allocation71 [shape = 's32[1]{0}', space=sflag, size = 0x4, scoped, tag = 'scoped memory for _lambda_.1']
    #allocation72 [shape = 'u8[32768]{0}', space=vmem, size = 0x8000, scoped, tag = 'input window, operand 58, single buffered']
    #allocation73 [shape = 'u8[512]{0}', space=vmem, size = 0x400, scoped, tag = 'input window, operand 59, single buffered']
    #allocation74 [shape = 's32[1]{0}', space=sflag, size = 0x4, scoped, tag = 'scoped memory for _lambda_.1']
    #allocation75 [shape = 'u8[512]{0}', space=vmem, size = 0x400, scoped, tag = 'input window, operand 60, single buffered']
    #allocation76 [shape = 'u8[512]{0}', space=vmem, size = 0x400, scoped, tag = 'input window, operand 61, single buffered']
    #allocation77 [shape = 's32[1]{0}', space=sflag, size = 0x4, scoped, tag = 'scoped memory for _lambda_.1']
    #allocation78 [shape = 'u8[512]{0}', space=vmem, size = 0x400, scoped, tag = 'input window, operand 62, single buffered']
    #allocation79 [shape = 'u8[512]{0}', space=vmem, size = 0x400, scoped, tag = 'input window, operand 63, single buffered']
    #allocation80 [shape = 's32[1]{0}', space=sflag, size = 0x4, scoped, tag = 'scoped memory for _lambda_.1']
    #allocation81 [shape = 'u8[512]{0}', space=vmem, size = 0x400, scoped, tag = 'input window, operand 64, single buffered']
    #allocation82 [shape = 'u8[512]{0}', space=vmem, size = 0x400, scoped, tag = 'input window, operand 65, single buffered']
    #allocation83 [shape = 's32[1]{0}', space=sflag, size = 0x4, scoped, tag = 'scoped memory for _lambda_.1']
    #allocation84 [shape = 'u8[65536]{0}', space=vmem, size = 0x10000, scoped, tag = 'input window, operand 66, single buffered']
    #allocation85 [shape = 'u8[1024]{0}', space=vmem, size = 0x400, scoped, tag = 'input window, operand 67, single buffered']
    #allocation86 [shape = 's32[1]{0}', space=sflag, size = 0x4, scoped, tag = 'scoped memory for _lambda_.1']
    #allocation87 [shape = 'u8[65536]{0}', space=vmem, size = 0x10000, scoped, tag = 'input window, operand 68, single buffered']
    #allocation88 [shape = 'u8[512]{0}', space=vmem, size = 0x400, scoped, tag = 'input window, operand 69, single buffered']
    #allocation89 [shape = 's32[1]{0}', space=sflag, size = 0x4, scoped, tag = 'scoped memory for _lambda_.1']
    %146 = vsyncpa [#allocation3], 0
    %147 = vsyncpa [#allocation5], 0
    %148 = vsyncpa [#allocation8], 0
    %149 = vsyncpa [#allocation11], 0
    %150 = vsyncpa [#allocation14], 0
    %151 = vsyncpa [#allocation17], 0
    %152 = vsyncpa [#allocation20], 0
    %153 = vsyncpa [#allocation23], 0
    %154 = vsyncpa [#allocation26], 0
    %155 = vsyncpa [#allocation29], 0
    %156 = vsyncpa [#allocation32], 0
    %157 = vsyncpa [#allocation35], 0
    %158 = vsyncpa [#allocation38], 0
    %159 = vsyncpa [#allocation41], 0
    %160 = vsyncpa [#allocation44], 0
    %161 = vsyncpa [#allocation47], 0
    %162 = vsyncpa [#allocation50], 0
    %163 = vsyncpa [#allocation53], 0
    %164 = vsyncpa [#allocation56], 0
    %165 = vsyncpa [#allocation59], 0
    %166 = vsyncpa [#allocation62], 0
    %167 = vsyncpa [#allocation65], 0
    %168 = vsyncpa [#allocation68], 0
    %169 = vsyncpa [#allocation71], 0
    %170 = vsyncpa [#allocation74], 0
    %171 = vsyncpa [#allocation77], 0
    %172 = vsyncpa [#allocation80], 0
    %173 = vsyncpa [#allocation83], 0
    %174 = vsyncpa [#allocation86], 0
    %175 = vsyncpa [#allocation89], 0
    // Predicated region
    $region2: #{_lambda_.1} parent=1 // pred_check
      _
    $region3: #{_lambda_.1} parent=1 // pred_check_branch
      %177 = sbr.rel (0) target = $region5
    $region4: #{_lambda_.1} parent=1 // pred_region
      _
    $region5: #{_lambda_.1} parent=1 // pred_fallthru
      _
    // Predicated region
    $region6: #{_lambda_.1} parent=1 // pred_check
      _
    $region7: #{_lambda_.1} parent=1 // pred_check_branch
      %179 = sbr.rel (0) target = $region9
    $region8: #{_lambda_.1} parent=1 // pred_region
      _
    $region9: #{_lambda_.1} parent=1 // pred_fallthru
      _
    // Predicated region
    $region10: #{_lambda_.1} parent=1 // pred_check
      _
    $region11: #{_lambda_.1} parent=1 // pred_check_branch
      %181 = sbr.rel (0) target = $region13
    $region12: #{_lambda_.1} parent=1 // pred_region
      _
    $region13: #{_lambda_.1} parent=1 // pred_fallthru
      _
    // Predicated region
    $region14: #{_lambda_.1} parent=1 // pred_check
      _
    $region15: #{_lambda_.1} parent=1 // pred_check_branch
      %183 = sbr.rel (0) target = $region17
    $region16: #{_lambda_.1} parent=1 // pred_region
      _
    $region17: #{_lambda_.1} parent=1 // pred_fallthru
      _
    // Predicated region
    $region18: #{_lambda_.1} parent=1 // pred_check
      _
    $region19: #{_lambda_.1} parent=1 // pred_check_branch
      %185 = sbr.rel (0) target = $region21
    $region20: #{_lambda_.1} parent=1 // pred_region
      _
    $region21: #{_lambda_.1} parent=1 // pred_fallthru
      _
    // Predicated region
    $region22: #{_lambda_.1} parent=1 // pred_check
      _
    $region23: #{_lambda_.1} parent=1 // pred_check_branch
      %187 = sbr.rel (0) target = $region25
    $region24: #{_lambda_.1} parent=1 // pred_region
      _
    $region25: #{_lambda_.1} parent=1 // pred_fallthru
      _
    // Predicated region
    $region26: #{_lambda_.1} parent=1 // pred_check
      _
    $region27: #{_lambda_.1} parent=1 // pred_check_branch
      %189 = sbr.rel (0) target = $region29
    $region28: #{_lambda_.1} parent=1 // pred_region
      _
    $region29: #{_lambda_.1} parent=1 // pred_fallthru
      _
    // Predicated region
    $region30: #{_lambda_.1} parent=1 // pred_check
      _
    $region31: #{_lambda_.1} parent=1 // pred_check_branch
      %191 = sbr.rel (0) target = $region33
    $region32: #{_lambda_.1} parent=1 // pred_region
      %s193 = ssub.s32 48, 48
      %194 = vsyncadd [#allocation3], %s193
      %s196 = sshll.u32 [#allocation2], 4
      %s197 = int_to_ptr.vmem [resolvable:$true] %s196
      %199 = dma.hbm_to_vmem [thread:$0]  %s15, 48, %s197, [#allocation3]
    $region33: #{_lambda_.1} parent=1 // pred_fallthru
      _
    // Predicated region
    $region34: #{_lambda_.1} parent=1 // pred_check
      _
    $region35: #{_lambda_.1} parent=1 // pred_check_branch
      %201 = sbr.rel (0) target = $region37
    $region36: #{_lambda_.1} parent=1 // pred_region
      _
    $region37: #{_lambda_.1} parent=1 // pred_fallthru
      _
    // Predicated region
    $region38: #{_lambda_.1} parent=1 // pred_check
      _
    $region39: #{_lambda_.1} parent=1 // pred_check_branch
      %203 = sbr.rel (0) target = $region41
    $region40: #{_lambda_.1} parent=1 // pred_region
      %s205 = ssub.s32 16, 16
      %206 = vsyncadd [#allocation5], %s205
      %s208 = sshll.u32 [#allocation4], 4
      %s209 = int_to_ptr.vmem [resolvable:$true] %s208
      %211 = dma.hbm_to_vmem [thread:$0]  %s19, 16, %s209, [#allocation5]
    $region41: #{_lambda_.1} parent=1 // pred_fallthru
      _
    // Predicated region
    $region42: #{_lambda_.1} parent=1 // pred_check
      _
    $region43: #{_lambda_.1} parent=1 // pred_check_branch
      %213 = sbr.rel (0) target = $region45
    $region44: #{_lambda_.1} parent=1 // pred_region
      %s215 = ssub.s32 16, 16
      %216 = vsyncadd [#allocation5], %s215
      %s218 = sshll.u32 [#allocation6], 4
      %s219 = int_to_ptr.vmem [resolvable:$true] %s218
      %221 = dma.hbm_to_vmem [thread:$0]  %s21, 16, %s219, [#allocation5]
    $region45: #{_lambda_.1} parent=1 // pred_fallthru
      _
    // Predicated region
    $region46: #{_lambda_.1} parent=1 // pred_check
      _
    $region47: #{_lambda_.1} parent=1 // pred_check_branch
      %223 = sbr.rel (0) target = $region49
    $region48: #{_lambda_.1} parent=1 // pred_region
      %s225 = ssub.s32 16, 16
      %226 = vsyncadd [#allocation8], %s225
      %s228 = sshll.u32 [#allocation7], 4
      %s229 = int_to_ptr.vmem [resolvable:$true] %s228
      %231 = dma.hbm_to_vmem [thread:$0]  %s23, 16, %s229, [#allocation8]
    $region49: #{_lambda_.1} parent=1 // pred_fallthru
      _
    // Predicated region
    $region50: #{_lambda_.1} parent=1 // pred_check
      _
    $region51: #{_lambda_.1} parent=1 // pred_check_branch
      %233 = sbr.rel (0) target = $region53
    $region52: #{_lambda_.1} parent=1 // pred_region
      %s235 = ssub.s32 16, 16
      %236 = vsyncadd [#allocation8], %s235
      %s238 = sshll.u32 [#allocation9], 4
      %s239 = int_to_ptr.vmem [resolvable:$true] %s238
      %241 = dma.hbm_to_vmem [thread:$0]  %s25, 16, %s239, [#allocation8]
    $region53: #{_lambda_.1} parent=1 // pred_fallthru
      _
    // Predicated region
    $region54: #{_lambda_.1} parent=1 // pred_check
      _
    $region55: #{_lambda_.1} parent=1 // pred_check_branch
      %243 = sbr.rel (0) target = $region57
    $region56: #{_lambda_.1} parent=1 // pred_region
      %s245 = ssub.s32 16, 16
      %246 = vsyncadd [#allocation11], %s245
      %s248 = sshll.u32 [#allocation10], 4
      %s249 = int_to_ptr.vmem [resolvable:$true] %s248
      %251 = dma.hbm_to_vmem [thread:$0]  %s27, 16, %s249, [#allocation11]
    $region57: #{_lambda_.1} parent=1 // pred_fallthru
      _
    // Predicated region
    $region58: #{_lambda_.1} parent=1 // pred_check
      _
    $region59: #{_lambda_.1} parent=1 // pred_check_branch
      %253 = sbr.rel (0) target = $region61
    $region60: #{_lambda_.1} parent=1 // pred_region
      %s255 = ssub.s32 2048, 2048
      %256 = vsyncadd [#allocation11], %s255
      %s257 = sshll.u32 [#allocation12], 4
      %s258 = int_to_ptr.vmem [resolvable:$true] %s257
      %263 = dma.hbm_to_vmem [thread:$0]  %s29, 2048, %s258, [#allocation11], 128, 128, 8
    $region61: #{_lambda_.1} parent=1 // pred_fallthru
      _
    // Predicated region
    $region62: #{_lambda_.1} parent=1 // pred_check
      _
    $region63: #{_lambda_.1} parent=1 // pred_check_branch
      %265 = sbr.rel (0) target = $region65
    $region64: #{_lambda_.1} parent=1 // pred_region
      %s267 = ssub.s32 32, 32
      %268 = vsyncadd [#allocation14], %s267
      %s270 = sshll.u32 [#allocation13], 4
      %s271 = int_to_ptr.vmem [resolvable:$true] %s270
      %273 = dma.hbm_to_vmem [thread:$0]  %s31, 32, %s271, [#allocation14]
    $region65: #{_lambda_.1} parent=1 // pred_fallthru
      _
    // Predicated region
    $region66: #{_lambda_.1} parent=1 // pred_check
      _
    $region67: #{_lambda_.1} parent=1 // pred_check_branch
      %275 = sbr.rel (0) target = $region69
    $region68: #{_lambda_.1} parent=1 // pred_region
      %s277 = ssub.s32 2048, 2048
      %278 = vsyncadd [#allocation14], %s277
      %s279 = sshll.u32 [#allocation15], 4
      %s280 = int_to_ptr.vmem [resolvable:$true] %s279
      %285 = dma.hbm_to_vmem [thread:$0]  %s33, 2048, %s280, [#allocation14], 64, 64, 4
    $region69: #{_lambda_.1} parent=1 // pred_fallthru
      _
    // Predicated region
    $region70: #{_lambda_.1} parent=1 // pred_check
      _
    $region71: #{_lambda_.1} parent=1 // pred_check_branch
      %287 = sbr.rel (0) target = $region73
    $region72: #{_lambda_.1} parent=1 // pred_region
      %s289 = ssub.s32 16, 16
      %290 = vsyncadd [#allocation17], %s289
      %s292 = sshll.u32 [#allocation16], 4
      %s293 = int_to_ptr.vmem [resolvable:$true] %s292
      %295 = dma.hbm_to_vmem [thread:$0]  %s35, 16, %s293, [#allocation17]
    $region73: #{_lambda_.1} parent=1 // pred_fallthru
      _
    // Predicated region
    $region74: #{_lambda_.1} parent=1 // pred_check
      _
    $region75: #{_lambda_.1} parent=1 // pred_check_branch
      %297 = sbr.rel (0) target = $region77
    $region76: #{_lambda_.1} parent=1 // pred_region
      _
    $region77: #{_lambda_.1} parent=1 // pred_fallthru
      _
    // Predicated region
    $region78: #{_lambda_.1} parent=1 // pred_check
      _
    $region79: #{_lambda_.1} parent=1 // pred_check_branch
      %299 = sbr.rel (0) target = $region81
    $region80: #{_lambda_.1} parent=1 // pred_region
      %s301 = ssub.s32 48, 48
      %302 = vsyncadd [#allocation17], %s301
      %s304 = sshll.u32 [#allocation18], 4
      %s305 = int_to_ptr.vmem [resolvable:$true] %s304
      %307 = dma.hbm_to_vmem [thread:$0]  %s39, 48, %s305, [#allocation17]
    $region81: #{_lambda_.1} parent=1 // pred_fallthru
      _
    // Predicated region
    $region82: #{_lambda_.1} parent=1 // pred_check
      _
    $region83: #{_lambda_.1} parent=1 // pred_check_branch
      %309 = sbr.rel (0) target = $region85
    $region84: #{_lambda_.1} parent=1 // pred_region
      %s311 = ssub.s32 1024, 1024
      %312 = vsyncadd [#allocation20], %s311
      %s313 = sshll.u32 [#allocation19], 4
      %s314 = int_to_ptr.vmem [resolvable:$true] %s313
      %319 = dma.hbm_to_vmem [thread:$0]  %s41, 1024, %s314, [#allocation20], 64, 64, 4
    $region85: #{_lambda_.1} parent=1 // pred_fallthru
      _
    // Predicated region
    $region86: #{_lambda_.1} parent=1 // pred_check
      _
    $region87: #{_lambda_.1} parent=1 // pred_check_branch
      %321 = sbr.rel (0) target = $region89
    $region88: #{_lambda_.1} parent=1 // pred_region
      %s323 = ssub.s32 16, 16
      %324 = vsyncadd [#allocation20], %s323
      %s326 = sshll.u32 [#allocation21], 4
      %s327 = int_to_ptr.vmem [resolvable:$true] %s326
      %329 = dma.hbm_to_vmem [thread:$0]  %s43, 16, %s327, [#allocation20]
    $region89: #{_lambda_.1} parent=1 // pred_fallthru
      _
    // Predicated region
    $region90: #{_lambda_.1} parent=1 // pred_check
      _
    $region91: #{_lambda_.1} parent=1 // pred_check_branch
      %331 = sbr.rel (0) target = $region93
    $region92: #{_lambda_.1} parent=1 // pred_region
      %s333 = ssub.s32 16, 16
      %334 = vsyncadd [#allocation23], %s333
      %s336 = sshll.u32 [#allocation22], 4
      %s337 = int_to_ptr.vmem [resolvable:$true] %s336
      %339 = dma.hbm_to_vmem [thread:$0]  %s45, 16, %s337, [#allocation23]
    $region93: #{_lambda_.1} parent=1 // pred_fallthru
      _
    // Predicated region
    $region94: #{_lambda_.1} parent=1 // pred_check
      _
    $region95: #{_lambda_.1} parent=1 // pred_check_branch
      %341 = sbr.rel (0) target = $region97
    $region96: #{_lambda_.1} parent=1 // pred_region
      %s343 = ssub.s32 16, 16
      %344 = vsyncadd [#allocation23], %s343
      %s346 = sshll.u32 [#allocation24], 4
      %s347 = int_to_ptr.vmem [resolvable:$true] %s346
      %349 = dma.hbm_to_vmem [thread:$0]  %s47, 16, %s347, [#allocation23]
    $region97: #{_lambda_.1} parent=1 // pred_fallthru
      _
    // Predicated region
    $region98: #{_lambda_.1} parent=1 // pred_check
      _
    $region99: #{_lambda_.1} parent=1 // pred_check_branch
      %351 = sbr.rel (0) target = $region101
    $region100: #{_lambda_.1} parent=1 // pred_region
      %s353 = ssub.s32 16, 16
      %354 = vsyncadd [#allocation26], %s353
      %s356 = sshll.u32 [#allocation25], 4
      %s357 = int_to_ptr.vmem [resolvable:$true] %s356
      %359 = dma.hbm_to_vmem [thread:$0]  %s49, 16, %s357, [#allocation26]
    $region101: #{_lambda_.1} parent=1 // pred_fallthru
      _
    // Predicated region
    $region102: #{_lambda_.1} parent=1 // pred_check
      _
    $region103: #{_lambda_.1} parent=1 // pred_check_branch
      %361 = sbr.rel (0) target = $region105
    $region104: #{_lambda_.1} parent=1 // pred_region
      %s363 = ssub.s32 16, 16
      %364 = vsyncadd [#allocation26], %s363
      %s366 = sshll.u32 [#allocation27], 4
      %s367 = int_to_ptr.vmem [resolvable:$true] %s366
      %369 = dma.hbm_to_vmem [thread:$0]  %s51, 16, %s367, [#allocation26]
    $region105: #{_lambda_.1} parent=1 // pred_fallthru
      _
    // Predicated region
    $region106: #{_lambda_.1} parent=1 // pred_check
      _
    $region107: #{_lambda_.1} parent=1 // pred_check_branch
      %371 = sbr.rel (0) target = $region109
    $region108: #{_lambda_.1} parent=1 // pred_region
      %s373 = ssub.s32 2048, 2048
      %374 = vsyncadd [#allocation29], %s373
      %s375 = sshll.u32 [#allocation28], 4
      %s376 = int_to_ptr.vmem [resolvable:$true] %s375
      %381 = dma.hbm_to_vmem [thread:$0]  %s53, 2048, %s376, [#allocation29], 128, 128, 8
    $region109: #{_lambda_.1} parent=1 // pred_fallthru
      _
    // Predicated region
    $region110: #{_lambda_.1} parent=1 // pred_check
      _
    $region111: #{_lambda_.1} parent=1 // pred_check_branch
      %383 = sbr.rel (0) target = $region113
    $region112: #{_lambda_.1} parent=1 // pred_region
      %s385 = ssub.s32 32, 32
      %386 = vsyncadd [#allocation29], %s385
      %s388 = sshll.u32 [#allocation30], 4
      %s389 = int_to_ptr.vmem [resolvable:$true] %s388
      %391 = dma.hbm_to_vmem [thread:$0]  %s55, 32, %s389, [#allocation29]
    $region113: #{_lambda_.1} parent=1 // pred_fallthru
      _
    // Predicated region
    $region114: #{_lambda_.1} parent=1 // pred_check
      _
    $region115: #{_lambda_.1} parent=1 // pred_check_branch
      %393 = sbr.rel (0) target = $region117
    $region116: #{_lambda_.1} parent=1 // pred_region
      %s395 = ssub.s32 2048, 2048
      %396 = vsyncadd [#allocation32], %s395
      %s397 = sshll.u32 [#allocation31], 4
      %s398 = int_to_ptr.vmem [resolvable:$true] %s397
      %403 = dma.hbm_to_vmem [thread:$0]  %s57, 2048, %s398, [#allocation32], 64, 64, 4
    $region117: #{_lambda_.1} parent=1 // pred_fallthru
      _
    // Predicated region
    $region118: #{_lambda_.1} parent=1 // pred_check
      _
    $region119: #{_lambda_.1} parent=1 // pred_check_branch
      %405 = sbr.rel (0) target = $region121
    $region120: #{_lambda_.1} parent=1 // pred_region
      %s407 = ssub.s32 16, 16
      %408 = vsyncadd [#allocation32], %s407
      %s410 = sshll.u32 [#allocation33], 4
      %s411 = int_to_ptr.vmem [resolvable:$true] %s410
      %413 = dma.hbm_to_vmem [thread:$0]  %s59, 16, %s411, [#allocation32]
    $region121: #{_lambda_.1} parent=1 // pred_fallthru
      _
    // Predicated region
    $region122: #{_lambda_.1} parent=1 // pred_check
      _
    $region123: #{_lambda_.1} parent=1 // pred_check_branch
      %415 = sbr.rel (0) target = $region125
    $region124: #{_lambda_.1} parent=1 // pred_region
      _
    $region125: #{_lambda_.1} parent=1 // pred_fallthru
      _
    // Predicated region
    $region126: #{_lambda_.1} parent=1 // pred_check
      _
    $region127: #{_lambda_.1} parent=1 // pred_check_branch
      %417 = sbr.rel (0) target = $region129
    $region128: #{_lambda_.1} parent=1 // pred_region
      %s419 = ssub.s32 48, 48
      %420 = vsyncadd [#allocation35], %s419
      %s422 = sshll.u32 [#allocation34], 4
      %s423 = int_to_ptr.vmem [resolvable:$true] %s422
      %425 = dma.hbm_to_vmem [thread:$0]  %s63, 48, %s423, [#allocation35]
    $region129: #{_lambda_.1} parent=1 // pred_fallthru
      _
    // Predicated region
    $region130: #{_lambda_.1} parent=1 // pred_check
      _
    $region131: #{_lambda_.1} parent=1 // pred_check_branch
      %427 = sbr.rel (0) target = $region133
    $region132: #{_lambda_.1} parent=1 // pred_region
      %s429 = ssub.s32 1024, 1024
      %430 = vsyncadd [#allocation35], %s429
      %s431 = sshll.u32 [#allocation36], 4
      %s432 = int_to_ptr.vmem [resolvable:$true] %s431
      %437 = dma.hbm_to_vmem [thread:$0]  %s65, 1024, %s432, [#allocation35], 64, 64, 4
    $region133: #{_lambda_.1} parent=1 // pred_fallthru
      _
    // Predicated region
    $region134: #{_lambda_.1} parent=1 // pred_check
      _
    $region135: #{_lambda_.1} parent=1 // pred_check_branch
      %439 = sbr.rel (0) target = $region137
    $region136: #{_lambda_.1} parent=1 // pred_region
      %s441 = ssub.s32 16, 16
      %442 = vsyncadd [#allocation38], %s441
      %s444 = sshll.u32 [#allocation37], 4
      %s445 = int_to_ptr.vmem [resolvable:$true] %s444
      %447 = dma.hbm_to_vmem [thread:$0]  %s67, 16, %s445, [#allocation38]
    $region137: #{_lambda_.1} parent=1 // pred_fallthru
      _
    // Predicated region
    $region138: #{_lambda_.1} parent=1 // pred_check
      _
    $region139: #{_lambda_.1} parent=1 // pred_check_branch
      %449 = sbr.rel (0) target = $region141
    $region140: #{_lambda_.1} parent=1 // pred_region
      %s451 = ssub.s32 1024, 1024
      %452 = vsyncadd [#allocation38], %s451
      %s453 = sshll.u32 [#allocation39], 4
      %s454 = int_to_ptr.vmem [resolvable:$true] %s453
      %459 = dma.hbm_to_vmem [thread:$0]  %s69, 1024, %s454, [#allocation38], 64, 64, 4
    $region141: #{_lambda_.1} parent=1 // pred_fallthru
      _
    // Predicated region
    $region142: #{_lambda_.1} parent=1 // pred_check
      _
    $region143: #{_lambda_.1} parent=1 // pred_check_branch
      %461 = sbr.rel (0) target = $region145
    $region144: #{_lambda_.1} parent=1 // pred_region
      %s463 = ssub.s32 16, 16
      %464 = vsyncadd [#allocation41], %s463
      %s466 = sshll.u32 [#allocation40], 4
      %s467 = int_to_ptr.vmem [resolvable:$true] %s466
      %469 = dma.hbm_to_vmem [thread:$0]  %s71, 16, %s467, [#allocation41]
    $region145: #{_lambda_.1} parent=1 // pred_fallthru
      _
    // Predicated region
    $region146: #{_lambda_.1} parent=1 // pred_check
      _
    $region147: #{_lambda_.1} parent=1 // pred_check_branch
      %471 = sbr.rel (0) target = $region149
    $region148: #{_lambda_.1} parent=1 // pred_region
      %s473 = ssub.s32 2048, 2048
      %474 = vsyncadd [#allocation41], %s473
      %s475 = sshll.u32 [#allocation42], 4
      %s476 = int_to_ptr.vmem [resolvable:$true] %s475
      %481 = dma.hbm_to_vmem [thread:$0]  %s73, 2048, %s476, [#allocation41], 128, 128, 8
    $region149: #{_lambda_.1} parent=1 // pred_fallthru
      _
    // Predicated region
    $region150: #{_lambda_.1} parent=1 // pred_check
      _
    $region151: #{_lambda_.1} parent=1 // pred_check_branch
      %483 = sbr.rel (0) target = $region153
    $region152: #{_lambda_.1} parent=1 // pred_region
      %s485 = ssub.s32 32, 32
      %486 = vsyncadd [#allocation44], %s485
      %s488 = sshll.u32 [#allocation43], 4
      %s489 = int_to_ptr.vmem [resolvable:$true] %s488
      %491 = dma.hbm_to_vmem [thread:$0]  %s75, 32, %s489, [#allocation44]
    $region153: #{_lambda_.1} parent=1 // pred_fallthru
      _
    // Predicated region
    $region154: #{_lambda_.1} parent=1 // pred_check
      _
    $region155: #{_lambda_.1} parent=1 // pred_check_branch
      %493 = sbr.rel (0) target = $region157
    $region156: #{_lambda_.1} parent=1 // pred_region
      %s495 = ssub.s32 1024, 1024
      %496 = vsyncadd [#allocation44], %s495
      %s497 = sshll.u32 [#allocation45], 4
      %s498 = int_to_ptr.vmem [resolvable:$true] %s497
      %503 = dma.hbm_to_vmem [thread:$0]  %s77, 1024, %s498, [#allocation44], 64, 64, 4
    $region157: #{_lambda_.1} parent=1 // pred_fallthru
      _
    // Predicated region
    $region158: #{_lambda_.1} parent=1 // pred_check
      _
    $region159: #{_lambda_.1} parent=1 // pred_check_branch
      %505 = sbr.rel (0) target = $region161
    $region160: #{_lambda_.1} parent=1 // pred_region
      %s507 = ssub.s32 16, 16
      %508 = vsyncadd [#allocation47], %s507
      %s510 = sshll.u32 [#allocation46], 4
      %s511 = int_to_ptr.vmem [resolvable:$true] %s510
      %513 = dma.hbm_to_vmem [thread:$0]  %s79, 16, %s511, [#allocation47]
    $region161: #{_lambda_.1} parent=1 // pred_fallthru
      _
    // Predicated region
    $region162: #{_lambda_.1} parent=1 // pred_check
      _
    $region163: #{_lambda_.1} parent=1 // pred_check_branch
      %515 = sbr.rel (0) target = $region165
    $region164: #{_lambda_.1} parent=1 // pred_region
      %s517 = ssub.s32 16, 16
      %518 = vsyncadd [#allocation47], %s517
      %s520 = sshll.u32 [#allocation48], 4
      %s521 = int_to_ptr.vmem [resolvable:$true] %s520
      %523 = dma.hbm_to_vmem [thread:$0]  %s81, 16, %s521, [#allocation47]
    $region165: #{_lambda_.1} parent=1 // pred_fallthru
      _
    // Predicated region
    $region166: #{_lambda_.1} parent=1 // pred_check
      _
    $region167: #{_lambda_.1} parent=1 // pred_check_branch
      %525 = sbr.rel (0) target = $region169
    $region168: #{_lambda_.1} parent=1 // pred_region
      %s527 = ssub.s32 16, 16
      %528 = vsyncadd [#allocation50], %s527
      %s530 = sshll.u32 [#allocation49], 4
      %s531 = int_to_ptr.vmem [resolvable:$true] %s530
      %533 = dma.hbm_to_vmem [thread:$0]  %s83, 16, %s531, [#allocation50]
    $region169: #{_lambda_.1} parent=1 // pred_fallthru
      _
    // Predicated region
    $region170: #{_lambda_.1} parent=1 // pred_check
      _
    $region171: #{_lambda_.1} parent=1 // pred_check_branch
      %535 = sbr.rel (0) target = $region173
    $region172: #{_lambda_.1} parent=1 // pred_region
      %s537 = ssub.s32 16, 16
      %538 = vsyncadd [#allocation50], %s537
      %s540 = sshll.u32 [#allocation51], 4
      %s541 = int_to_ptr.vmem [resolvable:$true] %s540
      %543 = dma.hbm_to_vmem [thread:$0]  %s85, 16, %s541, [#allocation50]
    $region173: #{_lambda_.1} parent=1 // pred_fallthru
      _
    // Predicated region
    $region174: #{_lambda_.1} parent=1 // pred_check
      _
    $region175: #{_lambda_.1} parent=1 // pred_check_branch
      %545 = sbr.rel (0) target = $region177
    $region176: #{_lambda_.1} parent=1 // pred_region
      %s547 = ssub.s32 16, 16
      %548 = vsyncadd [#allocation53], %s547
      %s550 = sshll.u32 [#allocation52], 4
      %s551 = int_to_ptr.vmem [resolvable:$true] %s550
      %553 = dma.hbm_to_vmem [thread:$0]  %s87, 16, %s551, [#allocation53]
    $region177: #{_lambda_.1} parent=1 // pred_fallthru
      _
    // Predicated region
    $region178: #{_lambda_.1} parent=1 // pred_check
      _
    $region179: #{_lambda_.1} parent=1 // pred_check_branch
      %555 = sbr.rel (0) target = $region181
    $region180: #{_lambda_.1} parent=1 // pred_region
      %s557 = ssub.s32 16, 16
      %558 = vsyncadd [#allocation53], %s557
      %s560 = sshll.u32 [#allocation54], 4
      %s561 = int_to_ptr.vmem [resolvable:$true] %s560
      %563 = dma.hbm_to_vmem [thread:$0]  %s89, 16, %s561, [#allocation53]
    $region181: #{_lambda_.1} parent=1 // pred_fallthru
      _
    // Predicated region
    $region182: #{_lambda_.1} parent=1 // pred_check
      _
    $region183: #{_lambda_.1} parent=1 // pred_check_branch
      %565 = sbr.rel (0) target = $region185
    $region184: #{_lambda_.1} parent=1 // pred_region
      %s567 = ssub.s32 16, 16
      %568 = vsyncadd [#allocation56], %s567
      %s570 = sshll.u32 [#allocation55], 4
      %s571 = int_to_ptr.vmem [resolvable:$true] %s570
      %573 = dma.hbm_to_vmem [thread:$0]  %s91, 16, %s571, [#allocation56]
    $region185: #{_lambda_.1} parent=1 // pred_fallthru
      _
    // Predicated region
    $region186: #{_lambda_.1} parent=1 // pred_check
      _
    $region187: #{_lambda_.1} parent=1 // pred_check_branch
      %575 = sbr.rel (0) target = $region189
    $region188: #{_lambda_.1} parent=1 // pred_region
      %s577 = ssub.s32 2048, 2048
      %578 = vsyncadd [#allocation56], %s577
      %s579 = sshll.u32 [#allocation57], 4
      %s580 = int_to_ptr.vmem [resolvable:$true] %s579
      %585 = dma.hbm_to_vmem [thread:$0]  %s93, 2048, %s580, [#allocation56], 128, 128, 8
    $region189: #{_lambda_.1} parent=1 // pred_fallthru
      _
    // Predicated region
    $region190: #{_lambda_.1} parent=1 // pred_check
      _
    $region191: #{_lambda_.1} parent=1 // pred_check_branch
      %587 = sbr.rel (0) target = $region193
    $region192: #{_lambda_.1} parent=1 // pred_region
      %s589 = ssub.s32 32, 32
      %590 = vsyncadd [#allocation59], %s589
      %s592 = sshll.u32 [#allocation58], 4
      %s593 = int_to_ptr.vmem [resolvable:$true] %s592
      %595 = dma.hbm_to_vmem [thread:$0]  %s95, 32, %s593, [#allocation59]
    $region193: #{_lambda_.1} parent=1 // pred_fallthru
      _
    // Predicated region
    $region194: #{_lambda_.1} parent=1 // pred_check
      _
    $region195: #{_lambda_.1} parent=1 // pred_check_branch
      %597 = sbr.rel (0) target = $region197
    $region196: #{_lambda_.1} parent=1 // pred_region
      %s599 = ssub.s32 2048, 2048
      %600 = vsyncadd [#allocation59], %s599
      %s601 = sshll.u32 [#allocation60], 4
      %s602 = int_to_ptr.vmem [resolvable:$true] %s601
      %607 = dma.hbm_to_vmem [thread:$0]  %s97, 2048, %s602, [#allocation59], 64, 64, 4
    $region197: #{_lambda_.1} parent=1 // pred_fallthru
      _
    // Predicated region
    $region198: #{_lambda_.1} parent=1 // pred_check
      _
    $region199: #{_lambda_.1} parent=1 // pred_check_branch
      %609 = sbr.rel (0) target = $region201
    $region200: #{_lambda_.1} parent=1 // pred_region
      %s611 = ssub.s32 16, 16
      %612 = vsyncadd [#allocation62], %s611
      %s614 = sshll.u32 [#allocation61], 4
      %s615 = int_to_ptr.vmem [resolvable:$true] %s614
      %617 = dma.hbm_to_vmem [thread:$0]  %s99, 16, %s615, [#allocation62]
    $region201: #{_lambda_.1} parent=1 // pred_fallthru
      _
    // Predicated region
    $region202: #{_lambda_.1} parent=1 // pred_check
      _
    $region203: #{_lambda_.1} parent=1 // pred_check_branch
      %619 = sbr.rel (0) target = $region205
    $region204: #{_lambda_.1} parent=1 // pred_region
      _
    $region205: #{_lambda_.1} parent=1 // pred_fallthru
      _
    // Predicated region
    $region206: #{_lambda_.1} parent=1 // pred_check
      _
    $region207: #{_lambda_.1} parent=1 // pred_check_branch
      %621 = sbr.rel (0) target = $region209
    $region208: #{_lambda_.1} parent=1 // pred_region
      _
    $region209: #{_lambda_.1} parent=1 // pred_fallthru
      _
    // Predicated region
    $region210: #{_lambda_.1} parent=1 // pred_check
      _
    $region211: #{_lambda_.1} parent=1 // pred_check_branch
      %623 = sbr.rel (0) target = $region213
    $region212: #{_lambda_.1} parent=1 // pred_region
      %s625 = ssub.s32 1024, 1024
      %626 = vsyncadd [#allocation62], %s625
      %s627 = sshll.u32 [#allocation63], 4
      %s628 = int_to_ptr.vmem [resolvable:$true] %s627
      %633 = dma.hbm_to_vmem [thread:$0]  %s105, 1024, %s628, [#allocation62], 64, 64, 4
    $region213: #{_lambda_.1} parent=1 // pred_fallthru
      _
    // Predicated region
    $region214: #{_lambda_.1} parent=1 // pred_check
      _
    $region215: #{_lambda_.1} parent=1 // pred_check_branch
      %635 = sbr.rel (0) target = $region217
    $region216: #{_lambda_.1} parent=1 // pred_region
      %s637 = ssub.s32 16, 16
      %638 = vsyncadd [#allocation65], %s637
      %s640 = sshll.u32 [#allocation64], 4
      %s641 = int_to_ptr.vmem [resolvable:$true] %s640
      %643 = dma.hbm_to_vmem [thread:$0]  %s107, 16, %s641, [#allocation65]
    $region217: #{_lambda_.1} parent=1 // pred_fallthru
      _
    // Predicated region
    $region218: #{_lambda_.1} parent=1 // pred_check
      _
    $region219: #{_lambda_.1} parent=1 // pred_check_branch
      %645 = sbr.rel (0) target = $region221
    $region220: #{_lambda_.1} parent=1 // pred_region
      %s647 = ssub.s32 1024, 1024
      %648 = vsyncadd [#allocation65], %s647
      %s649 = sshll.u32 [#allocation66], 4
      %s650 = int_to_ptr.vmem [resolvable:$true] %s649
      %655 = dma.hbm_to_vmem [thread:$0]  %s109, 1024, %s650, [#allocation65], 64, 64, 4
    $region221: #{_lambda_.1} parent=1 // pred_fallthru
      _
    // Predicated region
    $region222: #{_lambda_.1} parent=1 // pred_check
      _
    $region223: #{_lambda_.1} parent=1 // pred_check_branch
      %657 = sbr.rel (0) target = $region225
    $region224: #{_lambda_.1} parent=1 // pred_region
      %s659 = ssub.s32 16, 16
      %660 = vsyncadd [#allocation68], %s659
      %s662 = sshll.u32 [#allocation67], 4
      %s663 = int_to_ptr.vmem [resolvable:$true] %s662
      %665 = dma.hbm_to_vmem [thread:$0]  %s111, 16, %s663, [#allocation68]
    $region225: #{_lambda_.1} parent=1 // pred_fallthru
      _
    // Predicated region
    $region226: #{_lambda_.1} parent=1 // pred_check
      _
    $region227: #{_lambda_.1} parent=1 // pred_check_branch
      %667 = sbr.rel (0) target = $region229
    $region228: #{_lambda_.1} parent=1 // pred_region
      %s669 = ssub.s32 2048, 2048
      %670 = vsyncadd [#allocation68], %s669
      %s671 = sshll.u32 [#allocation69], 4
      %s672 = int_to_ptr.vmem [resolvable:$true] %s671
      %677 = dma.hbm_to_vmem [thread:$0]  %s113, 2048, %s672, [#allocation68], 128, 128, 8
    $region229: #{_lambda_.1} parent=1 // pred_fallthru
      _
    // Predicated region
    $region230: #{_lambda_.1} parent=1 // pred_check
      _
    $region231: #{_lambda_.1} parent=1 // pred_check_branch
      %679 = sbr.rel (0) target = $region233
    $region232: #{_lambda_.1} parent=1 // pred_region
      %s681 = ssub.s32 32, 32
      %682 = vsyncadd [#allocation71], %s681
      %s684 = sshll.u32 [#allocation70], 4
      %s685 = int_to_ptr.vmem [resolvable:$true] %s684
      %687 = dma.hbm_to_vmem [thread:$0]  %s115, 32, %s685, [#allocation71]
    $region233: #{_lambda_.1} parent=1 // pred_fallthru
      _
    // Predicated region
    $region234: #{_lambda_.1} parent=1 // pred_check
      _
    $region235: #{_lambda_.1} parent=1 // pred_check_branch
      %689 = sbr.rel (0) target = $region237
    $region236: #{_lambda_.1} parent=1 // pred_region
      %s691 = ssub.s32 1024, 1024
      %692 = vsyncadd [#allocation71], %s691
      %s693 = sshll.u32 [#allocation72], 4
      %s694 = int_to_ptr.vmem [resolvable:$true] %s693
      %699 = dma.hbm_to_vmem [thread:$0]  %s117, 1024, %s694, [#allocation71], 64, 64, 4
    $region237: #{_lambda_.1} parent=1 // pred_fallthru
      _
    // Predicated region
    $region238: #{_lambda_.1} parent=1 // pred_check
      _
    $region239: #{_lambda_.1} parent=1 // pred_check_branch
      %701 = sbr.rel (0) target = $region241
    $region240: #{_lambda_.1} parent=1 // pred_region
      %s703 = ssub.s32 16, 16
      %704 = vsyncadd [#allocation74], %s703
      %s706 = sshll.u32 [#allocation73], 4
      %s707 = int_to_ptr.vmem [resolvable:$true] %s706
      %709 = dma.hbm_to_vmem [thread:$0]  %s119, 16, %s707, [#allocation74]
    $region241: #{_lambda_.1} parent=1 // pred_fallthru
      _
    // Predicated region
    $region242: #{_lambda_.1} parent=1 // pred_check
      _
    $region243: #{_lambda_.1} parent=1 // pred_check_branch
      %711 = sbr.rel (0) target = $region245
    $region244: #{_lambda_.1} parent=1 // pred_region
      %s713 = ssub.s32 16, 16
      %714 = vsyncadd [#allocation74], %s713
      %s716 = sshll.u32 [#allocation75], 4
      %s717 = int_to_ptr.vmem [resolvable:$true] %s716
      %719 = dma.hbm_to_vmem [thread:$0]  %s121, 16, %s717, [#allocation74]
    $region245: #{_lambda_.1} parent=1 // pred_fallthru
      _
    // Predicated region
    $region246: #{_lambda_.1} parent=1 // pred_check
      _
    $region247: #{_lambda_.1} parent=1 // pred_check_branch
      %721 = sbr.rel (0) target = $region249
    $region248: #{_lambda_.1} parent=1 // pred_region
      %s723 = ssub.s32 16, 16
      %724 = vsyncadd [#allocation77], %s723
      %s726 = sshll.u32 [#allocation76], 4
      %s727 = int_to_ptr.vmem [resolvable:$true] %s726
      %729 = dma.hbm_to_vmem [thread:$0]  %s123, 16, %s727, [#allocation77]
    $region249: #{_lambda_.1} parent=1 // pred_fallthru
      _
    // Predicated region
    $region250: #{_lambda_.1} parent=1 // pred_check
      _
    $region251: #{_lambda_.1} parent=1 // pred_check_branch
      %731 = sbr.rel (0) target = $region253
    $region252: #{_lambda_.1} parent=1 // pred_region
      %s733 = ssub.s32 16, 16
      %734 = vsyncadd [#allocation77], %s733
      %s736 = sshll.u32 [#allocation78], 4
      %s737 = int_to_ptr.vmem [resolvable:$true] %s736
      %739 = dma.hbm_to_vmem [thread:$0]  %s125, 16, %s737, [#allocation77]
    $region253: #{_lambda_.1} parent=1 // pred_fallthru
      _
    // Predicated region
    $region254: #{_lambda_.1} parent=1 // pred_check
      _
    $region255: #{_lambda_.1} parent=1 // pred_check_branch
      %741 = sbr.rel (0) target = $region257
    $region256: #{_lambda_.1} parent=1 // pred_region
      %s743 = ssub.s32 16, 16
      %744 = vsyncadd [#allocation80], %s743
      %s746 = sshll.u32 [#allocation79], 4
      %s747 = int_to_ptr.vmem [resolvable:$true] %s746
      %749 = dma.hbm_to_vmem [thread:$0]  %s127, 16, %s747, [#allocation80]
    $region257: #{_lambda_.1} parent=1 // pred_fallthru
      _
    // Predicated region
    $region258: #{_lambda_.1} parent=1 // pred_check
      _
    $region259: #{_lambda_.1} parent=1 // pred_check_branch
      %751 = sbr.rel (0) target = $region261
    $region260: #{_lambda_.1} parent=1 // pred_region
      %s753 = ssub.s32 16, 16
      %754 = vsyncadd [#allocation80], %s753
      %s756 = sshll.u32 [#allocation81], 4
      %s757 = int_to_ptr.vmem [resolvable:$true] %s756
      %759 = dma.hbm_to_vmem [thread:$0]  %s129, 16, %s757, [#allocation80]
    $region261: #{_lambda_.1} parent=1 // pred_fallthru
      _
    // Predicated region
    $region262: #{_lambda_.1} parent=1 // pred_check
      _
    $region263: #{_lambda_.1} parent=1 // pred_check_branch
      %761 = sbr.rel (0) target = $region265
    $region264: #{_lambda_.1} parent=1 // pred_region
      %s763 = ssub.s32 16, 16
      %764 = vsyncadd [#allocation83], %s763
      %s766 = sshll.u32 [#allocation82], 4
      %s767 = int_to_ptr.vmem [resolvable:$true] %s766
      %769 = dma.hbm_to_vmem [thread:$0]  %s131, 16, %s767, [#allocation83]
    $region265: #{_lambda_.1} parent=1 // pred_fallthru
      _
    // Predicated region
    $region266: #{_lambda_.1} parent=1 // pred_check
      _
    $region267: #{_lambda_.1} parent=1 // pred_check_branch
      %771 = sbr.rel (0) target = $region269
    $region268: #{_lambda_.1} parent=1 // pred_region
      %s773 = ssub.s32 2048, 2048
      %774 = vsyncadd [#allocation83], %s773
      %s775 = sshll.u32 [#allocation84], 4
      %s776 = int_to_ptr.vmem [resolvable:$true] %s775
      %781 = dma.hbm_to_vmem [thread:$0]  %s133, 2048, %s776, [#allocation83], 128, 128, 8
    $region269: #{_lambda_.1} parent=1 // pred_fallthru
      _
    // Predicated region
    $region270: #{_lambda_.1} parent=1 // pred_check
      _
    $region271: #{_lambda_.1} parent=1 // pred_check_branch
      %783 = sbr.rel (0) target = $region273
    $region272: #{_lambda_.1} parent=1 // pred_region
      %s785 = ssub.s32 32, 32
      %786 = vsyncadd [#allocation86], %s785
      %s788 = sshll.u32 [#allocation85], 4
      %s789 = int_to_ptr.vmem [resolvable:$true] %s788
      %791 = dma.hbm_to_vmem [thread:$0]  %s135, 32, %s789, [#allocation86]
    $region273: #{_lambda_.1} parent=1 // pred_fallthru
      _
    // Predicated region
    $region274: #{_lambda_.1} parent=1 // pred_check
      _
    $region275: #{_lambda_.1} parent=1 // pred_check_branch
      %793 = sbr.rel (0) target = $region277
    $region276: #{_lambda_.1} parent=1 // pred_region
      %s795 = ssub.s32 2048, 2048
      %796 = vsyncadd [#allocation86], %s795
      %s797 = sshll.u32 [#allocation87], 4
      %s798 = int_to_ptr.vmem [resolvable:$true] %s797
      %803 = dma.hbm_to_vmem [thread:$0]  %s137, 2048, %s798, [#allocation86], 64, 64, 4
    $region277: #{_lambda_.1} parent=1 // pred_fallthru
      _
    // Predicated region
    $region278: #{_lambda_.1} parent=1 // pred_check
      _
    $region279: #{_lambda_.1} parent=1 // pred_check_branch
      %805 = sbr.rel (0) target = $region281
    $region280: #{_lambda_.1} parent=1 // pred_region
      %s807 = ssub.s32 16, 16
      %808 = vsyncadd [#allocation89], %s807
      %s810 = sshll.u32 [#allocation88], 4
      %s811 = int_to_ptr.vmem [resolvable:$true] %s810
      %813 = dma.hbm_to_vmem [thread:$0]  %s139, 16, %s811, [#allocation89]
    $region281: #{_lambda_.1} parent=1 // pred_fallthru
      _
    // Predicated region
    $region282: #{_lambda_.1} parent=1 // pred_check
      _
    $region283: #{_lambda_.1} parent=1 // pred_check_branch
      %815 = sbr.rel (0) target = $region285
    $region284: #{_lambda_.1} parent=1 // pred_region
      %816 = dma.done [#allocation3], 48
    $region285: #{_lambda_.1} parent=1 // pred_fallthru
      _
    // Predicated region
    $region286: #{_lambda_.1} parent=1 // pred_check
      _
    $region287: #{_lambda_.1} parent=1 // pred_check_branch
      %818 = sbr.rel (0) target = $region289
    $region288: #{_lambda_.1} parent=1 // pred_region
      %819 = dma.done [#allocation5], 16
    $region289: #{_lambda_.1} parent=1 // pred_fallthru
      _
    // Predicated region
    $region290: #{_lambda_.1} parent=1 // pred_check
      _
    $region291: #{_lambda_.1} parent=1 // pred_check_branch
      %821 = sbr.rel (0) target = $region293
    $region292: #{_lambda_.1} parent=1 // pred_region
      %822 = dma.done [#allocation5], 16
    $region293: #{_lambda_.1} parent=1 // pred_fallthru
      _
    // Predicated region
    $region294: #{_lambda_.1} parent=1 // pred_check
      _
    $region295: #{_lambda_.1} parent=1 // pred_check_branch
      %824 = sbr.rel (0) target = $region297
    $region296: #{_lambda_.1} parent=1 // pred_region
      %825 = dma.done [#allocation8], 16
    $region297: #{_lambda_.1} parent=1 // pred_fallthru
      _
    // Predicated region
    $region298: #{_lambda_.1} parent=1 // pred_check
      _
    $region299: #{_lambda_.1} parent=1 // pred_check_branch
      %827 = sbr.rel (0) target = $region301
    $region300: #{_lambda_.1} parent=1 // pred_region
      %828 = dma.done [#allocation8], 16
    $region301: #{_lambda_.1} parent=1 // pred_fallthru
      _
    // Predicated region
    $region302: #{_lambda_.1} parent=1 // pred_check
      _
    $region303: #{_lambda_.1} parent=1 // pred_check_branch
      %830 = sbr.rel (0) target = $region305
    $region304: #{_lambda_.1} parent=1 // pred_region
      %831 = dma.done [#allocation11], 16
    $region305: #{_lambda_.1} parent=1 // pred_fallthru
      _
    // Predicated region
    $region306: #{_lambda_.1} parent=1 // pred_check
      _
    $region307: #{_lambda_.1} parent=1 // pred_check_branch
      %833 = sbr.rel (0) target = $region309
    $region308: #{_lambda_.1} parent=1 // pred_region
      %834 = dma.done [#allocation11], 2048
    $region309: #{_lambda_.1} parent=1 // pred_fallthru
      _
    // Predicated region
    $region310: #{_lambda_.1} parent=1 // pred_check
      _
    $region311: #{_lambda_.1} parent=1 // pred_check_branch
      %836 = sbr.rel (0) target = $region313
    $region312: #{_lambda_.1} parent=1 // pred_region
      %837 = dma.done [#allocation14], 32
    $region313: #{_lambda_.1} parent=1 // pred_fallthru
      _
    // Predicated region
    $region314: #{_lambda_.1} parent=1 // pred_check
      _
    $region315: #{_lambda_.1} parent=1 // pred_check_branch
      %839 = sbr.rel (0) target = $region317
    $region316: #{_lambda_.1} parent=1 // pred_region
      %840 = dma.done [#allocation14], 2048
    $region317: #{_lambda_.1} parent=1 // pred_fallthru
      _
    // Predicated region
    $region318: #{_lambda_.1} parent=1 // pred_check
      _
    $region319: #{_lambda_.1} parent=1 // pred_check_branch
      %842 = sbr.rel (0) target = $region321
    $region320: #{_lambda_.1} parent=1 // pred_region
      %843 = dma.done [#allocation17], 16
    $region321: #{_lambda_.1} parent=1 // pred_fallthru
      _
    // Predicated region
    $region322: #{_lambda_.1} parent=1 // pred_check
      _
    $region323: #{_lambda_.1} parent=1 // pred_check_branch
      %845 = sbr.rel (0) target = $region325
    $region324: #{_lambda_.1} parent=1 // pred_region
      %846 = dma.done [#allocation17], 48
    $region325: #{_lambda_.1} parent=1 // pred_fallthru
      _
    // Predicated region
    $region326: #{_lambda_.1} parent=1 // pred_check
      _
    $region327: #{_lambda_.1} parent=1 // pred_check_branch
      %848 = sbr.rel (0) target = $region329
    $region328: #{_lambda_.1} parent=1 // pred_region
      %849 = dma.done [#allocation20], 1024
    $region329: #{_lambda_.1} parent=1 // pred_fallthru
      _
    // Predicated region
    $region330: #{_lambda_.1} parent=1 // pred_check
      _
    $region331: #{_lambda_.1} parent=1 // pred_check_branch
      %851 = sbr.rel (0) target = $region333
    $region332: #{_lambda_.1} parent=1 // pred_region
      %852 = dma.done [#allocation20], 16
    $region333: #{_lambda_.1} parent=1 // pred_fallthru
      _
    // Predicated region
    $region334: #{_lambda_.1} parent=1 // pred_check
      _
    $region335: #{_lambda_.1} parent=1 // pred_check_branch
      %854 = sbr.rel (0) target = $region337
    $region336: #{_lambda_.1} parent=1 // pred_region
      %855 = dma.done [#allocation23], 16
    $region337: #{_lambda_.1} parent=1 // pred_fallthru
      _
    // Predicated region
    $region338: #{_lambda_.1} parent=1 // pred_check
      _
    $region339: #{_lambda_.1} parent=1 // pred_check_branch
      %857 = sbr.rel (0) target = $region341
    $region340: #{_lambda_.1} parent=1 // pred_region
      %858 = dma.done [#allocation23], 16
    $region341: #{_lambda_.1} parent=1 // pred_fallthru
      _
    // Predicated region
    $region342: #{_lambda_.1} parent=1 // pred_check
      _
    $region343: #{_lambda_.1} parent=1 // pred_check_branch
      %860 = sbr.rel (0) target = $region345
    $region344: #{_lambda_.1} parent=1 // pred_region
      %861 = dma.done [#allocation26], 16
    $region345: #{_lambda_.1} parent=1 // pred_fallthru
      _
    // Predicated region
    $region346: #{_lambda_.1} parent=1 // pred_check
      _
    $region347: #{_lambda_.1} parent=1 // pred_check_branch
      %863 = sbr.rel (0) target = $region349
    $region348: #{_lambda_.1} parent=1 // pred_region
      %864 = dma.done [#allocation26], 16
    $region349: #{_lambda_.1} parent=1 // pred_fallthru
      _
    // Predicated region
    $region350: #{_lambda_.1} parent=1 // pred_check
      _
    $region351: #{_lambda_.1} parent=1 // pred_check_branch
      %866 = sbr.rel (0) target = $region353
    $region352: #{_lambda_.1} parent=1 // pred_region
      %867 = dma.done [#allocation29], 2048
    $region353: #{_lambda_.1} parent=1 // pred_fallthru
      _
    // Predicated region
    $region354: #{_lambda_.1} parent=1 // pred_check
      _
    $region355: #{_lambda_.1} parent=1 // pred_check_branch
      %869 = sbr.rel (0) target = $region357
    $region356: #{_lambda_.1} parent=1 // pred_region
      %870 = dma.done [#allocation29], 32
    $region357: #{_lambda_.1} parent=1 // pred_fallthru
      _
    // Predicated region
    $region358: #{_lambda_.1} parent=1 // pred_check
      _
    $region359: #{_lambda_.1} parent=1 // pred_check_branch
      %872 = sbr.rel (0) target = $region361
    $region360: #{_lambda_.1} parent=1 // pred_region
      %873 = dma.done [#allocation32], 2048
    $region361: #{_lambda_.1} parent=1 // pred_fallthru
      _
    // Predicated region
    $region362: #{_lambda_.1} parent=1 // pred_check
      _
    $region363: #{_lambda_.1} parent=1 // pred_check_branch
      %875 = sbr.rel (0) target = $region365
    $region364: #{_lambda_.1} parent=1 // pred_region
      %876 = dma.done [#allocation32], 16
    $region365: #{_lambda_.1} parent=1 // pred_fallthru
      _
    // Predicated region
    $region366: #{_lambda_.1} parent=1 // pred_check
      _
    $region367: #{_lambda_.1} parent=1 // pred_check_branch
      %878 = sbr.rel (0) target = $region369
    $region368: #{_lambda_.1} parent=1 // pred_region
      %879 = dma.done [#allocation35], 48
    $region369: #{_lambda_.1} parent=1 // pred_fallthru
      _
    // Predicated region
    $region370: #{_lambda_.1} parent=1 // pred_check
      _
    $region371: #{_lambda_.1} parent=1 // pred_check_branch
      %881 = sbr.rel (0) target = $region373
    $region372: #{_lambda_.1} parent=1 // pred_region
      %882 = dma.done [#allocation35], 1024
    $region373: #{_lambda_.1} parent=1 // pred_fallthru
      _
    // Predicated region
    $region374: #{_lambda_.1} parent=1 // pred_check
      _
    $region375: #{_lambda_.1} parent=1 // pred_check_branch
      %884 = sbr.rel (0) target = $region377
    $region376: #{_lambda_.1} parent=1 // pred_region
      %885 = dma.done [#allocation38], 16
    $region377: #{_lambda_.1} parent=1 // pred_fallthru
      _
    // Predicated region
    $region378: #{_lambda_.1} parent=1 // pred_check
      _
    $region379: #{_lambda_.1} parent=1 // pred_check_branch
      %887 = sbr.rel (0) target = $region381
    $region380: #{_lambda_.1} parent=1 // pred_region
      %888 = dma.done [#allocation38], 1024
    $region381: #{_lambda_.1} parent=1 // pred_fallthru
      _
    // Predicated region
    $region382: #{_lambda_.1} parent=1 // pred_check
      _
    $region383: #{_lambda_.1} parent=1 // pred_check_branch
      %890 = sbr.rel (0) target = $region385
    $region384: #{_lambda_.1} parent=1 // pred_region
      %891 = dma.done [#allocation41], 16
    $region385: #{_lambda_.1} parent=1 // pred_fallthru
      _
    // Predicated region
    $region386: #{_lambda_.1} parent=1 // pred_check
      _
    $region387: #{_lambda_.1} parent=1 // pred_check_branch
      %893 = sbr.rel (0) target = $region389
    $region388: #{_lambda_.1} parent=1 // pred_region
      %894 = dma.done [#allocation41], 2048
    $region389: #{_lambda_.1} parent=1 // pred_fallthru
      _
    // Predicated region
    $region390: #{_lambda_.1} parent=1 // pred_check
      _
    $region391: #{_lambda_.1} parent=1 // pred_check_branch
      %896 = sbr.rel (0) target = $region393
    $region392: #{_lambda_.1} parent=1 // pred_region
      %897 = dma.done [#allocation44], 32
    $region393: #{_lambda_.1} parent=1 // pred_fallthru
      _
    // Predicated region
    $region394: #{_lambda_.1} parent=1 // pred_check
      _
    $region395: #{_lambda_.1} parent=1 // pred_check_branch
      %899 = sbr.rel (0) target = $region397
    $region396: #{_lambda_.1} parent=1 // pred_region
      %900 = dma.done [#allocation44], 1024
    $region397: #{_lambda_.1} parent=1 // pred_fallthru
      _
    // Predicated region
    $region398: #{_lambda_.1} parent=1 // pred_check
      _
    $region399: #{_lambda_.1} parent=1 // pred_check_branch
      %902 = sbr.rel (0) target = $region401
    $region400: #{_lambda_.1} parent=1 // pred_region
      %903 = dma.done [#allocation47], 16
    $region401: #{_lambda_.1} parent=1 // pred_fallthru
      _
    // Predicated region
    $region402: #{_lambda_.1} parent=1 // pred_check
      _
    $region403: #{_lambda_.1} parent=1 // pred_check_branch
      %905 = sbr.rel (0) target = $region405
    $region404: #{_lambda_.1} parent=1 // pred_region
      %906 = dma.done [#allocation47], 16
    $region405: #{_lambda_.1} parent=1 // pred_fallthru
      _
    // Predicated region
    $region406: #{_lambda_.1} parent=1 // pred_check
      _
    $region407: #{_lambda_.1} parent=1 // pred_check_branch
      %908 = sbr.rel (0) target = $region409
    $region408: #{_lambda_.1} parent=1 // pred_region
      %909 = dma.done [#allocation50], 16
    $region409: #{_lambda_.1} parent=1 // pred_fallthru
      _
    // Predicated region
    $region410: #{_lambda_.1} parent=1 // pred_check
      _
    $region411: #{_lambda_.1} parent=1 // pred_check_branch
      %911 = sbr.rel (0) target = $region413
    $region412: #{_lambda_.1} parent=1 // pred_region
      %912 = dma.done [#allocation50], 16
    $region413: #{_lambda_.1} parent=1 // pred_fallthru
      _
    // Predicated region
    $region414: #{_lambda_.1} parent=1 // pred_check
      _
    $region415: #{_lambda_.1} parent=1 // pred_check_branch
      %914 = sbr.rel (0) target = $region417
    $region416: #{_lambda_.1} parent=1 // pred_region
      %915 = dma.done [#allocation53], 16
    $region417: #{_lambda_.1} parent=1 // pred_fallthru
      _
    // Predicated region
    $region418: #{_lambda_.1} parent=1 // pred_check
      _
    $region419: #{_lambda_.1} parent=1 // pred_check_branch
      %917 = sbr.rel (0) target = $region421
    $region420: #{_lambda_.1} parent=1 // pred_region
      %918 = dma.done [#allocation53], 16
    $region421: #{_lambda_.1} parent=1 // pred_fallthru
      _
    // Predicated region
    $region422: #{_lambda_.1} parent=1 // pred_check
      _
    $region423: #{_lambda_.1} parent=1 // pred_check_branch
      %920 = sbr.rel (0) target = $region425
    $region424: #{_lambda_.1} parent=1 // pred_region
      %921 = dma.done [#allocation56], 16
    $region425: #{_lambda_.1} parent=1 // pred_fallthru
      _
    // Predicated region
    $region426: #{_lambda_.1} parent=1 // pred_check
      _
    $region427: #{_lambda_.1} parent=1 // pred_check_branch
      %923 = sbr.rel (0) target = $region429
    $region428: #{_lambda_.1} parent=1 // pred_region
      %924 = dma.done [#allocation56], 2048
    $region429: #{_lambda_.1} parent=1 // pred_fallthru
      _
    // Predicated region
    $region430: #{_lambda_.1} parent=1 // pred_check
      _
    $region431: #{_lambda_.1} parent=1 // pred_check_branch
      %926 = sbr.rel (0) target = $region433
    $region432: #{_lambda_.1} parent=1 // pred_region
      %927 = dma.done [#allocation59], 32
    $region433: #{_lambda_.1} parent=1 // pred_fallthru
      _
    // Predicated region
    $region434: #{_lambda_.1} parent=1 // pred_check
      _
    $region435: #{_lambda_.1} parent=1 // pred_check_branch
      %929 = sbr.rel (0) target = $region437
    $region436: #{_lambda_.1} parent=1 // pred_region
      %930 = dma.done [#allocation59], 2048
    $region437: #{_lambda_.1} parent=1 // pred_fallthru
      _
    // Predicated region
    $region438: #{_lambda_.1} parent=1 // pred_check
      _
    $region439: #{_lambda_.1} parent=1 // pred_check_branch
      %932 = sbr.rel (0) target = $region441
    $region440: #{_lambda_.1} parent=1 // pred_region
      %933 = dma.done [#allocation62], 16
    $region441: #{_lambda_.1} parent=1 // pred_fallthru
      _
    // Predicated region
    $region442: #{_lambda_.1} parent=1 // pred_check
      _
    $region443: #{_lambda_.1} parent=1 // pred_check_branch
      %935 = sbr.rel (0) target = $region445
    $region444: #{_lambda_.1} parent=1 // pred_region
      %936 = dma.done [#allocation62], 1024
    $region445: #{_lambda_.1} parent=1 // pred_fallthru
      _
    // Predicated region
    $region446: #{_lambda_.1} parent=1 // pred_check
      _
    $region447: #{_lambda_.1} parent=1 // pred_check_branch
      %938 = sbr.rel (0) target = $region449
    $region448: #{_lambda_.1} parent=1 // pred_region
      %939 = dma.done [#allocation65], 16
    $region449: #{_lambda_.1} parent=1 // pred_fallthru
      _
    // Predicated region
    $region450: #{_lambda_.1} parent=1 // pred_check
      _
    $region451: #{_lambda_.1} parent=1 // pred_check_branch
      %941 = sbr.rel (0) target = $region453
    $region452: #{_lambda_.1} parent=1 // pred_region
      %942 = dma.done [#allocation65], 1024
    $region453: #{_lambda_.1} parent=1 // pred_fallthru
      _
    // Predicated region
    $region454: #{_lambda_.1} parent=1 // pred_check
      _
    $region455: #{_lambda_.1} parent=1 // pred_check_branch
      %944 = sbr.rel (0) target = $region457
    $region456: #{_lambda_.1} parent=1 // pred_region
      %945 = dma.done [#allocation68], 16
    $region457: #{_lambda_.1} parent=1 // pred_fallthru
      _
    // Predicated region
    $region458: #{_lambda_.1} parent=1 // pred_check
      _
    $region459: #{_lambda_.1} parent=1 // pred_check_branch
      %947 = sbr.rel (0) target = $region461
    $region460: #{_lambda_.1} parent=1 // pred_region
      %948 = dma.done [#allocation68], 2048
    $region461: #{_lambda_.1} parent=1 // pred_fallthru
      _
    // Predicated region
    $region462: #{_lambda_.1} parent=1 // pred_check
      _
    $region463: #{_lambda_.1} parent=1 // pred_check_branch
      %950 = sbr.rel (0) target = $region465
    $region464: #{_lambda_.1} parent=1 // pred_region
      %951 = dma.done [#allocation71], 32
    $region465: #{_lambda_.1} parent=1 // pred_fallthru
      _
    // Predicated region
    $region466: #{_lambda_.1} parent=1 // pred_check
      _
    $region467: #{_lambda_.1} parent=1 // pred_check_branch
      %953 = sbr.rel (0) target = $region469
    $region468: #{_lambda_.1} parent=1 // pred_region
      %954 = dma.done [#allocation71], 1024
    $region469: #{_lambda_.1} parent=1 // pred_fallthru
      _
    // Predicated region
    $region470: #{_lambda_.1} parent=1 // pred_check
      _
    $region471: #{_lambda_.1} parent=1 // pred_check_branch
      %956 = sbr.rel (0) target = $region473
    $region472: #{_lambda_.1} parent=1 // pred_region
      %957 = dma.done [#allocation74], 16
    $region473: #{_lambda_.1} parent=1 // pred_fallthru
      _
    // Predicated region
    $region474: #{_lambda_.1} parent=1 // pred_check
      _
    $region475: #{_lambda_.1} parent=1 // pred_check_branch
      %959 = sbr.rel (0) target = $region477
    $region476: #{_lambda_.1} parent=1 // pred_region
      %960 = dma.done [#allocation74], 16
    $region477: #{_lambda_.1} parent=1 // pred_fallthru
      _
    // Predicated region
    $region478: #{_lambda_.1} parent=1 // pred_check
      _
    $region479: #{_lambda_.1} parent=1 // pred_check_branch
      %962 = sbr.rel (0) target = $region481
    $region480: #{_lambda_.1} parent=1 // pred_region
      %963 = dma.done [#allocation77], 16
    $region481: #{_lambda_.1} parent=1 // pred_fallthru
      _
    // Predicated region
    $region482: #{_lambda_.1} parent=1 // pred_check
      _
    $region483: #{_lambda_.1} parent=1 // pred_check_branch
      %965 = sbr.rel (0) target = $region485
    $region484: #{_lambda_.1} parent=1 // pred_region
      %966 = dma.done [#allocation77], 16
    $region485: #{_lambda_.1} parent=1 // pred_fallthru
      _
    // Predicated region
    $region486: #{_lambda_.1} parent=1 // pred_check
      _
    $region487: #{_lambda_.1} parent=1 // pred_check_branch
      %968 = sbr.rel (0) target = $region489
    $region488: #{_lambda_.1} parent=1 // pred_region
      %969 = dma.done [#allocation80], 16
    $region489: #{_lambda_.1} parent=1 // pred_fallthru
      _
    // Predicated region
    $region490: #{_lambda_.1} parent=1 // pred_check
      _
    $region491: #{_lambda_.1} parent=1 // pred_check_branch
      %971 = sbr.rel (0) target = $region493
    $region492: #{_lambda_.1} parent=1 // pred_region
      %972 = dma.done [#allocation80], 16
    $region493: #{_lambda_.1} parent=1 // pred_fallthru
      _
    // Predicated region
    $region494: #{_lambda_.1} parent=1 // pred_check
      _
    $region495: #{_lambda_.1} parent=1 // pred_check_branch
      %974 = sbr.rel (0) target = $region497
    $region496: #{_lambda_.1} parent=1 // pred_region
      %975 = dma.done [#allocation83], 16
    $region497: #{_lambda_.1} parent=1 // pred_fallthru
      _
    // Predicated region
    $region498: #{_lambda_.1} parent=1 // pred_check
      _
    $region499: #{_lambda_.1} parent=1 // pred_check_branch
      %977 = sbr.rel (0) target = $region501
    $region500: #{_lambda_.1} parent=1 // pred_region
      %978 = dma.done [#allocation83], 2048
    $region501: #{_lambda_.1} parent=1 // pred_fallthru
      _
    // Predicated region
    $region502: #{_lambda_.1} parent=1 // pred_check
      _
    $region503: #{_lambda_.1} parent=1 // pred_check_branch
      %980 = sbr.rel (0) target = $region505
    $region504: #{_lambda_.1} parent=1 // pred_region
      %981 = dma.done [#allocation86], 32
    $region505: #{_lambda_.1} parent=1 // pred_fallthru
      _
    // Predicated region
    $region506: #{_lambda_.1} parent=1 // pred_check
      _
    $region507: #{_lambda_.1} parent=1 // pred_check_branch
      %983 = sbr.rel (0) target = $region509
    $region508: #{_lambda_.1} parent=1 // pred_region
      %984 = dma.done [#allocation86], 2048
    $region509: #{_lambda_.1} parent=1 // pred_fallthru
      _
    // Predicated region
    $region510: #{_lambda_.1} parent=1 // pred_check
      _
    $region511: #{_lambda_.1} parent=1 // pred_check_branch
      %986 = sbr.rel (0) target = $region513
    $region512: #{_lambda_.1} parent=1 // pred_region
      %987 = dma.done [#allocation89], 16
    $region513: #{_lambda_.1} parent=1 // pred_fallthru
      _
    %v989 = vld [vmem:[%s1] sm:$0xff]
    %v990 = vld [vmem:[%s1 + $0x8] sm:$0xff]
    %v991 = vld [vmem:[%s3] sm:$0x1]
    %v992 = vld [vmem:[%s3 + $0x1] sm:$0x1]
    %v993 = vld [vmem:[%s5] sm:$0xff]
    %v994 = vld [vmem:[%s5 + $0x8] sm:$0xff]
    %v995 = vld [vmem:[%s7] sm:$0x1]
    %v996 = vld [vmem:[%s7 + $0x1] sm:$0x1]
    %v997 = vld [vmem:[#allocation6] sm:$0x1]
    %v998 = vld [vmem:[#allocation7] sm:$0x1]
    %999 = vadd.xlane.f32.xlu0 %v989
    %v1000 = vpop.xlane.xlu0 %999
    %1001 = vadd.xlane.f32.xlu0 %v990
    %v1002 = vpop.xlane.xlu0 %1001
    %v1003 = vrcp.pop 128.0
    %v1004 = vmul.f32 %v1000, %v1003
    %v1005 = vmul.f32 %v1002, %v1003
    %v1006 = vsub.f32 %v989, %v1004
    %v1007 = vsub.f32 %v990, %v1005
    %v1008 = vmul.f32 %v1006, %v1006
    %v1009 = vmul.f32 %v1007, %v1007
    %1010 = vadd.xlane.f32.xlu0 %v1008
    %v1011 = vpop.xlane.xlu0 %1010
    %1012 = vadd.xlane.f32.xlu0 %v1009
    %v1013 = vpop.xlane.xlu0 %1012
    %v1014 = vmul.f32 %v1011, %v1003
    %v1015 = vmul.f32 %v1013, %v1003
    %v1016 = vadd.f32 %v1014, 1e-05
    %v1017 = vadd.f32 %v1015, 1e-05
    %v1018 = vrsqrt.pop %v1016
    %v1019 = vrsqrt.pop %v1017
    %v1020 = vmul.f32 %v1006, %v1018
    %v1021 = vmul.f32 %v1007, %v1019
    %v1023 = vlaneseq
    %v1024 = vshrl.u32 %v1023, 7
    %v1025 = vsub.s32 0, %v1024
    %v1026 = vrot.slane %v997, %v1025
    %v1028 = vmul.f32 %v1020, %v1026
    %v1029 = vmul.f32 %v1021, %v1026
    %v1031 = vlaneseq
    %v1032 = vshrl.u32 %v1031, 7
    %v1033 = vsub.s32 0, %v1032
    %v1034 = vrot.slane %v998, %v1033
    %v1036 = vadd.f32 %v1028, %v1034
    %v1037 = vadd.f32 %v1029, %v1034
    %v1038 = vld [vmem:[%s13] sm:$0xff]
    %v1039 = vld [vmem:[%s13 + $0x8] sm:$0xf]
    %v1040 = vld [vmem:[%s13 + $0xc] sm:$0xff]
    %v1041 = vld [vmem:[%s13 + $0x14] sm:$0xf]
    %v1042 = vld [vmem:[%s13 + $0x18] sm:$0xff]
    %v1043 = vld [vmem:[%s13 + $0x20] sm:$0xf]
    %v1044 = vld [vmem:[%s13 + $0x24] sm:$0xff]
    %v1045 = vld [vmem:[%s13 + $0x2c] sm:$0xf]
    %v1046 = vld [vmem:[%s13 + $0x30] sm:$0xff]
    %v1047 = vld [vmem:[%s13 + $0x38] sm:$0xf]
    %v1048 = vld [vmem:[%s13 + $0x3c] sm:$0xff]
    %v1049 = vld [vmem:[%s13 + $0x44] sm:$0xf]
    %v1050 = vld [vmem:[%s13 + $0x48] sm:$0xff]
    %v1051 = vld [vmem:[%s13 + $0x50] sm:$0xf]
    %v1052 = vld [vmem:[%s13 + $0x54] sm:$0xff]
    %v1053 = vld [vmem:[%s13 + $0x5c] sm:$0xf]
    %v1054 = vld [vmem:[%s13 + $0x60] sm:$0xff]
    %v1055 = vld [vmem:[%s13 + $0x68] sm:$0xf]
    %v1056 = vld [vmem:[%s13 + $0x6c] sm:$0xff]
    %v1057 = vld [vmem:[%s13 + $0x74] sm:$0xf]
    %v1058 = vld [vmem:[%s13 + $0x78] sm:$0xff]
    %v1059 = vld [vmem:[%s13 + $0x80] sm:$0xf]
    %v1060 = vld [vmem:[%s13 + $0x84] sm:$0xff]
    %v1061 = vld [vmem:[%s13 + $0x8c] sm:$0xf]
    %v1062 = vld [vmem:[%s13 + $0x90] sm:$0xff]
    %v1063 = vld [vmem:[%s13 + $0x98] sm:$0xf]
    %v1064 = vld [vmem:[%s13 + $0x9c] sm:$0xff]
    %v1065 = vld [vmem:[%s13 + $0xa4] sm:$0xf]
    %v1066 = vld [vmem:[%s13 + $0xa8] sm:$0xff]
    %v1067 = vld [vmem:[%s13 + $0xb0] sm:$0xf]
    %v1068 = vld [vmem:[%s13 + $0xb4] sm:$0xff]
    %v1069 = vld [vmem:[%s13 + $0xbc] sm:$0xf]
    %v1070 = vpack.c.bf16 %v1037, %v1036
    %v1071 = vld [vmem:[#allocation2] sm:$0x7]
    %v1073 = vlaneseq
    %v1074 = vshrl.u32 %v1073, 7
    %v1075 = vsub.s32 0, %v1074
    %v1076 = vrot.slane %v1071, %v1075
    %v1077 = vlaneseq
    %v1078 = vshrl.u32 %v1077, 7
    %v1079 = vsub.s32 1, %v1078
    %v1080 = vrot.slane %v1071, %v1079
    %v1081 = vlaneseq
    %v1082 = vshrl.u32 %v1081, 7
    %v1083 = vsub.s32 2, %v1082
    %v1084 = vrot.slane %v1071, %v1083
    %v1120 = vunpack.c.l.b16 %v1038
    %v1121 = vunpack.c.h.b16 %v1038
    %v1122 = vunpack.c.l.b16 %v1039
    %v1123 = vunpack.c.l.b16 %v1040
    %v1124 = vunpack.c.h.b16 %v1040
    %v1125 = vunpack.c.l.b16 %v1041
    %v1126 = vunpack.c.l.b16 %v1042
    %v1127 = vunpack.c.h.b16 %v1042
    %v1128 = vunpack.c.l.b16 %v1043
    %v1129 = vunpack.c.l.b16 %v1044
    %v1130 = vunpack.c.h.b16 %v1044
    %v1131 = vunpack.c.l.b16 %v1045
    %v1132 = vunpack.c.l.b16 %v1046
    %v1133 = vunpack.c.h.b16 %v1046
    %v1134 = vunpack.c.l.b16 %v1047
    %v1135 = vunpack.c.l.b16 %v1048
    %v1136 = vunpack.c.h.b16 %v1048
    %v1137 = vunpack.c.l.b16 %v1049
    %v1138 = vunpack.c.l.b16 %v1050
    %v1139 = vunpack.c.h.b16 %v1050
    %v1140 = vunpack.c.l.b16 %v1051
    %v1141 = vunpack.c.l.b16 %v1052
    %v1142 = vunpack.c.h.b16 %v1052
    %v1143 = vunpack.c.l.b16 %v1053
    %v1144 = vunpack.c.l.b16 %v1054
    %v1145 = vunpack.c.h.b16 %v1054
    %v1146 = vunpack.c.l.b16 %v1055
    %v1147 = vunpack.c.l.b16 %v1056
    %v1148 = vunpack.c.h.b16 %v1056
    %v1149 = vunpack.c.l.b16 %v1057
    %v1150 = vunpack.c.l.b16 %v1058
    %v1151 = vunpack.c.h.b16 %v1058
    %v1152 = vunpack.c.l.b16 %v1059
    %v1153 = vunpack.c.l.b16 %v1060
    %v1154 = vunpack.c.h.b16 %v1060
    %v1155 = vunpack.c.l.b16 %v1061
    %v1156 = vunpack.c.l.b16 %v1062
    %v1157 = vunpack.c.h.b16 %v1062
    %v1158 = vunpack.c.l.b16 %v1063
    %v1159 = vunpack.c.l.b16 %v1064
    %v1160 = vunpack.c.h.b16 %v1064
    %v1161 = vunpack.c.l.b16 %v1065
    %v1162 = vunpack.c.l.b16 %v1066
    %v1163 = vunpack.c.h.b16 %v1066
    %v1164 = vunpack.c.l.b16 %v1067
    %v1165 = vunpack.c.l.b16 %v1068
    %v1166 = vunpack.c.h.b16 %v1068
    %v1167 = vunpack.c.l.b16 %v1069
    %v1168 = vpack.c.b16 %v1123, %v1120
    %v1169 = vpack.c.b16 %v1124, %v1121
    %v1170 = vpack.c.b16 %v1125, %v1122
    %v1171 = vpack.c.b16 %v1129, %v1126
    %v1172 = vpack.c.b16 %v1130, %v1127
    %v1173 = vpack.c.b16 %v1131, %v1128
    %v1174 = vpack.c.b16 %v1135, %v1132
    %v1175 = vpack.c.b16 %v1136, %v1133
    %v1176 = vpack.c.b16 %v1137, %v1134
    %v1177 = vpack.c.b16 %v1141, %v1138
    %v1178 = vpack.c.b16 %v1142, %v1139
    %v1179 = vpack.c.b16 %v1143, %v1140
    %v1180 = vpack.c.b16 %v1147, %v1144
    %v1181 = vpack.c.b16 %v1148, %v1145
    %v1182 = vpack.c.b16 %v1149, %v1146
    %v1183 = vpack.c.b16 %v1153, %v1150
    %v1184 = vpack.c.b16 %v1154, %v1151
    %v1185 = vpack.c.b16 %v1155, %v1152
    %v1186 = vpack.c.b16 %v1159, %v1156
    %v1187 = vpack.c.b16 %v1160, %v1157
    %v1188 = vpack.c.b16 %v1161, %v1158
    %v1189 = vpack.c.b16 %v1165, %v1162
    %v1190 = vpack.c.b16 %v1166, %v1163
    %v1191 = vpack.c.b16 %v1167, %v1164
    %1216 = vmatprep.subr.bf16.mxu0 %v1190
    %1217 = vmatpush1.bf16.msra.mxu0 %v1189
    %1218 = vmatprep.subr.bf16.mxu0 %v1187
    %1219 = vmatpush1.bf16.msra.mxu0 %v1186
    %1220 = vmatprep.subr.bf16.mxu0 %v1184
    %1221 = vmatpush1.bf16.msra.mxu0 %v1183
    %1222 = vmatprep.subr.bf16.mxu0 %v1181
    %1223 = vmatpush1.bf16.msra.mxu0 %v1180
    %1224 = vmatprep.subr.bf16.mxu0 %v1178
    %1225 = vmatpush1.bf16.msra.mxu0 %v1177
    %1226 = vmatprep.subr.bf16.mxu0 %v1175
    %1227 = vmatpush1.bf16.msra.mxu0 %v1174
    %1228 = vmatprep.subr.bf16.mxu0 %v1172
    %1229 = vmatpush1.bf16.msra.mxu0 %v1171
    %1230 = vmatprep.subr.bf16.mxu0 %v1169
    %1231 = vmatpush1.bf16.msra.mxu0 %v1168
    %1232 = vmatprep.subr.bf16.mxu0 0
    %1233 = vmatpush2.bf16.msra.mxu0 0
    %1234 = vmatprep.subr.bf16.mxu0 0
    %1235 = vmatpush2.bf16.msra.mxu0 0
    %1236 = vmatprep.subr.bf16.mxu0 0
    %1237 = vmatpush2.bf16.msra.mxu0 0
    %1238 = vmatprep.subr.bf16.mxu0 0
    %1239 = vmatpush2.bf16.msra.mxu0 0
    %1240 = vmatprep.subr.bf16.mxu0 0
    %1241 = vmatpush2.bf16.msra.mxu0 0
    %1242 = vmatprep.subr.bf16.mxu0 0
    %1243 = vmatpush2.bf16.msra.mxu0 0
    %1244 = vmatprep.subr.bf16.mxu0 0
    %1245 = vmatpush2.bf16.msra.mxu0 0
    %1246 = vmatprep.subr.bf16.mxu0 0
    %1247 = vmatpush2.bf16.msra.mxu0 0
    %1248 = vmatprep.mubr.bf16.mxu0 0
    %1249 = vmatmul.mubr.bf16.gmra.mxu0 %v1070
    %v1250 = vpop.f32.mrf.mxu0
    %v1251 = vadd.f32 %v1076, %v1250
    %v1252 = vpop.f32.mrf.mxu0
    %v1253 = vadd.f32 %v1080, %v1252
    %v1254 = vpop.f32.mrf.mxu0
    %v1255 = vadd.f32 %v1076, %v1254
    %v1256 = vpop.f32.mrf.mxu0
    %v1257 = vadd.f32 %v1080, %v1256
    %1258 = vdwg.mxu0
    %1259 = vmatprep.subr.bf16.mxu0 0
    %1260 = vmatpush1.bf16.msra.mxu0 %v1191
    %1261 = vmatprep.subr.bf16.mxu0 0
    %1262 = vmatpush1.bf16.msra.mxu0 %v1188
    %1263 = vmatprep.subr.bf16.mxu0 0
    %1264 = vmatpush1.bf16.msra.mxu0 %v1185
    %1265 = vmatprep.subr.bf16.mxu0 0
    %1266 = vmatpush1.bf16.msra.mxu0 %v1182
    %1267 = vmatprep.subr.bf16.mxu0 0
    %1268 = vmatpush1.bf16.msra.mxu0 %v1179
    %1269 = vmatprep.subr.bf16.mxu0 0
    %1270 = vmatpush1.bf16.msra.mxu0 %v1176
    %1271 = vmatprep.subr.bf16.mxu0 0
    %1272 = vmatpush1.bf16.msra.mxu0 %v1173
    %1273 = vmatprep.subr.bf16.mxu0 0
    %1274 = vmatpush1.bf16.msra.mxu0 %v1170
    %1275 = vmatprep.subr.bf16.mxu0 0
    %1276 = vmatpush2.bf16.msra.mxu0 0
    %1277 = vmatprep.subr.bf16.mxu0 0
    %1278 = vmatpush2.bf16.msra.mxu0 0
    %1279 = vmatprep.subr.bf16.mxu0 0
    %1280 = vmatpush2.bf16.msra.mxu0 0
    %1281 = vmatprep.subr.bf16.mxu0 0
    %1282 = vmatpush2.bf16.msra.mxu0 0
    %1283 = vmatprep.subr.bf16.mxu0 0
    %1284 = vmatpush2.bf16.msra.mxu0 0
    %1285 = vmatprep.subr.bf16.mxu0 0
    %1286 = vmatpush2.bf16.msra.mxu0 0
    %1287 = vmatprep.subr.bf16.mxu0 0
    %1288 = vmatpush2.bf16.msra.mxu0 0
    %1289 = vmatprep.subr.bf16.mxu0 0
    %1290 = vmatpush2.bf16.msra.mxu0 0
    %1291 = vmatprep.mubr.bf16.mxu0 0
    %1292 = vmatmul.mubr.bf16.gmra.mxu0 %v1070
    %v1293 = vpop.f32.mrf.mxu0
    %v1294 = vadd.f32 %v1084, %v1293
    %v1295 = vpop.f32.mrf.mxu0
    %v1296 = vpop.f32.mrf.mxu0
    %v1297 = vadd.f32 %v1084, %v1296
    %v1298 = vpop.f32.mrf.mxu0
    %1299 = vdwg.mxu0
    %v1300 = vpack.c.bf16 %v1251, %v1251
    %v1301 = vpack.c.bf16 %v1255, %v1255
    %v1302 = vpack.c.bf16 %v1253, %v1253
    %v1303 = vpack.c.bf16 %v1257, %v1257
    %v1304 = vpack.c.bf16 %v1294, %v1294
    %v1305 = vpack.c.bf16 %v1297, %v1297
    %v1308 = vlaneseq
    %v1309 = vshrl.u32 %v1308, 7
    %v1310 = vsub.s32 0, %v1309
    %v1311 = vrot.slane %v991, %v1310
    %v1312 = vlaneseq
    %v1313 = vshrl.u32 %v1312, 7
    %v1314 = vsub.s32 0, %v1313
    %v1315 = vrot.slane %v992, %v1314
    %vm1318 = vcmask 261120
    %v1320 = vsel %vm1318, %v1300, 0
    %v1323 = vsel %vm1318, %v1302, 0
    %1325 = vmatprep.subr.bf16.mxu0 0
    %1326 = vmatpush1.bf16.xpose.msra.mxu0 0
    %1327 = vmatprep.subr.bf16.mxu0 0
    %1328 = vmatpush1.bf16.xpose.msra.mxu0 0
    %1329 = vmatprep.subr.bf16.mxu0 0
    %1330 = vmatpush1.bf16.xpose.msra.mxu0 0
    %1331 = vmatprep.subr.bf16.mxu0 0
    %1332 = vmatpush1.bf16.xpose.msra.mxu0 0
    %1333 = vmatprep.subr.bf16.mxu0 0
    %1334 = vmatpush1.bf16.xpose.msra.mxu0 0
    %1335 = vmatprep.subr.bf16.mxu0 0
    %1336 = vmatpush1.bf16.xpose.msra.mxu0 0
    %1337 = vmatprep.subr.bf16.mxu0 0
    %1338 = vmatpush1.bf16.xpose.msra.mxu0 0
    %1339 = vmatprep.subr.bf16.mxu0 0
    %1340 = vmatpush1.bf16.xpose.msra.mxu0 %v1323
    %1341 = vmatprep.subr.bf16.mxu0 0
    %1342 = vmatpush2.bf16.xpose.msra.mxu0 0
    %1343 = vmatprep.subr.bf16.mxu0 0
    %1344 = vmatpush2.bf16.xpose.msra.mxu0 0
    %1345 = vmatprep.subr.bf16.mxu0 0
    %1346 = vmatpush2.bf16.xpose.msra.mxu0 0
    %1347 = vmatprep.subr.bf16.mxu0 0
    %1348 = vmatpush2.bf16.xpose.msra.mxu0 0
    %1349 = vmatprep.subr.bf16.mxu0 0
    %1350 = vmatpush2.bf16.xpose.msra.mxu0 0
    %1351 = vmatprep.subr.bf16.mxu0 0
    %1352 = vmatpush2.bf16.xpose.msra.mxu0 0
    %1353 = vmatprep.subr.bf16.mxu0 0
    %1354 = vmatpush2.bf16.xpose.msra.mxu0 0
    %1355 = vmatprep.subr.bf16.mxu0 0
    %1356 = vmatpush2.bf16.xpose.msra.mxu0 0
    %1357 = vmatprep.mubr.bf16.mxu0 0
    %1358 = vmatmul.mubr.bf16.gmra.mxu0 %v1320
    %v1359 = vpop.f32.mrf.mxu0
    %v1360 = vadd.f32 %v1311, %v1359
    %v1361 = vpop.f32.mrf.mxu0
    %v1362 = vpop.f32.mrf.mxu0
    %v1363 = vpop.f32.mrf.mxu0
    %1364 = vdwg.mxu0
    %v1366 = vsel %vm1318, %v1301, 0
    %v1369 = vsel %vm1318, %v1303, 0
    %1371 = vmatprep.subr.bf16.mxu0 0
    %1372 = vmatpush1.bf16.xpose.msra.mxu0 0
    %1373 = vmatprep.subr.bf16.mxu0 0
    %1374 = vmatpush1.bf16.xpose.msra.mxu0 0
    %1375 = vmatprep.subr.bf16.mxu0 0
    %1376 = vmatpush1.bf16.xpose.msra.mxu0 0
    %1377 = vmatprep.subr.bf16.mxu0 0
    %1378 = vmatpush1.bf16.xpose.msra.mxu0 0
    %1379 = vmatprep.subr.bf16.mxu0 0
    %1380 = vmatpush1.bf16.xpose.msra.mxu0 0
    %1381 = vmatprep.subr.bf16.mxu0 0
    %1382 = vmatpush1.bf16.xpose.msra.mxu0 0
    %1383 = vmatprep.subr.bf16.mxu0 0
    %1384 = vmatpush1.bf16.xpose.msra.mxu0 0
    %1385 = vmatprep.subr.bf16.mxu0 0
    %1386 = vmatpush1.bf16.xpose.msra.mxu0 %v1369
    %1387 = vmatprep.subr.bf16.mxu0 0
    %1388 = vmatpush2.bf16.xpose.msra.mxu0 0
    %1389 = vmatprep.subr.bf16.mxu0 0
    %1390 = vmatpush2.bf16.xpose.msra.mxu0 0
    %1391 = vmatprep.subr.bf16.mxu0 0
    %1392 = vmatpush2.bf16.xpose.msra.mxu0 0
    %1393 = vmatprep.subr.bf16.mxu0 0
    %1394 = vmatpush2.bf16.xpose.msra.mxu0 0
    %1395 = vmatprep.subr.bf16.mxu0 0
    %1396 = vmatpush2.bf16.xpose.msra.mxu0 0
    %1397 = vmatprep.subr.bf16.mxu0 0
    %1398 = vmatpush2.bf16.xpose.msra.mxu0 0
    %1399 = vmatprep.subr.bf16.mxu0 0
    %1400 = vmatpush2.bf16.xpose.msra.mxu0 0
    %1401 = vmatprep.subr.bf16.mxu0 0
    %1402 = vmatpush2.bf16.xpose.msra.mxu0 0
    %1403 = vmatprep.mubr.bf16.mxu0 0
    %1404 = vmatmul.mubr.bf16.gmra.mxu0 %v1366
    %v1405 = vpop.f32.mrf.mxu0
    %v1406 = vadd.f32 %v1315, %v1405
    %v1407 = vpop.f32.mrf.mxu0
    %v1408 = vpop.f32.mrf.mxu0
    %v1409 = vpop.f32.mrf.mxu0
    %1410 = vdwg.mxu0
    %vm1411 = vcmask 64512
    %v1412 = vsel %vm1411, %v1360, -inf
    %1413 = vmax.xlane.f32.xlu0 %v1412
    %v1414 = vpop.xlane.xlu0 %1413
    %v1415 = vsel %vm1411, %v1406, -inf
    %1416 = vmax.xlane.f32.xlu0 %v1415
    %v1417 = vpop.xlane.xlu0 %1416
    %v1418 = vsub.f32 %v1360, %v1414
    %v1419 = vsub.f32 %v1406, %v1417
    %v1420 = vmul.f32 %v1418, 1.442695
    %v1421 = vpow.pop %v1420
    %v1422 = vmul.f32 %v1419, 1.442695
    %v1423 = vpow.pop %v1422
    %v1424 = vsel %vm1411, %v1421, 0.0
    %1425 = vadd.xlane.f32.xlu0 %v1424
    %v1426 = vpop.xlane.xlu0 %1425
    %v1427 = vsel %vm1411, %v1423, 0.0
    %1428 = vadd.xlane.f32.xlu0 %v1427
    %v1429 = vpop.xlane.xlu0 %1428
    %v1430 = vrcp.pop %v1426
    %v1431 = vrcp.pop %v1429
    %v1432 = vmul.f32 %v1421, %v1430
    %v1433 = vmul.f32 %v1423, %v1431
    %v1434 = vpack.c.bf16 %v1432, %v1432
    %v1435 = vpack.c.bf16 %v1433, %v1433
    %v1437 = vsel %vm1411, %v1434, 0
    %vm1439 = vcmask 1043456
    %v1441 = vsel %vm1439, %v1304, 0
    %1443 = vmatprep.subr.bf16.mxu0 0
    %1444 = vmatpush1.bf16.msra.mxu0 0
    %1445 = vmatprep.subr.bf16.mxu0 0
    %1446 = vmatpush1.bf16.msra.mxu0 0
    %1447 = vmatprep.subr.bf16.mxu0 0
    %1448 = vmatpush1.bf16.msra.mxu0 0
    %1449 = vmatprep.subr.bf16.mxu0 0
    %1450 = vmatpush1.bf16.msra.mxu0 0
    %1451 = vmatprep.subr.bf16.mxu0 0
    %1452 = vmatpush1.bf16.msra.mxu0 0
    %1453 = vmatprep.subr.bf16.mxu0 0
    %1454 = vmatpush1.bf16.msra.mxu0 0
    %1455 = vmatprep.subr.bf16.mxu0 0
    %1456 = vmatpush1.bf16.msra.mxu0 0
    %1457 = vmatprep.subr.bf16.mxu0 0
    %1458 = vmatpush1.bf16.msra.mxu0 %v1441
    %1459 = vmatprep.subr.bf16.mxu0 0
    %1460 = vmatpush2.bf16.msra.mxu0 0
    %1461 = vmatprep.subr.bf16.mxu0 0
    %1462 = vmatpush2.bf16.msra.mxu0 0
    %1463 = vmatprep.subr.bf16.mxu0 0
    %1464 = vmatpush2.bf16.msra.mxu0 0
    %1465 = vmatprep.subr.bf16.mxu0 0
    %1466 = vmatpush2.bf16.msra.mxu0 0
    %1467 = vmatprep.subr.bf16.mxu0 0
    %1468 = vmatpush2.bf16.msra.mxu0 0
    %1469 = vmatprep.subr.bf16.mxu0 0
    %1470 = vmatpush2.bf16.msra.mxu0 0
    %1471 = vmatprep.subr.bf16.mxu0 0
    %1472 = vmatpush2.bf16.msra.mxu0 0
    %1473 = vmatprep.subr.bf16.mxu0 0
    %1474 = vmatpush2.bf16.msra.mxu0 0
    %1475 = vmatprep.mubr.bf16.mxu0 0
    %1476 = vmatmul.mubr.bf16.gmra.mxu0 %v1437
    %v1477 = vpop.f32.mrf.mxu0
    %v1478 = vadd.f32 0.0, %v1477
    %v1479 = vpop.f32.mrf.mxu0
    %v1480 = vpop.f32.mrf.mxu0
    %v1481 = vpop.f32.mrf.mxu0
    %1482 = vdwg.mxu0
    %v1484 = vsel %vm1411, %v1435, 0
    %v1487 = vsel %vm1439, %v1305, 0
    %1489 = vmatprep.subr.bf16.mxu0 0
    %1490 = vmatpush1.bf16.msra.mxu0 0
    %1491 = vmatprep.subr.bf16.mxu0 0
    %1492 = vmatpush1.bf16.msra.mxu0 0
    %1493 = vmatprep.subr.bf16.mxu0 0
    %1494 = vmatpush1.bf16.msra.mxu0 0
    %1495 = vmatprep.subr.bf16.mxu0 0
    %1496 = vmatpush1.bf16.msra.mxu0 0
    %1497 = vmatprep.subr.bf16.mxu0 0
    %1498 = vmatpush1.bf16.msra.mxu0 0
    %1499 = vmatprep.subr.bf16.mxu0 0
    %1500 = vmatpush1.bf16.msra.mxu0 0
    %1501 = vmatprep.subr.bf16.mxu0 0
    %1502 = vmatpush1.bf16.msra.mxu0 0
    %1503 = vmatprep.subr.bf16.mxu0 0
    %1504 = vmatpush1.bf16.msra.mxu0 %v1487
    %1505 = vmatprep.subr.bf16.mxu0 0
    %1506 = vmatpush2.bf16.msra.mxu0 0
    %1507 = vmatprep.subr.bf16.mxu0 0
    %1508 = vmatpush2.bf16.msra.mxu0 0
    %1509 = vmatprep.subr.bf16.mxu0 0
    %1510 = vmatpush2.bf16.msra.mxu0 0
    %1511 = vmatprep.subr.bf16.mxu0 0
    %1512 = vmatpush2.bf16.msra.mxu0 0
    %1513 = vmatprep.subr.bf16.mxu0 0
    %1514 = vmatpush2.bf16.msra.mxu0 0
    %1515 = vmatprep.subr.bf16.mxu0 0
    %1516 = vmatpush2.bf16.msra.mxu0 0
    %1517 = vmatprep.subr.bf16.mxu0 0
    %1518 = vmatpush2.bf16.msra.mxu0 0
    %1519 = vmatprep.subr.bf16.mxu0 0
    %1520 = vmatpush2.bf16.msra.mxu0 0
    %1521 = vmatprep.mubr.bf16.mxu0 0
    %1522 = vmatmul.mubr.bf16.gmra.mxu0 %v1484
    %v1523 = vpop.f32.mrf.mxu0
    %v1524 = vadd.f32 0.0, %v1523
    %v1525 = vpop.f32.mrf.mxu0
    %v1526 = vpop.f32.mrf.mxu0
    %v1527 = vpop.f32.mrf.mxu0
    %1528 = vdwg.mxu0
    %1530 = vrot.lane.b32.xlu0 %v1300, 96
    %v1531 = vpop.permute.xlu0 %1530
    %1533 = vrot.lane.b32.xlu0 %v1302, 96
    %v1534 = vpop.permute.xlu0 %1533
    %v1536 = vsel %vm1318, %v1531, 0
    %v1539 = vsel %vm1318, %v1534, 0
    %1541 = vmatprep.subr.bf16.mxu0 0
    %1542 = vmatpush1.bf16.xpose.msra.mxu0 0
    %1543 = vmatprep.subr.bf16.mxu0 0
    %1544 = vmatpush1.bf16.xpose.msra.mxu0 0
    %1545 = vmatprep.subr.bf16.mxu0 0
    %1546 = vmatpush1.bf16.xpose.msra.mxu0 0
    %1547 = vmatprep.subr.bf16.mxu0 0
    %1548 = vmatpush1.bf16.xpose.msra.mxu0 0
    %1549 = vmatprep.subr.bf16.mxu0 0
    %1550 = vmatpush1.bf16.xpose.msra.mxu0 0
    %1551 = vmatprep.subr.bf16.mxu0 0
    %1552 = vmatpush1.bf16.xpose.msra.mxu0 0
    %1553 = vmatprep.subr.bf16.mxu0 0
    %1554 = vmatpush1.bf16.xpose.msra.mxu0 0
    %1555 = vmatprep.subr.bf16.mxu0 0
    %1556 = vmatpush1.bf16.xpose.msra.mxu0 %v1539
    %1557 = vmatprep.subr.bf16.mxu0 0
    %1558 = vmatpush2.bf16.xpose.msra.mxu0 0
    %1559 = vmatprep.subr.bf16.mxu0 0
    %1560 = vmatpush2.bf16.xpose.msra.mxu0 0
    %1561 = vmatprep.subr.bf16.mxu0 0
    %1562 = vmatpush2.bf16.xpose.msra.mxu0 0
    %1563 = vmatprep.subr.bf16.mxu0 0
    %1564 = vmatpush2.bf16.xpose.msra.mxu0 0
    %1565 = vmatprep.subr.bf16.mxu0 0
    %1566 = vmatpush2.bf16.xpose.msra.mxu0 0
    %1567 = vmatprep.subr.bf16.mxu0 0
    %1568 = vmatpush2.bf16.xpose.msra.mxu0 0
    %1569 = vmatprep.subr.bf16.mxu0 0
    %1570 = vmatpush2.bf16.xpose.msra.mxu0 0
    %1571 = vmatprep.subr.bf16.mxu0 0
    %1572 = vmatpush2.bf16.xpose.msra.mxu0 0
    %1573 = vmatprep.mubr.bf16.mxu0 0
    %1574 = vmatmul.mubr.bf16.gmra.mxu0 %v1536
    %v1575 = vpop.f32.mrf.mxu0
    %v1576 = vadd.f32 %v1311, %v1575
    %v1577 = vpop.f32.mrf.mxu0
    %v1578 = vpop.f32.mrf.mxu0
    %v1579 = vpop.f32.mrf.mxu0
    %1580 = vdwg.mxu0
    %1582 = vrot.lane.b32.xlu0 %v1301, 96
    %v1583 = vpop.permute.xlu0 %1582
    %1585 = vrot.lane.b32.xlu0 %v1303, 96
    %v1586 = vpop.permute.xlu0 %1585
    %v1588 = vsel %vm1318, %v1583, 0
    %v1591 = vsel %vm1318, %v1586, 0
    %1593 = vmatprep.subr.bf16.mxu0 0
    %1594 = vmatpush1.bf16.xpose.msra.mxu0 0
    %1595 = vmatprep.subr.bf16.mxu0 0
    %1596 = vmatpush1.bf16.xpose.msra.mxu0 0
    %1597 = vmatprep.subr.bf16.mxu0 0
    %1598 = vmatpush1.bf16.xpose.msra.mxu0 0
    %1599 = vmatprep.subr.bf16.mxu0 0
    %1600 = vmatpush1.bf16.xpose.msra.mxu0 0
    %1601 = vmatprep.subr.bf16.mxu0 0
    %1602 = vmatpush1.bf16.xpose.msra.mxu0 0
    %1603 = vmatprep.subr.bf16.mxu0 0
    %1604 = vmatpush1.bf16.xpose.msra.mxu0 0
    %1605 = vmatprep.subr.bf16.mxu0 0
    %1606 = vmatpush1.bf16.xpose.msra.mxu0 0
    %1607 = vmatprep.subr.bf16.mxu0 0
    %1608 = vmatpush1.bf16.xpose.msra.mxu0 %v1591
    %1609 = vmatprep.subr.bf16.mxu0 0
    %1610 = vmatpush2.bf16.xpose.msra.mxu0 0
    %1611 = vmatprep.subr.bf16.mxu0 0
    %1612 = vmatpush2.bf16.xpose.msra.mxu0 0
    %1613 = vmatprep.subr.bf16.mxu0 0
    %1614 = vmatpush2.bf16.xpose.msra.mxu0 0
    %1615 = vmatprep.subr.bf16.mxu0 0
    %1616 = vmatpush2.bf16.xpose.msra.mxu0 0
    %1617 = vmatprep.subr.bf16.mxu0 0
    %1618 = vmatpush2.bf16.xpose.msra.mxu0 0
    %1619 = vmatprep.subr.bf16.mxu0 0
    %1620 = vmatpush2.bf16.xpose.msra.mxu0 0
    %1621 = vmatprep.subr.bf16.mxu0 0
    %1622 = vmatpush2.bf16.xpose.msra.mxu0 0
    %1623 = vmatprep.subr.bf16.mxu0 0
    %1624 = vmatpush2.bf16.xpose.msra.mxu0 0
    %1625 = vmatprep.mubr.bf16.mxu0 0
    %1626 = vmatmul.mubr.bf16.gmra.mxu0 %v1588
    %v1627 = vpop.f32.mrf.mxu0
    %v1628 = vadd.f32 %v1315, %v1627
    %v1629 = vpop.f32.mrf.mxu0
    %v1630 = vpop.f32.mrf.mxu0
    %v1631 = vpop.f32.mrf.mxu0
    %1632 = vdwg.mxu0
    %v1633 = vsel %vm1411, %v1576, -inf
    %1634 = vmax.xlane.f32.xlu0 %v1633
    %v1635 = vpop.xlane.xlu0 %1634
    %v1636 = vsel %vm1411, %v1628, -inf
    %1637 = vmax.xlane.f32.xlu0 %v1636
    %v1638 = vpop.xlane.xlu0 %1637
    %v1639 = vsub.f32 %v1576, %v1635
    %v1640 = vsub.f32 %v1628, %v1638
    %v1641 = vmul.f32 %v1639, 1.442695
    %v1642 = vpow.pop %v1641
    %v1643 = vmul.f32 %v1640, 1.442695
    %v1644 = vpow.pop %v1643
    %v1645 = vsel %vm1411, %v1642, 0.0
    %1646 = vadd.xlane.f32.xlu0 %v1645
    %v1647 = vpop.xlane.xlu0 %1646
    %v1648 = vsel %vm1411, %v1644, 0.0
    %1649 = vadd.xlane.f32.xlu0 %v1648
    %v1650 = vpop.xlane.xlu0 %1649
    %v1651 = vrcp.pop %v1647
    %v1652 = vrcp.pop %v1650
    %v1653 = vmul.f32 %v1642, %v1651
    %v1654 = vmul.f32 %v1644, %v1652
    %v1655 = vpack.c.bf16 %v1653, %v1653
    %v1656 = vpack.c.bf16 %v1654, %v1654
    %1658 = vrot.lane.b32.xlu0 %v1304, 96
    %v1659 = vpop.permute.xlu0 %1658
    %v1661 = vsel %vm1411, %v1655, 0
    %v1664 = vsel %vm1439, %v1659, 0
    %1666 = vmatprep.subr.bf16.mxu0 0
    %1667 = vmatpush1.bf16.msra.mxu0 0
    %1668 = vmatprep.subr.bf16.mxu0 0
    %1669 = vmatpush1.bf16.msra.mxu0 0
    %1670 = vmatprep.subr.bf16.mxu0 0
    %1671 = vmatpush1.bf16.msra.mxu0 0
    %1672 = vmatprep.subr.bf16.mxu0 0
    %1673 = vmatpush1.bf16.msra.mxu0 0
    %1674 = vmatprep.subr.bf16.mxu0 0
    %1675 = vmatpush1.bf16.msra.mxu0 0
    %1676 = vmatprep.subr.bf16.mxu0 0
    %1677 = vmatpush1.bf16.msra.mxu0 0
    %1678 = vmatprep.subr.bf16.mxu0 0
    %1679 = vmatpush1.bf16.msra.mxu0 0
    %1680 = vmatprep.subr.bf16.mxu0 0
    %1681 = vmatpush1.bf16.msra.mxu0 %v1664
    %1682 = vmatprep.subr.bf16.mxu0 0
    %1683 = vmatpush2.bf16.msra.mxu0 0
    %1684 = vmatprep.subr.bf16.mxu0 0
    %1685 = vmatpush2.bf16.msra.mxu0 0
    %1686 = vmatprep.subr.bf16.mxu0 0
    %1687 = vmatpush2.bf16.msra.mxu0 0
    %1688 = vmatprep.subr.bf16.mxu0 0
    %1689 = vmatpush2.bf16.msra.mxu0 0
    %1690 = vmatprep.subr.bf16.mxu0 0
    %1691 = vmatpush2.bf16.msra.mxu0 0
    %1692 = vmatprep.subr.bf16.mxu0 0
    %1693 = vmatpush2.bf16.msra.mxu0 0
    %1694 = vmatprep.subr.bf16.mxu0 0
    %1695 = vmatpush2.bf16.msra.mxu0 0
    %1696 = vmatprep.subr.bf16.mxu0 0
    %1697 = vmatpush2.bf16.msra.mxu0 0
    %1698 = vmatprep.mubr.bf16.mxu0 0
    %1699 = vmatmul.mubr.bf16.gmra.mxu0 %v1661
    %v1700 = vpop.f32.mrf.mxu0
    %v1701 = vadd.f32 0.0, %v1700
    %v1702 = vpop.f32.mrf.mxu0
    %v1703 = vpop.f32.mrf.mxu0
    %v1704 = vpop.f32.mrf.mxu0
    %1705 = vdwg.mxu0
    %1707 = vrot.lane.b32.xlu0 %v1305, 96
    %v1708 = vpop.permute.xlu0 %1707
    %v1710 = vsel %vm1411, %v1656, 0
    %v1713 = vsel %vm1439, %v1708, 0
    %1715 = vmatprep.subr.bf16.mxu0 0
    %1716 = vmatpush1.bf16.msra.mxu0 0
    %1717 = vmatprep.subr.bf16.mxu0 0
    %1718 = vmatpush1.bf16.msra.mxu0 0
    %1719 = vmatprep.subr.bf16.mxu0 0
    %1720 = vmatpush1.bf16.msra.mxu0 0
    %1721 = vmatprep.subr.bf16.mxu0 0
    %1722 = vmatpush1.bf16.msra.mxu0 0
    %1723 = vmatprep.subr.bf16.mxu0 0
    %1724 = vmatpush1.bf16.msra.mxu0 0
    %1725 = vmatprep.subr.bf16.mxu0 0
    %1726 = vmatpush1.bf16.msra.mxu0 0
    %1727 = vmatprep.subr.bf16.mxu0 0
    %1728 = vmatpush1.bf16.msra.mxu0 0
    %1729 = vmatprep.subr.bf16.mxu0 0
    %1730 = vmatpush1.bf16.msra.mxu0 %v1713
    %1731 = vmatprep.subr.bf16.mxu0 0
    %1732 = vmatpush2.bf16.msra.mxu0 0
    %1733 = vmatprep.subr.bf16.mxu0 0
    %1734 = vmatpush2.bf16.msra.mxu0 0
    %1735 = vmatprep.subr.bf16.mxu0 0
    %1736 = vmatpush2.bf16.msra.mxu0 0
    %1737 = vmatprep.subr.bf16.mxu0 0
    %1738 = vmatpush2.bf16.msra.mxu0 0
    %1739 = vmatprep.subr.bf16.mxu0 0
    %1740 = vmatpush2.bf16.msra.mxu0 0
    %1741 = vmatprep.subr.bf16.mxu0 0
    %1742 = vmatpush2.bf16.msra.mxu0 0
    %1743 = vmatprep.subr.bf16.mxu0 0
    %1744 = vmatpush2.bf16.msra.mxu0 0
    %1745 = vmatprep.subr.bf16.mxu0 0
    %1746 = vmatpush2.bf16.msra.mxu0 0
    %1747 = vmatprep.mubr.bf16.mxu0 0
    %1748 = vmatmul.mubr.bf16.gmra.mxu0 %v1710
    %v1749 = vpop.f32.mrf.mxu0
    %v1750 = vadd.f32 0.0, %v1749
    %v1751 = vpop.f32.mrf.mxu0
    %v1752 = vpop.f32.mrf.mxu0
    %v1753 = vpop.f32.mrf.mxu0
    %1754 = vdwg.mxu0
    %1755 = vrot.lane.b32.xlu0 %v1300, 64
    %v1756 = vpop.permute.xlu0 %1755
    %1757 = vrot.lane.b32.xlu0 %v1302, 64
    %v1758 = vpop.permute.xlu0 %1757
    %v1760 = vsel %vm1318, %v1756, 0
    %v1763 = vsel %vm1318, %v1758, 0
    %1765 = vmatprep.subr.bf16.mxu0 0
    %1766 = vmatpush1.bf16.xpose.msra.mxu0 0
    %1767 = vmatprep.subr.bf16.mxu0 0
    %1768 = vmatpush1.bf16.xpose.msra.mxu0 0
    %1769 = vmatprep.subr.bf16.mxu0 0
    %1770 = vmatpush1.bf16.xpose.msra.mxu0 0
    %1771 = vmatprep.subr.bf16.mxu0 0
    %1772 = vmatpush1.bf16.xpose.msra.mxu0 0
    %1773 = vmatprep.subr.bf16.mxu0 0
    %1774 = vmatpush1.bf16.xpose.msra.mxu0 0
    %1775 = vmatprep.subr.bf16.mxu0 0
    %1776 = vmatpush1.bf16.xpose.msra.mxu0 0
    %1777 = vmatprep.subr.bf16.mxu0 0
    %1778 = vmatpush1.bf16.xpose.msra.mxu0 0
    %1779 = vmatprep.subr.bf16.mxu0 0
    %1780 = vmatpush1.bf16.xpose.msra.mxu0 %v1763
    %1781 = vmatprep.subr.bf16.mxu0 0
    %1782 = vmatpush2.bf16.xpose.msra.mxu0 0
    %1783 = vmatprep.subr.bf16.mxu0 0
    %1784 = vmatpush2.bf16.xpose.msra.mxu0 0
    %1785 = vmatprep.subr.bf16.mxu0 0
    %1786 = vmatpush2.bf16.xpose.msra.mxu0 0
    %1787 = vmatprep.subr.bf16.mxu0 0
    %1788 = vmatpush2.bf16.xpose.msra.mxu0 0
    %1789 = vmatprep.subr.bf16.mxu0 0
    %1790 = vmatpush2.bf16.xpose.msra.mxu0 0
    %1791 = vmatprep.subr.bf16.mxu0 0
    %1792 = vmatpush2.bf16.xpose.msra.mxu0 0
    %1793 = vmatprep.subr.bf16.mxu0 0
    %1794 = vmatpush2.bf16.xpose.msra.mxu0 0
    %1795 = vmatprep.subr.bf16.mxu0 0
    %1796 = vmatpush2.bf16.xpose.msra.mxu0 0
    %1797 = vmatprep.mubr.bf16.mxu0 0
    %1798 = vmatmul.mubr.bf16.gmra.mxu0 %v1760
    %v1799 = vpop.f32.mrf.mxu0
    %v1800 = vadd.f32 %v1311, %v1799
    %v1801 = vpop.f32.mrf.mxu0
    %v1802 = vpop.f32.mrf.mxu0
    %v1803 = vpop.f32.mrf.mxu0
    %1804 = vdwg.mxu0
    %1805 = vrot.lane.b32.xlu0 %v1301, 64
    %v1806 = vpop.permute.xlu0 %1805
    %1807 = vrot.lane.b32.xlu0 %v1303, 64
    %v1808 = vpop.permute.xlu0 %1807
    %v1810 = vsel %vm1318, %v1806, 0
    %v1813 = vsel %vm1318, %v1808, 0
    %1815 = vmatprep.subr.bf16.mxu0 0
    %1816 = vmatpush1.bf16.xpose.msra.mxu0 0
    %1817 = vmatprep.subr.bf16.mxu0 0
    %1818 = vmatpush1.bf16.xpose.msra.mxu0 0
    %1819 = vmatprep.subr.bf16.mxu0 0
    %1820 = vmatpush1.bf16.xpose.msra.mxu0 0
    %1821 = vmatprep.subr.bf16.mxu0 0
    %1822 = vmatpush1.bf16.xpose.msra.mxu0 0
    %1823 = vmatprep.subr.bf16.mxu0 0
    %1824 = vmatpush1.bf16.xpose.msra.mxu0 0
    %1825 = vmatprep.subr.bf16.mxu0 0
    %1826 = vmatpush1.bf16.xpose.msra.mxu0 0
    %1827 = vmatprep.subr.bf16.mxu0 0
    %1828 = vmatpush1.bf16.xpose.msra.mxu0 0
    %1829 = vmatprep.subr.bf16.mxu0 0
    %1830 = vmatpush1.bf16.xpose.msra.mxu0 %v1813
    %1831 = vmatprep.subr.bf16.mxu0 0
    %1832 = vmatpush2.bf16.xpose.msra.mxu0 0
    %1833 = vmatprep.subr.bf16.mxu0 0
    %1834 = vmatpush2.bf16.xpose.msra.mxu0 0
    %1835 = vmatprep.subr.bf16.mxu0 0
    %1836 = vmatpush2.bf16.xpose.msra.mxu0 0
    %1837 = vmatprep.subr.bf16.mxu0 0
    %1838 = vmatpush2.bf16.xpose.msra.mxu0 0
    %1839 = vmatprep.subr.bf16.mxu0 0
    %1840 = vmatpush2.bf16.xpose.msra.mxu0 0
    %1841 = vmatprep.subr.bf16.mxu0 0
    %1842 = vmatpush2.bf16.xpose.msra.mxu0 0
    %1843 = vmatprep.subr.bf16.mxu0 0
    %1844 = vmatpush2.bf16.xpose.msra.mxu0 0
    %1845 = vmatprep.subr.bf16.mxu0 0
    %1846 = vmatpush2.bf16.xpose.msra.mxu0 0
    %1847 = vmatprep.mubr.bf16.mxu0 0
    %1848 = vmatmul.mubr.bf16.gmra.mxu0 %v1810
    %v1849 = vpop.f32.mrf.mxu0
    %v1850 = vadd.f32 %v1315, %v1849
    %v1851 = vpop.f32.mrf.mxu0
    %v1852 = vpop.f32.mrf.mxu0
    %v1853 = vpop.f32.mrf.mxu0
    %1854 = vdwg.mxu0
    %v1855 = vsel %vm1411, %v1800, -inf
    %1856 = vmax.xlane.f32.xlu0 %v1855
    %v1857 = vpop.xlane.xlu0 %1856
    %v1858 = vsel %vm1411, %v1850, -inf
    %1859 = vmax.xlane.f32.xlu0 %v1858
    %v1860 = vpop.xlane.xlu0 %1859
    %v1861 = vsub.f32 %v1800, %v1857
    %v1862 = vsub.f32 %v1850, %v1860
    %v1863 = vmul.f32 %v1861, 1.442695
    %v1864 = vpow.pop %v1863
    %v1865 = vmul.f32 %v1862, 1.442695
    %v1866 = vpow.pop %v1865
    %v1867 = vsel %vm1411, %v1864, 0.0
    %1868 = vadd.xlane.f32.xlu0 %v1867
    %v1869 = vpop.xlane.xlu0 %1868
    %v1870 = vsel %vm1411, %v1866, 0.0
    %1871 = vadd.xlane.f32.xlu0 %v1870
    %v1872 = vpop.xlane.xlu0 %1871
    %v1873 = vrcp.pop %v1869
    %v1874 = vrcp.pop %v1872
    %v1875 = vmul.f32 %v1864, %v1873
    %v1876 = vmul.f32 %v1866, %v1874
    %v1877 = vpack.c.bf16 %v1875, %v1875
    %v1878 = vpack.c.bf16 %v1876, %v1876
    %1879 = vrot.lane.b32.xlu0 %v1304, 64
    %v1880 = vpop.permute.xlu0 %1879
    %v1882 = vsel %vm1411, %v1877, 0
    %v1885 = vsel %vm1439, %v1880, 0
    %1887 = vmatprep.subr.bf16.mxu0 0
    %1888 = vmatpush1.bf16.msra.mxu0 0
    %1889 = vmatprep.subr.bf16.mxu0 0
    %1890 = vmatpush1.bf16.msra.mxu0 0
    %1891 = vmatprep.subr.bf16.mxu0 0
    %1892 = vmatpush1.bf16.msra.mxu0 0
    %1893 = vmatprep.subr.bf16.mxu0 0
    %1894 = vmatpush1.bf16.msra.mxu0 0
    %1895 = vmatprep.subr.bf16.mxu0 0
    %1896 = vmatpush1.bf16.msra.mxu0 0
    %1897 = vmatprep.subr.bf16.mxu0 0
    %1898 = vmatpush1.bf16.msra.mxu0 0
    %1899 = vmatprep.subr.bf16.mxu0 0
    %1900 = vmatpush1.bf16.msra.mxu0 0
    %1901 = vmatprep.subr.bf16.mxu0 0
    %1902 = vmatpush1.bf16.msra.mxu0 %v1885
    %1903 = vmatprep.subr.bf16.mxu0 0
    %1904 = vmatpush2.bf16.msra.mxu0 0
    %1905 = vmatprep.subr.bf16.mxu0 0
    %1906 = vmatpush2.bf16.msra.mxu0 0
    %1907 = vmatprep.subr.bf16.mxu0 0
    %1908 = vmatpush2.bf16.msra.mxu0 0
    %1909 = vmatprep.subr.bf16.mxu0 0
    %1910 = vmatpush2.bf16.msra.mxu0 0
    %1911 = vmatprep.subr.bf16.mxu0 0
    %1912 = vmatpush2.bf16.msra.mxu0 0
    %1913 = vmatprep.subr.bf16.mxu0 0
    %1914 = vmatpush2.bf16.msra.mxu0 0
    %1915 = vmatprep.subr.bf16.mxu0 0
    %1916 = vmatpush2.bf16.msra.mxu0 0
    %1917 = vmatprep.subr.bf16.mxu0 0
    %1918 = vmatpush2.bf16.msra.mxu0 0
    %1919 = vmatprep.mubr.bf16.mxu0 0
    %1920 = vmatmul.mubr.bf16.gmra.mxu0 %v1882
    %v1921 = vpop.f32.mrf.mxu0
    %v1922 = vadd.f32 0.0, %v1921
    %v1923 = vpop.f32.mrf.mxu0
    %v1924 = vpop.f32.mrf.mxu0
    %v1925 = vpop.f32.mrf.mxu0
    %1926 = vdwg.mxu0
    %1927 = vrot.lane.b32.xlu0 %v1305, 64
    %v1928 = vpop.permute.xlu0 %1927
    %v1930 = vsel %vm1411, %v1878, 0
    %v1933 = vsel %vm1439, %v1928, 0
    %1935 = vmatprep.subr.bf16.mxu0 0
    %1936 = vmatpush1.bf16.msra.mxu0 0
    %1937 = vmatprep.subr.bf16.mxu0 0
    %1938 = vmatpush1.bf16.msra.mxu0 0
    %1939 = vmatprep.subr.bf16.mxu0 0
    %1940 = vmatpush1.bf16.msra.mxu0 0
    %1941 = vmatprep.subr.bf16.mxu0 0
    %1942 = vmatpush1.bf16.msra.mxu0 0
    %1943 = vmatprep.subr.bf16.mxu0 0
    %1944 = vmatpush1.bf16.msra.mxu0 0
    %1945 = vmatprep.subr.bf16.mxu0 0
    %1946 = vmatpush1.bf16.msra.mxu0 0
    %1947 = vmatprep.subr.bf16.mxu0 0
    %1948 = vmatpush1.bf16.msra.mxu0 0
    %1949 = vmatprep.subr.bf16.mxu0 0
    %1950 = vmatpush1.bf16.msra.mxu0 %v1933
    %1951 = vmatprep.subr.bf16.mxu0 0
    %1952 = vmatpush2.bf16.msra.mxu0 0
    %1953 = vmatprep.subr.bf16.mxu0 0
    %1954 = vmatpush2.bf16.msra.mxu0 0
    %1955 = vmatprep.subr.bf16.mxu0 0
    %1956 = vmatpush2.bf16.msra.mxu0 0
    %1957 = vmatprep.subr.bf16.mxu0 0
    %1958 = vmatpush2.bf16.msra.mxu0 0
    %1959 = vmatprep.subr.bf16.mxu0 0
    %1960 = vmatpush2.bf16.msra.mxu0 0
    %1961 = vmatprep.subr.bf16.mxu0 0
    %1962 = vmatpush2.bf16.msra.mxu0 0
    %1963 = vmatprep.subr.bf16.mxu0 0
    %1964 = vmatpush2.bf16.msra.mxu0 0
    %1965 = vmatprep.subr.bf16.mxu0 0
    %1966 = vmatpush2.bf16.msra.mxu0 0
    %1967 = vmatprep.mubr.bf16.mxu0 0
    %1968 = vmatmul.mubr.bf16.gmra.mxu0 %v1930
    %v1969 = vpop.f32.mrf.mxu0
    %v1970 = vadd.f32 0.0, %v1969
    %v1971 = vpop.f32.mrf.mxu0
    %v1972 = vpop.f32.mrf.mxu0
    %v1973 = vpop.f32.mrf.mxu0
    %1974 = vdwg.mxu0
    %1975 = vrot.lane.b32.xlu0 %v1300, 32
    %v1976 = vpop.permute.xlu0 %1975
    %1977 = vrot.lane.b32.xlu0 %v1302, 32
    %v1978 = vpop.permute.xlu0 %1977
    %v1980 = vsel %vm1318, %v1976, 0
    %v1983 = vsel %vm1318, %v1978, 0
    %1985 = vmatprep.subr.bf16.mxu0 0
    %1986 = vmatpush1.bf16.xpose.msra.mxu0 0
    %1987 = vmatprep.subr.bf16.mxu0 0
    %1988 = vmatpush1.bf16.xpose.msra.mxu0 0
    %1989 = vmatprep.subr.bf16.mxu0 0
    %1990 = vmatpush1.bf16.xpose.msra.mxu0 0
    %1991 = vmatprep.subr.bf16.mxu0 0
    %1992 = vmatpush1.bf16.xpose.msra.mxu0 0
    %1993 = vmatprep.subr.bf16.mxu0 0
    %1994 = vmatpush1.bf16.xpose.msra.mxu0 0
    %1995 = vmatprep.subr.bf16.mxu0 0
    %1996 = vmatpush1.bf16.xpose.msra.mxu0 0
    %1997 = vmatprep.subr.bf16.mxu0 0
    %1998 = vmatpush1.bf16.xpose.msra.mxu0 0
    %1999 = vmatprep.subr.bf16.mxu0 0
    %2000 = vmatpush1.bf16.xpose.msra.mxu0 %v1983
    %2001 = vmatprep.subr.bf16.mxu0 0
    %2002 = vmatpush2.bf16.xpose.msra.mxu0 0
    %2003 = vmatprep.subr.bf16.mxu0 0
    %2004 = vmatpush2.bf16.xpose.msra.mxu0 0
    %2005 = vmatprep.subr.bf16.mxu0 0
    %2006 = vmatpush2.bf16.xpose.msra.mxu0 0
    %2007 = vmatprep.subr.bf16.mxu0 0
    %2008 = vmatpush2.bf16.xpose.msra.mxu0 0
    %2009 = vmatprep.subr.bf16.mxu0 0
    %2010 = vmatpush2.bf16.xpose.msra.mxu0 0
    %2011 = vmatprep.subr.bf16.mxu0 0
    %2012 = vmatpush2.bf16.xpose.msra.mxu0 0
    %2013 = vmatprep.subr.bf16.mxu0 0
    %2014 = vmatpush2.bf16.xpose.msra.mxu0 0
    %2015 = vmatprep.subr.bf16.mxu0 0
    %2016 = vmatpush2.bf16.xpose.msra.mxu0 0
    %2017 = vmatprep.mubr.bf16.mxu0 0
    %2018 = vmatmul.mubr.bf16.gmra.mxu0 %v1980
    %v2019 = vpop.f32.mrf.mxu0
    %v2020 = vadd.f32 %v1311, %v2019
    %v2021 = vpop.f32.mrf.mxu0
    %v2022 = vpop.f32.mrf.mxu0
    %v2023 = vpop.f32.mrf.mxu0
    %2024 = vdwg.mxu0
    %2025 = vrot.lane.b32.xlu0 %v1301, 32
    %v2026 = vpop.permute.xlu0 %2025
    %2027 = vrot.lane.b32.xlu0 %v1303, 32
    %v2028 = vpop.permute.xlu0 %2027
    %v2030 = vsel %vm1318, %v2026, 0
    %v2033 = vsel %vm1318, %v2028, 0
    %2035 = vmatprep.subr.bf16.mxu0 0
    %2036 = vmatpush1.bf16.xpose.msra.mxu0 0
    %2037 = vmatprep.subr.bf16.mxu0 0
    %2038 = vmatpush1.bf16.xpose.msra.mxu0 0
    %2039 = vmatprep.subr.bf16.mxu0 0
    %2040 = vmatpush1.bf16.xpose.msra.mxu0 0
    %2041 = vmatprep.subr.bf16.mxu0 0
    %2042 = vmatpush1.bf16.xpose.msra.mxu0 0
    %2043 = vmatprep.subr.bf16.mxu0 0
    %2044 = vmatpush1.bf16.xpose.msra.mxu0 0
    %2045 = vmatprep.subr.bf16.mxu0 0
    %2046 = vmatpush1.bf16.xpose.msra.mxu0 0
    %2047 = vmatprep.subr.bf16.mxu0 0
    %2048 = vmatpush1.bf16.xpose.msra.mxu0 0
    %2049 = vmatprep.subr.bf16.mxu0 0
    %2050 = vmatpush1.bf16.xpose.msra.mxu0 %v2033
    %2051 = vmatprep.subr.bf16.mxu0 0
    %2052 = vmatpush2.bf16.xpose.msra.mxu0 0
    %2053 = vmatprep.subr.bf16.mxu0 0
    %2054 = vmatpush2.bf16.xpose.msra.mxu0 0
    %2055 = vmatprep.subr.bf16.mxu0 0
    %2056 = vmatpush2.bf16.xpose.msra.mxu0 0
    %2057 = vmatprep.subr.bf16.mxu0 0
    %2058 = vmatpush2.bf16.xpose.msra.mxu0 0
    %2059 = vmatprep.subr.bf16.mxu0 0
    %2060 = vmatpush2.bf16.xpose.msra.mxu0 0
    %2061 = vmatprep.subr.bf16.mxu0 0
    %2062 = vmatpush2.bf16.xpose.msra.mxu0 0
    %2063 = vmatprep.subr.bf16.mxu0 0
    %2064 = vmatpush2.bf16.xpose.msra.mxu0 0
    %2065 = vmatprep.subr.bf16.mxu0 0
    %2066 = vmatpush2.bf16.xpose.msra.mxu0 0
    %2067 = vmatprep.mubr.bf16.mxu0 0
    %2068 = vmatmul.mubr.bf16.gmra.mxu0 %v2030
    %v2069 = vpop.f32.mrf.mxu0
    %v2070 = vadd.f32 %v1315, %v2069
    %v2071 = vpop.f32.mrf.mxu0
    %v2072 = vpop.f32.mrf.mxu0
    %v2073 = vpop.f32.mrf.mxu0
    %2074 = vdwg.mxu0
    %v2075 = vsel %vm1411, %v2020, -inf
    %2076 = vmax.xlane.f32.xlu0 %v2075
    %v2077 = vpop.xlane.xlu0 %2076
    %v2078 = vsel %vm1411, %v2070, -inf
    %2079 = vmax.xlane.f32.xlu0 %v2078
    %v2080 = vpop.xlane.xlu0 %2079
    %v2081 = vsub.f32 %v2020, %v2077
    %v2082 = vsub.f32 %v2070, %v2080
    %v2083 = vmul.f32 %v2081, 1.442695
    %v2084 = vpow.pop %v2083
    %v2085 = vmul.f32 %v2082, 1.442695
    %v2086 = vpow.pop %v2085
    %v2087 = vsel %vm1411, %v2084, 0.0
    %2088 = vadd.xlane.f32.xlu0 %v2087
    %v2089 = vpop.xlane.xlu0 %2088
    %v2090 = vsel %vm1411, %v2086, 0.0
    %2091 = vadd.xlane.f32.xlu0 %v2090
    %v2092 = vpop.xlane.xlu0 %2091
    %v2093 = vrcp.pop %v2089
    %v2094 = vrcp.pop %v2092
    %v2095 = vmul.f32 %v2084, %v2093
    %v2096 = vmul.f32 %v2086, %v2094
    %v2097 = vpack.c.bf16 %v2095, %v2095
    %v2098 = vpack.c.bf16 %v2096, %v2096
    %2099 = vrot.lane.b32.xlu0 %v1304, 32
    %v2100 = vpop.permute.xlu0 %2099
    %v2102 = vsel %vm1411, %v2097, 0
    %v2105 = vsel %vm1439, %v2100, 0
    %2107 = vmatprep.subr.bf16.mxu0 0
    %2108 = vmatpush1.bf16.msra.mxu0 0
    %2109 = vmatprep.subr.bf16.mxu0 0
    %2110 = vmatpush1.bf16.msra.mxu0 0
    %2111 = vmatprep.subr.bf16.mxu0 0
    %2112 = vmatpush1.bf16.msra.mxu0 0
    %2113 = vmatprep.subr.bf16.mxu0 0
    %2114 = vmatpush1.bf16.msra.mxu0 0
    %2115 = vmatprep.subr.bf16.mxu0 0
    %2116 = vmatpush1.bf16.msra.mxu0 0
    %2117 = vmatprep.subr.bf16.mxu0 0
    %2118 = vmatpush1.bf16.msra.mxu0 0
    %2119 = vmatprep.subr.bf16.mxu0 0
    %2120 = vmatpush1.bf16.msra.mxu0 0
    %2121 = vmatprep.subr.bf16.mxu0 0
    %2122 = vmatpush1.bf16.msra.mxu0 %v2105
    %2123 = vmatprep.subr.bf16.mxu0 0
    %2124 = vmatpush2.bf16.msra.mxu0 0
    %2125 = vmatprep.subr.bf16.mxu0 0
    %2126 = vmatpush2.bf16.msra.mxu0 0
    %2127 = vmatprep.subr.bf16.mxu0 0
    %2128 = vmatpush2.bf16.msra.mxu0 0
    %2129 = vmatprep.subr.bf16.mxu0 0
    %2130 = vmatpush2.bf16.msra.mxu0 0
    %2131 = vmatprep.subr.bf16.mxu0 0
    %2132 = vmatpush2.bf16.msra.mxu0 0
    %2133 = vmatprep.subr.bf16.mxu0 0
    %2134 = vmatpush2.bf16.msra.mxu0 0
    %2135 = vmatprep.subr.bf16.mxu0 0
    %2136 = vmatpush2.bf16.msra.mxu0 0
    %2137 = vmatprep.subr.bf16.mxu0 0
    %2138 = vmatpush2.bf16.msra.mxu0 0
    %2139 = vmatprep.mubr.bf16.mxu0 0
    %2140 = vmatmul.mubr.bf16.gmra.mxu0 %v2102
    %v2141 = vpop.f32.mrf.mxu0
    %v2142 = vadd.f32 0.0, %v2141
    %v2143 = vpop.f32.mrf.mxu0
    %v2144 = vpop.f32.mrf.mxu0
    %v2145 = vpop.f32.mrf.mxu0
    %2146 = vdwg.mxu0
    %2147 = vrot.lane.b32.xlu0 %v1305, 32
    %v2148 = vpop.permute.xlu0 %2147
    %v2150 = vsel %vm1411, %v2098, 0
    %v2153 = vsel %vm1439, %v2148, 0
    %2155 = vmatprep.subr.bf16.mxu0 0
    %2156 = vmatpush1.bf16.msra.mxu0 0
    %2157 = vmatprep.subr.bf16.mxu0 0
    %2158 = vmatpush1.bf16.msra.mxu0 0
    %2159 = vmatprep.subr.bf16.mxu0 0
    %2160 = vmatpush1.bf16.msra.mxu0 0
    %2161 = vmatprep.subr.bf16.mxu0 0
    %2162 = vmatpush1.bf16.msra.mxu0 0
    %2163 = vmatprep.subr.bf16.mxu0 0
    %2164 = vmatpush1.bf16.msra.mxu0 0
    %2165 = vmatprep.subr.bf16.mxu0 0
    %2166 = vmatpush1.bf16.msra.mxu0 0
    %2167 = vmatprep.subr.bf16.mxu0 0
    %2168 = vmatpush1.bf16.msra.mxu0 0
    %2169 = vmatprep.subr.bf16.mxu0 0
    %2170 = vmatpush1.bf16.msra.mxu0 %v2153
    %2171 = vmatprep.subr.bf16.mxu0 0
    %2172 = vmatpush2.bf16.msra.mxu0 0
    %2173 = vmatprep.subr.bf16.mxu0 0
    %2174 = vmatpush2.bf16.msra.mxu0 0
    %2175 = vmatprep.subr.bf16.mxu0 0
    %2176 = vmatpush2.bf16.msra.mxu0 0
    %2177 = vmatprep.subr.bf16.mxu0 0
    %2178 = vmatpush2.bf16.msra.mxu0 0
    %2179 = vmatprep.subr.bf16.mxu0 0
    %2180 = vmatpush2.bf16.msra.mxu0 0
    %2181 = vmatprep.subr.bf16.mxu0 0
    %2182 = vmatpush2.bf16.msra.mxu0 0
    %2183 = vmatprep.subr.bf16.mxu0 0
    %2184 = vmatpush2.bf16.msra.mxu0 0
    %2185 = vmatprep.subr.bf16.mxu0 0
    %2186 = vmatpush2.bf16.msra.mxu0 0
    %2187 = vmatprep.mubr.bf16.mxu0 0
    %2188 = vmatmul.mubr.bf16.gmra.mxu0 %v2150
    %v2189 = vpop.f32.mrf.mxu0
    %v2190 = vadd.f32 0.0, %v2189
    %v2191 = vpop.f32.mrf.mxu0
    %v2192 = vpop.f32.mrf.mxu0
    %v2193 = vpop.f32.mrf.mxu0
    %2194 = vdwg.mxu0
    %2197 = vrot.lane.b32.xlu0 %v1701, 32
    %v2198 = vpop.permute.xlu0 %2197
    %2199 = vrot.lane.b32.xlu0 %v1750, 32
    %v2200 = vpop.permute.xlu0 %2199
    %2205 = vrot.lane.b32.xlu0 %v1922, 64
    %v2206 = vpop.permute.xlu0 %2205
    %2207 = vrot.lane.b32.xlu0 %v1970, 64
    %v2208 = vpop.permute.xlu0 %2207
    %2213 = vrot.lane.b32.xlu0 %v2142, 96
    %v2214 = vpop.permute.xlu0 %2213
    %2215 = vrot.lane.b32.xlu0 %v2190, 96
    %v2216 = vpop.permute.xlu0 %2215
    %v2219 = vsel %vm1318, %v1478, %v2198
    %v2220 = vsel %vm1318, %v1524, %v2200
    %vm2221 = vcmask 523264
    %v2222 = vsel %vm2221, %v2219, %v2206
    %v2223 = vsel %vm2221, %v2220, %v2208
    %vm2224 = vcmask 785408
    %v2225 = vsel %vm2224, %v2222, %v2214
    %v2226 = vsel %vm2224, %v2223, %v2216
    %v2227 = vld [vmem:[%s17] sm:$0xf]
    %v2228 = vld [vmem:[%s17 + $0x4] sm:$0xf]
    %v2229 = vld [vmem:[%s17 + $0x8] sm:$0xf]
    %v2230 = vld [vmem:[%s17 + $0xc] sm:$0xf]
    %v2231 = vld [vmem:[%s17 + $0x10] sm:$0xf]
    %v2232 = vld [vmem:[%s17 + $0x14] sm:$0xf]
    %v2233 = vld [vmem:[%s17 + $0x18] sm:$0xf]
    %v2234 = vld [vmem:[%s17 + $0x1c] sm:$0xf]
    %v2235 = vld [vmem:[%s17 + $0x20] sm:$0xf]
    %v2236 = vld [vmem:[%s17 + $0x24] sm:$0xf]
    %v2237 = vld [vmem:[%s17 + $0x28] sm:$0xf]
    %v2238 = vld [vmem:[%s17 + $0x2c] sm:$0xf]
    %v2239 = vld [vmem:[%s17 + $0x30] sm:$0xf]
    %v2240 = vld [vmem:[%s17 + $0x34] sm:$0xf]
    %v2241 = vld [vmem:[%s17 + $0x38] sm:$0xf]
    %v2242 = vld [vmem:[%s17 + $0x3c] sm:$0xf]
    %v2243 = vpack.c.bf16 %v2226, %v2225
    %v2260 = vunpack.c.l.b16 %v2227
    %v2261 = vunpack.c.l.b16 %v2228
    %v2262 = vunpack.c.l.b16 %v2229
    %v2263 = vunpack.c.l.b16 %v2230
    %v2264 = vunpack.c.l.b16 %v2231
    %v2265 = vunpack.c.l.b16 %v2232
    %v2266 = vunpack.c.l.b16 %v2233
    %v2267 = vunpack.c.l.b16 %v2234
    %v2268 = vunpack.c.l.b16 %v2235
    %v2269 = vunpack.c.l.b16 %v2236
    %v2270 = vunpack.c.l.b16 %v2237
    %v2271 = vunpack.c.l.b16 %v2238
    %v2272 = vunpack.c.l.b16 %v2239
    %v2273 = vunpack.c.l.b16 %v2240
    %v2274 = vunpack.c.l.b16 %v2241
    %v2275 = vunpack.c.l.b16 %v2242
    %v2276 = vpack.c.b16 %v2261, %v2260
    %v2277 = vpack.c.b16 %v2263, %v2262
    %v2278 = vpack.c.b16 %v2265, %v2264
    %v2279 = vpack.c.b16 %v2267, %v2266
    %v2280 = vpack.c.b16 %v2269, %v2268
    %v2281 = vpack.c.b16 %v2271, %v2270
    %v2282 = vpack.c.b16 %v2273, %v2272
    %v2283 = vpack.c.b16 %v2275, %v2274
    %2292 = vmatprep.subr.bf16.mxu0 0
    %2293 = vmatpush1.bf16.msra.mxu0 %v2283
    %2294 = vmatprep.subr.bf16.mxu0 0
    %2295 = vmatpush1.bf16.msra.mxu0 %v2282
    %2296 = vmatprep.subr.bf16.mxu0 0
    %2297 = vmatpush1.bf16.msra.mxu0 %v2281
    %2298 = vmatprep.subr.bf16.mxu0 0
    %2299 = vmatpush1.bf16.msra.mxu0 %v2280
    %2300 = vmatprep.subr.bf16.mxu0 0
    %2301 = vmatpush1.bf16.msra.mxu0 %v2279
    %2302 = vmatprep.subr.bf16.mxu0 0
    %2303 = vmatpush1.bf16.msra.mxu0 %v2278
    %2304 = vmatprep.subr.bf16.mxu0 0
    %2305 = vmatpush1.bf16.msra.mxu0 %v2277
    %2306 = vmatprep.subr.bf16.mxu0 0
    %2307 = vmatpush1.bf16.msra.mxu0 %v2276
    %2308 = vmatprep.subr.bf16.mxu0 0
    %2309 = vmatpush2.bf16.msra.mxu0 0
    %2310 = vmatprep.subr.bf16.mxu0 0
    %2311 = vmatpush2.bf16.msra.mxu0 0
    %2312 = vmatprep.subr.bf16.mxu0 0
    %2313 = vmatpush2.bf16.msra.mxu0 0
    %2314 = vmatprep.subr.bf16.mxu0 0
    %2315 = vmatpush2.bf16.msra.mxu0 0
    %2316 = vmatprep.subr.bf16.mxu0 0
    %2317 = vmatpush2.bf16.msra.mxu0 0
    %2318 = vmatprep.subr.bf16.mxu0 0
    %2319 = vmatpush2.bf16.msra.mxu0 0
    %2320 = vmatprep.subr.bf16.mxu0 0
    %2321 = vmatpush2.bf16.msra.mxu0 0
    %2322 = vmatprep.subr.bf16.mxu0 0
    %2323 = vmatpush2.bf16.msra.mxu0 0
    %2324 = vmatprep.mubr.bf16.mxu0 0
    %2325 = vmatmul.mubr.bf16.gmra.mxu0 %v2243
    %v2326 = vpop.f32.mrf.mxu0
    %v2327 = vadd.f32 0.0, %v2326
    %v2328 = vpop.f32.mrf.mxu0
    %v2329 = vpop.f32.mrf.mxu0
    %v2330 = vadd.f32 0.0, %v2329
    %v2331 = vpop.f32.mrf.mxu0
    %2332 = vdwg.mxu0
    %v2333 = vadd.f32 %v989, %v2327
    %v2334 = vadd.f32 %v990, %v2330
    %v2335 = vld [vmem:[#allocation4] sm:$0x1]
    %v2337 = vlaneseq
    %v2338 = vshrl.u32 %v2337, 7
    %v2339 = vsub.s32 0, %v2338
    %v2340 = vrot.slane %v2335, %v2339
    %v2342 = vadd.f32 %v2333, %v2340
    %v2343 = vadd.f32 %v2334, %v2340
    %v2344 = vld [vmem:[#allocation9] sm:$0x1]
    %v2345 = vld [vmem:[#allocation10] sm:$0x1]
    %2346 = vadd.xlane.f32.xlu0 %v2342
    %v2347 = vpop.xlane.xlu0 %2346
    %2348 = vadd.xlane.f32.xlu0 %v2343
    %v2349 = vpop.xlane.xlu0 %2348
    %v2350 = vmul.f32 %v2347, %v1003
    %v2351 = vmul.f32 %v2349, %v1003
    %v2352 = vsub.f32 %v2342, %v2350
    %v2353 = vsub.f32 %v2343, %v2351
    %v2354 = vmul.f32 %v2352, %v2352
    %v2355 = vmul.f32 %v2353, %v2353
    %2356 = vadd.xlane.f32.xlu0 %v2354
    %v2357 = vpop.xlane.xlu0 %2356
    %2358 = vadd.xlane.f32.xlu0 %v2355
    %v2359 = vpop.xlane.xlu0 %2358
    %v2360 = vmul.f32 %v2357, %v1003
    %v2361 = vmul.f32 %v2359, %v1003
    %v2362 = vadd.f32 %v2360, 1e-05
    %v2363 = vadd.f32 %v2361, 1e-05
    %v2364 = vrsqrt.pop %v2362
    %v2365 = vrsqrt.pop %v2363
    %v2366 = vmul.f32 %v2352, %v2364
    %v2367 = vmul.f32 %v2353, %v2365
    %v2369 = vlaneseq
    %v2370 = vshrl.u32 %v2369, 7
    %v2371 = vsub.s32 0, %v2370
    %v2372 = vrot.slane %v2344, %v2371
    %v2374 = vmul.f32 %v2366, %v2372
    %v2375 = vmul.f32 %v2367, %v2372
    %v2377 = vlaneseq
    %v2378 = vshrl.u32 %v2377, 7
    %v2379 = vsub.s32 0, %v2378
    %v2380 = vrot.slane %v2345, %v2379
    %v2382 = vadd.f32 %v2374, %v2380
    %v2383 = vadd.f32 %v2375, %v2380
    %v2384 = vld [vmem:[#allocation12] sm:$0xff]
    %v2385 = vld [vmem:[#allocation12 + $0x8] sm:$0xff]
    %v2386 = vld [vmem:[#allocation12 + $0x10] sm:$0xff]
    %v2387 = vld [vmem:[#allocation12 + $0x18] sm:$0xff]
    %v2388 = vld [vmem:[#allocation12 + $0x20] sm:$0xff]
    %v2389 = vld [vmem:[#allocation12 + $0x28] sm:$0xff]
    %v2390 = vld [vmem:[#allocation12 + $0x30] sm:$0xff]
    %v2391 = vld [vmem:[#allocation12 + $0x38] sm:$0xff]
    %v2392 = vld [vmem:[#allocation12 + $0x40] sm:$0xff]
    %v2393 = vld [vmem:[#allocation12 + $0x48] sm:$0xff]
    %v2394 = vld [vmem:[#allocation12 + $0x50] sm:$0xff]
    %v2395 = vld [vmem:[#allocation12 + $0x58] sm:$0xff]
    %v2396 = vld [vmem:[#allocation12 + $0x60] sm:$0xff]
    %v2397 = vld [vmem:[#allocation12 + $0x68] sm:$0xff]
    %v2398 = vld [vmem:[#allocation12 + $0x70] sm:$0xff]
    %v2399 = vld [vmem:[#allocation12 + $0x78] sm:$0xff]
    %v2400 = vpack.c.bf16 %v2383, %v2382
    %v2401 = vld [vmem:[#allocation13] sm:$0x3]
    %v2403 = vlaneseq
    %v2404 = vshrl.u32 %v2403, 7
    %v2405 = vsub.s32 0, %v2404
    %v2406 = vrot.slane %v2401, %v2405
    %v2407 = vlaneseq
    %v2408 = vshrl.u32 %v2407, 7
    %v2409 = vsub.s32 1, %v2408
    %v2410 = vrot.slane %v2401, %v2409
    %v2429 = vunpack.c.l.b16 %v2384
    %v2430 = vunpack.c.h.b16 %v2384
    %v2431 = vunpack.c.l.b16 %v2385
    %v2432 = vunpack.c.h.b16 %v2385
    %v2433 = vunpack.c.l.b16 %v2386
    %v2434 = vunpack.c.h.b16 %v2386
    %v2435 = vunpack.c.l.b16 %v2387
    %v2436 = vunpack.c.h.b16 %v2387
    %v2437 = vunpack.c.l.b16 %v2388
    %v2438 = vunpack.c.h.b16 %v2388
    %v2439 = vunpack.c.l.b16 %v2389
    %v2440 = vunpack.c.h.b16 %v2389
    %v2441 = vunpack.c.l.b16 %v2390
    %v2442 = vunpack.c.h.b16 %v2390
    %v2443 = vunpack.c.l.b16 %v2391
    %v2444 = vunpack.c.h.b16 %v2391
    %v2445 = vunpack.c.l.b16 %v2392
    %v2446 = vunpack.c.h.b16 %v2392
    %v2447 = vunpack.c.l.b16 %v2393
    %v2448 = vunpack.c.h.b16 %v2393
    %v2449 = vunpack.c.l.b16 %v2394
    %v2450 = vunpack.c.h.b16 %v2394
    %v2451 = vunpack.c.l.b16 %v2395
    %v2452 = vunpack.c.h.b16 %v2395
    %v2453 = vunpack.c.l.b16 %v2396
    %v2454 = vunpack.c.h.b16 %v2396
    %v2455 = vunpack.c.l.b16 %v2397
    %v2456 = vunpack.c.h.b16 %v2397
    %v2457 = vunpack.c.l.b16 %v2398
    %v2458 = vunpack.c.h.b16 %v2398
    %v2459 = vunpack.c.l.b16 %v2399
    %v2460 = vunpack.c.h.b16 %v2399
    %v2461 = vpack.c.b16 %v2431, %v2429
    %v2462 = vpack.c.b16 %v2432, %v2430
    %v2463 = vpack.c.b16 %v2435, %v2433
    %v2464 = vpack.c.b16 %v2436, %v2434
    %v2465 = vpack.c.b16 %v2439, %v2437
    %v2466 = vpack.c.b16 %v2440, %v2438
    %v2467 = vpack.c.b16 %v2443, %v2441
    %v2468 = vpack.c.b16 %v2444, %v2442
    %v2469 = vpack.c.b16 %v2447, %v2445
    %v2470 = vpack.c.b16 %v2448, %v2446
    %v2471 = vpack.c.b16 %v2451, %v2449
    %v2472 = vpack.c.b16 %v2452, %v2450
    %v2473 = vpack.c.b16 %v2455, %v2453
    %v2474 = vpack.c.b16 %v2456, %v2454
    %v2475 = vpack.c.b16 %v2459, %v2457
    %v2476 = vpack.c.b16 %v2460, %v2458
    %2493 = vmatprep.subr.bf16.mxu0 %v2476
    %2494 = vmatpush1.bf16.msra.mxu0 %v2475
    %2495 = vmatprep.subr.bf16.mxu0 %v2474
    %2496 = vmatpush1.bf16.msra.mxu0 %v2473
    %2497 = vmatprep.subr.bf16.mxu0 %v2472
    %2498 = vmatpush1.bf16.msra.mxu0 %v2471
    %2499 = vmatprep.subr.bf16.mxu0 %v2470
    %2500 = vmatpush1.bf16.msra.mxu0 %v2469
    %2501 = vmatprep.subr.bf16.mxu0 %v2468
    %2502 = vmatpush1.bf16.msra.mxu0 %v2467
    %2503 = vmatprep.subr.bf16.mxu0 %v2466
    %2504 = vmatpush1.bf16.msra.mxu0 %v2465
    %2505 = vmatprep.subr.bf16.mxu0 %v2464
    %2506 = vmatpush1.bf16.msra.mxu0 %v2463
    %2507 = vmatprep.subr.bf16.mxu0 %v2462
    %2508 = vmatpush1.bf16.msra.mxu0 %v2461
    %2509 = vmatprep.subr.bf16.mxu0 0
    %2510 = vmatpush2.bf16.msra.mxu0 0
    %2511 = vmatprep.subr.bf16.mxu0 0
    %2512 = vmatpush2.bf16.msra.mxu0 0
    %2513 = vmatprep.subr.bf16.mxu0 0
    %2514 = vmatpush2.bf16.msra.mxu0 0
    %2515 = vmatprep.subr.bf16.mxu0 0
    %2516 = vmatpush2.bf16.msra.mxu0 0
    %2517 = vmatprep.subr.bf16.mxu0 0
    %2518 = vmatpush2.bf16.msra.mxu0 0
    %2519 = vmatprep.subr.bf16.mxu0 0
    %2520 = vmatpush2.bf16.msra.mxu0 0
    %2521 = vmatprep.subr.bf16.mxu0 0
    %2522 = vmatpush2.bf16.msra.mxu0 0
    %2523 = vmatprep.subr.bf16.mxu0 0
    %2524 = vmatpush2.bf16.msra.mxu0 0
    %2525 = vmatprep.mubr.bf16.mxu0 0
    %2526 = vmatmul.mubr.bf16.gmra.mxu0 %v2400
    %v2527 = vpop.f32.mrf.mxu0
    %v2528 = vadd.f32 %v2406, %v2527
    %v2529 = vpop.f32.mrf.mxu0
    %v2530 = vadd.f32 %v2410, %v2529
    %v2531 = vpop.f32.mrf.mxu0
    %v2532 = vadd.f32 %v2406, %v2531
    %v2533 = vpop.f32.mrf.mxu0
    %v2534 = vadd.f32 %v2410, %v2533
    %2535 = vdwg.mxu0
    %v2536 = vmax.f32 %v2528, 0.0
    %v2537 = vmax.f32 %v2530, 0.0
    %v2538 = vmax.f32 %v2532, 0.0
    %v2539 = vmax.f32 %v2534, 0.0
    %v2540 = vld [vmem:[#allocation15] sm:$0xf]
    %v2541 = vld [vmem:[#allocation15 + $0x4] sm:$0xf]
    %v2542 = vld [vmem:[#allocation15 + $0x8] sm:$0xf]
    %v2543 = vld [vmem:[#allocation15 + $0xc] sm:$0xf]
    %v2544 = vld [vmem:[#allocation15 + $0x10] sm:$0xf]
    %v2545 = vld [vmem:[#allocation15 + $0x14] sm:$0xf]
    %v2546 = vld [vmem:[#allocation15 + $0x18] sm:$0xf]
    %v2547 = vld [vmem:[#allocation15 + $0x1c] sm:$0xf]
    %v2548 = vld [vmem:[#allocation15 + $0x20] sm:$0xf]
    %v2549 = vld [vmem:[#allocation15 + $0x24] sm:$0xf]
    %v2550 = vld [vmem:[#allocation15 + $0x28] sm:$0xf]
    %v2551 = vld [vmem:[#allocation15 + $0x2c] sm:$0xf]
    %v2552 = vld [vmem:[#allocation15 + $0x30] sm:$0xf]
    %v2553 = vld [vmem:[#allocation15 + $0x34] sm:$0xf]
    %v2554 = vld [vmem:[#allocation15 + $0x38] sm:$0xf]
    %v2555 = vld [vmem:[#allocation15 + $0x3c] sm:$0xf]
    %v2556 = vld [vmem:[#allocation15 + $0x40] sm:$0xf]
    %v2557 = vld [vmem:[#allocation15 + $0x44] sm:$0xf]
    %v2558 = vld [vmem:[#allocation15 + $0x48] sm:$0xf]
    %v2559 = vld [vmem:[#allocation15 + $0x4c] sm:$0xf]
    %v2560 = vld [vmem:[#allocation15 + $0x50] sm:$0xf]
    %v2561 = vld [vmem:[#allocation15 + $0x54] sm:$0xf]
    %v2562 = vld [vmem:[#allocation15 + $0x58] sm:$0xf]
    %v2563 = vld [vmem:[#allocation15 + $0x5c] sm:$0xf]
    %v2564 = vld [vmem:[#allocation15 + $0x60] sm:$0xf]
    %v2565 = vld [vmem:[#allocation15 + $0x64] sm:$0xf]
    %v2566 = vld [vmem:[#allocation15 + $0x68] sm:$0xf]
    %v2567 = vld [vmem:[#allocation15 + $0x6c] sm:$0xf]
    %v2568 = vld [vmem:[#allocation15 + $0x70] sm:$0xf]
    %v2569 = vld [vmem:[#allocation15 + $0x74] sm:$0xf]
    %v2570 = vld [vmem:[#allocation15 + $0x78] sm:$0xf]
    %v2571 = vld [vmem:[#allocation15 + $0x7c] sm:$0xf]
    %v2572 = vpack.c.bf16 %v2538, %v2536
    %v2573 = vpack.c.bf16 %v2539, %v2537
    %v2606 = vunpack.c.l.b16 %v2540
    %v2607 = vunpack.c.l.b16 %v2541
    %v2608 = vunpack.c.l.b16 %v2542
    %v2609 = vunpack.c.l.b16 %v2543
    %v2610 = vunpack.c.l.b16 %v2544
    %v2611 = vunpack.c.l.b16 %v2545
    %v2612 = vunpack.c.l.b16 %v2546
    %v2613 = vunpack.c.l.b16 %v2547
    %v2614 = vunpack.c.l.b16 %v2548
    %v2615 = vunpack.c.l.b16 %v2549
    %v2616 = vunpack.c.l.b16 %v2550
    %v2617 = vunpack.c.l.b16 %v2551
    %v2618 = vunpack.c.l.b16 %v2552
    %v2619 = vunpack.c.l.b16 %v2553
    %v2620 = vunpack.c.l.b16 %v2554
    %v2621 = vunpack.c.l.b16 %v2555
    %v2622 = vunpack.c.l.b16 %v2556
    %v2623 = vunpack.c.l.b16 %v2557
    %v2624 = vunpack.c.l.b16 %v2558
    %v2625 = vunpack.c.l.b16 %v2559
    %v2626 = vunpack.c.l.b16 %v2560
    %v2627 = vunpack.c.l.b16 %v2561
    %v2628 = vunpack.c.l.b16 %v2562
    %v2629 = vunpack.c.l.b16 %v2563
    %v2630 = vunpack.c.l.b16 %v2564
    %v2631 = vunpack.c.l.b16 %v2565
    %v2632 = vunpack.c.l.b16 %v2566
    %v2633 = vunpack.c.l.b16 %v2567
    %v2634 = vunpack.c.l.b16 %v2568
    %v2635 = vunpack.c.l.b16 %v2569
    %v2636 = vunpack.c.l.b16 %v2570
    %v2637 = vunpack.c.l.b16 %v2571
    %v2638 = vpack.c.b16 %v2607, %v2606
    %v2639 = vpack.c.b16 %v2609, %v2608
    %v2640 = vpack.c.b16 %v2611, %v2610
    %v2641 = vpack.c.b16 %v2613, %v2612
    %v2642 = vpack.c.b16 %v2615, %v2614
    %v2643 = vpack.c.b16 %v2617, %v2616
    %v2644 = vpack.c.b16 %v2619, %v2618
    %v2645 = vpack.c.b16 %v2621, %v2620
    %v2646 = vpack.c.b16 %v2623, %v2622
    %v2647 = vpack.c.b16 %v2625, %v2624
    %v2648 = vpack.c.b16 %v2627, %v2626
    %v2649 = vpack.c.b16 %v2629, %v2628
    %v2650 = vpack.c.b16 %v2631, %v2630
    %v2651 = vpack.c.b16 %v2633, %v2632
    %v2652 = vpack.c.b16 %v2635, %v2634
    %v2653 = vpack.c.b16 %v2637, %v2636
    %2670 = vmatprep.subr.bf16.mxu0 0
    %2671 = vmatpush1.bf16.msra.mxu0 %v2645
    %2672 = vmatprep.subr.bf16.mxu0 0
    %2673 = vmatpush1.bf16.msra.mxu0 %v2644
    %2674 = vmatprep.subr.bf16.mxu0 0
    %2675 = vmatpush1.bf16.msra.mxu0 %v2643
    %2676 = vmatprep.subr.bf16.mxu0 0
    %2677 = vmatpush1.bf16.msra.mxu0 %v2642
    %2678 = vmatprep.subr.bf16.mxu0 0
    %2679 = vmatpush1.bf16.msra.mxu0 %v2641
    %2680 = vmatprep.subr.bf16.mxu0 0
    %2681 = vmatpush1.bf16.msra.mxu0 %v2640
    %2682 = vmatprep.subr.bf16.mxu0 0
    %2683 = vmatpush1.bf16.msra.mxu0 %v2639
    %2684 = vmatprep.subr.bf16.mxu0 0
    %2685 = vmatpush1.bf16.msra.mxu0 %v2638
    %2686 = vmatprep.subr.bf16.mxu0 0
    %2687 = vmatpush2.bf16.msra.mxu0 %v2653
    %2688 = vmatprep.subr.bf16.mxu0 0
    %2689 = vmatpush2.bf16.msra.mxu0 %v2652
    %2690 = vmatprep.subr.bf16.mxu0 0
    %2691 = vmatpush2.bf16.msra.mxu0 %v2651
    %2692 = vmatprep.subr.bf16.mxu0 0
    %2693 = vmatpush2.bf16.msra.mxu0 %v2650
    %2694 = vmatprep.subr.bf16.mxu0 0
    %2695 = vmatpush2.bf16.msra.mxu0 %v2649
    %2696 = vmatprep.subr.bf16.mxu0 0
    %2697 = vmatpush2.bf16.msra.mxu0 %v2648
    %2698 = vmatprep.subr.bf16.mxu0 0
    %2699 = vmatpush2.bf16.msra.mxu0 %v2647
    %2700 = vmatprep.subr.bf16.mxu0 0
    %2701 = vmatpush2.bf16.msra.mxu0 %v2646
    %2702 = vmatprep.mubr.bf16.mxu0 %v2573
    %2703 = vmatmul.mubr.bf16.gmra.mxu0 %v2572
    %v2704 = vpop.f32.mrf.mxu0
    %v2705 = vadd.f32 0.0, %v2704
    %v2706 = vpop.f32.mrf.mxu0
    %v2707 = vpop.f32.mrf.mxu0
    %v2708 = vadd.f32 0.0, %v2707
    %v2709 = vpop.f32.mrf.mxu0
    %2710 = vdwg.mxu0
    %v2711 = vadd.f32 %v2342, %v2705
    %v2712 = vadd.f32 %v2343, %v2708
    %v2713 = vld [vmem:[#allocation16] sm:$0x1]
    %v2715 = vlaneseq
    %v2716 = vshrl.u32 %v2715, 7
    %v2717 = vsub.s32 0, %v2716
    %v2718 = vrot.slane %v2713, %v2717
    %v2720 = vadd.f32 %v2711, %v2718
    %v2721 = vadd.f32 %v2712, %v2718
    %v2722 = vld [vmem:[#allocation22] sm:$0x1]
    %v2723 = vld [vmem:[#allocation24] sm:$0x1]
    %2724 = vadd.xlane.f32.xlu0 %v2720
    %v2725 = vpop.xlane.xlu0 %2724
    %2726 = vadd.xlane.f32.xlu0 %v2721
    %v2727 = vpop.xlane.xlu0 %2726
    %v2728 = vmul.f32 %v2725, %v1003
    %v2729 = vmul.f32 %v2727, %v1003
    %v2730 = vsub.f32 %v2720, %v2728
    %v2731 = vsub.f32 %v2721, %v2729
    %v2732 = vmul.f32 %v2730, %v2730
    %v2733 = vmul.f32 %v2731, %v2731
    %2734 = vadd.xlane.f32.xlu0 %v2732
    %v2735 = vpop.xlane.xlu0 %2734
    %2736 = vadd.xlane.f32.xlu0 %v2733
    %v2737 = vpop.xlane.xlu0 %2736
    %v2738 = vmul.f32 %v2735, %v1003
    %v2739 = vmul.f32 %v2737, %v1003
    %v2740 = vadd.f32 %v2738, 1e-05
    %v2741 = vadd.f32 %v2739, 1e-05
    %v2742 = vrsqrt.pop %v2740
    %v2743 = vrsqrt.pop %v2741
    %v2744 = vmul.f32 %v2730, %v2742
    %v2745 = vmul.f32 %v2731, %v2743
    %v2747 = vlaneseq
    %v2748 = vshrl.u32 %v2747, 7
    %v2749 = vsub.s32 0, %v2748
    %v2750 = vrot.slane %v2722, %v2749
    %v2752 = vmul.f32 %v2744, %v2750
    %v2753 = vmul.f32 %v2745, %v2750
    %v2755 = vlaneseq
    %v2756 = vshrl.u32 %v2755, 7
    %v2757 = vsub.s32 0, %v2756
    %v2758 = vrot.slane %v2723, %v2757
    %v2760 = vadd.f32 %v2752, %v2758
    %v2761 = vadd.f32 %v2753, %v2758
    %v2762 = vld [vmem:[%s37] sm:$0xff]
    %v2763 = vld [vmem:[%s37 + $0x8] sm:$0xf]
    %v2764 = vld [vmem:[%s37 + $0xc] sm:$0xff]
    %v2765 = vld [vmem:[%s37 + $0x14] sm:$0xf]
    %v2766 = vld [vmem:[%s37 + $0x18] sm:$0xff]
    %v2767 = vld [vmem:[%s37 + $0x20] sm:$0xf]
    %v2768 = vld [vmem:[%s37 + $0x24] sm:$0xff]
    %v2769 = vld [vmem:[%s37 + $0x2c] sm:$0xf]
    %v2770 = vld [vmem:[%s37 + $0x30] sm:$0xff]
    %v2771 = vld [vmem:[%s37 + $0x38] sm:$0xf]
    %v2772 = vld [vmem:[%s37 + $0x3c] sm:$0xff]
    %v2773 = vld [vmem:[%s37 + $0x44] sm:$0xf]
    %v2774 = vld [vmem:[%s37 + $0x48] sm:$0xff]
    %v2775 = vld [vmem:[%s37 + $0x50] sm:$0xf]
    %v2776 = vld [vmem:[%s37 + $0x54] sm:$0xff]
    %v2777 = vld [vmem:[%s37 + $0x5c] sm:$0xf]
    %v2778 = vld [vmem:[%s37 + $0x60] sm:$0xff]
    %v2779 = vld [vmem:[%s37 + $0x68] sm:$0xf]
    %v2780 = vld [vmem:[%s37 + $0x6c] sm:$0xff]
    %v2781 = vld [vmem:[%s37 + $0x74] sm:$0xf]
    %v2782 = vld [vmem:[%s37 + $0x78] sm:$0xff]
    %v2783 = vld [vmem:[%s37 + $0x80] sm:$0xf]
    %v2784 = vld [vmem:[%s37 + $0x84] sm:$0xff]
    %v2785 = vld [vmem:[%s37 + $0x8c] sm:$0xf]
    %v2786 = vld [vmem:[%s37 + $0x90] sm:$0xff]
    %v2787 = vld [vmem:[%s37 + $0x98] sm:$0xf]
    %v2788 = vld [vmem:[%s37 + $0x9c] sm:$0xff]
    %v2789 = vld [vmem:[%s37 + $0xa4] sm:$0xf]
    %v2790 = vld [vmem:[%s37 + $0xa8] sm:$0xff]
    %v2791 = vld [vmem:[%s37 + $0xb0] sm:$0xf]
    %v2792 = vld [vmem:[%s37 + $0xb4] sm:$0xff]
    %v2793 = vld [vmem:[%s37 + $0xbc] sm:$0xf]
    %v2794 = vpack.c.bf16 %v2761, %v2760
    %v2795 = vld [vmem:[#allocation18] sm:$0x7]
    %v2797 = vlaneseq
    %v2798 = vshrl.u32 %v2797, 7
    %v2799 = vsub.s32 0, %v2798
    %v2800 = vrot.slane %v2795, %v2799
    %v2801 = vlaneseq
    %v2802 = vshrl.u32 %v2801, 7
    %v2803 = vsub.s32 1, %v2802
    %v2804 = vrot.slane %v2795, %v2803
    %v2805 = vlaneseq
    %v2806 = vshrl.u32 %v2805, 7
    %v2807 = vsub.s32 2, %v2806
    %v2808 = vrot.slane %v2795, %v2807
    %v2844 = vunpack.c.l.b16 %v2762
    %v2845 = vunpack.c.h.b16 %v2762
    %v2846 = vunpack.c.l.b16 %v2763
    %v2847 = vunpack.c.l.b16 %v2764
    %v2848 = vunpack.c.h.b16 %v2764
    %v2849 = vunpack.c.l.b16 %v2765
    %v2850 = vunpack.c.l.b16 %v2766
    %v2851 = vunpack.c.h.b16 %v2766
    %v2852 = vunpack.c.l.b16 %v2767
    %v2853 = vunpack.c.l.b16 %v2768
    %v2854 = vunpack.c.h.b16 %v2768
    %v2855 = vunpack.c.l.b16 %v2769
    %v2856 = vunpack.c.l.b16 %v2770
    %v2857 = vunpack.c.h.b16 %v2770
    %v2858 = vunpack.c.l.b16 %v2771
    %v2859 = vunpack.c.l.b16 %v2772
    %v2860 = vunpack.c.h.b16 %v2772
    %v2861 = vunpack.c.l.b16 %v2773
    %v2862 = vunpack.c.l.b16 %v2774
    %v2863 = vunpack.c.h.b16 %v2774
    %v2864 = vunpack.c.l.b16 %v2775
    %v2865 = vunpack.c.l.b16 %v2776
    %v2866 = vunpack.c.h.b16 %v2776
    %v2867 = vunpack.c.l.b16 %v2777
    %v2868 = vunpack.c.l.b16 %v2778
    %v2869 = vunpack.c.h.b16 %v2778
    %v2870 = vunpack.c.l.b16 %v2779
    %v2871 = vunpack.c.l.b16 %v2780
    %v2872 = vunpack.c.h.b16 %v2780
    %v2873 = vunpack.c.l.b16 %v2781
    %v2874 = vunpack.c.l.b16 %v2782
    %v2875 = vunpack.c.h.b16 %v2782
    %v2876 = vunpack.c.l.b16 %v2783
    %v2877 = vunpack.c.l.b16 %v2784
    %v2878 = vunpack.c.h.b16 %v2784
    %v2879 = vunpack.c.l.b16 %v2785
    %v2880 = vunpack.c.l.b16 %v2786
    %v2881 = vunpack.c.h.b16 %v2786
    %v2882 = vunpack.c.l.b16 %v2787
    %v2883 = vunpack.c.l.b16 %v2788
    %v2884 = vunpack.c.h.b16 %v2788
    %v2885 = vunpack.c.l.b16 %v2789
    %v2886 = vunpack.c.l.b16 %v2790
    %v2887 = vunpack.c.h.b16 %v2790
    %v2888 = vunpack.c.l.b16 %v2791
    %v2889 = vunpack.c.l.b16 %v2792
    %v2890 = vunpack.c.h.b16 %v2792
    %v2891 = vunpack.c.l.b16 %v2793
    %v2892 = vpack.c.b16 %v2847, %v2844
    %v2893 = vpack.c.b16 %v2848, %v2845
    %v2894 = vpack.c.b16 %v2849, %v2846
    %v2895 = vpack.c.b16 %v2853, %v2850
    %v2896 = vpack.c.b16 %v2854, %v2851
    %v2897 = vpack.c.b16 %v2855, %v2852
    %v2898 = vpack.c.b16 %v2859, %v2856
    %v2899 = vpack.c.b16 %v2860, %v2857
    %v2900 = vpack.c.b16 %v2861, %v2858
    %v2901 = vpack.c.b16 %v2865, %v2862
    %v2902 = vpack.c.b16 %v2866, %v2863
    %v2903 = vpack.c.b16 %v2867, %v2864
    %v2904 = vpack.c.b16 %v2871, %v2868
    %v2905 = vpack.c.b16 %v2872, %v2869
    %v2906 = vpack.c.b16 %v2873, %v2870
    %v2907 = vpack.c.b16 %v2877, %v2874
    %v2908 = vpack.c.b16 %v2878, %v2875
    %v2909 = vpack.c.b16 %v2879, %v2876
    %v2910 = vpack.c.b16 %v2883, %v2880
    %v2911 = vpack.c.b16 %v2884, %v2881
    %v2912 = vpack.c.b16 %v2885, %v2882
    %v2913 = vpack.c.b16 %v2889, %v2886
    %v2914 = vpack.c.b16 %v2890, %v2887
    %v2915 = vpack.c.b16 %v2891, %v2888
    %2940 = vmatprep.subr.bf16.mxu0 %v2914
    %2941 = vmatpush1.bf16.msra.mxu0 %v2913
    %2942 = vmatprep.subr.bf16.mxu0 %v2911
    %2943 = vmatpush1.bf16.msra.mxu0 %v2910
    %2944 = vmatprep.subr.bf16.mxu0 %v2908
    %2945 = vmatpush1.bf16.msra.mxu0 %v2907
    %2946 = vmatprep.subr.bf16.mxu0 %v2905
    %2947 = vmatpush1.bf16.msra.mxu0 %v2904
    %2948 = vmatprep.subr.bf16.mxu0 %v2902
    %2949 = vmatpush1.bf16.msra.mxu0 %v2901
    %2950 = vmatprep.subr.bf16.mxu0 %v2899
    %2951 = vmatpush1.bf16.msra.mxu0 %v2898
    %2952 = vmatprep.subr.bf16.mxu0 %v2896
    %2953 = vmatpush1.bf16.msra.mxu0 %v2895
    %2954 = vmatprep.subr.bf16.mxu0 %v2893
    %2955 = vmatpush1.bf16.msra.mxu0 %v2892
    %2956 = vmatprep.subr.bf16.mxu0 0
    %2957 = vmatpush2.bf16.msra.mxu0 0
    %2958 = vmatprep.subr.bf16.mxu0 0
    %2959 = vmatpush2.bf16.msra.mxu0 0
    %2960 = vmatprep.subr.bf16.mxu0 0
    %2961 = vmatpush2.bf16.msra.mxu0 0
    %2962 = vmatprep.subr.bf16.mxu0 0
    %2963 = vmatpush2.bf16.msra.mxu0 0
    %2964 = vmatprep.subr.bf16.mxu0 0
    %2965 = vmatpush2.bf16.msra.mxu0 0
    %2966 = vmatprep.subr.bf16.mxu0 0
    %2967 = vmatpush2.bf16.msra.mxu0 0
    %2968 = vmatprep.subr.bf16.mxu0 0
    %2969 = vmatpush2.bf16.msra.mxu0 0
    %2970 = vmatprep.subr.bf16.mxu0 0
    %2971 = vmatpush2.bf16.msra.mxu0 0
    %2972 = vmatprep.mubr.bf16.mxu0 0
    %2973 = vmatmul.mubr.bf16.gmra.mxu0 %v2794
    %v2974 = vpop.f32.mrf.mxu0
    %v2975 = vadd.f32 %v2800, %v2974
    %v2976 = vpop.f32.mrf.mxu0
    %v2977 = vadd.f32 %v2804, %v2976
    %v2978 = vpop.f32.mrf.mxu0
    %v2979 = vadd.f32 %v2800, %v2978
    %v2980 = vpop.f32.mrf.mxu0
    %v2981 = vadd.f32 %v2804, %v2980
    %2982 = vdwg.mxu0
    %2983 = vmatprep.subr.bf16.mxu0 0
    %2984 = vmatpush1.bf16.msra.mxu0 %v2915
    %2985 = vmatprep.subr.bf16.mxu0 0
    %2986 = vmatpush1.bf16.msra.mxu0 %v2912
    %2987 = vmatprep.subr.bf16.mxu0 0
    %2988 = vmatpush1.bf16.msra.mxu0 %v2909
    %2989 = vmatprep.subr.bf16.mxu0 0
    %2990 = vmatpush1.bf16.msra.mxu0 %v2906
    %2991 = vmatprep.subr.bf16.mxu0 0
    %2992 = vmatpush1.bf16.msra.mxu0 %v2903
    %2993 = vmatprep.subr.bf16.mxu0 0
    %2994 = vmatpush1.bf16.msra.mxu0 %v2900
    %2995 = vmatprep.subr.bf16.mxu0 0
    %2996 = vmatpush1.bf16.msra.mxu0 %v2897
    %2997 = vmatprep.subr.bf16.mxu0 0
    %2998 = vmatpush1.bf16.msra.mxu0 %v2894
    %2999 = vmatprep.subr.bf16.mxu0 0
    %3000 = vmatpush2.bf16.msra.mxu0 0
    %3001 = vmatprep.subr.bf16.mxu0 0
    %3002 = vmatpush2.bf16.msra.mxu0 0
    %3003 = vmatprep.subr.bf16.mxu0 0
    %3004 = vmatpush2.bf16.msra.mxu0 0
    %3005 = vmatprep.subr.bf16.mxu0 0
    %3006 = vmatpush2.bf16.msra.mxu0 0
    %3007 = vmatprep.subr.bf16.mxu0 0
    %3008 = vmatpush2.bf16.msra.mxu0 0
    %3009 = vmatprep.subr.bf16.mxu0 0
    %3010 = vmatpush2.bf16.msra.mxu0 0
    %3011 = vmatprep.subr.bf16.mxu0 0
    %3012 = vmatpush2.bf16.msra.mxu0 0
    %3013 = vmatprep.subr.bf16.mxu0 0
    %3014 = vmatpush2.bf16.msra.mxu0 0
    %3015 = vmatprep.mubr.bf16.mxu0 0
    %3016 = vmatmul.mubr.bf16.gmra.mxu0 %v2794
    %v3017 = vpop.f32.mrf.mxu0
    %v3018 = vadd.f32 %v2808, %v3017
    %v3019 = vpop.f32.mrf.mxu0
    %v3020 = vpop.f32.mrf.mxu0
    %v3021 = vadd.f32 %v2808, %v3020
    %v3022 = vpop.f32.mrf.mxu0
    %3023 = vdwg.mxu0
    %v3024 = vpack.c.bf16 %v2975, %v2975
    %v3025 = vpack.c.bf16 %v2979, %v2979
    %v3026 = vpack.c.bf16 %v2977, %v2977
    %v3027 = vpack.c.bf16 %v2981, %v2981
    %v3028 = vpack.c.bf16 %v3018, %v3018
    %v3029 = vpack.c.bf16 %v3021, %v3021
    %v3031 = vsel %vm1318, %v3024, 0
    %v3034 = vsel %vm1318, %v3026, 0
    %3036 = vmatprep.subr.bf16.mxu0 0
    %3037 = vmatpush1.bf16.xpose.msra.mxu0 0
    %3038 = vmatprep.subr.bf16.mxu0 0
    %3039 = vmatpush1.bf16.xpose.msra.mxu0 0
    %3040 = vmatprep.subr.bf16.mxu0 0
    %3041 = vmatpush1.bf16.xpose.msra.mxu0 0
    %3042 = vmatprep.subr.bf16.mxu0 0
    %3043 = vmatpush1.bf16.xpose.msra.mxu0 0
    %3044 = vmatprep.subr.bf16.mxu0 0
    %3045 = vmatpush1.bf16.xpose.msra.mxu0 0
    %3046 = vmatprep.subr.bf16.mxu0 0
    %3047 = vmatpush1.bf16.xpose.msra.mxu0 0
    %3048 = vmatprep.subr.bf16.mxu0 0
    %3049 = vmatpush1.bf16.xpose.msra.mxu0 0
    %3050 = vmatprep.subr.bf16.mxu0 0
    %3051 = vmatpush1.bf16.xpose.msra.mxu0 %v3034
    %3052 = vmatprep.subr.bf16.mxu0 0
    %3053 = vmatpush2.bf16.xpose.msra.mxu0 0
    %3054 = vmatprep.subr.bf16.mxu0 0
    %3055 = vmatpush2.bf16.xpose.msra.mxu0 0
    %3056 = vmatprep.subr.bf16.mxu0 0
    %3057 = vmatpush2.bf16.xpose.msra.mxu0 0
    %3058 = vmatprep.subr.bf16.mxu0 0
    %3059 = vmatpush2.bf16.xpose.msra.mxu0 0
    %3060 = vmatprep.subr.bf16.mxu0 0
    %3061 = vmatpush2.bf16.xpose.msra.mxu0 0
    %3062 = vmatprep.subr.bf16.mxu0 0
    %3063 = vmatpush2.bf16.xpose.msra.mxu0 0
    %3064 = vmatprep.subr.bf16.mxu0 0
    %3065 = vmatpush2.bf16.xpose.msra.mxu0 0
    %3066 = vmatprep.subr.bf16.mxu0 0
    %3067 = vmatpush2.bf16.xpose.msra.mxu0 0
    %3068 = vmatprep.mubr.bf16.mxu0 0
    %3069 = vmatmul.mubr.bf16.gmra.mxu0 %v3031
    %v3070 = vpop.f32.mrf.mxu0
    %v3071 = vadd.f32 %v1311, %v3070
    %v3072 = vpop.f32.mrf.mxu0
    %v3073 = vpop.f32.mrf.mxu0
    %v3074 = vpop.f32.mrf.mxu0
    %3075 = vdwg.mxu0
    %v3077 = vsel %vm1318, %v3025, 0
    %v3080 = vsel %vm1318, %v3027, 0
    %3082 = vmatprep.subr.bf16.mxu0 0
    %3083 = vmatpush1.bf16.xpose.msra.mxu0 0
    %3084 = vmatprep.subr.bf16.mxu0 0
    %3085 = vmatpush1.bf16.xpose.msra.mxu0 0
    %3086 = vmatprep.subr.bf16.mxu0 0
    %3087 = vmatpush1.bf16.xpose.msra.mxu0 0
    %3088 = vmatprep.subr.bf16.mxu0 0
    %3089 = vmatpush1.bf16.xpose.msra.mxu0 0
    %3090 = vmatprep.subr.bf16.mxu0 0
    %3091 = vmatpush1.bf16.xpose.msra.mxu0 0
    %3092 = vmatprep.subr.bf16.mxu0 0
    %3093 = vmatpush1.bf16.xpose.msra.mxu0 0
    %3094 = vmatprep.subr.bf16.mxu0 0
    %3095 = vmatpush1.bf16.xpose.msra.mxu0 0
    %3096 = vmatprep.subr.bf16.mxu0 0
    %3097 = vmatpush1.bf16.xpose.msra.mxu0 %v3080
    %3098 = vmatprep.subr.bf16.mxu0 0
    %3099 = vmatpush2.bf16.xpose.msra.mxu0 0
    %3100 = vmatprep.subr.bf16.mxu0 0
    %3101 = vmatpush2.bf16.xpose.msra.mxu0 0
    %3102 = vmatprep.subr.bf16.mxu0 0
    %3103 = vmatpush2.bf16.xpose.msra.mxu0 0
    %3104 = vmatprep.subr.bf16.mxu0 0
    %3105 = vmatpush2.bf16.xpose.msra.mxu0 0
    %3106 = vmatprep.subr.bf16.mxu0 0
    %3107 = vmatpush2.bf16.xpose.msra.mxu0 0
    %3108 = vmatprep.subr.bf16.mxu0 0
    %3109 = vmatpush2.bf16.xpose.msra.mxu0 0
    %3110 = vmatprep.subr.bf16.mxu0 0
    %3111 = vmatpush2.bf16.xpose.msra.mxu0 0
    %3112 = vmatprep.subr.bf16.mxu0 0
    %3113 = vmatpush2.bf16.xpose.msra.mxu0 0
    %3114 = vmatprep.mubr.bf16.mxu0 0
    %3115 = vmatmul.mubr.bf16.gmra.mxu0 %v3077
    %v3116 = vpop.f32.mrf.mxu0
    %v3117 = vadd.f32 %v1315, %v3116
    %v3118 = vpop.f32.mrf.mxu0
    %v3119 = vpop.f32.mrf.mxu0
    %v3120 = vpop.f32.mrf.mxu0
    %3121 = vdwg.mxu0
    %v3122 = vsel %vm1411, %v3071, -inf
    %3123 = vmax.xlane.f32.xlu0 %v3122
    %v3124 = vpop.xlane.xlu0 %3123
    %v3125 = vsel %vm1411, %v3117, -inf
    %3126 = vmax.xlane.f32.xlu0 %v3125
    %v3127 = vpop.xlane.xlu0 %3126
    %v3128 = vsub.f32 %v3071, %v3124
    %v3129 = vsub.f32 %v3117, %v3127
    %v3130 = vmul.f32 %v3128, 1.442695
    %v3131 = vpow.pop %v3130
    %v3132 = vmul.f32 %v3129, 1.442695
    %v3133 = vpow.pop %v3132
    %v3134 = vsel %vm1411, %v3131, 0.0
    %3135 = vadd.xlane.f32.xlu0 %v3134
    %v3136 = vpop.xlane.xlu0 %3135
    %v3137 = vsel %vm1411, %v3133, 0.0
    %3138 = vadd.xlane.f32.xlu0 %v3137
    %v3139 = vpop.xlane.xlu0 %3138
    %v3140 = vrcp.pop %v3136
    %v3141 = vrcp.pop %v3139
    %v3142 = vmul.f32 %v3131, %v3140
    %v3143 = vmul.f32 %v3133, %v3141
    %v3144 = vpack.c.bf16 %v3142, %v3142
    %v3145 = vpack.c.bf16 %v3143, %v3143
    %v3147 = vsel %vm1411, %v3144, 0
    %v3150 = vsel %vm1439, %v3028, 0
    %3152 = vmatprep.subr.bf16.mxu0 0
    %3153 = vmatpush1.bf16.msra.mxu0 0
    %3154 = vmatprep.subr.bf16.mxu0 0
    %3155 = vmatpush1.bf16.msra.mxu0 0
    %3156 = vmatprep.subr.bf16.mxu0 0
    %3157 = vmatpush1.bf16.msra.mxu0 0
    %3158 = vmatprep.subr.bf16.mxu0 0
    %3159 = vmatpush1.bf16.msra.mxu0 0
    %3160 = vmatprep.subr.bf16.mxu0 0
    %3161 = vmatpush1.bf16.msra.mxu0 0
    %3162 = vmatprep.subr.bf16.mxu0 0
    %3163 = vmatpush1.bf16.msra.mxu0 0
    %3164 = vmatprep.subr.bf16.mxu0 0
    %3165 = vmatpush1.bf16.msra.mxu0 0
    %3166 = vmatprep.subr.bf16.mxu0 0
    %3167 = vmatpush1.bf16.msra.mxu0 %v3150
    %3168 = vmatprep.subr.bf16.mxu0 0
    %3169 = vmatpush2.bf16.msra.mxu0 0
    %3170 = vmatprep.subr.bf16.mxu0 0
    %3171 = vmatpush2.bf16.msra.mxu0 0
    %3172 = vmatprep.subr.bf16.mxu0 0
    %3173 = vmatpush2.bf16.msra.mxu0 0
    %3174 = vmatprep.subr.bf16.mxu0 0
    %3175 = vmatpush2.bf16.msra.mxu0 0
    %3176 = vmatprep.subr.bf16.mxu0 0
    %3177 = vmatpush2.bf16.msra.mxu0 0
    %3178 = vmatprep.subr.bf16.mxu0 0
    %3179 = vmatpush2.bf16.msra.mxu0 0
    %3180 = vmatprep.subr.bf16.mxu0 0
    %3181 = vmatpush2.bf16.msra.mxu0 0
    %3182 = vmatprep.subr.bf16.mxu0 0
    %3183 = vmatpush2.bf16.msra.mxu0 0
    %3184 = vmatprep.mubr.bf16.mxu0 0
    %3185 = vmatmul.mubr.bf16.gmra.mxu0 %v3147
    %v3186 = vpop.f32.mrf.mxu0
    %v3187 = vadd.f32 0.0, %v3186
    %v3188 = vpop.f32.mrf.mxu0
    %v3189 = vpop.f32.mrf.mxu0
    %v3190 = vpop.f32.mrf.mxu0
    %3191 = vdwg.mxu0
    %v3193 = vsel %vm1411, %v3145, 0
    %v3196 = vsel %vm1439, %v3029, 0
    %3198 = vmatprep.subr.bf16.mxu0 0
    %3199 = vmatpush1.bf16.msra.mxu0 0
    %3200 = vmatprep.subr.bf16.mxu0 0
    %3201 = vmatpush1.bf16.msra.mxu0 0
    %3202 = vmatprep.subr.bf16.mxu0 0
    %3203 = vmatpush1.bf16.msra.mxu0 0
    %3204 = vmatprep.subr.bf16.mxu0 0
    %3205 = vmatpush1.bf16.msra.mxu0 0
    %3206 = vmatprep.subr.bf16.mxu0 0
    %3207 = vmatpush1.bf16.msra.mxu0 0
    %3208 = vmatprep.subr.bf16.mxu0 0
    %3209 = vmatpush1.bf16.msra.mxu0 0
    %3210 = vmatprep.subr.bf16.mxu0 0
    %3211 = vmatpush1.bf16.msra.mxu0 0
    %3212 = vmatprep.subr.bf16.mxu0 0
    %3213 = vmatpush1.bf16.msra.mxu0 %v3196
    %3214 = vmatprep.subr.bf16.mxu0 0
    %3215 = vmatpush2.bf16.msra.mxu0 0
    %3216 = vmatprep.subr.bf16.mxu0 0
    %3217 = vmatpush2.bf16.msra.mxu0 0
    %3218 = vmatprep.subr.bf16.mxu0 0
    %3219 = vmatpush2.bf16.msra.mxu0 0
    %3220 = vmatprep.subr.bf16.mxu0 0
    %3221 = vmatpush2.bf16.msra.mxu0 0
    %3222 = vmatprep.subr.bf16.mxu0 0
    %3223 = vmatpush2.bf16.msra.mxu0 0
    %3224 = vmatprep.subr.bf16.mxu0 0
    %3225 = vmatpush2.bf16.msra.mxu0 0
    %3226 = vmatprep.subr.bf16.mxu0 0
    %3227 = vmatpush2.bf16.msra.mxu0 0
    %3228 = vmatprep.subr.bf16.mxu0 0
    %3229 = vmatpush2.bf16.msra.mxu0 0
    %3230 = vmatprep.mubr.bf16.mxu0 0
    %3231 = vmatmul.mubr.bf16.gmra.mxu0 %v3193
    %v3232 = vpop.f32.mrf.mxu0
    %v3233 = vadd.f32 0.0, %v3232
    %v3234 = vpop.f32.mrf.mxu0
    %v3235 = vpop.f32.mrf.mxu0
    %v3236 = vpop.f32.mrf.mxu0
    %3237 = vdwg.mxu0
    %3239 = vrot.lane.b32.xlu0 %v3024, 96
    %v3240 = vpop.permute.xlu0 %3239
    %3242 = vrot.lane.b32.xlu0 %v3026, 96
    %v3243 = vpop.permute.xlu0 %3242
    %v3245 = vsel %vm1318, %v3240, 0
    %v3248 = vsel %vm1318, %v3243, 0
    %3250 = vmatprep.subr.bf16.mxu0 0
    %3251 = vmatpush1.bf16.xpose.msra.mxu0 0
    %3252 = vmatprep.subr.bf16.mxu0 0
    %3253 = vmatpush1.bf16.xpose.msra.mxu0 0
    %3254 = vmatprep.subr.bf16.mxu0 0
    %3255 = vmatpush1.bf16.xpose.msra.mxu0 0
    %3256 = vmatprep.subr.bf16.mxu0 0
    %3257 = vmatpush1.bf16.xpose.msra.mxu0 0
    %3258 = vmatprep.subr.bf16.mxu0 0
    %3259 = vmatpush1.bf16.xpose.msra.mxu0 0
    %3260 = vmatprep.subr.bf16.mxu0 0
    %3261 = vmatpush1.bf16.xpose.msra.mxu0 0
    %3262 = vmatprep.subr.bf16.mxu0 0
    %3263 = vmatpush1.bf16.xpose.msra.mxu0 0
    %3264 = vmatprep.subr.bf16.mxu0 0
    %3265 = vmatpush1.bf16.xpose.msra.mxu0 %v3248
    %3266 = vmatprep.subr.bf16.mxu0 0
    %3267 = vmatpush2.bf16.xpose.msra.mxu0 0
    %3268 = vmatprep.subr.bf16.mxu0 0
    %3269 = vmatpush2.bf16.xpose.msra.mxu0 0
    %3270 = vmatprep.subr.bf16.mxu0 0
    %3271 = vmatpush2.bf16.xpose.msra.mxu0 0
    %3272 = vmatprep.subr.bf16.mxu0 0
    %3273 = vmatpush2.bf16.xpose.msra.mxu0 0
    %3274 = vmatprep.subr.bf16.mxu0 0
    %3275 = vmatpush2.bf16.xpose.msra.mxu0 0
    %3276 = vmatprep.subr.bf16.mxu0 0
    %3277 = vmatpush2.bf16.xpose.msra.mxu0 0
    %3278 = vmatprep.subr.bf16.mxu0 0
    %3279 = vmatpush2.bf16.xpose.msra.mxu0 0
    %3280 = vmatprep.subr.bf16.mxu0 0
    %3281 = vmatpush2.bf16.xpose.msra.mxu0 0
    %3282 = vmatprep.mubr.bf16.mxu0 0
    %3283 = vmatmul.mubr.bf16.gmra.mxu0 %v3245
    %v3284 = vpop.f32.mrf.mxu0
    %v3285 = vadd.f32 %v1311, %v3284
    %v3286 = vpop.f32.mrf.mxu0
    %v3287 = vpop.f32.mrf.mxu0
    %v3288 = vpop.f32.mrf.mxu0
    %3289 = vdwg.mxu0
    %3291 = vrot.lane.b32.xlu0 %v3025, 96
    %v3292 = vpop.permute.xlu0 %3291
    %3294 = vrot.lane.b32.xlu0 %v3027, 96
    %v3295 = vpop.permute.xlu0 %3294
    %v3297 = vsel %vm1318, %v3292, 0
    %v3300 = vsel %vm1318, %v3295, 0
    %3302 = vmatprep.subr.bf16.mxu0 0
    %3303 = vmatpush1.bf16.xpose.msra.mxu0 0
    %3304 = vmatprep.subr.bf16.mxu0 0
    %3305 = vmatpush1.bf16.xpose.msra.mxu0 0
    %3306 = vmatprep.subr.bf16.mxu0 0
    %3307 = vmatpush1.bf16.xpose.msra.mxu0 0
    %3308 = vmatprep.subr.bf16.mxu0 0
    %3309 = vmatpush1.bf16.xpose.msra.mxu0 0
    %3310 = vmatprep.subr.bf16.mxu0 0
    %3311 = vmatpush1.bf16.xpose.msra.mxu0 0
    %3312 = vmatprep.subr.bf16.mxu0 0
    %3313 = vmatpush1.bf16.xpose.msra.mxu0 0
    %3314 = vmatprep.subr.bf16.mxu0 0
    %3315 = vmatpush1.bf16.xpose.msra.mxu0 0
    %3316 = vmatprep.subr.bf16.mxu0 0
    %3317 = vmatpush1.bf16.xpose.msra.mxu0 %v3300
    %3318 = vmatprep.subr.bf16.mxu0 0
    %3319 = vmatpush2.bf16.xpose.msra.mxu0 0
    %3320 = vmatprep.subr.bf16.mxu0 0
    %3321 = vmatpush2.bf16.xpose.msra.mxu0 0
    %3322 = vmatprep.subr.bf16.mxu0 0
    %3323 = vmatpush2.bf16.xpose.msra.mxu0 0
    %3324 = vmatprep.subr.bf16.mxu0 0
    %3325 = vmatpush2.bf16.xpose.msra.mxu0 0
    %3326 = vmatprep.subr.bf16.mxu0 0
    %3327 = vmatpush2.bf16.xpose.msra.mxu0 0
    %3328 = vmatprep.subr.bf16.mxu0 0
    %3329 = vmatpush2.bf16.xpose.msra.mxu0 0
    %3330 = vmatprep.subr.bf16.mxu0 0
    %3331 = vmatpush2.bf16.xpose.msra.mxu0 0
    %3332 = vmatprep.subr.bf16.mxu0 0
    %3333 = vmatpush2.bf16.xpose.msra.mxu0 0
    %3334 = vmatprep.mubr.bf16.mxu0 0
    %3335 = vmatmul.mubr.bf16.gmra.mxu0 %v3297
    %v3336 = vpop.f32.mrf.mxu0
    %v3337 = vadd.f32 %v1315, %v3336
    %v3338 = vpop.f32.mrf.mxu0
    %v3339 = vpop.f32.mrf.mxu0
    %v3340 = vpop.f32.mrf.mxu0
    %3341 = vdwg.mxu0
    %v3342 = vsel %vm1411, %v3285, -inf
    %3343 = vmax.xlane.f32.xlu0 %v3342
    %v3344 = vpop.xlane.xlu0 %3343
    %v3345 = vsel %vm1411, %v3337, -inf
    %3346 = vmax.xlane.f32.xlu0 %v3345
    %v3347 = vpop.xlane.xlu0 %3346
    %v3348 = vsub.f32 %v3285, %v3344
    %v3349 = vsub.f32 %v3337, %v3347
    %v3350 = vmul.f32 %v3348, 1.442695
    %v3351 = vpow.pop %v3350
    %v3352 = vmul.f32 %v3349, 1.442695
    %v3353 = vpow.pop %v3352
    %v3354 = vsel %vm1411, %v3351, 0.0
    %3355 = vadd.xlane.f32.xlu0 %v3354
    %v3356 = vpop.xlane.xlu0 %3355
    %v3357 = vsel %vm1411, %v3353, 0.0
    %3358 = vadd.xlane.f32.xlu0 %v3357
    %v3359 = vpop.xlane.xlu0 %3358
    %v3360 = vrcp.pop %v3356
    %v3361 = vrcp.pop %v3359
    %v3362 = vmul.f32 %v3351, %v3360
    %v3363 = vmul.f32 %v3353, %v3361
    %v3364 = vpack.c.bf16 %v3362, %v3362
    %v3365 = vpack.c.bf16 %v3363, %v3363
    %3367 = vrot.lane.b32.xlu0 %v3028, 96
    %v3368 = vpop.permute.xlu0 %3367
    %v3370 = vsel %vm1411, %v3364, 0
    %v3373 = vsel %vm1439, %v3368, 0
    %3375 = vmatprep.subr.bf16.mxu0 0
    %3376 = vmatpush1.bf16.msra.mxu0 0
    %3377 = vmatprep.subr.bf16.mxu0 0
    %3378 = vmatpush1.bf16.msra.mxu0 0
    %3379 = vmatprep.subr.bf16.mxu0 0
    %3380 = vmatpush1.bf16.msra.mxu0 0
    %3381 = vmatprep.subr.bf16.mxu0 0
    %3382 = vmatpush1.bf16.msra.mxu0 0
    %3383 = vmatprep.subr.bf16.mxu0 0
    %3384 = vmatpush1.bf16.msra.mxu0 0
    %3385 = vmatprep.subr.bf16.mxu0 0
    %3386 = vmatpush1.bf16.msra.mxu0 0
    %3387 = vmatprep.subr.bf16.mxu0 0
    %3388 = vmatpush1.bf16.msra.mxu0 0
    %3389 = vmatprep.subr.bf16.mxu0 0
    %3390 = vmatpush1.bf16.msra.mxu0 %v3373
    %3391 = vmatprep.subr.bf16.mxu0 0
    %3392 = vmatpush2.bf16.msra.mxu0 0
    %3393 = vmatprep.subr.bf16.mxu0 0
    %3394 = vmatpush2.bf16.msra.mxu0 0
    %3395 = vmatprep.subr.bf16.mxu0 0
    %3396 = vmatpush2.bf16.msra.mxu0 0
    %3397 = vmatprep.subr.bf16.mxu0 0
    %3398 = vmatpush2.bf16.msra.mxu0 0
    %3399 = vmatprep.subr.bf16.mxu0 0
    %3400 = vmatpush2.bf16.msra.mxu0 0
    %3401 = vmatprep.subr.bf16.mxu0 0
    %3402 = vmatpush2.bf16.msra.mxu0 0
    %3403 = vmatprep.subr.bf16.mxu0 0
    %3404 = vmatpush2.bf16.msra.mxu0 0
    %3405 = vmatprep.subr.bf16.mxu0 0
    %3406 = vmatpush2.bf16.msra.mxu0 0
    %3407 = vmatprep.mubr.bf16.mxu0 0
    %3408 = vmatmul.mubr.bf16.gmra.mxu0 %v3370
    %v3409 = vpop.f32.mrf.mxu0
    %v3410 = vadd.f32 0.0, %v3409
    %v3411 = vpop.f32.mrf.mxu0
    %v3412 = vpop.f32.mrf.mxu0
    %v3413 = vpop.f32.mrf.mxu0
    %3414 = vdwg.mxu0
    %3416 = vrot.lane.b32.xlu0 %v3029, 96
    %v3417 = vpop.permute.xlu0 %3416
    %v3419 = vsel %vm1411, %v3365, 0
    %v3422 = vsel %vm1439, %v3417, 0
    %3424 = vmatprep.subr.bf16.mxu0 0
    %3425 = vmatpush1.bf16.msra.mxu0 0
    %3426 = vmatprep.subr.bf16.mxu0 0
    %3427 = vmatpush1.bf16.msra.mxu0 0
    %3428 = vmatprep.subr.bf16.mxu0 0
    %3429 = vmatpush1.bf16.msra.mxu0 0
    %3430 = vmatprep.subr.bf16.mxu0 0
    %3431 = vmatpush1.bf16.msra.mxu0 0
    %3432 = vmatprep.subr.bf16.mxu0 0
    %3433 = vmatpush1.bf16.msra.mxu0 0
    %3434 = vmatprep.subr.bf16.mxu0 0
    %3435 = vmatpush1.bf16.msra.mxu0 0
    %3436 = vmatprep.subr.bf16.mxu0 0
    %3437 = vmatpush1.bf16.msra.mxu0 0
    %3438 = vmatprep.subr.bf16.mxu0 0
    %3439 = vmatpush1.bf16.msra.mxu0 %v3422
    %3440 = vmatprep.subr.bf16.mxu0 0
    %3441 = vmatpush2.bf16.msra.mxu0 0
    %3442 = vmatprep.subr.bf16.mxu0 0
    %3443 = vmatpush2.bf16.msra.mxu0 0
    %3444 = vmatprep.subr.bf16.mxu0 0
    %3445 = vmatpush2.bf16.msra.mxu0 0
    %3446 = vmatprep.subr.bf16.mxu0 0
    %3447 = vmatpush2.bf16.msra.mxu0 0
    %3448 = vmatprep.subr.bf16.mxu0 0
    %3449 = vmatpush2.bf16.msra.mxu0 0
    %3450 = vmatprep.subr.bf16.mxu0 0
    %3451 = vmatpush2.bf16.msra.mxu0 0
    %3452 = vmatprep.subr.bf16.mxu0 0
    %3453 = vmatpush2.bf16.msra.mxu0 0
    %3454 = vmatprep.subr.bf16.mxu0 0
    %3455 = vmatpush2.bf16.msra.mxu0 0
    %3456 = vmatprep.mubr.bf16.mxu0 0
    %3457 = vmatmul.mubr.bf16.gmra.mxu0 %v3419
    %v3458 = vpop.f32.mrf.mxu0
    %v3459 = vadd.f32 0.0, %v3458
    %v3460 = vpop.f32.mrf.mxu0
    %v3461 = vpop.f32.mrf.mxu0
    %v3462 = vpop.f32.mrf.mxu0
    %3463 = vdwg.mxu0
    %3464 = vrot.lane.b32.xlu0 %v3024, 64
    %v3465 = vpop.permute.xlu0 %3464
    %3466 = vrot.lane.b32.xlu0 %v3026, 64
    %v3467 = vpop.permute.xlu0 %3466
    %v3469 = vsel %vm1318, %v3465, 0
    %v3472 = vsel %vm1318, %v3467, 0
    %3474 = vmatprep.subr.bf16.mxu0 0
    %3475 = vmatpush1.bf16.xpose.msra.mxu0 0
    %3476 = vmatprep.subr.bf16.mxu0 0
    %3477 = vmatpush1.bf16.xpose.msra.mxu0 0
    %3478 = vmatprep.subr.bf16.mxu0 0
    %3479 = vmatpush1.bf16.xpose.msra.mxu0 0
    %3480 = vmatprep.subr.bf16.mxu0 0
    %3481 = vmatpush1.bf16.xpose.msra.mxu0 0
    %3482 = vmatprep.subr.bf16.mxu0 0
    %3483 = vmatpush1.bf16.xpose.msra.mxu0 0
    %3484 = vmatprep.subr.bf16.mxu0 0
    %3485 = vmatpush1.bf16.xpose.msra.mxu0 0
    %3486 = vmatprep.subr.bf16.mxu0 0
    %3487 = vmatpush1.bf16.xpose.msra.mxu0 0
    %3488 = vmatprep.subr.bf16.mxu0 0
    %3489 = vmatpush1.bf16.xpose.msra.mxu0 %v3472
    %3490 = vmatprep.subr.bf16.mxu0 0
    %3491 = vmatpush2.bf16.xpose.msra.mxu0 0
    %3492 = vmatprep.subr.bf16.mxu0 0
    %3493 = vmatpush2.bf16.xpose.msra.mxu0 0
    %3494 = vmatprep.subr.bf16.mxu0 0
    %3495 = vmatpush2.bf16.xpose.msra.mxu0 0
    %3496 = vmatprep.subr.bf16.mxu0 0
    %3497 = vmatpush2.bf16.xpose.msra.mxu0 0
    %3498 = vmatprep.subr.bf16.mxu0 0
    %3499 = vmatpush2.bf16.xpose.msra.mxu0 0
    %3500 = vmatprep.subr.bf16.mxu0 0
    %3501 = vmatpush2.bf16.xpose.msra.mxu0 0
    %3502 = vmatprep.subr.bf16.mxu0 0
    %3503 = vmatpush2.bf16.xpose.msra.mxu0 0
    %3504 = vmatprep.subr.bf16.mxu0 0
    %3505 = vmatpush2.bf16.xpose.msra.mxu0 0
    %3506 = vmatprep.mubr.bf16.mxu0 0
    %3507 = vmatmul.mubr.bf16.gmra.mxu0 %v3469
    %v3508 = vpop.f32.mrf.mxu0
    %v3509 = vadd.f32 %v1311, %v3508
    %v3510 = vpop.f32.mrf.mxu0
    %v3511 = vpop.f32.mrf.mxu0
    %v3512 = vpop.f32.mrf.mxu0
    %3513 = vdwg.mxu0
    %3514 = vrot.lane.b32.xlu0 %v3025, 64
    %v3515 = vpop.permute.xlu0 %3514
    %3516 = vrot.lane.b32.xlu0 %v3027, 64
    %v3517 = vpop.permute.xlu0 %3516
    %v3519 = vsel %vm1318, %v3515, 0
    %v3522 = vsel %vm1318, %v3517, 0
    %3524 = vmatprep.subr.bf16.mxu0 0
    %3525 = vmatpush1.bf16.xpose.msra.mxu0 0
    %3526 = vmatprep.subr.bf16.mxu0 0
    %3527 = vmatpush1.bf16.xpose.msra.mxu0 0
    %3528 = vmatprep.subr.bf16.mxu0 0
    %3529 = vmatpush1.bf16.xpose.msra.mxu0 0
    %3530 = vmatprep.subr.bf16.mxu0 0
    %3531 = vmatpush1.bf16.xpose.msra.mxu0 0
    %3532 = vmatprep.subr.bf16.mxu0 0
    %3533 = vmatpush1.bf16.xpose.msra.mxu0 0
    %3534 = vmatprep.subr.bf16.mxu0 0
    %3535 = vmatpush1.bf16.xpose.msra.mxu0 0
    %3536 = vmatprep.subr.bf16.mxu0 0
    %3537 = vmatpush1.bf16.xpose.msra.mxu0 0
    %3538 = vmatprep.subr.bf16.mxu0 0
    %3539 = vmatpush1.bf16.xpose.msra.mxu0 %v3522
    %3540 = vmatprep.subr.bf16.mxu0 0
    %3541 = vmatpush2.bf16.xpose.msra.mxu0 0
    %3542 = vmatprep.subr.bf16.mxu0 0
    %3543 = vmatpush2.bf16.xpose.msra.mxu0 0
    %3544 = vmatprep.subr.bf16.mxu0 0
    %3545 = vmatpush2.bf16.xpose.msra.mxu0 0
    %3546 = vmatprep.subr.bf16.mxu0 0
    %3547 = vmatpush2.bf16.xpose.msra.mxu0 0
    %3548 = vmatprep.subr.bf16.mxu0 0
    %3549 = vmatpush2.bf16.xpose.msra.mxu0 0
    %3550 = vmatprep.subr.bf16.mxu0 0
    %3551 = vmatpush2.bf16.xpose.msra.mxu0 0
    %3552 = vmatprep.subr.bf16.mxu0 0
    %3553 = vmatpush2.bf16.xpose.msra.mxu0 0
    %3554 = vmatprep.subr.bf16.mxu0 0
    %3555 = vmatpush2.bf16.xpose.msra.mxu0 0
    %3556 = vmatprep.mubr.bf16.mxu0 0
    %3557 = vmatmul.mubr.bf16.gmra.mxu0 %v3519
    %v3558 = vpop.f32.mrf.mxu0
    %v3559 = vadd.f32 %v1315, %v3558
    %v3560 = vpop.f32.mrf.mxu0
    %v3561 = vpop.f32.mrf.mxu0
    %v3562 = vpop.f32.mrf.mxu0
    %3563 = vdwg.mxu0
    %v3564 = vsel %vm1411, %v3509, -inf
    %3565 = vmax.xlane.f32.xlu0 %v3564
    %v3566 = vpop.xlane.xlu0 %3565
    %v3567 = vsel %vm1411, %v3559, -inf
    %3568 = vmax.xlane.f32.xlu0 %v3567
    %v3569 = vpop.xlane.xlu0 %3568
    %v3570 = vsub.f32 %v3509, %v3566
    %v3571 = vsub.f32 %v3559, %v3569
    %v3572 = vmul.f32 %v3570, 1.442695
    %v3573 = vpow.pop %v3572
    %v3574 = vmul.f32 %v3571, 1.442695
    %v3575 = vpow.pop %v3574
    %v3576 = vsel %vm1411, %v3573, 0.0
    %3577 = vadd.xlane.f32.xlu0 %v3576
    %v3578 = vpop.xlane.xlu0 %3577
    %v3579 = vsel %vm1411, %v3575, 0.0
    %3580 = vadd.xlane.f32.xlu0 %v3579
    %v3581 = vpop.xlane.xlu0 %3580
    %v3582 = vrcp.pop %v3578
    %v3583 = vrcp.pop %v3581
    %v3584 = vmul.f32 %v3573, %v3582
    %v3585 = vmul.f32 %v3575, %v3583
    %v3586 = vpack.c.bf16 %v3584, %v3584
    %v3587 = vpack.c.bf16 %v3585, %v3585
    %3588 = vrot.lane.b32.xlu0 %v3028, 64
    %v3589 = vpop.permute.xlu0 %3588
    %v3591 = vsel %vm1411, %v3586, 0
    %v3594 = vsel %vm1439, %v3589, 0
    %3596 = vmatprep.subr.bf16.mxu0 0
    %3597 = vmatpush1.bf16.msra.mxu0 0
    %3598 = vmatprep.subr.bf16.mxu0 0
    %3599 = vmatpush1.bf16.msra.mxu0 0
    %3600 = vmatprep.subr.bf16.mxu0 0
    %3601 = vmatpush1.bf16.msra.mxu0 0
    %3602 = vmatprep.subr.bf16.mxu0 0
    %3603 = vmatpush1.bf16.msra.mxu0 0
    %3604 = vmatprep.subr.bf16.mxu0 0
    %3605 = vmatpush1.bf16.msra.mxu0 0
    %3606 = vmatprep.subr.bf16.mxu0 0
    %3607 = vmatpush1.bf16.msra.mxu0 0
    %3608 = vmatprep.subr.bf16.mxu0 0
    %3609 = vmatpush1.bf16.msra.mxu0 0
    %3610 = vmatprep.subr.bf16.mxu0 0
    %3611 = vmatpush1.bf16.msra.mxu0 %v3594
    %3612 = vmatprep.subr.bf16.mxu0 0
    %3613 = vmatpush2.bf16.msra.mxu0 0
    %3614 = vmatprep.subr.bf16.mxu0 0
    %3615 = vmatpush2.bf16.msra.mxu0 0
    %3616 = vmatprep.subr.bf16.mxu0 0
    %3617 = vmatpush2.bf16.msra.mxu0 0
    %3618 = vmatprep.subr.bf16.mxu0 0
    %3619 = vmatpush2.bf16.msra.mxu0 0
    %3620 = vmatprep.subr.bf16.mxu0 0
    %3621 = vmatpush2.bf16.msra.mxu0 0
    %3622 = vmatprep.subr.bf16.mxu0 0
    %3623 = vmatpush2.bf16.msra.mxu0 0
    %3624 = vmatprep.subr.bf16.mxu0 0
    %3625 = vmatpush2.bf16.msra.mxu0 0
    %3626 = vmatprep.subr.bf16.mxu0 0
    %3627 = vmatpush2.bf16.msra.mxu0 0
    %3628 = vmatprep.mubr.bf16.mxu0 0
    %3629 = vmatmul.mubr.bf16.gmra.mxu0 %v3591
    %v3630 = vpop.f32.mrf.mxu0
    %v3631 = vadd.f32 0.0, %v3630
    %v3632 = vpop.f32.mrf.mxu0
    %v3633 = vpop.f32.mrf.mxu0
    %v3634 = vpop.f32.mrf.mxu0
    %3635 = vdwg.mxu0
    %3636 = vrot.lane.b32.xlu0 %v3029, 64
    %v3637 = vpop.permute.xlu0 %3636
    %v3639 = vsel %vm1411, %v3587, 0
    %v3642 = vsel %vm1439, %v3637, 0
    %3644 = vmatprep.subr.bf16.mxu0 0
    %3645 = vmatpush1.bf16.msra.mxu0 0
    %3646 = vmatprep.subr.bf16.mxu0 0
    %3647 = vmatpush1.bf16.msra.mxu0 0
    %3648 = vmatprep.subr.bf16.mxu0 0
    %3649 = vmatpush1.bf16.msra.mxu0 0
    %3650 = vmatprep.subr.bf16.mxu0 0
    %3651 = vmatpush1.bf16.msra.mxu0 0
    %3652 = vmatprep.subr.bf16.mxu0 0
    %3653 = vmatpush1.bf16.msra.mxu0 0
    %3654 = vmatprep.subr.bf16.mxu0 0
    %3655 = vmatpush1.bf16.msra.mxu0 0
    %3656 = vmatprep.subr.bf16.mxu0 0
    %3657 = vmatpush1.bf16.msra.mxu0 0
    %3658 = vmatprep.subr.bf16.mxu0 0
    %3659 = vmatpush1.bf16.msra.mxu0 %v3642
    %3660 = vmatprep.subr.bf16.mxu0 0
    %3661 = vmatpush2.bf16.msra.mxu0 0
    %3662 = vmatprep.subr.bf16.mxu0 0
    %3663 = vmatpush2.bf16.msra.mxu0 0
    %3664 = vmatprep.subr.bf16.mxu0 0
    %3665 = vmatpush2.bf16.msra.mxu0 0
    %3666 = vmatprep.subr.bf16.mxu0 0
    %3667 = vmatpush2.bf16.msra.mxu0 0
    %3668 = vmatprep.subr.bf16.mxu0 0
    %3669 = vmatpush2.bf16.msra.mxu0 0
    %3670 = vmatprep.subr.bf16.mxu0 0
    %3671 = vmatpush2.bf16.msra.mxu0 0
    %3672 = vmatprep.subr.bf16.mxu0 0
    %3673 = vmatpush2.bf16.msra.mxu0 0
    %3674 = vmatprep.subr.bf16.mxu0 0
    %3675 = vmatpush2.bf16.msra.mxu0 0
    %3676 = vmatprep.mubr.bf16.mxu0 0
    %3677 = vmatmul.mubr.bf16.gmra.mxu0 %v3639
    %v3678 = vpop.f32.mrf.mxu0
    %v3679 = vadd.f32 0.0, %v3678
    %v3680 = vpop.f32.mrf.mxu0
    %v3681 = vpop.f32.mrf.mxu0
    %v3682 = vpop.f32.mrf.mxu0
    %3683 = vdwg.mxu0
    %3684 = vrot.lane.b32.xlu0 %v3024, 32
    %v3685 = vpop.permute.xlu0 %3684
    %3686 = vrot.lane.b32.xlu0 %v3026, 32
    %v3687 = vpop.permute.xlu0 %3686
    %v3689 = vsel %vm1318, %v3685, 0
    %v3692 = vsel %vm1318, %v3687, 0
    %3694 = vmatprep.subr.bf16.mxu0 0
    %3695 = vmatpush1.bf16.xpose.msra.mxu0 0
    %3696 = vmatprep.subr.bf16.mxu0 0
    %3697 = vmatpush1.bf16.xpose.msra.mxu0 0
    %3698 = vmatprep.subr.bf16.mxu0 0
    %3699 = vmatpush1.bf16.xpose.msra.mxu0 0
    %3700 = vmatprep.subr.bf16.mxu0 0
    %3701 = vmatpush1.bf16.xpose.msra.mxu0 0
    %3702 = vmatprep.subr.bf16.mxu0 0
    %3703 = vmatpush1.bf16.xpose.msra.mxu0 0
    %3704 = vmatprep.subr.bf16.mxu0 0
    %3705 = vmatpush1.bf16.xpose.msra.mxu0 0
    %3706 = vmatprep.subr.bf16.mxu0 0
    %3707 = vmatpush1.bf16.xpose.msra.mxu0 0
    %3708 = vmatprep.subr.bf16.mxu0 0
    %3709 = vmatpush1.bf16.xpose.msra.mxu0 %v3692
    %3710 = vmatprep.subr.bf16.mxu0 0
    %3711 = vmatpush2.bf16.xpose.msra.mxu0 0
    %3712 = vmatprep.subr.bf16.mxu0 0
    %3713 = vmatpush2.bf16.xpose.msra.mxu0 0
    %3714 = vmatprep.subr.bf16.mxu0 0
    %3715 = vmatpush2.bf16.xpose.msra.mxu0 0
    %3716 = vmatprep.subr.bf16.mxu0 0
    %3717 = vmatpush2.bf16.xpose.msra.mxu0 0
    %3718 = vmatprep.subr.bf16.mxu0 0
    %3719 = vmatpush2.bf16.xpose.msra.mxu0 0
    %3720 = vmatprep.subr.bf16.mxu0 0
    %3721 = vmatpush2.bf16.xpose.msra.mxu0 0
    %3722 = vmatprep.subr.bf16.mxu0 0
    %3723 = vmatpush2.bf16.xpose.msra.mxu0 0
    %3724 = vmatprep.subr.bf16.mxu0 0
    %3725 = vmatpush2.bf16.xpose.msra.mxu0 0
    %3726 = vmatprep.mubr.bf16.mxu0 0
    %3727 = vmatmul.mubr.bf16.gmra.mxu0 %v3689
    %v3728 = vpop.f32.mrf.mxu0
    %v3729 = vadd.f32 %v1311, %v3728
    %v3730 = vpop.f32.mrf.mxu0
    %v3731 = vpop.f32.mrf.mxu0
    %v3732 = vpop.f32.mrf.mxu0
    %3733 = vdwg.mxu0
    %3734 = vrot.lane.b32.xlu0 %v3025, 32
    %v3735 = vpop.permute.xlu0 %3734
    %3736 = vrot.lane.b32.xlu0 %v3027, 32
    %v3737 = vpop.permute.xlu0 %3736
    %v3739 = vsel %vm1318, %v3735, 0
    %v3742 = vsel %vm1318, %v3737, 0
    %3744 = vmatprep.subr.bf16.mxu0 0
    %3745 = vmatpush1.bf16.xpose.msra.mxu0 0
    %3746 = vmatprep.subr.bf16.mxu0 0
    %3747 = vmatpush1.bf16.xpose.msra.mxu0 0
    %3748 = vmatprep.subr.bf16.mxu0 0
    %3749 = vmatpush1.bf16.xpose.msra.mxu0 0
    %3750 = vmatprep.subr.bf16.mxu0 0
    %3751 = vmatpush1.bf16.xpose.msra.mxu0 0
    %3752 = vmatprep.subr.bf16.mxu0 0
    %3753 = vmatpush1.bf16.xpose.msra.mxu0 0
    %3754 = vmatprep.subr.bf16.mxu0 0
    %3755 = vmatpush1.bf16.xpose.msra.mxu0 0
    %3756 = vmatprep.subr.bf16.mxu0 0
    %3757 = vmatpush1.bf16.xpose.msra.mxu0 0
    %3758 = vmatprep.subr.bf16.mxu0 0
    %3759 = vmatpush1.bf16.xpose.msra.mxu0 %v3742
    %3760 = vmatprep.subr.bf16.mxu0 0
    %3761 = vmatpush2.bf16.xpose.msra.mxu0 0
    %3762 = vmatprep.subr.bf16.mxu0 0
    %3763 = vmatpush2.bf16.xpose.msra.mxu0 0
    %3764 = vmatprep.subr.bf16.mxu0 0
    %3765 = vmatpush2.bf16.xpose.msra.mxu0 0
    %3766 = vmatprep.subr.bf16.mxu0 0
    %3767 = vmatpush2.bf16.xpose.msra.mxu0 0
    %3768 = vmatprep.subr.bf16.mxu0 0
    %3769 = vmatpush2.bf16.xpose.msra.mxu0 0
    %3770 = vmatprep.subr.bf16.mxu0 0
    %3771 = vmatpush2.bf16.xpose.msra.mxu0 0
    %3772 = vmatprep.subr.bf16.mxu0 0
    %3773 = vmatpush2.bf16.xpose.msra.mxu0 0
    %3774 = vmatprep.subr.bf16.mxu0 0
    %3775 = vmatpush2.bf16.xpose.msra.mxu0 0
    %3776 = vmatprep.mubr.bf16.mxu0 0
    %3777 = vmatmul.mubr.bf16.gmra.mxu0 %v3739
    %v3778 = vpop.f32.mrf.mxu0
    %v3779 = vadd.f32 %v1315, %v3778
    %v3780 = vpop.f32.mrf.mxu0
    %v3781 = vpop.f32.mrf.mxu0
    %v3782 = vpop.f32.mrf.mxu0
    %3783 = vdwg.mxu0
    %v3784 = vsel %vm1411, %v3729, -inf
    %3785 = vmax.xlane.f32.xlu0 %v3784
    %v3786 = vpop.xlane.xlu0 %3785
    %v3787 = vsel %vm1411, %v3779, -inf
    %3788 = vmax.xlane.f32.xlu0 %v3787
    %v3789 = vpop.xlane.xlu0 %3788
    %v3790 = vsub.f32 %v3729, %v3786
    %v3791 = vsub.f32 %v3779, %v3789
    %v3792 = vmul.f32 %v3790, 1.442695
    %v3793 = vpow.pop %v3792
    %v3794 = vmul.f32 %v3791, 1.442695
    %v3795 = vpow.pop %v3794
    %v3796 = vsel %vm1411, %v3793, 0.0
    %3797 = vadd.xlane.f32.xlu0 %v3796
    %v3798 = vpop.xlane.xlu0 %3797
    %v3799 = vsel %vm1411, %v3795, 0.0
    %3800 = vadd.xlane.f32.xlu0 %v3799
    %v3801 = vpop.xlane.xlu0 %3800
    %v3802 = vrcp.pop %v3798
    %v3803 = vrcp.pop %v3801
    %v3804 = vmul.f32 %v3793, %v3802
    %v3805 = vmul.f32 %v3795, %v3803
    %v3806 = vpack.c.bf16 %v3804, %v3804
    %v3807 = vpack.c.bf16 %v3805, %v3805
    %3808 = vrot.lane.b32.xlu0 %v3028, 32
    %v3809 = vpop.permute.xlu0 %3808
    %v3811 = vsel %vm1411, %v3806, 0
    %v3814 = vsel %vm1439, %v3809, 0
    %3816 = vmatprep.subr.bf16.mxu0 0
    %3817 = vmatpush1.bf16.msra.mxu0 0
    %3818 = vmatprep.subr.bf16.mxu0 0
    %3819 = vmatpush1.bf16.msra.mxu0 0
    %3820 = vmatprep.subr.bf16.mxu0 0
    %3821 = vmatpush1.bf16.msra.mxu0 0
    %3822 = vmatprep.subr.bf16.mxu0 0
    %3823 = vmatpush1.bf16.msra.mxu0 0
    %3824 = vmatprep.subr.bf16.mxu0 0
    %3825 = vmatpush1.bf16.msra.mxu0 0
    %3826 = vmatprep.subr.bf16.mxu0 0
    %3827 = vmatpush1.bf16.msra.mxu0 0
    %3828 = vmatprep.subr.bf16.mxu0 0
    %3829 = vmatpush1.bf16.msra.mxu0 0
    %3830 = vmatprep.subr.bf16.mxu0 0
    %3831 = vmatpush1.bf16.msra.mxu0 %v3814
    %3832 = vmatprep.subr.bf16.mxu0 0
    %3833 = vmatpush2.bf16.msra.mxu0 0
    %3834 = vmatprep.subr.bf16.mxu0 0
    %3835 = vmatpush2.bf16.msra.mxu0 0
    %3836 = vmatprep.subr.bf16.mxu0 0
    %3837 = vmatpush2.bf16.msra.mxu0 0
    %3838 = vmatprep.subr.bf16.mxu0 0
    %3839 = vmatpush2.bf16.msra.mxu0 0
    %3840 = vmatprep.subr.bf16.mxu0 0
    %3841 = vmatpush2.bf16.msra.mxu0 0
    %3842 = vmatprep.subr.bf16.mxu0 0
    %3843 = vmatpush2.bf16.msra.mxu0 0
    %3844 = vmatprep.subr.bf16.mxu0 0
    %3845 = vmatpush2.bf16.msra.mxu0 0
    %3846 = vmatprep.subr.bf16.mxu0 0
    %3847 = vmatpush2.bf16.msra.mxu0 0
    %3848 = vmatprep.mubr.bf16.mxu0 0
    %3849 = vmatmul.mubr.bf16.gmra.mxu0 %v3811
    %v3850 = vpop.f32.mrf.mxu0
    %v3851 = vadd.f32 0.0, %v3850
    %v3852 = vpop.f32.mrf.mxu0
    %v3853 = vpop.f32.mrf.mxu0
    %v3854 = vpop.f32.mrf.mxu0
    %3855 = vdwg.mxu0
    %3856 = vrot.lane.b32.xlu0 %v3029, 32
    %v3857 = vpop.permute.xlu0 %3856
    %v3859 = vsel %vm1411, %v3807, 0
    %v3862 = vsel %vm1439, %v3857, 0
    %3864 = vmatprep.subr.bf16.mxu0 0
    %3865 = vmatpush1.bf16.msra.mxu0 0
    %3866 = vmatprep.subr.bf16.mxu0 0
    %3867 = vmatpush1.bf16.msra.mxu0 0
    %3868 = vmatprep.subr.bf16.mxu0 0
    %3869 = vmatpush1.bf16.msra.mxu0 0
    %3870 = vmatprep.subr.bf16.mxu0 0
    %3871 = vmatpush1.bf16.msra.mxu0 0
    %3872 = vmatprep.subr.bf16.mxu0 0
    %3873 = vmatpush1.bf16.msra.mxu0 0
    %3874 = vmatprep.subr.bf16.mxu0 0
    %3875 = vmatpush1.bf16.msra.mxu0 0
    %3876 = vmatprep.subr.bf16.mxu0 0
    %3877 = vmatpush1.bf16.msra.mxu0 0
    %3878 = vmatprep.subr.bf16.mxu0 0
    %3879 = vmatpush1.bf16.msra.mxu0 %v3862
    %3880 = vmatprep.subr.bf16.mxu0 0
    %3881 = vmatpush2.bf16.msra.mxu0 0
    %3882 = vmatprep.subr.bf16.mxu0 0
    %3883 = vmatpush2.bf16.msra.mxu0 0
    %3884 = vmatprep.subr.bf16.mxu0 0
    %3885 = vmatpush2.bf16.msra.mxu0 0
    %3886 = vmatprep.subr.bf16.mxu0 0
    %3887 = vmatpush2.bf16.msra.mxu0 0
    %3888 = vmatprep.subr.bf16.mxu0 0
    %3889 = vmatpush2.bf16.msra.mxu0 0
    %3890 = vmatprep.subr.bf16.mxu0 0
    %3891 = vmatpush2.bf16.msra.mxu0 0
    %3892 = vmatprep.subr.bf16.mxu0 0
    %3893 = vmatpush2.bf16.msra.mxu0 0
    %3894 = vmatprep.subr.bf16.mxu0 0
    %3895 = vmatpush2.bf16.msra.mxu0 0
    %3896 = vmatprep.mubr.bf16.mxu0 0
    %3897 = vmatmul.mubr.bf16.gmra.mxu0 %v3859
    %v3898 = vpop.f32.mrf.mxu0
    %v3899 = vadd.f32 0.0, %v3898
    %v3900 = vpop.f32.mrf.mxu0
    %v3901 = vpop.f32.mrf.mxu0
    %v3902 = vpop.f32.mrf.mxu0
    %3903 = vdwg.mxu0
    %3906 = vrot.lane.b32.xlu0 %v3410, 32
    %v3907 = vpop.permute.xlu0 %3906
    %3908 = vrot.lane.b32.xlu0 %v3459, 32
    %v3909 = vpop.permute.xlu0 %3908
    %3914 = vrot.lane.b32.xlu0 %v3631, 64
    %v3915 = vpop.permute.xlu0 %3914
    %3916 = vrot.lane.b32.xlu0 %v3679, 64
    %v3917 = vpop.permute.xlu0 %3916
    %3922 = vrot.lane.b32.xlu0 %v3851, 96
    %v3923 = vpop.permute.xlu0 %3922
    %3924 = vrot.lane.b32.xlu0 %v3899, 96
    %v3925 = vpop.permute.xlu0 %3924
    %v3928 = vsel %vm1318, %v3187, %v3907
    %v3929 = vsel %vm1318, %v3233, %v3909
    %v3930 = vsel %vm2221, %v3928, %v3915
    %v3931 = vsel %vm2221, %v3929, %v3917
    %v3932 = vsel %vm2224, %v3930, %v3923
    %v3933 = vsel %vm2224, %v3931, %v3925
    %v3934 = vld [vmem:[#allocation19] sm:$0xf]
    %v3935 = vld [vmem:[#allocation19 + $0x4] sm:$0xf]
    %v3936 = vld [vmem:[#allocation19 + $0x8] sm:$0xf]
    %v3937 = vld [vmem:[#allocation19 + $0xc] sm:$0xf]
    %v3938 = vld [vmem:[#allocation19 + $0x10] sm:$0xf]
    %v3939 = vld [vmem:[#allocation19 + $0x14] sm:$0xf]
    %v3940 = vld [vmem:[#allocation19 + $0x18] sm:$0xf]
    %v3941 = vld [vmem:[#allocation19 + $0x1c] sm:$0xf]
    %v3942 = vld [vmem:[#allocation19 + $0x20] sm:$0xf]
    %v3943 = vld [vmem:[#allocation19 + $0x24] sm:$0xf]
    %v3944 = vld [vmem:[#allocation19 + $0x28] sm:$0xf]
    %v3945 = vld [vmem:[#allocation19 + $0x2c] sm:$0xf]
    %v3946 = vld [vmem:[#allocation19 + $0x30] sm:$0xf]
    %v3947 = vld [vmem:[#allocation19 + $0x34] sm:$0xf]
    %v3948 = vld [vmem:[#allocation19 + $0x38] sm:$0xf]
    %v3949 = vld [vmem:[#allocation19 + $0x3c] sm:$0xf]
    %v3950 = vpack.c.bf16 %v3933, %v3932
    %v3967 = vunpack.c.l.b16 %v3934
    %v3968 = vunpack.c.l.b16 %v3935
    %v3969 = vunpack.c.l.b16 %v3936
    %v3970 = vunpack.c.l.b16 %v3937
    %v3971 = vunpack.c.l.b16 %v3938
    %v3972 = vunpack.c.l.b16 %v3939
    %v3973 = vunpack.c.l.b16 %v3940
    %v3974 = vunpack.c.l.b16 %v3941
    %v3975 = vunpack.c.l.b16 %v3942
    %v3976 = vunpack.c.l.b16 %v3943
    %v3977 = vunpack.c.l.b16 %v3944
    %v3978 = vunpack.c.l.b16 %v3945
    %v3979 = vunpack.c.l.b16 %v3946
    %v3980 = vunpack.c.l.b16 %v3947
    %v3981 = vunpack.c.l.b16 %v3948
    %v3982 = vunpack.c.l.b16 %v3949
    %v3983 = vpack.c.b16 %v3968, %v3967
    %v3984 = vpack.c.b16 %v3970, %v3969
    %v3985 = vpack.c.b16 %v3972, %v3971
    %v3986 = vpack.c.b16 %v3974, %v3973
    %v3987 = vpack.c.b16 %v3976, %v3975
    %v3988 = vpack.c.b16 %v3978, %v3977
    %v3989 = vpack.c.b16 %v3980, %v3979
    %v3990 = vpack.c.b16 %v3982, %v3981
    %3999 = vmatprep.subr.bf16.mxu0 0
    %4000 = vmatpush1.bf16.msra.mxu0 %v3990
    %4001 = vmatprep.subr.bf16.mxu0 0
    %4002 = vmatpush1.bf16.msra.mxu0 %v3989
    %4003 = vmatprep.subr.bf16.mxu0 0
    %4004 = vmatpush1.bf16.msra.mxu0 %v3988
    %4005 = vmatprep.subr.bf16.mxu0 0
    %4006 = vmatpush1.bf16.msra.mxu0 %v3987
    %4007 = vmatprep.subr.bf16.mxu0 0
    %4008 = vmatpush1.bf16.msra.mxu0 %v3986
    %4009 = vmatprep.subr.bf16.mxu0 0
    %4010 = vmatpush1.bf16.msra.mxu0 %v3985
    %4011 = vmatprep.subr.bf16.mxu0 0
    %4012 = vmatpush1.bf16.msra.mxu0 %v3984
    %4013 = vmatprep.subr.bf16.mxu0 0
    %4014 = vmatpush1.bf16.msra.mxu0 %v3983
    %4015 = vmatprep.subr.bf16.mxu0 0
    %4016 = vmatpush2.bf16.msra.mxu0 0
    %4017 = vmatprep.subr.bf16.mxu0 0
    %4018 = vmatpush2.bf16.msra.mxu0 0
    %4019 = vmatprep.subr.bf16.mxu0 0
    %4020 = vmatpush2.bf16.msra.mxu0 0
    %4021 = vmatprep.subr.bf16.mxu0 0
    %4022 = vmatpush2.bf16.msra.mxu0 0
    %4023 = vmatprep.subr.bf16.mxu0 0
    %4024 = vmatpush2.bf16.msra.mxu0 0
    %4025 = vmatprep.subr.bf16.mxu0 0
    %4026 = vmatpush2.bf16.msra.mxu0 0
    %4027 = vmatprep.subr.bf16.mxu0 0
    %4028 = vmatpush2.bf16.msra.mxu0 0
    %4029 = vmatprep.subr.bf16.mxu0 0
    %4030 = vmatpush2.bf16.msra.mxu0 0
    %4031 = vmatprep.mubr.bf16.mxu0 0
    %4032 = vmatmul.mubr.bf16.gmra.mxu0 %v3950
    %v4033 = vpop.f32.mrf.mxu0
    %v4034 = vadd.f32 0.0, %v4033
    %v4035 = vpop.f32.mrf.mxu0
    %v4036 = vpop.f32.mrf.mxu0
    %v4037 = vadd.f32 0.0, %v4036
    %v4038 = vpop.f32.mrf.mxu0
    %4039 = vdwg.mxu0
    %v4040 = vadd.f32 %v2720, %v4034
    %v4041 = vadd.f32 %v2721, %v4037
    %v4042 = vld [vmem:[#allocation21] sm:$0x1]
    %v4044 = vlaneseq
    %v4045 = vshrl.u32 %v4044, 7
    %v4046 = vsub.s32 0, %v4045
    %v4047 = vrot.slane %v4042, %v4046
    %v4049 = vadd.f32 %v4040, %v4047
    %v4050 = vadd.f32 %v4041, %v4047
    %v4051 = vld [vmem:[#allocation25] sm:$0x1]
    %v4052 = vld [vmem:[#allocation27] sm:$0x1]
    %4053 = vadd.xlane.f32.xlu0 %v4049
    %v4054 = vpop.xlane.xlu0 %4053
    %4055 = vadd.xlane.f32.xlu0 %v4050
    %v4056 = vpop.xlane.xlu0 %4055
    %v4057 = vmul.f32 %v4054, %v1003
    %v4058 = vmul.f32 %v4056, %v1003
    %v4059 = vsub.f32 %v4049, %v4057
    %v4060 = vsub.f32 %v4050, %v4058
    %v4061 = vmul.f32 %v4059, %v4059
    %v4062 = vmul.f32 %v4060, %v4060
    %4063 = vadd.xlane.f32.xlu0 %v4061
    %v4064 = vpop.xlane.xlu0 %4063
    %4065 = vadd.xlane.f32.xlu0 %v4062
    %v4066 = vpop.xlane.xlu0 %4065
    %v4067 = vmul.f32 %v4064, %v1003
    %v4068 = vmul.f32 %v4066, %v1003
    %v4069 = vadd.f32 %v4067, 1e-05
    %v4070 = vadd.f32 %v4068, 1e-05
    %v4071 = vrsqrt.pop %v4069
    %v4072 = vrsqrt.pop %v4070
    %v4073 = vmul.f32 %v4059, %v4071
    %v4074 = vmul.f32 %v4060, %v4072
    %v4076 = vlaneseq
    %v4077 = vshrl.u32 %v4076, 7
    %v4078 = vsub.s32 0, %v4077
    %v4079 = vrot.slane %v4051, %v4078
    %v4081 = vmul.f32 %v4073, %v4079
    %v4082 = vmul.f32 %v4074, %v4079
    %v4084 = vlaneseq
    %v4085 = vshrl.u32 %v4084, 7
    %v4086 = vsub.s32 0, %v4085
    %v4087 = vrot.slane %v4052, %v4086
    %v4089 = vadd.f32 %v4081, %v4087
    %v4090 = vadd.f32 %v4082, %v4087
    %v4091 = vld [vmem:[#allocation28] sm:$0xff]
    %v4092 = vld [vmem:[#allocation28 + $0x8] sm:$0xff]
    %v4093 = vld [vmem:[#allocation28 + $0x10] sm:$0xff]
    %v4094 = vld [vmem:[#allocation28 + $0x18] sm:$0xff]
    %v4095 = vld [vmem:[#allocation28 + $0x20] sm:$0xff]
    %v4096 = vld [vmem:[#allocation28 + $0x28] sm:$0xff]
    %v4097 = vld [vmem:[#allocation28 + $0x30] sm:$0xff]
    %v4098 = vld [vmem:[#allocation28 + $0x38] sm:$0xff]
    %v4099 = vld [vmem:[#allocation28 + $0x40] sm:$0xff]
    %v4100 = vld [vmem:[#allocation28 + $0x48] sm:$0xff]
    %v4101 = vld [vmem:[#allocation28 + $0x50] sm:$0xff]
    %v4102 = vld [vmem:[#allocation28 + $0x58] sm:$0xff]
    %v4103 = vld [vmem:[#allocation28 + $0x60] sm:$0xff]
    %v4104 = vld [vmem:[#allocation28 + $0x68] sm:$0xff]
    %v4105 = vld [vmem:[#allocation28 + $0x70] sm:$0xff]
    %v4106 = vld [vmem:[#allocation28 + $0x78] sm:$0xff]
    %v4107 = vpack.c.bf16 %v4090, %v4089
    %v4108 = vld [vmem:[#allocation30] sm:$0x3]
    %v4110 = vlaneseq
    %v4111 = vshrl.u32 %v4110, 7
    %v4112 = vsub.s32 0, %v4111
    %v4113 = vrot.slane %v4108, %v4112
    %v4114 = vlaneseq
    %v4115 = vshrl.u32 %v4114, 7
    %v4116 = vsub.s32 1, %v4115
    %v4117 = vrot.slane %v4108, %v4116
    %v4136 = vunpack.c.l.b16 %v4091
    %v4137 = vunpack.c.h.b16 %v4091
    %v4138 = vunpack.c.l.b16 %v4092
    %v4139 = vunpack.c.h.b16 %v4092
    %v4140 = vunpack.c.l.b16 %v4093
    %v4141 = vunpack.c.h.b16 %v4093
    %v4142 = vunpack.c.l.b16 %v4094
    %v4143 = vunpack.c.h.b16 %v4094
    %v4144 = vunpack.c.l.b16 %v4095
    %v4145 = vunpack.c.h.b16 %v4095
    %v4146 = vunpack.c.l.b16 %v4096
    %v4147 = vunpack.c.h.b16 %v4096
    %v4148 = vunpack.c.l.b16 %v4097
    %v4149 = vunpack.c.h.b16 %v4097
    %v4150 = vunpack.c.l.b16 %v4098
    %v4151 = vunpack.c.h.b16 %v4098
    %v4152 = vunpack.c.l.b16 %v4099
    %v4153 = vunpack.c.h.b16 %v4099
    %v4154 = vunpack.c.l.b16 %v4100
    %v4155 = vunpack.c.h.b16 %v4100
    %v4156 = vunpack.c.l.b16 %v4101
    %v4157 = vunpack.c.h.b16 %v4101
    %v4158 = vunpack.c.l.b16 %v4102
    %v4159 = vunpack.c.h.b16 %v4102
    %v4160 = vunpack.c.l.b16 %v4103
    %v4161 = vunpack.c.h.b16 %v4103
    %v4162 = vunpack.c.l.b16 %v4104
    %v4163 = vunpack.c.h.b16 %v4104
    %v4164 = vunpack.c.l.b16 %v4105
    %v4165 = vunpack.c.h.b16 %v4105
    %v4166 = vunpack.c.l.b16 %v4106
    %v4167 = vunpack.c.h.b16 %v4106
    %v4168 = vpack.c.b16 %v4138, %v4136
    %v4169 = vpack.c.b16 %v4139, %v4137
    %v4170 = vpack.c.b16 %v4142, %v4140
    %v4171 = vpack.c.b16 %v4143, %v4141
    %v4172 = vpack.c.b16 %v4146, %v4144
    %v4173 = vpack.c.b16 %v4147, %v4145
    %v4174 = vpack.c.b16 %v4150, %v4148
    %v4175 = vpack.c.b16 %v4151, %v4149
    %v4176 = vpack.c.b16 %v4154, %v4152
    %v4177 = vpack.c.b16 %v4155, %v4153
    %v4178 = vpack.c.b16 %v4158, %v4156
    %v4179 = vpack.c.b16 %v4159, %v4157
    %v4180 = vpack.c.b16 %v4162, %v4160
    %v4181 = vpack.c.b16 %v4163, %v4161
    %v4182 = vpack.c.b16 %v4166, %v4164
    %v4183 = vpack.c.b16 %v4167, %v4165
    %4200 = vmatprep.subr.bf16.mxu0 %v4183
    %4201 = vmatpush1.bf16.msra.mxu0 %v4182
    %4202 = vmatprep.subr.bf16.mxu0 %v4181
    %4203 = vmatpush1.bf16.msra.mxu0 %v4180
    %4204 = vmatprep.subr.bf16.mxu0 %v4179
    %4205 = vmatpush1.bf16.msra.mxu0 %v4178
    %4206 = vmatprep.subr.bf16.mxu0 %v4177
    %4207 = vmatpush1.bf16.msra.mxu0 %v4176
    %4208 = vmatprep.subr.bf16.mxu0 %v4175
    %4209 = vmatpush1.bf16.msra.mxu0 %v4174
    %4210 = vmatprep.subr.bf16.mxu0 %v4173
    %4211 = vmatpush1.bf16.msra.mxu0 %v4172
    %4212 = vmatprep.subr.bf16.mxu0 %v4171
    %4213 = vmatpush1.bf16.msra.mxu0 %v4170
    %4214 = vmatprep.subr.bf16.mxu0 %v4169
    %4215 = vmatpush1.bf16.msra.mxu0 %v4168
    %4216 = vmatprep.subr.bf16.mxu0 0
    %4217 = vmatpush2.bf16.msra.mxu0 0
    %4218 = vmatprep.subr.bf16.mxu0 0
    %4219 = vmatpush2.bf16.msra.mxu0 0
    %4220 = vmatprep.subr.bf16.mxu0 0
    %4221 = vmatpush2.bf16.msra.mxu0 0
    %4222 = vmatprep.subr.bf16.mxu0 0
    %4223 = vmatpush2.bf16.msra.mxu0 0
    %4224 = vmatprep.subr.bf16.mxu0 0
    %4225 = vmatpush2.bf16.msra.mxu0 0
    %4226 = vmatprep.subr.bf16.mxu0 0
    %4227 = vmatpush2.bf16.msra.mxu0 0
    %4228 = vmatprep.subr.bf16.mxu0 0
    %4229 = vmatpush2.bf16.msra.mxu0 0
    %4230 = vmatprep.subr.bf16.mxu0 0
    %4231 = vmatpush2.bf16.msra.mxu0 0
    %4232 = vmatprep.mubr.bf16.mxu0 0
    %4233 = vmatmul.mubr.bf16.gmra.mxu0 %v4107
    %v4234 = vpop.f32.mrf.mxu0
    %v4235 = vadd.f32 %v4113, %v4234
    %v4236 = vpop.f32.mrf.mxu0
    %v4237 = vadd.f32 %v4117, %v4236
    %v4238 = vpop.f32.mrf.mxu0
    %v4239 = vadd.f32 %v4113, %v4238
    %v4240 = vpop.f32.mrf.mxu0
    %v4241 = vadd.f32 %v4117, %v4240
    %4242 = vdwg.mxu0
    %v4243 = vmax.f32 %v4235, 0.0
    %v4244 = vmax.f32 %v4237, 0.0
    %v4245 = vmax.f32 %v4239, 0.0
    %v4246 = vmax.f32 %v4241, 0.0
    %v4247 = vld [vmem:[#allocation31] sm:$0xf]
    %v4248 = vld [vmem:[#allocation31 + $0x4] sm:$0xf]
    %v4249 = vld [vmem:[#allocation31 + $0x8] sm:$0xf]
    %v4250 = vld [vmem:[#allocation31 + $0xc] sm:$0xf]
    %v4251 = vld [vmem:[#allocation31 + $0x10] sm:$0xf]
    %v4252 = vld [vmem:[#allocation31 + $0x14] sm:$0xf]
    %v4253 = vld [vmem:[#allocation31 + $0x18] sm:$0xf]
    %v4254 = vld [vmem:[#allocation31 + $0x1c] sm:$0xf]
    %v4255 = vld [vmem:[#allocation31 + $0x20] sm:$0xf]
    %v4256 = vld [vmem:[#allocation31 + $0x24] sm:$0xf]
    %v4257 = vld [vmem:[#allocation31 + $0x28] sm:$0xf]
    %v4258 = vld [vmem:[#allocation31 + $0x2c] sm:$0xf]
    %v4259 = vld [vmem:[#allocation31 + $0x30] sm:$0xf]
    %v4260 = vld [vmem:[#allocation31 + $0x34] sm:$0xf]
    %v4261 = vld [vmem:[#allocation31 + $0x38] sm:$0xf]
    %v4262 = vld [vmem:[#allocation31 + $0x3c] sm:$0xf]
    %v4263 = vld [vmem:[#allocation31 + $0x40] sm:$0xf]
    %v4264 = vld [vmem:[#allocation31 + $0x44] sm:$0xf]
    %v4265 = vld [vmem:[#allocation31 + $0x48] sm:$0xf]
    %v4266 = vld [vmem:[#allocation31 + $0x4c] sm:$0xf]
    %v4267 = vld [vmem:[#allocation31 + $0x50] sm:$0xf]
    %v4268 = vld [vmem:[#allocation31 + $0x54] sm:$0xf]
    %v4269 = vld [vmem:[#allocation31 + $0x58] sm:$0xf]
    %v4270 = vld [vmem:[#allocation31 + $0x5c] sm:$0xf]
    %v4271 = vld [vmem:[#allocation31 + $0x60] sm:$0xf]
    %v4272 = vld [vmem:[#allocation31 + $0x64] sm:$0xf]
    %v4273 = vld [vmem:[#allocation31 + $0x68] sm:$0xf]
    %v4274 = vld [vmem:[#allocation31 + $0x6c] sm:$0xf]
    %v4275 = vld [vmem:[#allocation31 + $0x70] sm:$0xf]
    %v4276 = vld [vmem:[#allocation31 + $0x74] sm:$0xf]
    %v4277 = vld [vmem:[#allocation31 + $0x78] sm:$0xf]
    %v4278 = vld [vmem:[#allocation31 + $0x7c] sm:$0xf]
    %v4279 = vpack.c.bf16 %v4245, %v4243
    %v4280 = vpack.c.bf16 %v4246, %v4244
    %v4313 = vunpack.c.l.b16 %v4247
    %v4314 = vunpack.c.l.b16 %v4248
    %v4315 = vunpack.c.l.b16 %v4249
    %v4316 = vunpack.c.l.b16 %v4250
    %v4317 = vunpack.c.l.b16 %v4251
    %v4318 = vunpack.c.l.b16 %v4252
    %v4319 = vunpack.c.l.b16 %v4253
    %v4320 = vunpack.c.l.b16 %v4254
    %v4321 = vunpack.c.l.b16 %v4255
    %v4322 = vunpack.c.l.b16 %v4256
    %v4323 = vunpack.c.l.b16 %v4257
    %v4324 = vunpack.c.l.b16 %v4258
    %v4325 = vunpack.c.l.b16 %v4259
    %v4326 = vunpack.c.l.b16 %v4260
    %v4327 = vunpack.c.l.b16 %v4261
    %v4328 = vunpack.c.l.b16 %v4262
    %v4329 = vunpack.c.l.b16 %v4263
    %v4330 = vunpack.c.l.b16 %v4264
    %v4331 = vunpack.c.l.b16 %v4265
    %v4332 = vunpack.c.l.b16 %v4266
    %v4333 = vunpack.c.l.b16 %v4267
    %v4334 = vunpack.c.l.b16 %v4268
    %v4335 = vunpack.c.l.b16 %v4269
    %v4336 = vunpack.c.l.b16 %v4270
    %v4337 = vunpack.c.l.b16 %v4271
    %v4338 = vunpack.c.l.b16 %v4272
    %v4339 = vunpack.c.l.b16 %v4273
    %v4340 = vunpack.c.l.b16 %v4274
    %v4341 = vunpack.c.l.b16 %v4275
    %v4342 = vunpack.c.l.b16 %v4276
    %v4343 = vunpack.c.l.b16 %v4277
    %v4344 = vunpack.c.l.b16 %v4278
    %v4345 = vpack.c.b16 %v4314, %v4313
    %v4346 = vpack.c.b16 %v4316, %v4315
    %v4347 = vpack.c.b16 %v4318, %v4317
    %v4348 = vpack.c.b16 %v4320, %v4319
    %v4349 = vpack.c.b16 %v4322, %v4321
    %v4350 = vpack.c.b16 %v4324, %v4323
    %v4351 = vpack.c.b16 %v4326, %v4325
    %v4352 = vpack.c.b16 %v4328, %v4327
    %v4353 = vpack.c.b16 %v4330, %v4329
    %v4354 = vpack.c.b16 %v4332, %v4331
    %v4355 = vpack.c.b16 %v4334, %v4333
    %v4356 = vpack.c.b16 %v4336, %v4335
    %v4357 = vpack.c.b16 %v4338, %v4337
    %v4358 = vpack.c.b16 %v4340, %v4339
    %v4359 = vpack.c.b16 %v4342, %v4341
    %v4360 = vpack.c.b16 %v4344, %v4343
    %4377 = vmatprep.subr.bf16.mxu0 0
    %4378 = vmatpush1.bf16.msra.mxu0 %v4352
    %4379 = vmatprep.subr.bf16.mxu0 0
    %4380 = vmatpush1.bf16.msra.mxu0 %v4351
    %4381 = vmatprep.subr.bf16.mxu0 0
    %4382 = vmatpush1.bf16.msra.mxu0 %v4350
    %4383 = vmatprep.subr.bf16.mxu0 0
    %4384 = vmatpush1.bf16.msra.mxu0 %v4349
    %4385 = vmatprep.subr.bf16.mxu0 0
    %4386 = vmatpush1.bf16.msra.mxu0 %v4348
    %4387 = vmatprep.subr.bf16.mxu0 0
    %4388 = vmatpush1.bf16.msra.mxu0 %v4347
    %4389 = vmatprep.subr.bf16.mxu0 0
    %4390 = vmatpush1.bf16.msra.mxu0 %v4346
    %4391 = vmatprep.subr.bf16.mxu0 0
    %4392 = vmatpush1.bf16.msra.mxu0 %v4345
    %4393 = vmatprep.subr.bf16.mxu0 0
    %4394 = vmatpush2.bf16.msra.mxu0 %v4360
    %4395 = vmatprep.subr.bf16.mxu0 0
    %4396 = vmatpush2.bf16.msra.mxu0 %v4359
    %4397 = vmatprep.subr.bf16.mxu0 0
    %4398 = vmatpush2.bf16.msra.mxu0 %v4358
    %4399 = vmatprep.subr.bf16.mxu0 0
    %4400 = vmatpush2.bf16.msra.mxu0 %v4357
    %4401 = vmatprep.subr.bf16.mxu0 0
    %4402 = vmatpush2.bf16.msra.mxu0 %v4356
    %4403 = vmatprep.subr.bf16.mxu0 0
    %4404 = vmatpush2.bf16.msra.mxu0 %v4355
    %4405 = vmatprep.subr.bf16.mxu0 0
    %4406 = vmatpush2.bf16.msra.mxu0 %v4354
    %4407 = vmatprep.subr.bf16.mxu0 0
    %4408 = vmatpush2.bf16.msra.mxu0 %v4353
    %4409 = vmatprep.mubr.bf16.mxu0 %v4280
    %4410 = vmatmul.mubr.bf16.gmra.mxu0 %v4279
    %v4411 = vpop.f32.mrf.mxu0
    %v4412 = vadd.f32 0.0, %v4411
    %v4413 = vpop.f32.mrf.mxu0
    %v4414 = vpop.f32.mrf.mxu0
    %v4415 = vadd.f32 0.0, %v4414
    %v4416 = vpop.f32.mrf.mxu0
    %4417 = vdwg.mxu0
    %v4418 = vadd.f32 %v4049, %v4412
    %v4419 = vadd.f32 %v4050, %v4415
    %v4420 = vld [vmem:[#allocation33] sm:$0x1]
    %v4422 = vlaneseq
    %v4423 = vshrl.u32 %v4422, 7
    %v4424 = vsub.s32 0, %v4423
    %v4425 = vrot.slane %v4420, %v4424
    %v4427 = vadd.f32 %v4418, %v4425
    %v4428 = vadd.f32 %v4419, %v4425
    %v4429 = vld [vmem:[#allocation48] sm:$0x1]
    %v4430 = vld [vmem:[#allocation49] sm:$0x1]
    %4431 = vadd.xlane.f32.xlu0 %v4427
    %v4432 = vpop.xlane.xlu0 %4431
    %4433 = vadd.xlane.f32.xlu0 %v4428
    %v4434 = vpop.xlane.xlu0 %4433
    %v4435 = vmul.f32 %v4432, %v1003
    %v4436 = vmul.f32 %v4434, %v1003
    %v4437 = vsub.f32 %v4427, %v4435
    %v4438 = vsub.f32 %v4428, %v4436
    %v4439 = vmul.f32 %v4437, %v4437
    %v4440 = vmul.f32 %v4438, %v4438
    %4441 = vadd.xlane.f32.xlu0 %v4439
    %v4442 = vpop.xlane.xlu0 %4441
    %4443 = vadd.xlane.f32.xlu0 %v4440
    %v4444 = vpop.xlane.xlu0 %4443
    %v4445 = vmul.f32 %v4442, %v1003
    %v4446 = vmul.f32 %v4444, %v1003
    %v4447 = vadd.f32 %v4445, 1e-05
    %v4448 = vadd.f32 %v4446, 1e-05
    %v4449 = vrsqrt.pop %v4447
    %v4450 = vrsqrt.pop %v4448
    %v4451 = vmul.f32 %v4437, %v4449
    %v4452 = vmul.f32 %v4438, %v4450
    %v4454 = vlaneseq
    %v4455 = vshrl.u32 %v4454, 7
    %v4456 = vsub.s32 0, %v4455
    %v4457 = vrot.slane %v4429, %v4456
    %v4459 = vmul.f32 %v4451, %v4457
    %v4460 = vmul.f32 %v4452, %v4457
    %v4462 = vlaneseq
    %v4463 = vshrl.u32 %v4462, 7
    %v4464 = vsub.s32 0, %v4463
    %v4465 = vrot.slane %v4430, %v4464
    %v4467 = vadd.f32 %v4459, %v4465
    %v4468 = vadd.f32 %v4460, %v4465
    %v4469 = vld [vmem:[%s61] sm:$0xff]
    %v4470 = vld [vmem:[%s61 + $0x8] sm:$0xf]
    %v4471 = vld [vmem:[%s61 + $0xc] sm:$0xff]
    %v4472 = vld [vmem:[%s61 + $0x14] sm:$0xf]
    %v4473 = vld [vmem:[%s61 + $0x18] sm:$0xff]
    %v4474 = vld [vmem:[%s61 + $0x20] sm:$0xf]
    %v4475 = vld [vmem:[%s61 + $0x24] sm:$0xff]
    %v4476 = vld [vmem:[%s61 + $0x2c] sm:$0xf]
    %v4477 = vld [vmem:[%s61 + $0x30] sm:$0xff]
    %v4478 = vld [vmem:[%s61 + $0x38] sm:$0xf]
    %v4479 = vld [vmem:[%s61 + $0x3c] sm:$0xff]
    %v4480 = vld [vmem:[%s61 + $0x44] sm:$0xf]
    %v4481 = vld [vmem:[%s61 + $0x48] sm:$0xff]
    %v4482 = vld [vmem:[%s61 + $0x50] sm:$0xf]
    %v4483 = vld [vmem:[%s61 + $0x54] sm:$0xff]
    %v4484 = vld [vmem:[%s61 + $0x5c] sm:$0xf]
    %v4485 = vld [vmem:[%s61 + $0x60] sm:$0xff]
    %v4486 = vld [vmem:[%s61 + $0x68] sm:$0xf]
    %v4487 = vld [vmem:[%s61 + $0x6c] sm:$0xff]
    %v4488 = vld [vmem:[%s61 + $0x74] sm:$0xf]
    %v4489 = vld [vmem:[%s61 + $0x78] sm:$0xff]
    %v4490 = vld [vmem:[%s61 + $0x80] sm:$0xf]
    %v4491 = vld [vmem:[%s61 + $0x84] sm:$0xff]
    %v4492 = vld [vmem:[%s61 + $0x8c] sm:$0xf]
    %v4493 = vld [vmem:[%s61 + $0x90] sm:$0xff]
    %v4494 = vld [vmem:[%s61 + $0x98] sm:$0xf]
    %v4495 = vld [vmem:[%s61 + $0x9c] sm:$0xff]
    %v4496 = vld [vmem:[%s61 + $0xa4] sm:$0xf]
    %v4497 = vld [vmem:[%s61 + $0xa8] sm:$0xff]
    %v4498 = vld [vmem:[%s61 + $0xb0] sm:$0xf]
    %v4499 = vld [vmem:[%s61 + $0xb4] sm:$0xff]
    %v4500 = vld [vmem:[%s61 + $0xbc] sm:$0xf]
    %v4501 = vpack.c.bf16 %v4468, %v4467
    %v4502 = vld [vmem:[#allocation34] sm:$0x7]
    %v4504 = vlaneseq
    %v4505 = vshrl.u32 %v4504, 7
    %v4506 = vsub.s32 0, %v4505
    %v4507 = vrot.slane %v4502, %v4506
    %v4508 = vlaneseq
    %v4509 = vshrl.u32 %v4508, 7
    %v4510 = vsub.s32 1, %v4509
    %v4511 = vrot.slane %v4502, %v4510
    %v4512 = vlaneseq
    %v4513 = vshrl.u32 %v4512, 7
    %v4514 = vsub.s32 2, %v4513
    %v4515 = vrot.slane %v4502, %v4514
    %v4551 = vunpack.c.l.b16 %v4469
    %v4552 = vunpack.c.h.b16 %v4469
    %v4553 = vunpack.c.l.b16 %v4470
    %v4554 = vunpack.c.l.b16 %v4471
    %v4555 = vunpack.c.h.b16 %v4471
    %v4556 = vunpack.c.l.b16 %v4472
    %v4557 = vunpack.c.l.b16 %v4473
    %v4558 = vunpack.c.h.b16 %v4473
    %v4559 = vunpack.c.l.b16 %v4474
    %v4560 = vunpack.c.l.b16 %v4475
    %v4561 = vunpack.c.h.b16 %v4475
    %v4562 = vunpack.c.l.b16 %v4476
    %v4563 = vunpack.c.l.b16 %v4477
    %v4564 = vunpack.c.h.b16 %v4477
    %v4565 = vunpack.c.l.b16 %v4478
    %v4566 = vunpack.c.l.b16 %v4479
    %v4567 = vunpack.c.h.b16 %v4479
    %v4568 = vunpack.c.l.b16 %v4480
    %v4569 = vunpack.c.l.b16 %v4481
    %v4570 = vunpack.c.h.b16 %v4481
    %v4571 = vunpack.c.l.b16 %v4482
    %v4572 = vunpack.c.l.b16 %v4483
    %v4573 = vunpack.c.h.b16 %v4483
    %v4574 = vunpack.c.l.b16 %v4484
    %v4575 = vunpack.c.l.b16 %v4485
    %v4576 = vunpack.c.h.b16 %v4485
    %v4577 = vunpack.c.l.b16 %v4486
    %v4578 = vunpack.c.l.b16 %v4487
    %v4579 = vunpack.c.h.b16 %v4487
    %v4580 = vunpack.c.l.b16 %v4488
    %v4581 = vunpack.c.l.b16 %v4489
    %v4582 = vunpack.c.h.b16 %v4489
    %v4583 = vunpack.c.l.b16 %v4490
    %v4584 = vunpack.c.l.b16 %v4491
    %v4585 = vunpack.c.h.b16 %v4491
    %v4586 = vunpack.c.l.b16 %v4492
    %v4587 = vunpack.c.l.b16 %v4493
    %v4588 = vunpack.c.h.b16 %v4493
    %v4589 = vunpack.c.l.b16 %v4494
    %v4590 = vunpack.c.l.b16 %v4495
    %v4591 = vunpack.c.h.b16 %v4495
    %v4592 = vunpack.c.l.b16 %v4496
    %v4593 = vunpack.c.l.b16 %v4497
    %v4594 = vunpack.c.h.b16 %v4497
    %v4595 = vunpack.c.l.b16 %v4498
    %v4596 = vunpack.c.l.b16 %v4499
    %v4597 = vunpack.c.h.b16 %v4499
    %v4598 = vunpack.c.l.b16 %v4500
    %v4599 = vpack.c.b16 %v4554, %v4551
    %v4600 = vpack.c.b16 %v4555, %v4552
    %v4601 = vpack.c.b16 %v4556, %v4553
    %v4602 = vpack.c.b16 %v4560, %v4557
    %v4603 = vpack.c.b16 %v4561, %v4558
    %v4604 = vpack.c.b16 %v4562, %v4559
    %v4605 = vpack.c.b16 %v4566, %v4563
    %v4606 = vpack.c.b16 %v4567, %v4564
    %v4607 = vpack.c.b16 %v4568, %v4565
    %v4608 = vpack.c.b16 %v4572, %v4569
    %v4609 = vpack.c.b16 %v4573, %v4570
    %v4610 = vpack.c.b16 %v4574, %v4571
    %v4611 = vpack.c.b16 %v4578, %v4575
    %v4612 = vpack.c.b16 %v4579, %v4576
    %v4613 = vpack.c.b16 %v4580, %v4577
    %v4614 = vpack.c.b16 %v4584, %v4581
    %v4615 = vpack.c.b16 %v4585, %v4582
    %v4616 = vpack.c.b16 %v4586, %v4583
    %v4617 = vpack.c.b16 %v4590, %v4587
    %v4618 = vpack.c.b16 %v4591, %v4588
    %v4619 = vpack.c.b16 %v4592, %v4589
    %v4620 = vpack.c.b16 %v4596, %v4593
    %v4621 = vpack.c.b16 %v4597, %v4594
    %v4622 = vpack.c.b16 %v4598, %v4595
    %4647 = vmatprep.subr.bf16.mxu0 %v4621
    %4648 = vmatpush1.bf16.msra.mxu0 %v4620
    %4649 = vmatprep.subr.bf16.mxu0 %v4618
    %4650 = vmatpush1.bf16.msra.mxu0 %v4617
    %4651 = vmatprep.subr.bf16.mxu0 %v4615
    %4652 = vmatpush1.bf16.msra.mxu0 %v4614
    %4653 = vmatprep.subr.bf16.mxu0 %v4612
    %4654 = vmatpush1.bf16.msra.mxu0 %v4611
    %4655 = vmatprep.subr.bf16.mxu0 %v4609
    %4656 = vmatpush1.bf16.msra.mxu0 %v4608
    %4657 = vmatprep.subr.bf16.mxu0 %v4606
    %4658 = vmatpush1.bf16.msra.mxu0 %v4605
    %4659 = vmatprep.subr.bf16.mxu0 %v4603
    %4660 = vmatpush1.bf16.msra.mxu0 %v4602
    %4661 = vmatprep.subr.bf16.mxu0 %v4600
    %4662 = vmatpush1.bf16.msra.mxu0 %v4599
    %4663 = vmatprep.subr.bf16.mxu0 0
    %4664 = vmatpush2.bf16.msra.mxu0 0
    %4665 = vmatprep.subr.bf16.mxu0 0
    %4666 = vmatpush2.bf16.msra.mxu0 0
    %4667 = vmatprep.subr.bf16.mxu0 0
    %4668 = vmatpush2.bf16.msra.mxu0 0
    %4669 = vmatprep.subr.bf16.mxu0 0
    %4670 = vmatpush2.bf16.msra.mxu0 0
    %4671 = vmatprep.subr.bf16.mxu0 0
    %4672 = vmatpush2.bf16.msra.mxu0 0
    %4673 = vmatprep.subr.bf16.mxu0 0
    %4674 = vmatpush2.bf16.msra.mxu0 0
    %4675 = vmatprep.subr.bf16.mxu0 0
    %4676 = vmatpush2.bf16.msra.mxu0 0
    %4677 = vmatprep.subr.bf16.mxu0 0
    %4678 = vmatpush2.bf16.msra.mxu0 0
    %4679 = vmatprep.mubr.bf16.mxu0 0
    %4680 = vmatmul.mubr.bf16.gmra.mxu0 %v4501
    %v4681 = vpop.f32.mrf.mxu0
    %v4682 = vadd.f32 %v4507, %v4681
    %v4683 = vpop.f32.mrf.mxu0
    %v4684 = vadd.f32 %v4511, %v4683
    %v4685 = vpop.f32.mrf.mxu0
    %v4686 = vadd.f32 %v4507, %v4685
    %v4687 = vpop.f32.mrf.mxu0
    %v4688 = vadd.f32 %v4511, %v4687
    %4689 = vdwg.mxu0
    %4690 = vmatprep.subr.bf16.mxu0 0
    %4691 = vmatpush1.bf16.msra.mxu0 %v4622
    %4692 = vmatprep.subr.bf16.mxu0 0
    %4693 = vmatpush1.bf16.msra.mxu0 %v4619
    %4694 = vmatprep.subr.bf16.mxu0 0
    %4695 = vmatpush1.bf16.msra.mxu0 %v4616
    %4696 = vmatprep.subr.bf16.mxu0 0
    %4697 = vmatpush1.bf16.msra.mxu0 %v4613
    %4698 = vmatprep.subr.bf16.mxu0 0
    %4699 = vmatpush1.bf16.msra.mxu0 %v4610
    %4700 = vmatprep.subr.bf16.mxu0 0
    %4701 = vmatpush1.bf16.msra.mxu0 %v4607
    %4702 = vmatprep.subr.bf16.mxu0 0
    %4703 = vmatpush1.bf16.msra.mxu0 %v4604
    %4704 = vmatprep.subr.bf16.mxu0 0
    %4705 = vmatpush1.bf16.msra.mxu0 %v4601
    %4706 = vmatprep.subr.bf16.mxu0 0
    %4707 = vmatpush2.bf16.msra.mxu0 0
    %4708 = vmatprep.subr.bf16.mxu0 0
    %4709 = vmatpush2.bf16.msra.mxu0 0
    %4710 = vmatprep.subr.bf16.mxu0 0
    %4711 = vmatpush2.bf16.msra.mxu0 0
    %4712 = vmatprep.subr.bf16.mxu0 0
    %4713 = vmatpush2.bf16.msra.mxu0 0
    %4714 = vmatprep.subr.bf16.mxu0 0
    %4715 = vmatpush2.bf16.msra.mxu0 0
    %4716 = vmatprep.subr.bf16.mxu0 0
    %4717 = vmatpush2.bf16.msra.mxu0 0
    %4718 = vmatprep.subr.bf16.mxu0 0
    %4719 = vmatpush2.bf16.msra.mxu0 0
    %4720 = vmatprep.subr.bf16.mxu0 0
    %4721 = vmatpush2.bf16.msra.mxu0 0
    %4722 = vmatprep.mubr.bf16.mxu0 0
    %4723 = vmatmul.mubr.bf16.gmra.mxu0 %v4501
    %v4724 = vpop.f32.mrf.mxu0
    %v4725 = vadd.f32 %v4515, %v4724
    %v4726 = vpop.f32.mrf.mxu0
    %v4727 = vpop.f32.mrf.mxu0
    %v4728 = vadd.f32 %v4515, %v4727
    %v4729 = vpop.f32.mrf.mxu0
    %4730 = vdwg.mxu0
    %v4731 = vpack.c.bf16 %v4682, %v4682
    %v4732 = vpack.c.bf16 %v4686, %v4686
    %v4733 = vpack.c.bf16 %v4684, %v4684
    %v4734 = vpack.c.bf16 %v4688, %v4688
    %v4735 = vpack.c.bf16 %v4725, %v4725
    %v4736 = vpack.c.bf16 %v4728, %v4728
    %v4738 = vsel %vm1318, %v4731, 0
    %v4741 = vsel %vm1318, %v4733, 0
    %4743 = vmatprep.subr.bf16.mxu0 0
    %4744 = vmatpush1.bf16.xpose.msra.mxu0 0
    %4745 = vmatprep.subr.bf16.mxu0 0
    %4746 = vmatpush1.bf16.xpose.msra.mxu0 0
    %4747 = vmatprep.subr.bf16.mxu0 0
    %4748 = vmatpush1.bf16.xpose.msra.mxu0 0
    %4749 = vmatprep.subr.bf16.mxu0 0
    %4750 = vmatpush1.bf16.xpose.msra.mxu0 0
    %4751 = vmatprep.subr.bf16.mxu0 0
    %4752 = vmatpush1.bf16.xpose.msra.mxu0 0
    %4753 = vmatprep.subr.bf16.mxu0 0
    %4754 = vmatpush1.bf16.xpose.msra.mxu0 0
    %4755 = vmatprep.subr.bf16.mxu0 0
    %4756 = vmatpush1.bf16.xpose.msra.mxu0 0
    %4757 = vmatprep.subr.bf16.mxu0 0
    %4758 = vmatpush1.bf16.xpose.msra.mxu0 %v4741
    %4759 = vmatprep.subr.bf16.mxu0 0
    %4760 = vmatpush2.bf16.xpose.msra.mxu0 0
    %4761 = vmatprep.subr.bf16.mxu0 0
    %4762 = vmatpush2.bf16.xpose.msra.mxu0 0
    %4763 = vmatprep.subr.bf16.mxu0 0
    %4764 = vmatpush2.bf16.xpose.msra.mxu0 0
    %4765 = vmatprep.subr.bf16.mxu0 0
    %4766 = vmatpush2.bf16.xpose.msra.mxu0 0
    %4767 = vmatprep.subr.bf16.mxu0 0
    %4768 = vmatpush2.bf16.xpose.msra.mxu0 0
    %4769 = vmatprep.subr.bf16.mxu0 0
    %4770 = vmatpush2.bf16.xpose.msra.mxu0 0
    %4771 = vmatprep.subr.bf16.mxu0 0
    %4772 = vmatpush2.bf16.xpose.msra.mxu0 0
    %4773 = vmatprep.subr.bf16.mxu0 0
    %4774 = vmatpush2.bf16.xpose.msra.mxu0 0
    %4775 = vmatprep.mubr.bf16.mxu0 0
    %4776 = vmatmul.mubr.bf16.gmra.mxu0 %v4738
    %v4777 = vpop.f32.mrf.mxu0
    %v4778 = vadd.f32 %v1311, %v4777
    %v4779 = vpop.f32.mrf.mxu0
    %v4780 = vpop.f32.mrf.mxu0
    %v4781 = vpop.f32.mrf.mxu0
    %4782 = vdwg.mxu0
    %v4784 = vsel %vm1318, %v4732, 0
    %v4787 = vsel %vm1318, %v4734, 0
    %4789 = vmatprep.subr.bf16.mxu0 0
    %4790 = vmatpush1.bf16.xpose.msra.mxu0 0
    %4791 = vmatprep.subr.bf16.mxu0 0
    %4792 = vmatpush1.bf16.xpose.msra.mxu0 0
    %4793 = vmatprep.subr.bf16.mxu0 0
    %4794 = vmatpush1.bf16.xpose.msra.mxu0 0
    %4795 = vmatprep.subr.bf16.mxu0 0
    %4796 = vmatpush1.bf16.xpose.msra.mxu0 0
    %4797 = vmatprep.subr.bf16.mxu0 0
    %4798 = vmatpush1.bf16.xpose.msra.mxu0 0
    %4799 = vmatprep.subr.bf16.mxu0 0
    %4800 = vmatpush1.bf16.xpose.msra.mxu0 0
    %4801 = vmatprep.subr.bf16.mxu0 0
    %4802 = vmatpush1.bf16.xpose.msra.mxu0 0
    %4803 = vmatprep.subr.bf16.mxu0 0
    %4804 = vmatpush1.bf16.xpose.msra.mxu0 %v4787
    %4805 = vmatprep.subr.bf16.mxu0 0
    %4806 = vmatpush2.bf16.xpose.msra.mxu0 0
    %4807 = vmatprep.subr.bf16.mxu0 0
    %4808 = vmatpush2.bf16.xpose.msra.mxu0 0
    %4809 = vmatprep.subr.bf16.mxu0 0
    %4810 = vmatpush2.bf16.xpose.msra.mxu0 0
    %4811 = vmatprep.subr.bf16.mxu0 0
    %4812 = vmatpush2.bf16.xpose.msra.mxu0 0
    %4813 = vmatprep.subr.bf16.mxu0 0
    %4814 = vmatpush2.bf16.xpose.msra.mxu0 0
    %4815 = vmatprep.subr.bf16.mxu0 0
    %4816 = vmatpush2.bf16.xpose.msra.mxu0 0
    %4817 = vmatprep.subr.bf16.mxu0 0
    %4818 = vmatpush2.bf16.xpose.msra.mxu0 0
    %4819 = vmatprep.subr.bf16.mxu0 0
    %4820 = vmatpush2.bf16.xpose.msra.mxu0 0
    %4821 = vmatprep.mubr.bf16.mxu0 0
    %4822 = vmatmul.mubr.bf16.gmra.mxu0 %v4784
    %v4823 = vpop.f32.mrf.mxu0
    %v4824 = vadd.f32 %v1315, %v4823
    %v4825 = vpop.f32.mrf.mxu0
    %v4826 = vpop.f32.mrf.mxu0
    %v4827 = vpop.f32.mrf.mxu0
    %4828 = vdwg.mxu0
    %v4829 = vsel %vm1411, %v4778, -inf
    %4830 = vmax.xlane.f32.xlu0 %v4829
    %v4831 = vpop.xlane.xlu0 %4830
    %v4832 = vsel %vm1411, %v4824, -inf
    %4833 = vmax.xlane.f32.xlu0 %v4832
    %v4834 = vpop.xlane.xlu0 %4833
    %v4835 = vsub.f32 %v4778, %v4831
    %v4836 = vsub.f32 %v4824, %v4834
    %v4837 = vmul.f32 %v4835, 1.442695
    %v4838 = vpow.pop %v4837
    %v4839 = vmul.f32 %v4836, 1.442695
    %v4840 = vpow.pop %v4839
    %v4841 = vsel %vm1411, %v4838, 0.0
    %4842 = vadd.xlane.f32.xlu0 %v4841
    %v4843 = vpop.xlane.xlu0 %4842
    %v4844 = vsel %vm1411, %v4840, 0.0
    %4845 = vadd.xlane.f32.xlu0 %v4844
    %v4846 = vpop.xlane.xlu0 %4845
    %v4847 = vrcp.pop %v4843
    %v4848 = vrcp.pop %v4846
    %v4849 = vmul.f32 %v4838, %v4847
    %v4850 = vmul.f32 %v4840, %v4848
    %v4851 = vpack.c.bf16 %v4849, %v4849
    %v4852 = vpack.c.bf16 %v4850, %v4850
    %v4854 = vsel %vm1411, %v4851, 0
    %v4857 = vsel %vm1439, %v4735, 0
    %4859 = vmatprep.subr.bf16.mxu0 0
    %4860 = vmatpush1.bf16.msra.mxu0 0
    %4861 = vmatprep.subr.bf16.mxu0 0
    %4862 = vmatpush1.bf16.msra.mxu0 0
    %4863 = vmatprep.subr.bf16.mxu0 0
    %4864 = vmatpush1.bf16.msra.mxu0 0
    %4865 = vmatprep.subr.bf16.mxu0 0
    %4866 = vmatpush1.bf16.msra.mxu0 0
    %4867 = vmatprep.subr.bf16.mxu0 0
    %4868 = vmatpush1.bf16.msra.mxu0 0
    %4869 = vmatprep.subr.bf16.mxu0 0
    %4870 = vmatpush1.bf16.msra.mxu0 0
    %4871 = vmatprep.subr.bf16.mxu0 0
    %4872 = vmatpush1.bf16.msra.mxu0 0
    %4873 = vmatprep.subr.bf16.mxu0 0
    %4874 = vmatpush1.bf16.msra.mxu0 %v4857
    %4875 = vmatprep.subr.bf16.mxu0 0
    %4876 = vmatpush2.bf16.msra.mxu0 0
    %4877 = vmatprep.subr.bf16.mxu0 0
    %4878 = vmatpush2.bf16.msra.mxu0 0
    %4879 = vmatprep.subr.bf16.mxu0 0
    %4880 = vmatpush2.bf16.msra.mxu0 0
    %4881 = vmatprep.subr.bf16.mxu0 0
    %4882 = vmatpush2.bf16.msra.mxu0 0
    %4883 = vmatprep.subr.bf16.mxu0 0
    %4884 = vmatpush2.bf16.msra.mxu0 0
    %4885 = vmatprep.subr.bf16.mxu0 0
    %4886 = vmatpush2.bf16.msra.mxu0 0
    %4887 = vmatprep.subr.bf16.mxu0 0
    %4888 = vmatpush2.bf16.msra.mxu0 0
    %4889 = vmatprep.subr.bf16.mxu0 0
    %4890 = vmatpush2.bf16.msra.mxu0 0
    %4891 = vmatprep.mubr.bf16.mxu0 0
    %4892 = vmatmul.mubr.bf16.gmra.mxu0 %v4854
    %v4893 = vpop.f32.mrf.mxu0
    %v4894 = vadd.f32 0.0, %v4893
    %v4895 = vpop.f32.mrf.mxu0
    %v4896 = vpop.f32.mrf.mxu0
    %v4897 = vpop.f32.mrf.mxu0
    %4898 = vdwg.mxu0
    %v4900 = vsel %vm1411, %v4852, 0
    %v4903 = vsel %vm1439, %v4736, 0
    %4905 = vmatprep.subr.bf16.mxu0 0
    %4906 = vmatpush1.bf16.msra.mxu0 0
    %4907 = vmatprep.subr.bf16.mxu0 0
    %4908 = vmatpush1.bf16.msra.mxu0 0
    %4909 = vmatprep.subr.bf16.mxu0 0
    %4910 = vmatpush1.bf16.msra.mxu0 0
    %4911 = vmatprep.subr.bf16.mxu0 0
    %4912 = vmatpush1.bf16.msra.mxu0 0
    %4913 = vmatprep.subr.bf16.mxu0 0
    %4914 = vmatpush1.bf16.msra.mxu0 0
    %4915 = vmatprep.subr.bf16.mxu0 0
    %4916 = vmatpush1.bf16.msra.mxu0 0
    %4917 = vmatprep.subr.bf16.mxu0 0
    %4918 = vmatpush1.bf16.msra.mxu0 0
    %4919 = vmatprep.subr.bf16.mxu0 0
    %4920 = vmatpush1.bf16.msra.mxu0 %v4903
    %4921 = vmatprep.subr.bf16.mxu0 0
    %4922 = vmatpush2.bf16.msra.mxu0 0
    %4923 = vmatprep.subr.bf16.mxu0 0
    %4924 = vmatpush2.bf16.msra.mxu0 0
    %4925 = vmatprep.subr.bf16.mxu0 0
    %4926 = vmatpush2.bf16.msra.mxu0 0
    %4927 = vmatprep.subr.bf16.mxu0 0
    %4928 = vmatpush2.bf16.msra.mxu0 0
    %4929 = vmatprep.subr.bf16.mxu0 0
    %4930 = vmatpush2.bf16.msra.mxu0 0
    %4931 = vmatprep.subr.bf16.mxu0 0
    %4932 = vmatpush2.bf16.msra.mxu0 0
    %4933 = vmatprep.subr.bf16.mxu0 0
    %4934 = vmatpush2.bf16.msra.mxu0 0
    %4935 = vmatprep.subr.bf16.mxu0 0
    %4936 = vmatpush2.bf16.msra.mxu0 0
    %4937 = vmatprep.mubr.bf16.mxu0 0
    %4938 = vmatmul.mubr.bf16.gmra.mxu0 %v4900
    %v4939 = vpop.f32.mrf.mxu0
    %v4940 = vadd.f32 0.0, %v4939
    %v4941 = vpop.f32.mrf.mxu0
    %v4942 = vpop.f32.mrf.mxu0
    %v4943 = vpop.f32.mrf.mxu0
    %4944 = vdwg.mxu0
    %4946 = vrot.lane.b32.xlu0 %v4731, 96
    %v4947 = vpop.permute.xlu0 %4946
    %4949 = vrot.lane.b32.xlu0 %v4733, 96
    %v4950 = vpop.permute.xlu0 %4949
    %v4952 = vsel %vm1318, %v4947, 0
    %v4955 = vsel %vm1318, %v4950, 0
    %4957 = vmatprep.subr.bf16.mxu0 0
    %4958 = vmatpush1.bf16.xpose.msra.mxu0 0
    %4959 = vmatprep.subr.bf16.mxu0 0
    %4960 = vmatpush1.bf16.xpose.msra.mxu0 0
    %4961 = vmatprep.subr.bf16.mxu0 0
    %4962 = vmatpush1.bf16.xpose.msra.mxu0 0
    %4963 = vmatprep.subr.bf16.mxu0 0
    %4964 = vmatpush1.bf16.xpose.msra.mxu0 0
    %4965 = vmatprep.subr.bf16.mxu0 0
    %4966 = vmatpush1.bf16.xpose.msra.mxu0 0
    %4967 = vmatprep.subr.bf16.mxu0 0
    %4968 = vmatpush1.bf16.xpose.msra.mxu0 0
    %4969 = vmatprep.subr.bf16.mxu0 0
    %4970 = vmatpush1.bf16.xpose.msra.mxu0 0
    %4971 = vmatprep.subr.bf16.mxu0 0
    %4972 = vmatpush1.bf16.xpose.msra.mxu0 %v4955
    %4973 = vmatprep.subr.bf16.mxu0 0
    %4974 = vmatpush2.bf16.xpose.msra.mxu0 0
    %4975 = vmatprep.subr.bf16.mxu0 0
    %4976 = vmatpush2.bf16.xpose.msra.mxu0 0
    %4977 = vmatprep.subr.bf16.mxu0 0
    %4978 = vmatpush2.bf16.xpose.msra.mxu0 0
    %4979 = vmatprep.subr.bf16.mxu0 0
    %4980 = vmatpush2.bf16.xpose.msra.mxu0 0
    %4981 = vmatprep.subr.bf16.mxu0 0
    %4982 = vmatpush2.bf16.xpose.msra.mxu0 0
    %4983 = vmatprep.subr.bf16.mxu0 0
    %4984 = vmatpush2.bf16.xpose.msra.mxu0 0
    %4985 = vmatprep.subr.bf16.mxu0 0
    %4986 = vmatpush2.bf16.xpose.msra.mxu0 0
    %4987 = vmatprep.subr.bf16.mxu0 0
    %4988 = vmatpush2.bf16.xpose.msra.mxu0 0
    %4989 = vmatprep.mubr.bf16.mxu0 0
    %4990 = vmatmul.mubr.bf16.gmra.mxu0 %v4952
    %v4991 = vpop.f32.mrf.mxu0
    %v4992 = vadd.f32 %v1311, %v4991
    %v4993 = vpop.f32.mrf.mxu0
    %v4994 = vpop.f32.mrf.mxu0
    %v4995 = vpop.f32.mrf.mxu0
    %4996 = vdwg.mxu0
    %4998 = vrot.lane.b32.xlu0 %v4732, 96
    %v4999 = vpop.permute.xlu0 %4998
    %5001 = vrot.lane.b32.xlu0 %v4734, 96
    %v5002 = vpop.permute.xlu0 %5001
    %v5004 = vsel %vm1318, %v4999, 0
    %v5007 = vsel %vm1318, %v5002, 0
    %5009 = vmatprep.subr.bf16.mxu0 0
    %5010 = vmatpush1.bf16.xpose.msra.mxu0 0
    %5011 = vmatprep.subr.bf16.mxu0 0
    %5012 = vmatpush1.bf16.xpose.msra.mxu0 0
    %5013 = vmatprep.subr.bf16.mxu0 0
    %5014 = vmatpush1.bf16.xpose.msra.mxu0 0
    %5015 = vmatprep.subr.bf16.mxu0 0
    %5016 = vmatpush1.bf16.xpose.msra.mxu0 0
    %5017 = vmatprep.subr.bf16.mxu0 0
    %5018 = vmatpush1.bf16.xpose.msra.mxu0 0
    %5019 = vmatprep.subr.bf16.mxu0 0
    %5020 = vmatpush1.bf16.xpose.msra.mxu0 0
    %5021 = vmatprep.subr.bf16.mxu0 0
    %5022 = vmatpush1.bf16.xpose.msra.mxu0 0
    %5023 = vmatprep.subr.bf16.mxu0 0
    %5024 = vmatpush1.bf16.xpose.msra.mxu0 %v5007
    %5025 = vmatprep.subr.bf16.mxu0 0
    %5026 = vmatpush2.bf16.xpose.msra.mxu0 0
    %5027 = vmatprep.subr.bf16.mxu0 0
    %5028 = vmatpush2.bf16.xpose.msra.mxu0 0
    %5029 = vmatprep.subr.bf16.mxu0 0
    %5030 = vmatpush2.bf16.xpose.msra.mxu0 0
    %5031 = vmatprep.subr.bf16.mxu0 0
    %5032 = vmatpush2.bf16.xpose.msra.mxu0 0
    %5033 = vmatprep.subr.bf16.mxu0 0
    %5034 = vmatpush2.bf16.xpose.msra.mxu0 0
    %5035 = vmatprep.subr.bf16.mxu0 0
    %5036 = vmatpush2.bf16.xpose.msra.mxu0 0
    %5037 = vmatprep.subr.bf16.mxu0 0
    %5038 = vmatpush2.bf16.xpose.msra.mxu0 0
    %5039 = vmatprep.subr.bf16.mxu0 0
    %5040 = vmatpush2.bf16.xpose.msra.mxu0 0
    %5041 = vmatprep.mubr.bf16.mxu0 0
    %5042 = vmatmul.mubr.bf16.gmra.mxu0 %v5004
    %v5043 = vpop.f32.mrf.mxu0
    %v5044 = vadd.f32 %v1315, %v5043
    %v5045 = vpop.f32.mrf.mxu0
    %v5046 = vpop.f32.mrf.mxu0
    %v5047 = vpop.f32.mrf.mxu0
    %5048 = vdwg.mxu0
    %v5049 = vsel %vm1411, %v4992, -inf
    %5050 = vmax.xlane.f32.xlu0 %v5049
    %v5051 = vpop.xlane.xlu0 %5050
    %v5052 = vsel %vm1411, %v5044, -inf
    %5053 = vmax.xlane.f32.xlu0 %v5052
    %v5054 = vpop.xlane.xlu0 %5053
    %v5055 = vsub.f32 %v4992, %v5051
    %v5056 = vsub.f32 %v5044, %v5054
    %v5057 = vmul.f32 %v5055, 1.442695
    %v5058 = vpow.pop %v5057
    %v5059 = vmul.f32 %v5056, 1.442695
    %v5060 = vpow.pop %v5059
    %v5061 = vsel %vm1411, %v5058, 0.0
    %5062 = vadd.xlane.f32.xlu0 %v5061
    %v5063 = vpop.xlane.xlu0 %5062
    %v5064 = vsel %vm1411, %v5060, 0.0
    %5065 = vadd.xlane.f32.xlu0 %v5064
    %v5066 = vpop.xlane.xlu0 %5065
    %v5067 = vrcp.pop %v5063
    %v5068 = vrcp.pop %v5066
    %v5069 = vmul.f32 %v5058, %v5067
    %v5070 = vmul.f32 %v5060, %v5068
    %v5071 = vpack.c.bf16 %v5069, %v5069
    %v5072 = vpack.c.bf16 %v5070, %v5070
    %5074 = vrot.lane.b32.xlu0 %v4735, 96
    %v5075 = vpop.permute.xlu0 %5074
    %v5077 = vsel %vm1411, %v5071, 0
    %v5080 = vsel %vm1439, %v5075, 0
    %5082 = vmatprep.subr.bf16.mxu0 0
    %5083 = vmatpush1.bf16.msra.mxu0 0
    %5084 = vmatprep.subr.bf16.mxu0 0
    %5085 = vmatpush1.bf16.msra.mxu0 0
    %5086 = vmatprep.subr.bf16.mxu0 0
    %5087 = vmatpush1.bf16.msra.mxu0 0
    %5088 = vmatprep.subr.bf16.mxu0 0
    %5089 = vmatpush1.bf16.msra.mxu0 0
    %5090 = vmatprep.subr.bf16.mxu0 0
    %5091 = vmatpush1.bf16.msra.mxu0 0
    %5092 = vmatprep.subr.bf16.mxu0 0
    %5093 = vmatpush1.bf16.msra.mxu0 0
    %5094 = vmatprep.subr.bf16.mxu0 0
    %5095 = vmatpush1.bf16.msra.mxu0 0
    %5096 = vmatprep.subr.bf16.mxu0 0
    %5097 = vmatpush1.bf16.msra.mxu0 %v5080
    %5098 = vmatprep.subr.bf16.mxu0 0
    %5099 = vmatpush2.bf16.msra.mxu0 0
    %5100 = vmatprep.subr.bf16.mxu0 0
    %5101 = vmatpush2.bf16.msra.mxu0 0
    %5102 = vmatprep.subr.bf16.mxu0 0
    %5103 = vmatpush2.bf16.msra.mxu0 0
    %5104 = vmatprep.subr.bf16.mxu0 0
    %5105 = vmatpush2.bf16.msra.mxu0 0
    %5106 = vmatprep.subr.bf16.mxu0 0
    %5107 = vmatpush2.bf16.msra.mxu0 0
    %5108 = vmatprep.subr.bf16.mxu0 0
    %5109 = vmatpush2.bf16.msra.mxu0 0
    %5110 = vmatprep.subr.bf16.mxu0 0
    %5111 = vmatpush2.bf16.msra.mxu0 0
    %5112 = vmatprep.subr.bf16.mxu0 0
    %5113 = vmatpush2.bf16.msra.mxu0 0
    %5114 = vmatprep.mubr.bf16.mxu0 0
    %5115 = vmatmul.mubr.bf16.gmra.mxu0 %v5077
    %v5116 = vpop.f32.mrf.mxu0
    %v5117 = vadd.f32 0.0, %v5116
    %v5118 = vpop.f32.mrf.mxu0
    %v5119 = vpop.f32.mrf.mxu0
    %v5120 = vpop.f32.mrf.mxu0
    %5121 = vdwg.mxu0
    %5123 = vrot.lane.b32.xlu0 %v4736, 96
    %v5124 = vpop.permute.xlu0 %5123
    %v5126 = vsel %vm1411, %v5072, 0
    %v5129 = vsel %vm1439, %v5124, 0
    %5131 = vmatprep.subr.bf16.mxu0 0
    %5132 = vmatpush1.bf16.msra.mxu0 0
    %5133 = vmatprep.subr.bf16.mxu0 0
    %5134 = vmatpush1.bf16.msra.mxu0 0
    %5135 = vmatprep.subr.bf16.mxu0 0
    %5136 = vmatpush1.bf16.msra.mxu0 0
    %5137 = vmatprep.subr.bf16.mxu0 0
    %5138 = vmatpush1.bf16.msra.mxu0 0
    %5139 = vmatprep.subr.bf16.mxu0 0
    %5140 = vmatpush1.bf16.msra.mxu0 0
    %5141 = vmatprep.subr.bf16.mxu0 0
    %5142 = vmatpush1.bf16.msra.mxu0 0
    %5143 = vmatprep.subr.bf16.mxu0 0
    %5144 = vmatpush1.bf16.msra.mxu0 0
    %5145 = vmatprep.subr.bf16.mxu0 0
    %5146 = vmatpush1.bf16.msra.mxu0 %v5129
    %5147 = vmatprep.subr.bf16.mxu0 0
    %5148 = vmatpush2.bf16.msra.mxu0 0
    %5149 = vmatprep.subr.bf16.mxu0 0
    %5150 = vmatpush2.bf16.msra.mxu0 0
    %5151 = vmatprep.subr.bf16.mxu0 0
    %5152 = vmatpush2.bf16.msra.mxu0 0
    %5153 = vmatprep.subr.bf16.mxu0 0
    %5154 = vmatpush2.bf16.msra.mxu0 0
    %5155 = vmatprep.subr.bf16.mxu0 0
    %5156 = vmatpush2.bf16.msra.mxu0 0
    %5157 = vmatprep.subr.bf16.mxu0 0
    %5158 = vmatpush2.bf16.msra.mxu0 0
    %5159 = vmatprep.subr.bf16.mxu0 0
    %5160 = vmatpush2.bf16.msra.mxu0 0
    %5161 = vmatprep.subr.bf16.mxu0 0
    %5162 = vmatpush2.bf16.msra.mxu0 0
    %5163 = vmatprep.mubr.bf16.mxu0 0
    %5164 = vmatmul.mubr.bf16.gmra.mxu0 %v5126
    %v5165 = vpop.f32.mrf.mxu0
    %v5166 = vadd.f32 0.0, %v5165
    %v5167 = vpop.f32.mrf.mxu0
    %v5168 = vpop.f32.mrf.mxu0
    %v5169 = vpop.f32.mrf.mxu0
    %5170 = vdwg.mxu0
    %5171 = vrot.lane.b32.xlu0 %v4731, 64
    %v5172 = vpop.permute.xlu0 %5171
    %5173 = vrot.lane.b32.xlu0 %v4733, 64
    %v5174 = vpop.permute.xlu0 %5173
    %v5176 = vsel %vm1318, %v5172, 0
    %v5179 = vsel %vm1318, %v5174, 0
    %5181 = vmatprep.subr.bf16.mxu0 0
    %5182 = vmatpush1.bf16.xpose.msra.mxu0 0
    %5183 = vmatprep.subr.bf16.mxu0 0
    %5184 = vmatpush1.bf16.xpose.msra.mxu0 0
    %5185 = vmatprep.subr.bf16.mxu0 0
    %5186 = vmatpush1.bf16.xpose.msra.mxu0 0
    %5187 = vmatprep.subr.bf16.mxu0 0
    %5188 = vmatpush1.bf16.xpose.msra.mxu0 0
    %5189 = vmatprep.subr.bf16.mxu0 0
    %5190 = vmatpush1.bf16.xpose.msra.mxu0 0
    %5191 = vmatprep.subr.bf16.mxu0 0
    %5192 = vmatpush1.bf16.xpose.msra.mxu0 0
    %5193 = vmatprep.subr.bf16.mxu0 0
    %5194 = vmatpush1.bf16.xpose.msra.mxu0 0
    %5195 = vmatprep.subr.bf16.mxu0 0
    %5196 = vmatpush1.bf16.xpose.msra.mxu0 %v5179
    %5197 = vmatprep.subr.bf16.mxu0 0
    %5198 = vmatpush2.bf16.xpose.msra.mxu0 0
    %5199 = vmatprep.subr.bf16.mxu0 0
    %5200 = vmatpush2.bf16.xpose.msra.mxu0 0
    %5201 = vmatprep.subr.bf16.mxu0 0
    %5202 = vmatpush2.bf16.xpose.msra.mxu0 0
    %5203 = vmatprep.subr.bf16.mxu0 0
    %5204 = vmatpush2.bf16.xpose.msra.mxu0 0
    %5205 = vmatprep.subr.bf16.mxu0 0
    %5206 = vmatpush2.bf16.xpose.msra.mxu0 0
    %5207 = vmatprep.subr.bf16.mxu0 0
    %5208 = vmatpush2.bf16.xpose.msra.mxu0 0
    %5209 = vmatprep.subr.bf16.mxu0 0
    %5210 = vmatpush2.bf16.xpose.msra.mxu0 0
    %5211 = vmatprep.subr.bf16.mxu0 0
    %5212 = vmatpush2.bf16.xpose.msra.mxu0 0
    %5213 = vmatprep.mubr.bf16.mxu0 0
    %5214 = vmatmul.mubr.bf16.gmra.mxu0 %v5176
    %v5215 = vpop.f32.mrf.mxu0
    %v5216 = vadd.f32 %v1311, %v5215
    %v5217 = vpop.f32.mrf.mxu0
    %v5218 = vpop.f32.mrf.mxu0
    %v5219 = vpop.f32.mrf.mxu0
    %5220 = vdwg.mxu0
    %5221 = vrot.lane.b32.xlu0 %v4732, 64
    %v5222 = vpop.permute.xlu0 %5221
    %5223 = vrot.lane.b32.xlu0 %v4734, 64
    %v5224 = vpop.permute.xlu0 %5223
    %v5226 = vsel %vm1318, %v5222, 0
    %v5229 = vsel %vm1318, %v5224, 0
    %5231 = vmatprep.subr.bf16.mxu0 0
    %5232 = vmatpush1.bf16.xpose.msra.mxu0 0
    %5233 = vmatprep.subr.bf16.mxu0 0
    %5234 = vmatpush1.bf16.xpose.msra.mxu0 0
    %5235 = vmatprep.subr.bf16.mxu0 0
    %5236 = vmatpush1.bf16.xpose.msra.mxu0 0
    %5237 = vmatprep.subr.bf16.mxu0 0
    %5238 = vmatpush1.bf16.xpose.msra.mxu0 0
    %5239 = vmatprep.subr.bf16.mxu0 0
    %5240 = vmatpush1.bf16.xpose.msra.mxu0 0
    %5241 = vmatprep.subr.bf16.mxu0 0
    %5242 = vmatpush1.bf16.xpose.msra.mxu0 0
    %5243 = vmatprep.subr.bf16.mxu0 0
    %5244 = vmatpush1.bf16.xpose.msra.mxu0 0
    %5245 = vmatprep.subr.bf16.mxu0 0
    %5246 = vmatpush1.bf16.xpose.msra.mxu0 %v5229
    %5247 = vmatprep.subr.bf16.mxu0 0
    %5248 = vmatpush2.bf16.xpose.msra.mxu0 0
    %5249 = vmatprep.subr.bf16.mxu0 0
    %5250 = vmatpush2.bf16.xpose.msra.mxu0 0
    %5251 = vmatprep.subr.bf16.mxu0 0
    %5252 = vmatpush2.bf16.xpose.msra.mxu0 0
    %5253 = vmatprep.subr.bf16.mxu0 0
    %5254 = vmatpush2.bf16.xpose.msra.mxu0 0
    %5255 = vmatprep.subr.bf16.mxu0 0
    %5256 = vmatpush2.bf16.xpose.msra.mxu0 0
    %5257 = vmatprep.subr.bf16.mxu0 0
    %5258 = vmatpush2.bf16.xpose.msra.mxu0 0
    %5259 = vmatprep.subr.bf16.mxu0 0
    %5260 = vmatpush2.bf16.xpose.msra.mxu0 0
    %5261 = vmatprep.subr.bf16.mxu0 0
    %5262 = vmatpush2.bf16.xpose.msra.mxu0 0
    %5263 = vmatprep.mubr.bf16.mxu0 0
    %5264 = vmatmul.mubr.bf16.gmra.mxu0 %v5226
    %v5265 = vpop.f32.mrf.mxu0
    %v5266 = vadd.f32 %v1315, %v5265
    %v5267 = vpop.f32.mrf.mxu0
    %v5268 = vpop.f32.mrf.mxu0
    %v5269 = vpop.f32.mrf.mxu0
    %5270 = vdwg.mxu0
    %v5271 = vsel %vm1411, %v5216, -inf
    %5272 = vmax.xlane.f32.xlu0 %v5271
    %v5273 = vpop.xlane.xlu0 %5272
    %v5274 = vsel %vm1411, %v5266, -inf
    %5275 = vmax.xlane.f32.xlu0 %v5274
    %v5276 = vpop.xlane.xlu0 %5275
    %v5277 = vsub.f32 %v5216, %v5273
    %v5278 = vsub.f32 %v5266, %v5276
    %v5279 = vmul.f32 %v5277, 1.442695
    %v5280 = vpow.pop %v5279
    %v5281 = vmul.f32 %v5278, 1.442695
    %v5282 = vpow.pop %v5281
    %v5283 = vsel %vm1411, %v5280, 0.0
    %5284 = vadd.xlane.f32.xlu0 %v5283
    %v5285 = vpop.xlane.xlu0 %5284
    %v5286 = vsel %vm1411, %v5282, 0.0
    %5287 = vadd.xlane.f32.xlu0 %v5286
    %v5288 = vpop.xlane.xlu0 %5287
    %v5289 = vrcp.pop %v5285
    %v5290 = vrcp.pop %v5288
    %v5291 = vmul.f32 %v5280, %v5289
    %v5292 = vmul.f32 %v5282, %v5290
    %v5293 = vpack.c.bf16 %v5291, %v5291
    %v5294 = vpack.c.bf16 %v5292, %v5292
    %5295 = vrot.lane.b32.xlu0 %v4735, 64
    %v5296 = vpop.permute.xlu0 %5295
    %v5298 = vsel %vm1411, %v5293, 0
    %v5301 = vsel %vm1439, %v5296, 0
    %5303 = vmatprep.subr.bf16.mxu0 0
    %5304 = vmatpush1.bf16.msra.mxu0 0
    %5305 = vmatprep.subr.bf16.mxu0 0
    %5306 = vmatpush1.bf16.msra.mxu0 0
    %5307 = vmatprep.subr.bf16.mxu0 0
    %5308 = vmatpush1.bf16.msra.mxu0 0
    %5309 = vmatprep.subr.bf16.mxu0 0
    %5310 = vmatpush1.bf16.msra.mxu0 0
    %5311 = vmatprep.subr.bf16.mxu0 0
    %5312 = vmatpush1.bf16.msra.mxu0 0
    %5313 = vmatprep.subr.bf16.mxu0 0
    %5314 = vmatpush1.bf16.msra.mxu0 0
    %5315 = vmatprep.subr.bf16.mxu0 0
    %5316 = vmatpush1.bf16.msra.mxu0 0
    %5317 = vmatprep.subr.bf16.mxu0 0
    %5318 = vmatpush1.bf16.msra.mxu0 %v5301
    %5319 = vmatprep.subr.bf16.mxu0 0
    %5320 = vmatpush2.bf16.msra.mxu0 0
    %5321 = vmatprep.subr.bf16.mxu0 0
    %5322 = vmatpush2.bf16.msra.mxu0 0
    %5323 = vmatprep.subr.bf16.mxu0 0
    %5324 = vmatpush2.bf16.msra.mxu0 0
    %5325 = vmatprep.subr.bf16.mxu0 0
    %5326 = vmatpush2.bf16.msra.mxu0 0
    %5327 = vmatprep.subr.bf16.mxu0 0
    %5328 = vmatpush2.bf16.msra.mxu0 0
    %5329 = vmatprep.subr.bf16.mxu0 0
    %5330 = vmatpush2.bf16.msra.mxu0 0
    %5331 = vmatprep.subr.bf16.mxu0 0
    %5332 = vmatpush2.bf16.msra.mxu0 0
    %5333 = vmatprep.subr.bf16.mxu0 0
    %5334 = vmatpush2.bf16.msra.mxu0 0
    %5335 = vmatprep.mubr.bf16.mxu0 0
    %5336 = vmatmul.mubr.bf16.gmra.mxu0 %v5298
    %v5337 = vpop.f32.mrf.mxu0
    %v5338 = vadd.f32 0.0, %v5337
    %v5339 = vpop.f32.mrf.mxu0
    %v5340 = vpop.f32.mrf.mxu0
    %v5341 = vpop.f32.mrf.mxu0
    %5342 = vdwg.mxu0
    %5343 = vrot.lane.b32.xlu0 %v4736, 64
    %v5344 = vpop.permute.xlu0 %5343
    %v5346 = vsel %vm1411, %v5294, 0
    %v5349 = vsel %vm1439, %v5344, 0
    %5351 = vmatprep.subr.bf16.mxu0 0
    %5352 = vmatpush1.bf16.msra.mxu0 0
    %5353 = vmatprep.subr.bf16.mxu0 0
    %5354 = vmatpush1.bf16.msra.mxu0 0
    %5355 = vmatprep.subr.bf16.mxu0 0
    %5356 = vmatpush1.bf16.msra.mxu0 0
    %5357 = vmatprep.subr.bf16.mxu0 0
    %5358 = vmatpush1.bf16.msra.mxu0 0
    %5359 = vmatprep.subr.bf16.mxu0 0
    %5360 = vmatpush1.bf16.msra.mxu0 0
    %5361 = vmatprep.subr.bf16.mxu0 0
    %5362 = vmatpush1.bf16.msra.mxu0 0
    %5363 = vmatprep.subr.bf16.mxu0 0
    %5364 = vmatpush1.bf16.msra.mxu0 0
    %5365 = vmatprep.subr.bf16.mxu0 0
    %5366 = vmatpush1.bf16.msra.mxu0 %v5349
    %5367 = vmatprep.subr.bf16.mxu0 0
    %5368 = vmatpush2.bf16.msra.mxu0 0
    %5369 = vmatprep.subr.bf16.mxu0 0
    %5370 = vmatpush2.bf16.msra.mxu0 0
    %5371 = vmatprep.subr.bf16.mxu0 0
    %5372 = vmatpush2.bf16.msra.mxu0 0
    %5373 = vmatprep.subr.bf16.mxu0 0
    %5374 = vmatpush2.bf16.msra.mxu0 0
    %5375 = vmatprep.subr.bf16.mxu0 0
    %5376 = vmatpush2.bf16.msra.mxu0 0
    %5377 = vmatprep.subr.bf16.mxu0 0
    %5378 = vmatpush2.bf16.msra.mxu0 0
    %5379 = vmatprep.subr.bf16.mxu0 0
    %5380 = vmatpush2.bf16.msra.mxu0 0
    %5381 = vmatprep.subr.bf16.mxu0 0
    %5382 = vmatpush2.bf16.msra.mxu0 0
    %5383 = vmatprep.mubr.bf16.mxu0 0
    %5384 = vmatmul.mubr.bf16.gmra.mxu0 %v5346
    %v5385 = vpop.f32.mrf.mxu0
    %v5386 = vadd.f32 0.0, %v5385
    %v5387 = vpop.f32.mrf.mxu0
    %v5388 = vpop.f32.mrf.mxu0
    %v5389 = vpop.f32.mrf.mxu0
    %5390 = vdwg.mxu0
    %5391 = vrot.lane.b32.xlu0 %v4731, 32
    %v5392 = vpop.permute.xlu0 %5391
    %5393 = vrot.lane.b32.xlu0 %v4733, 32
    %v5394 = vpop.permute.xlu0 %5393
    %v5396 = vsel %vm1318, %v5392, 0
    %v5399 = vsel %vm1318, %v5394, 0
    %5401 = vmatprep.subr.bf16.mxu0 0
    %5402 = vmatpush1.bf16.xpose.msra.mxu0 0
    %5403 = vmatprep.subr.bf16.mxu0 0
    %5404 = vmatpush1.bf16.xpose.msra.mxu0 0
    %5405 = vmatprep.subr.bf16.mxu0 0
    %5406 = vmatpush1.bf16.xpose.msra.mxu0 0
    %5407 = vmatprep.subr.bf16.mxu0 0
    %5408 = vmatpush1.bf16.xpose.msra.mxu0 0
    %5409 = vmatprep.subr.bf16.mxu0 0
    %5410 = vmatpush1.bf16.xpose.msra.mxu0 0
    %5411 = vmatprep.subr.bf16.mxu0 0
    %5412 = vmatpush1.bf16.xpose.msra.mxu0 0
    %5413 = vmatprep.subr.bf16.mxu0 0
    %5414 = vmatpush1.bf16.xpose.msra.mxu0 0
    %5415 = vmatprep.subr.bf16.mxu0 0
    %5416 = vmatpush1.bf16.xpose.msra.mxu0 %v5399
    %5417 = vmatprep.subr.bf16.mxu0 0
    %5418 = vmatpush2.bf16.xpose.msra.mxu0 0
    %5419 = vmatprep.subr.bf16.mxu0 0
    %5420 = vmatpush2.bf16.xpose.msra.mxu0 0
    %5421 = vmatprep.subr.bf16.mxu0 0
    %5422 = vmatpush2.bf16.xpose.msra.mxu0 0
    %5423 = vmatprep.subr.bf16.mxu0 0
    %5424 = vmatpush2.bf16.xpose.msra.mxu0 0
    %5425 = vmatprep.subr.bf16.mxu0 0
    %5426 = vmatpush2.bf16.xpose.msra.mxu0 0
    %5427 = vmatprep.subr.bf16.mxu0 0
    %5428 = vmatpush2.bf16.xpose.msra.mxu0 0
    %5429 = vmatprep.subr.bf16.mxu0 0
    %5430 = vmatpush2.bf16.xpose.msra.mxu0 0
    %5431 = vmatprep.subr.bf16.mxu0 0
    %5432 = vmatpush2.bf16.xpose.msra.mxu0 0
    %5433 = vmatprep.mubr.bf16.mxu0 0
    %5434 = vmatmul.mubr.bf16.gmra.mxu0 %v5396
    %v5435 = vpop.f32.mrf.mxu0
    %v5436 = vadd.f32 %v1311, %v5435
    %v5437 = vpop.f32.mrf.mxu0
    %v5438 = vpop.f32.mrf.mxu0
    %v5439 = vpop.f32.mrf.mxu0
    %5440 = vdwg.mxu0
    %5441 = vrot.lane.b32.xlu0 %v4732, 32
    %v5442 = vpop.permute.xlu0 %5441
    %5443 = vrot.lane.b32.xlu0 %v4734, 32
    %v5444 = vpop.permute.xlu0 %5443
    %v5446 = vsel %vm1318, %v5442, 0
    %v5449 = vsel %vm1318, %v5444, 0
    %5451 = vmatprep.subr.bf16.mxu0 0
    %5452 = vmatpush1.bf16.xpose.msra.mxu0 0
    %5453 = vmatprep.subr.bf16.mxu0 0
    %5454 = vmatpush1.bf16.xpose.msra.mxu0 0
    %5455 = vmatprep.subr.bf16.mxu0 0
    %5456 = vmatpush1.bf16.xpose.msra.mxu0 0
    %5457 = vmatprep.subr.bf16.mxu0 0
    %5458 = vmatpush1.bf16.xpose.msra.mxu0 0
    %5459 = vmatprep.subr.bf16.mxu0 0
    %5460 = vmatpush1.bf16.xpose.msra.mxu0 0
    %5461 = vmatprep.subr.bf16.mxu0 0
    %5462 = vmatpush1.bf16.xpose.msra.mxu0 0
    %5463 = vmatprep.subr.bf16.mxu0 0
    %5464 = vmatpush1.bf16.xpose.msra.mxu0 0
    %5465 = vmatprep.subr.bf16.mxu0 0
    %5466 = vmatpush1.bf16.xpose.msra.mxu0 %v5449
    %5467 = vmatprep.subr.bf16.mxu0 0
    %5468 = vmatpush2.bf16.xpose.msra.mxu0 0
    %5469 = vmatprep.subr.bf16.mxu0 0
    %5470 = vmatpush2.bf16.xpose.msra.mxu0 0
    %5471 = vmatprep.subr.bf16.mxu0 0
    %5472 = vmatpush2.bf16.xpose.msra.mxu0 0
    %5473 = vmatprep.subr.bf16.mxu0 0
    %5474 = vmatpush2.bf16.xpose.msra.mxu0 0
    %5475 = vmatprep.subr.bf16.mxu0 0
    %5476 = vmatpush2.bf16.xpose.msra.mxu0 0
    %5477 = vmatprep.subr.bf16.mxu0 0
    %5478 = vmatpush2.bf16.xpose.msra.mxu0 0
    %5479 = vmatprep.subr.bf16.mxu0 0
    %5480 = vmatpush2.bf16.xpose.msra.mxu0 0
    %5481 = vmatprep.subr.bf16.mxu0 0
    %5482 = vmatpush2.bf16.xpose.msra.mxu0 0
    %5483 = vmatprep.mubr.bf16.mxu0 0
    %5484 = vmatmul.mubr.bf16.gmra.mxu0 %v5446
    %v5485 = vpop.f32.mrf.mxu0
    %v5486 = vadd.f32 %v1315, %v5485
    %v5487 = vpop.f32.mrf.mxu0
    %v5488 = vpop.f32.mrf.mxu0
    %v5489 = vpop.f32.mrf.mxu0
    %5490 = vdwg.mxu0
    %v5491 = vsel %vm1411, %v5436, -inf
    %5492 = vmax.xlane.f32.xlu0 %v5491
    %v5493 = vpop.xlane.xlu0 %5492
    %v5494 = vsel %vm1411, %v5486, -inf
    %5495 = vmax.xlane.f32.xlu0 %v5494
    %v5496 = vpop.xlane.xlu0 %5495
    %v5497 = vsub.f32 %v5436, %v5493
    %v5498 = vsub.f32 %v5486, %v5496
    %v5499 = vmul.f32 %v5497, 1.442695
    %v5500 = vpow.pop %v5499
    %v5501 = vmul.f32 %v5498, 1.442695
    %v5502 = vpow.pop %v5501
    %v5503 = vsel %vm1411, %v5500, 0.0
    %5504 = vadd.xlane.f32.xlu0 %v5503
    %v5505 = vpop.xlane.xlu0 %5504
    %v5506 = vsel %vm1411, %v5502, 0.0
    %5507 = vadd.xlane.f32.xlu0 %v5506
    %v5508 = vpop.xlane.xlu0 %5507
    %v5509 = vrcp.pop %v5505
    %v5510 = vrcp.pop %v5508
    %v5511 = vmul.f32 %v5500, %v5509
    %v5512 = vmul.f32 %v5502, %v5510
    %v5513 = vpack.c.bf16 %v5511, %v5511
    %v5514 = vpack.c.bf16 %v5512, %v5512
    %5515 = vrot.lane.b32.xlu0 %v4735, 32
    %v5516 = vpop.permute.xlu0 %5515
    %v5518 = vsel %vm1411, %v5513, 0
    %v5521 = vsel %vm1439, %v5516, 0
    %5523 = vmatprep.subr.bf16.mxu0 0
    %5524 = vmatpush1.bf16.msra.mxu0 0
    %5525 = vmatprep.subr.bf16.mxu0 0
    %5526 = vmatpush1.bf16.msra.mxu0 0
    %5527 = vmatprep.subr.bf16.mxu0 0
    %5528 = vmatpush1.bf16.msra.mxu0 0
    %5529 = vmatprep.subr.bf16.mxu0 0
    %5530 = vmatpush1.bf16.msra.mxu0 0
    %5531 = vmatprep.subr.bf16.mxu0 0
    %5532 = vmatpush1.bf16.msra.mxu0 0
    %5533 = vmatprep.subr.bf16.mxu0 0
    %5534 = vmatpush1.bf16.msra.mxu0 0
    %5535 = vmatprep.subr.bf16.mxu0 0
    %5536 = vmatpush1.bf16.msra.mxu0 0
    %5537 = vmatprep.subr.bf16.mxu0 0
    %5538 = vmatpush1.bf16.msra.mxu0 %v5521
    %5539 = vmatprep.subr.bf16.mxu0 0
    %5540 = vmatpush2.bf16.msra.mxu0 0
    %5541 = vmatprep.subr.bf16.mxu0 0
    %5542 = vmatpush2.bf16.msra.mxu0 0
    %5543 = vmatprep.subr.bf16.mxu0 0
    %5544 = vmatpush2.bf16.msra.mxu0 0
    %5545 = vmatprep.subr.bf16.mxu0 0
    %5546 = vmatpush2.bf16.msra.mxu0 0
    %5547 = vmatprep.subr.bf16.mxu0 0
    %5548 = vmatpush2.bf16.msra.mxu0 0
    %5549 = vmatprep.subr.bf16.mxu0 0
    %5550 = vmatpush2.bf16.msra.mxu0 0
    %5551 = vmatprep.subr.bf16.mxu0 0
    %5552 = vmatpush2.bf16.msra.mxu0 0
    %5553 = vmatprep.subr.bf16.mxu0 0
    %5554 = vmatpush2.bf16.msra.mxu0 0
    %5555 = vmatprep.mubr.bf16.mxu0 0
    %5556 = vmatmul.mubr.bf16.gmra.mxu0 %v5518
    %v5557 = vpop.f32.mrf.mxu0
    %v5558 = vadd.f32 0.0, %v5557
    %v5559 = vpop.f32.mrf.mxu0
    %v5560 = vpop.f32.mrf.mxu0
    %v5561 = vpop.f32.mrf.mxu0
    %5562 = vdwg.mxu0
    %5563 = vrot.lane.b32.xlu0 %v4736, 32
    %v5564 = vpop.permute.xlu0 %5563
    %v5566 = vsel %vm1411, %v5514, 0
    %v5569 = vsel %vm1439, %v5564, 0
    %5571 = vmatprep.subr.bf16.mxu0 0
    %5572 = vmatpush1.bf16.msra.mxu0 0
    %5573 = vmatprep.subr.bf16.mxu0 0
    %5574 = vmatpush1.bf16.msra.mxu0 0
    %5575 = vmatprep.subr.bf16.mxu0 0
    %5576 = vmatpush1.bf16.msra.mxu0 0
    %5577 = vmatprep.subr.bf16.mxu0 0
    %5578 = vmatpush1.bf16.msra.mxu0 0
    %5579 = vmatprep.subr.bf16.mxu0 0
    %5580 = vmatpush1.bf16.msra.mxu0 0
    %5581 = vmatprep.subr.bf16.mxu0 0
    %5582 = vmatpush1.bf16.msra.mxu0 0
    %5583 = vmatprep.subr.bf16.mxu0 0
    %5584 = vmatpush1.bf16.msra.mxu0 0
    %5585 = vmatprep.subr.bf16.mxu0 0
    %5586 = vmatpush1.bf16.msra.mxu0 %v5569
    %5587 = vmatprep.subr.bf16.mxu0 0
    %5588 = vmatpush2.bf16.msra.mxu0 0
    %5589 = vmatprep.subr.bf16.mxu0 0
    %5590 = vmatpush2.bf16.msra.mxu0 0
    %5591 = vmatprep.subr.bf16.mxu0 0
    %5592 = vmatpush2.bf16.msra.mxu0 0
    %5593 = vmatprep.subr.bf16.mxu0 0
    %5594 = vmatpush2.bf16.msra.mxu0 0
    %5595 = vmatprep.subr.bf16.mxu0 0
    %5596 = vmatpush2.bf16.msra.mxu0 0
    %5597 = vmatprep.subr.bf16.mxu0 0
    %5598 = vmatpush2.bf16.msra.mxu0 0
    %5599 = vmatprep.subr.bf16.mxu0 0
    %5600 = vmatpush2.bf16.msra.mxu0 0
    %5601 = vmatprep.subr.bf16.mxu0 0
    %5602 = vmatpush2.bf16.msra.mxu0 0
    %5603 = vmatprep.mubr.bf16.mxu0 0
    %5604 = vmatmul.mubr.bf16.gmra.mxu0 %v5566
    %v5605 = vpop.f32.mrf.mxu0
    %v5606 = vadd.f32 0.0, %v5605
    %v5607 = vpop.f32.mrf.mxu0
    %v5608 = vpop.f32.mrf.mxu0
    %v5609 = vpop.f32.mrf.mxu0
    %5610 = vdwg.mxu0
    %5613 = vrot.lane.b32.xlu0 %v5117, 32
    %v5614 = vpop.permute.xlu0 %5613
    %5615 = vrot.lane.b32.xlu0 %v5166, 32
    %v5616 = vpop.permute.xlu0 %5615
    %5621 = vrot.lane.b32.xlu0 %v5338, 64
    %v5622 = vpop.permute.xlu0 %5621
    %5623 = vrot.lane.b32.xlu0 %v5386, 64
    %v5624 = vpop.permute.xlu0 %5623
    %5629 = vrot.lane.b32.xlu0 %v5558, 96
    %v5630 = vpop.permute.xlu0 %5629
    %5631 = vrot.lane.b32.xlu0 %v5606, 96
    %v5632 = vpop.permute.xlu0 %5631
    %v5635 = vsel %vm1318, %v4894, %v5614
    %v5636 = vsel %vm1318, %v4940, %v5616
    %v5637 = vsel %vm2221, %v5635, %v5622
    %v5638 = vsel %vm2221, %v5636, %v5624
    %v5639 = vsel %vm2224, %v5637, %v5630
    %v5640 = vsel %vm2224, %v5638, %v5632
    %v5641 = vld [vmem:[#allocation36] sm:$0xf]
    %v5642 = vld [vmem:[#allocation36 + $0x4] sm:$0xf]
    %v5643 = vld [vmem:[#allocation36 + $0x8] sm:$0xf]
    %v5644 = vld [vmem:[#allocation36 + $0xc] sm:$0xf]
    %v5645 = vld [vmem:[#allocation36 + $0x10] sm:$0xf]
    %v5646 = vld [vmem:[#allocation36 + $0x14] sm:$0xf]
    %v5647 = vld [vmem:[#allocation36 + $0x18] sm:$0xf]
    %v5648 = vld [vmem:[#allocation36 + $0x1c] sm:$0xf]
    %v5649 = vld [vmem:[#allocation36 + $0x20] sm:$0xf]
    %v5650 = vld [vmem:[#allocation36 + $0x24] sm:$0xf]
    %v5651 = vld [vmem:[#allocation36 + $0x28] sm:$0xf]
    %v5652 = vld [vmem:[#allocation36 + $0x2c] sm:$0xf]
    %v5653 = vld [vmem:[#allocation36 + $0x30] sm:$0xf]
    %v5654 = vld [vmem:[#allocation36 + $0x34] sm:$0xf]
    %v5655 = vld [vmem:[#allocation36 + $0x38] sm:$0xf]
    %v5656 = vld [vmem:[#allocation36 + $0x3c] sm:$0xf]
    %v5657 = vpack.c.bf16 %v5640, %v5639
    %v5674 = vunpack.c.l.b16 %v5641
    %v5675 = vunpack.c.l.b16 %v5642
    %v5676 = vunpack.c.l.b16 %v5643
    %v5677 = vunpack.c.l.b16 %v5644
    %v5678 = vunpack.c.l.b16 %v5645
    %v5679 = vunpack.c.l.b16 %v5646
    %v5680 = vunpack.c.l.b16 %v5647
    %v5681 = vunpack.c.l.b16 %v5648
    %v5682 = vunpack.c.l.b16 %v5649
    %v5683 = vunpack.c.l.b16 %v5650
    %v5684 = vunpack.c.l.b16 %v5651
    %v5685 = vunpack.c.l.b16 %v5652
    %v5686 = vunpack.c.l.b16 %v5653
    %v5687 = vunpack.c.l.b16 %v5654
    %v5688 = vunpack.c.l.b16 %v5655
    %v5689 = vunpack.c.l.b16 %v5656
    %v5690 = vpack.c.b16 %v5675, %v5674
    %v5691 = vpack.c.b16 %v5677, %v5676
    %v5692 = vpack.c.b16 %v5679, %v5678
    %v5693 = vpack.c.b16 %v5681, %v5680
    %v5694 = vpack.c.b16 %v5683, %v5682
    %v5695 = vpack.c.b16 %v5685, %v5684
    %v5696 = vpack.c.b16 %v5687, %v5686
    %v5697 = vpack.c.b16 %v5689, %v5688
    %5706 = vmatprep.subr.bf16.mxu0 0
    %5707 = vmatpush1.bf16.msra.mxu0 %v5697
    %5708 = vmatprep.subr.bf16.mxu0 0
    %5709 = vmatpush1.bf16.msra.mxu0 %v5696
    %5710 = vmatprep.subr.bf16.mxu0 0
    %5711 = vmatpush1.bf16.msra.mxu0 %v5695
    %5712 = vmatprep.subr.bf16.mxu0 0
    %5713 = vmatpush1.bf16.msra.mxu0 %v5694
    %5714 = vmatprep.subr.bf16.mxu0 0
    %5715 = vmatpush1.bf16.msra.mxu0 %v5693
    %5716 = vmatprep.subr.bf16.mxu0 0
    %5717 = vmatpush1.bf16.msra.mxu0 %v5692
    %5718 = vmatprep.subr.bf16.mxu0 0
    %5719 = vmatpush1.bf16.msra.mxu0 %v5691
    %5720 = vmatprep.subr.bf16.mxu0 0
    %5721 = vmatpush1.bf16.msra.mxu0 %v5690
    %5722 = vmatprep.subr.bf16.mxu0 0
    %5723 = vmatpush2.bf16.msra.mxu0 0
    %5724 = vmatprep.subr.bf16.mxu0 0
    %5725 = vmatpush2.bf16.msra.mxu0 0
    %5726 = vmatprep.subr.bf16.mxu0 0
    %5727 = vmatpush2.bf16.msra.mxu0 0
    %5728 = vmatprep.subr.bf16.mxu0 0
    %5729 = vmatpush2.bf16.msra.mxu0 0
    %5730 = vmatprep.subr.bf16.mxu0 0
    %5731 = vmatpush2.bf16.msra.mxu0 0
    %5732 = vmatprep.subr.bf16.mxu0 0
    %5733 = vmatpush2.bf16.msra.mxu0 0
    %5734 = vmatprep.subr.bf16.mxu0 0
    %5735 = vmatpush2.bf16.msra.mxu0 0
    %5736 = vmatprep.subr.bf16.mxu0 0
    %5737 = vmatpush2.bf16.msra.mxu0 0
    %5738 = vmatprep.mubr.bf16.mxu0 0
    %5739 = vmatmul.mubr.bf16.gmra.mxu0 %v5657
    %v5740 = vpop.f32.mrf.mxu0
    %v5741 = vadd.f32 0.0, %v5740
    %v5742 = vpop.f32.mrf.mxu0
    %v5743 = vpop.f32.mrf.mxu0
    %v5744 = vadd.f32 0.0, %v5743
    %v5745 = vpop.f32.mrf.mxu0
    %5746 = vdwg.mxu0
    %v5747 = vadd.f32 %v4427, %v5741
    %v5748 = vadd.f32 %v4428, %v5744
    %v5749 = vld [vmem:[#allocation37] sm:$0x1]
    %v5751 = vlaneseq
    %v5752 = vshrl.u32 %v5751, 7
    %v5753 = vsub.s32 0, %v5752
    %v5754 = vrot.slane %v5749, %v5753
    %v5756 = vadd.f32 %v5747, %v5754
    %v5757 = vadd.f32 %v5748, %v5754
    %v5758 = vld [vmem:[#allocation51] sm:$0x1]
    %v5759 = vld [vmem:[#allocation52] sm:$0x1]
    %5760 = vadd.xlane.f32.xlu0 %v5756
    %v5761 = vpop.xlane.xlu0 %5760
    %5762 = vadd.xlane.f32.xlu0 %v5757
    %v5763 = vpop.xlane.xlu0 %5762
    %v5764 = vmul.f32 %v5761, %v1003
    %v5765 = vmul.f32 %v5763, %v1003
    %v5766 = vsub.f32 %v5756, %v5764
    %v5767 = vsub.f32 %v5757, %v5765
    %v5768 = vmul.f32 %v5766, %v5766
    %v5769 = vmul.f32 %v5767, %v5767
    %5770 = vadd.xlane.f32.xlu0 %v5768
    %v5771 = vpop.xlane.xlu0 %5770
    %5772 = vadd.xlane.f32.xlu0 %v5769
    %v5773 = vpop.xlane.xlu0 %5772
    %v5774 = vmul.f32 %v5771, %v1003
    %v5775 = vmul.f32 %v5773, %v1003
    %v5776 = vadd.f32 %v5774, 1e-05
    %v5777 = vadd.f32 %v5775, 1e-05
    %v5778 = vrsqrt.pop %v5776
    %v5779 = vrsqrt.pop %v5777
    %v5780 = vmul.f32 %v5766, %v5778
    %v5781 = vmul.f32 %v5767, %v5779
    %v5783 = vlaneseq
    %v5784 = vshrl.u32 %v5783, 7
    %v5785 = vsub.s32 0, %v5784
    %v5786 = vrot.slane %v5758, %v5785
    %v5788 = vmul.f32 %v5780, %v5786
    %v5789 = vmul.f32 %v5781, %v5786
    %v5791 = vlaneseq
    %v5792 = vshrl.u32 %v5791, 7
    %v5793 = vsub.s32 0, %v5792
    %v5794 = vrot.slane %v5759, %v5793
    %v5796 = vadd.f32 %v5788, %v5794
    %v5797 = vadd.f32 %v5789, %v5794
    %v5798 = vld [vmem:[#allocation39] sm:$0xf]
    %v5799 = vld [vmem:[#allocation39 + $0x4] sm:$0xf]
    %v5800 = vld [vmem:[#allocation39 + $0x8] sm:$0xf]
    %v5801 = vld [vmem:[#allocation39 + $0xc] sm:$0xf]
    %v5802 = vld [vmem:[#allocation39 + $0x10] sm:$0xf]
    %v5803 = vld [vmem:[#allocation39 + $0x14] sm:$0xf]
    %v5804 = vld [vmem:[#allocation39 + $0x18] sm:$0xf]
    %v5805 = vld [vmem:[#allocation39 + $0x1c] sm:$0xf]
    %v5806 = vld [vmem:[#allocation39 + $0x20] sm:$0xf]
    %v5807 = vld [vmem:[#allocation39 + $0x24] sm:$0xf]
    %v5808 = vld [vmem:[#allocation39 + $0x28] sm:$0xf]
    %v5809 = vld [vmem:[#allocation39 + $0x2c] sm:$0xf]
    %v5810 = vld [vmem:[#allocation39 + $0x30] sm:$0xf]
    %v5811 = vld [vmem:[#allocation39 + $0x34] sm:$0xf]
    %v5812 = vld [vmem:[#allocation39 + $0x38] sm:$0xf]
    %v5813 = vld [vmem:[#allocation39 + $0x3c] sm:$0xf]
    %v5814 = vpack.c.bf16 %v5797, %v5796
    %v5815 = vld [vmem:[#allocation40] sm:$0x1]
    %v5817 = vlaneseq
    %v5818 = vshrl.u32 %v5817, 7
    %v5819 = vsub.s32 0, %v5818
    %v5820 = vrot.slane %v5815, %v5819
    %v5838 = vunpack.c.l.b16 %v5798
    %v5839 = vunpack.c.l.b16 %v5799
    %v5840 = vunpack.c.l.b16 %v5800
    %v5841 = vunpack.c.l.b16 %v5801
    %v5842 = vunpack.c.l.b16 %v5802
    %v5843 = vunpack.c.l.b16 %v5803
    %v5844 = vunpack.c.l.b16 %v5804
    %v5845 = vunpack.c.l.b16 %v5805
    %v5846 = vunpack.c.l.b16 %v5806
    %v5847 = vunpack.c.l.b16 %v5807
    %v5848 = vunpack.c.l.b16 %v5808
    %v5849 = vunpack.c.l.b16 %v5809
    %v5850 = vunpack.c.l.b16 %v5810
    %v5851 = vunpack.c.l.b16 %v5811
    %v5852 = vunpack.c.l.b16 %v5812
    %v5853 = vunpack.c.l.b16 %v5813
    %v5854 = vpack.c.b16 %v5839, %v5838
    %v5855 = vpack.c.b16 %v5841, %v5840
    %v5856 = vpack.c.b16 %v5843, %v5842
    %v5857 = vpack.c.b16 %v5845, %v5844
    %v5858 = vpack.c.b16 %v5847, %v5846
    %v5859 = vpack.c.b16 %v5849, %v5848
    %v5860 = vpack.c.b16 %v5851, %v5850
    %v5861 = vpack.c.b16 %v5853, %v5852
    %5870 = vmatprep.subr.bf16.mxu0 0
    %5871 = vmatpush1.bf16.msra.mxu0 %v5861
    %5872 = vmatprep.subr.bf16.mxu0 0
    %5873 = vmatpush1.bf16.msra.mxu0 %v5860
    %5874 = vmatprep.subr.bf16.mxu0 0
    %5875 = vmatpush1.bf16.msra.mxu0 %v5859
    %5876 = vmatprep.subr.bf16.mxu0 0
    %5877 = vmatpush1.bf16.msra.mxu0 %v5858
    %5878 = vmatprep.subr.bf16.mxu0 0
    %5879 = vmatpush1.bf16.msra.mxu0 %v5857
    %5880 = vmatprep.subr.bf16.mxu0 0
    %5881 = vmatpush1.bf16.msra.mxu0 %v5856
    %5882 = vmatprep.subr.bf16.mxu0 0
    %5883 = vmatpush1.bf16.msra.mxu0 %v5855
    %5884 = vmatprep.subr.bf16.mxu0 0
    %5885 = vmatpush1.bf16.msra.mxu0 %v5854
    %5886 = vmatprep.subr.bf16.mxu0 0
    %5887 = vmatpush2.bf16.msra.mxu0 0
    %5888 = vmatprep.subr.bf16.mxu0 0
    %5889 = vmatpush2.bf16.msra.mxu0 0
    %5890 = vmatprep.subr.bf16.mxu0 0
    %5891 = vmatpush2.bf16.msra.mxu0 0
    %5892 = vmatprep.subr.bf16.mxu0 0
    %5893 = vmatpush2.bf16.msra.mxu0 0
    %5894 = vmatprep.subr.bf16.mxu0 0
    %5895 = vmatpush2.bf16.msra.mxu0 0
    %5896 = vmatprep.subr.bf16.mxu0 0
    %5897 = vmatpush2.bf16.msra.mxu0 0
    %5898 = vmatprep.subr.bf16.mxu0 0
    %5899 = vmatpush2.bf16.msra.mxu0 0
    %5900 = vmatprep.subr.bf16.mxu0 0
    %5901 = vmatpush2.bf16.msra.mxu0 0
    %5902 = vmatprep.mubr.bf16.mxu0 0
    %5903 = vmatmul.mubr.bf16.gmra.mxu0 %v5814
    %v5904 = vpop.f32.mrf.mxu0
    %v5905 = vadd.f32 %v5820, %v5904
    %v5906 = vpop.f32.mrf.mxu0
    %v5907 = vpop.f32.mrf.mxu0
    %v5908 = vadd.f32 %v5820, %v5907
    %v5909 = vpop.f32.mrf.mxu0
    %5910 = vdwg.mxu0
    %v5911 = vld [vmem:[#allocation42] sm:$0xff]
    %v5912 = vld [vmem:[#allocation42 + $0x8] sm:$0xff]
    %v5913 = vld [vmem:[#allocation42 + $0x10] sm:$0xff]
    %v5914 = vld [vmem:[#allocation42 + $0x18] sm:$0xff]
    %v5915 = vld [vmem:[#allocation42 + $0x20] sm:$0xff]
    %v5916 = vld [vmem:[#allocation42 + $0x28] sm:$0xff]
    %v5917 = vld [vmem:[#allocation42 + $0x30] sm:$0xff]
    %v5918 = vld [vmem:[#allocation42 + $0x38] sm:$0xff]
    %v5919 = vld [vmem:[#allocation42 + $0x40] sm:$0xff]
    %v5920 = vld [vmem:[#allocation42 + $0x48] sm:$0xff]
    %v5921 = vld [vmem:[#allocation42 + $0x50] sm:$0xff]
    %v5922 = vld [vmem:[#allocation42 + $0x58] sm:$0xff]
    %v5923 = vld [vmem:[#allocation42 + $0x60] sm:$0xff]
    %v5924 = vld [vmem:[#allocation42 + $0x68] sm:$0xff]
    %v5925 = vld [vmem:[#allocation42 + $0x70] sm:$0xff]
    %v5926 = vld [vmem:[#allocation42 + $0x78] sm:$0xff]
    %v5927 = vpack.c.bf16 %v994, %v993
    %v5928 = vld [vmem:[#allocation43] sm:$0x3]
    %v5930 = vlaneseq
    %v5931 = vshrl.u32 %v5930, 7
    %v5932 = vsub.s32 0, %v5931
    %v5933 = vrot.slane %v5928, %v5932
    %v5934 = vlaneseq
    %v5935 = vshrl.u32 %v5934, 7
    %v5936 = vsub.s32 1, %v5935
    %v5937 = vrot.slane %v5928, %v5936
    %v5956 = vunpack.c.l.b16 %v5911
    %v5957 = vunpack.c.h.b16 %v5911
    %v5958 = vunpack.c.l.b16 %v5912
    %v5959 = vunpack.c.h.b16 %v5912
    %v5960 = vunpack.c.l.b16 %v5913
    %v5961 = vunpack.c.h.b16 %v5913
    %v5962 = vunpack.c.l.b16 %v5914
    %v5963 = vunpack.c.h.b16 %v5914
    %v5964 = vunpack.c.l.b16 %v5915
    %v5965 = vunpack.c.h.b16 %v5915
    %v5966 = vunpack.c.l.b16 %v5916
    %v5967 = vunpack.c.h.b16 %v5916
    %v5968 = vunpack.c.l.b16 %v5917
    %v5969 = vunpack.c.h.b16 %v5917
    %v5970 = vunpack.c.l.b16 %v5918
    %v5971 = vunpack.c.h.b16 %v5918
    %v5972 = vunpack.c.l.b16 %v5919
    %v5973 = vunpack.c.h.b16 %v5919
    %v5974 = vunpack.c.l.b16 %v5920
    %v5975 = vunpack.c.h.b16 %v5920
    %v5976 = vunpack.c.l.b16 %v5921
    %v5977 = vunpack.c.h.b16 %v5921
    %v5978 = vunpack.c.l.b16 %v5922
    %v5979 = vunpack.c.h.b16 %v5922
    %v5980 = vunpack.c.l.b16 %v5923
    %v5981 = vunpack.c.h.b16 %v5923
    %v5982 = vunpack.c.l.b16 %v5924
    %v5983 = vunpack.c.h.b16 %v5924
    %v5984 = vunpack.c.l.b16 %v5925
    %v5985 = vunpack.c.h.b16 %v5925
    %v5986 = vunpack.c.l.b16 %v5926
    %v5987 = vunpack.c.h.b16 %v5926
    %v5988 = vpack.c.b16 %v5958, %v5956
    %v5989 = vpack.c.b16 %v5959, %v5957
    %v5990 = vpack.c.b16 %v5962, %v5960
    %v5991 = vpack.c.b16 %v5963, %v5961
    %v5992 = vpack.c.b16 %v5966, %v5964
    %v5993 = vpack.c.b16 %v5967, %v5965
    %v5994 = vpack.c.b16 %v5970, %v5968
    %v5995 = vpack.c.b16 %v5971, %v5969
    %v5996 = vpack.c.b16 %v5974, %v5972
    %v5997 = vpack.c.b16 %v5975, %v5973
    %v5998 = vpack.c.b16 %v5978, %v5976
    %v5999 = vpack.c.b16 %v5979, %v5977
    %v6000 = vpack.c.b16 %v5982, %v5980
    %v6001 = vpack.c.b16 %v5983, %v5981
    %v6002 = vpack.c.b16 %v5986, %v5984
    %v6003 = vpack.c.b16 %v5987, %v5985
    %6020 = vmatprep.subr.bf16.mxu0 %v6003
    %6021 = vmatpush1.bf16.msra.mxu0 %v6002
    %6022 = vmatprep.subr.bf16.mxu0 %v6001
    %6023 = vmatpush1.bf16.msra.mxu0 %v6000
    %6024 = vmatprep.subr.bf16.mxu0 %v5999
    %6025 = vmatpush1.bf16.msra.mxu0 %v5998
    %6026 = vmatprep.subr.bf16.mxu0 %v5997
    %6027 = vmatpush1.bf16.msra.mxu0 %v5996
    %6028 = vmatprep.subr.bf16.mxu0 %v5995
    %6029 = vmatpush1.bf16.msra.mxu0 %v5994
    %6030 = vmatprep.subr.bf16.mxu0 %v5993
    %6031 = vmatpush1.bf16.msra.mxu0 %v5992
    %6032 = vmatprep.subr.bf16.mxu0 %v5991
    %6033 = vmatpush1.bf16.msra.mxu0 %v5990
    %6034 = vmatprep.subr.bf16.mxu0 %v5989
    %6035 = vmatpush1.bf16.msra.mxu0 %v5988
    %6036 = vmatprep.subr.bf16.mxu0 0
    %6037 = vmatpush2.bf16.msra.mxu0 0
    %6038 = vmatprep.subr.bf16.mxu0 0
    %6039 = vmatpush2.bf16.msra.mxu0 0
    %6040 = vmatprep.subr.bf16.mxu0 0
    %6041 = vmatpush2.bf16.msra.mxu0 0
    %6042 = vmatprep.subr.bf16.mxu0 0
    %6043 = vmatpush2.bf16.msra.mxu0 0
    %6044 = vmatprep.subr.bf16.mxu0 0
    %6045 = vmatpush2.bf16.msra.mxu0 0
    %6046 = vmatprep.subr.bf16.mxu0 0
    %6047 = vmatpush2.bf16.msra.mxu0 0
    %6048 = vmatprep.subr.bf16.mxu0 0
    %6049 = vmatpush2.bf16.msra.mxu0 0
    %6050 = vmatprep.subr.bf16.mxu0 0
    %6051 = vmatpush2.bf16.msra.mxu0 0
    %6052 = vmatprep.mubr.bf16.mxu0 0
    %6053 = vmatmul.mubr.bf16.gmra.mxu0 %v5927
    %v6054 = vpop.f32.mrf.mxu0
    %v6055 = vadd.f32 %v5933, %v6054
    %v6056 = vpop.f32.mrf.mxu0
    %v6057 = vadd.f32 %v5937, %v6056
    %v6058 = vpop.f32.mrf.mxu0
    %v6059 = vadd.f32 %v5933, %v6058
    %v6060 = vpop.f32.mrf.mxu0
    %v6061 = vadd.f32 %v5937, %v6060
    %6062 = vdwg.mxu0
    %v6063 = vpack.c.bf16 %v5905, %v5905
    %v6064 = vpack.c.bf16 %v5908, %v5908
    %v6065 = vpack.c.bf16 %v6055, %v6055
    %v6066 = vpack.c.bf16 %v6059, %v6059
    %v6067 = vpack.c.bf16 %v6057, %v6057
    %v6068 = vpack.c.bf16 %v6061, %v6061
    %v6071 = vlaneseq
    %v6072 = vshrl.u32 %v6071, 7
    %v6073 = vsub.s32 0, %v6072
    %v6074 = vrot.slane %v995, %v6073
    %v6075 = vlaneseq
    %v6076 = vshrl.u32 %v6075, 7
    %v6077 = vsub.s32 0, %v6076
    %v6078 = vrot.slane %v996, %v6077
    %v6082 = vsel %vm1318, %v6063, 0
    %v6085 = vsel %vm1318, %v6065, 0
    %6087 = vmatprep.subr.bf16.mxu0 0
    %6088 = vmatpush1.bf16.xpose.msra.mxu0 0
    %6089 = vmatprep.subr.bf16.mxu0 0
    %6090 = vmatpush1.bf16.xpose.msra.mxu0 0
    %6091 = vmatprep.subr.bf16.mxu0 0
    %6092 = vmatpush1.bf16.xpose.msra.mxu0 0
    %6093 = vmatprep.subr.bf16.mxu0 0
    %6094 = vmatpush1.bf16.xpose.msra.mxu0 0
    %6095 = vmatprep.subr.bf16.mxu0 0
    %6096 = vmatpush1.bf16.xpose.msra.mxu0 0
    %6097 = vmatprep.subr.bf16.mxu0 0
    %6098 = vmatpush1.bf16.xpose.msra.mxu0 0
    %6099 = vmatprep.subr.bf16.mxu0 0
    %6100 = vmatpush1.bf16.xpose.msra.mxu0 0
    %6101 = vmatprep.subr.bf16.mxu0 0
    %6102 = vmatpush1.bf16.xpose.msra.mxu0 %v6085
    %6103 = vmatprep.subr.bf16.mxu0 0
    %6104 = vmatpush2.bf16.xpose.msra.mxu0 0
    %6105 = vmatprep.subr.bf16.mxu0 0
    %6106 = vmatpush2.bf16.xpose.msra.mxu0 0
    %6107 = vmatprep.subr.bf16.mxu0 0
    %6108 = vmatpush2.bf16.xpose.msra.mxu0 0
    %6109 = vmatprep.subr.bf16.mxu0 0
    %6110 = vmatpush2.bf16.xpose.msra.mxu0 0
    %6111 = vmatprep.subr.bf16.mxu0 0
    %6112 = vmatpush2.bf16.xpose.msra.mxu0 0
    %6113 = vmatprep.subr.bf16.mxu0 0
    %6114 = vmatpush2.bf16.xpose.msra.mxu0 0
    %6115 = vmatprep.subr.bf16.mxu0 0
    %6116 = vmatpush2.bf16.xpose.msra.mxu0 0
    %6117 = vmatprep.subr.bf16.mxu0 0
    %6118 = vmatpush2.bf16.xpose.msra.mxu0 0
    %6119 = vmatprep.mubr.bf16.mxu0 0
    %6120 = vmatmul.mubr.bf16.gmra.mxu0 %v6082
    %v6121 = vpop.f32.mrf.mxu0
    %v6122 = vadd.f32 %v6074, %v6121
    %v6123 = vpop.f32.mrf.mxu0
    %v6124 = vpop.f32.mrf.mxu0
    %v6125 = vpop.f32.mrf.mxu0
    %6126 = vdwg.mxu0
    %v6128 = vsel %vm1318, %v6064, 0
    %v6131 = vsel %vm1318, %v6066, 0
    %6133 = vmatprep.subr.bf16.mxu0 0
    %6134 = vmatpush1.bf16.xpose.msra.mxu0 0
    %6135 = vmatprep.subr.bf16.mxu0 0
    %6136 = vmatpush1.bf16.xpose.msra.mxu0 0
    %6137 = vmatprep.subr.bf16.mxu0 0
    %6138 = vmatpush1.bf16.xpose.msra.mxu0 0
    %6139 = vmatprep.subr.bf16.mxu0 0
    %6140 = vmatpush1.bf16.xpose.msra.mxu0 0
    %6141 = vmatprep.subr.bf16.mxu0 0
    %6142 = vmatpush1.bf16.xpose.msra.mxu0 0
    %6143 = vmatprep.subr.bf16.mxu0 0
    %6144 = vmatpush1.bf16.xpose.msra.mxu0 0
    %6145 = vmatprep.subr.bf16.mxu0 0
    %6146 = vmatpush1.bf16.xpose.msra.mxu0 0
    %6147 = vmatprep.subr.bf16.mxu0 0
    %6148 = vmatpush1.bf16.xpose.msra.mxu0 %v6131
    %6149 = vmatprep.subr.bf16.mxu0 0
    %6150 = vmatpush2.bf16.xpose.msra.mxu0 0
    %6151 = vmatprep.subr.bf16.mxu0 0
    %6152 = vmatpush2.bf16.xpose.msra.mxu0 0
    %6153 = vmatprep.subr.bf16.mxu0 0
    %6154 = vmatpush2.bf16.xpose.msra.mxu0 0
    %6155 = vmatprep.subr.bf16.mxu0 0
    %6156 = vmatpush2.bf16.xpose.msra.mxu0 0
    %6157 = vmatprep.subr.bf16.mxu0 0
    %6158 = vmatpush2.bf16.xpose.msra.mxu0 0
    %6159 = vmatprep.subr.bf16.mxu0 0
    %6160 = vmatpush2.bf16.xpose.msra.mxu0 0
    %6161 = vmatprep.subr.bf16.mxu0 0
    %6162 = vmatpush2.bf16.xpose.msra.mxu0 0
    %6163 = vmatprep.subr.bf16.mxu0 0
    %6164 = vmatpush2.bf16.xpose.msra.mxu0 0
    %6165 = vmatprep.mubr.bf16.mxu0 0
    %6166 = vmatmul.mubr.bf16.gmra.mxu0 %v6128
    %v6167 = vpop.f32.mrf.mxu0
    %v6168 = vadd.f32 %v6078, %v6167
    %v6169 = vpop.f32.mrf.mxu0
    %v6170 = vpop.f32.mrf.mxu0
    %v6171 = vpop.f32.mrf.mxu0
    %6172 = vdwg.mxu0
    %v6173 = vsel %vm1411, %v6122, -inf
    %6174 = vmax.xlane.f32.xlu0 %v6173
    %v6175 = vpop.xlane.xlu0 %6174
    %v6176 = vsel %vm1411, %v6168, -inf
    %6177 = vmax.xlane.f32.xlu0 %v6176
    %v6178 = vpop.xlane.xlu0 %6177
    %v6179 = vsub.f32 %v6122, %v6175
    %v6180 = vsub.f32 %v6168, %v6178
    %v6181 = vmul.f32 %v6179, 1.442695
    %v6182 = vpow.pop %v6181
    %v6183 = vmul.f32 %v6180, 1.442695
    %v6184 = vpow.pop %v6183
    %v6185 = vsel %vm1411, %v6182, 0.0
    %6186 = vadd.xlane.f32.xlu0 %v6185
    %v6187 = vpop.xlane.xlu0 %6186
    %v6188 = vsel %vm1411, %v6184, 0.0
    %6189 = vadd.xlane.f32.xlu0 %v6188
    %v6190 = vpop.xlane.xlu0 %6189
    %v6191 = vrcp.pop %v6187
    %v6192 = vrcp.pop %v6190
    %v6193 = vmul.f32 %v6182, %v6191
    %v6194 = vmul.f32 %v6184, %v6192
    %v6195 = vpack.c.bf16 %v6193, %v6193
    %v6196 = vpack.c.bf16 %v6194, %v6194
    %v6198 = vsel %vm1411, %v6195, 0
    %v6201 = vsel %vm1439, %v6067, 0
    %6203 = vmatprep.subr.bf16.mxu0 0
    %6204 = vmatpush1.bf16.msra.mxu0 0
    %6205 = vmatprep.subr.bf16.mxu0 0
    %6206 = vmatpush1.bf16.msra.mxu0 0
    %6207 = vmatprep.subr.bf16.mxu0 0
    %6208 = vmatpush1.bf16.msra.mxu0 0
    %6209 = vmatprep.subr.bf16.mxu0 0
    %6210 = vmatpush1.bf16.msra.mxu0 0
    %6211 = vmatprep.subr.bf16.mxu0 0
    %6212 = vmatpush1.bf16.msra.mxu0 0
    %6213 = vmatprep.subr.bf16.mxu0 0
    %6214 = vmatpush1.bf16.msra.mxu0 0
    %6215 = vmatprep.subr.bf16.mxu0 0
    %6216 = vmatpush1.bf16.msra.mxu0 0
    %6217 = vmatprep.subr.bf16.mxu0 0
    %6218 = vmatpush1.bf16.msra.mxu0 %v6201
    %6219 = vmatprep.subr.bf16.mxu0 0
    %6220 = vmatpush2.bf16.msra.mxu0 0
    %6221 = vmatprep.subr.bf16.mxu0 0
    %6222 = vmatpush2.bf16.msra.mxu0 0
    %6223 = vmatprep.subr.bf16.mxu0 0
    %6224 = vmatpush2.bf16.msra.mxu0 0
    %6225 = vmatprep.subr.bf16.mxu0 0
    %6226 = vmatpush2.bf16.msra.mxu0 0
    %6227 = vmatprep.subr.bf16.mxu0 0
    %6228 = vmatpush2.bf16.msra.mxu0 0
    %6229 = vmatprep.subr.bf16.mxu0 0
    %6230 = vmatpush2.bf16.msra.mxu0 0
    %6231 = vmatprep.subr.bf16.mxu0 0
    %6232 = vmatpush2.bf16.msra.mxu0 0
    %6233 = vmatprep.subr.bf16.mxu0 0
    %6234 = vmatpush2.bf16.msra.mxu0 0
    %6235 = vmatprep.mubr.bf16.mxu0 0
    %6236 = vmatmul.mubr.bf16.gmra.mxu0 %v6198
    %v6237 = vpop.f32.mrf.mxu0
    %v6238 = vadd.f32 0.0, %v6237
    %v6239 = vpop.f32.mrf.mxu0
    %v6240 = vpop.f32.mrf.mxu0
    %v6241 = vpop.f32.mrf.mxu0
    %6242 = vdwg.mxu0
    %v6244 = vsel %vm1411, %v6196, 0
    %v6247 = vsel %vm1439, %v6068, 0
    %6249 = vmatprep.subr.bf16.mxu0 0
    %6250 = vmatpush1.bf16.msra.mxu0 0
    %6251 = vmatprep.subr.bf16.mxu0 0
    %6252 = vmatpush1.bf16.msra.mxu0 0
    %6253 = vmatprep.subr.bf16.mxu0 0
    %6254 = vmatpush1.bf16.msra.mxu0 0
    %6255 = vmatprep.subr.bf16.mxu0 0
    %6256 = vmatpush1.bf16.msra.mxu0 0
    %6257 = vmatprep.subr.bf16.mxu0 0
    %6258 = vmatpush1.bf16.msra.mxu0 0
    %6259 = vmatprep.subr.bf16.mxu0 0
    %6260 = vmatpush1.bf16.msra.mxu0 0
    %6261 = vmatprep.subr.bf16.mxu0 0
    %6262 = vmatpush1.bf16.msra.mxu0 0
    %6263 = vmatprep.subr.bf16.mxu0 0
    %6264 = vmatpush1.bf16.msra.mxu0 %v6247
    %6265 = vmatprep.subr.bf16.mxu0 0
    %6266 = vmatpush2.bf16.msra.mxu0 0
    %6267 = vmatprep.subr.bf16.mxu0 0
    %6268 = vmatpush2.bf16.msra.mxu0 0
    %6269 = vmatprep.subr.bf16.mxu0 0
    %6270 = vmatpush2.bf16.msra.mxu0 0
    %6271 = vmatprep.subr.bf16.mxu0 0
    %6272 = vmatpush2.bf16.msra.mxu0 0
    %6273 = vmatprep.subr.bf16.mxu0 0
    %6274 = vmatpush2.bf16.msra.mxu0 0
    %6275 = vmatprep.subr.bf16.mxu0 0
    %6276 = vmatpush2.bf16.msra.mxu0 0
    %6277 = vmatprep.subr.bf16.mxu0 0
    %6278 = vmatpush2.bf16.msra.mxu0 0
    %6279 = vmatprep.subr.bf16.mxu0 0
    %6280 = vmatpush2.bf16.msra.mxu0 0
    %6281 = vmatprep.mubr.bf16.mxu0 0
    %6282 = vmatmul.mubr.bf16.gmra.mxu0 %v6244
    %v6283 = vpop.f32.mrf.mxu0
    %v6284 = vadd.f32 0.0, %v6283
    %v6285 = vpop.f32.mrf.mxu0
    %v6286 = vpop.f32.mrf.mxu0
    %v6287 = vpop.f32.mrf.mxu0
    %6288 = vdwg.mxu0
    %6290 = vrot.lane.b32.xlu0 %v6063, 96
    %v6291 = vpop.permute.xlu0 %6290
    %6293 = vrot.lane.b32.xlu0 %v6065, 96
    %v6294 = vpop.permute.xlu0 %6293
    %v6296 = vsel %vm1318, %v6291, 0
    %v6299 = vsel %vm1318, %v6294, 0
    %6301 = vmatprep.subr.bf16.mxu0 0
    %6302 = vmatpush1.bf16.xpose.msra.mxu0 0
    %6303 = vmatprep.subr.bf16.mxu0 0
    %6304 = vmatpush1.bf16.xpose.msra.mxu0 0
    %6305 = vmatprep.subr.bf16.mxu0 0
    %6306 = vmatpush1.bf16.xpose.msra.mxu0 0
    %6307 = vmatprep.subr.bf16.mxu0 0
    %6308 = vmatpush1.bf16.xpose.msra.mxu0 0
    %6309 = vmatprep.subr.bf16.mxu0 0
    %6310 = vmatpush1.bf16.xpose.msra.mxu0 0
    %6311 = vmatprep.subr.bf16.mxu0 0
    %6312 = vmatpush1.bf16.xpose.msra.mxu0 0
    %6313 = vmatprep.subr.bf16.mxu0 0
    %6314 = vmatpush1.bf16.xpose.msra.mxu0 0
    %6315 = vmatprep.subr.bf16.mxu0 0
    %6316 = vmatpush1.bf16.xpose.msra.mxu0 %v6299
    %6317 = vmatprep.subr.bf16.mxu0 0
    %6318 = vmatpush2.bf16.xpose.msra.mxu0 0
    %6319 = vmatprep.subr.bf16.mxu0 0
    %6320 = vmatpush2.bf16.xpose.msra.mxu0 0
    %6321 = vmatprep.subr.bf16.mxu0 0
    %6322 = vmatpush2.bf16.xpose.msra.mxu0 0
    %6323 = vmatprep.subr.bf16.mxu0 0
    %6324 = vmatpush2.bf16.xpose.msra.mxu0 0
    %6325 = vmatprep.subr.bf16.mxu0 0
    %6326 = vmatpush2.bf16.xpose.msra.mxu0 0
    %6327 = vmatprep.subr.bf16.mxu0 0
    %6328 = vmatpush2.bf16.xpose.msra.mxu0 0
    %6329 = vmatprep.subr.bf16.mxu0 0
    %6330 = vmatpush2.bf16.xpose.msra.mxu0 0
    %6331 = vmatprep.subr.bf16.mxu0 0
    %6332 = vmatpush2.bf16.xpose.msra.mxu0 0
    %6333 = vmatprep.mubr.bf16.mxu0 0
    %6334 = vmatmul.mubr.bf16.gmra.mxu0 %v6296
    %v6335 = vpop.f32.mrf.mxu0
    %v6336 = vadd.f32 %v6074, %v6335
    %v6337 = vpop.f32.mrf.mxu0
    %v6338 = vpop.f32.mrf.mxu0
    %v6339 = vpop.f32.mrf.mxu0
    %6340 = vdwg.mxu0
    %6342 = vrot.lane.b32.xlu0 %v6064, 96
    %v6343 = vpop.permute.xlu0 %6342
    %6345 = vrot.lane.b32.xlu0 %v6066, 96
    %v6346 = vpop.permute.xlu0 %6345
    %v6348 = vsel %vm1318, %v6343, 0
    %v6351 = vsel %vm1318, %v6346, 0
    %6353 = vmatprep.subr.bf16.mxu0 0
    %6354 = vmatpush1.bf16.xpose.msra.mxu0 0
    %6355 = vmatprep.subr.bf16.mxu0 0
    %6356 = vmatpush1.bf16.xpose.msra.mxu0 0
    %6357 = vmatprep.subr.bf16.mxu0 0
    %6358 = vmatpush1.bf16.xpose.msra.mxu0 0
    %6359 = vmatprep.subr.bf16.mxu0 0
    %6360 = vmatpush1.bf16.xpose.msra.mxu0 0
    %6361 = vmatprep.subr.bf16.mxu0 0
    %6362 = vmatpush1.bf16.xpose.msra.mxu0 0
    %6363 = vmatprep.subr.bf16.mxu0 0
    %6364 = vmatpush1.bf16.xpose.msra.mxu0 0
    %6365 = vmatprep.subr.bf16.mxu0 0
    %6366 = vmatpush1.bf16.xpose.msra.mxu0 0
    %6367 = vmatprep.subr.bf16.mxu0 0
    %6368 = vmatpush1.bf16.xpose.msra.mxu0 %v6351
    %6369 = vmatprep.subr.bf16.mxu0 0
    %6370 = vmatpush2.bf16.xpose.msra.mxu0 0
    %6371 = vmatprep.subr.bf16.mxu0 0
    %6372 = vmatpush2.bf16.xpose.msra.mxu0 0
    %6373 = vmatprep.subr.bf16.mxu0 0
    %6374 = vmatpush2.bf16.xpose.msra.mxu0 0
    %6375 = vmatprep.subr.bf16.mxu0 0
    %6376 = vmatpush2.bf16.xpose.msra.mxu0 0
    %6377 = vmatprep.subr.bf16.mxu0 0
    %6378 = vmatpush2.bf16.xpose.msra.mxu0 0
    %6379 = vmatprep.subr.bf16.mxu0 0
    %6380 = vmatpush2.bf16.xpose.msra.mxu0 0
    %6381 = vmatprep.subr.bf16.mxu0 0
    %6382 = vmatpush2.bf16.xpose.msra.mxu0 0
    %6383 = vmatprep.subr.bf16.mxu0 0
    %6384 = vmatpush2.bf16.xpose.msra.mxu0 0
    %6385 = vmatprep.mubr.bf16.mxu0 0
    %6386 = vmatmul.mubr.bf16.gmra.mxu0 %v6348
    %v6387 = vpop.f32.mrf.mxu0
    %v6388 = vadd.f32 %v6078, %v6387
    %v6389 = vpop.f32.mrf.mxu0
    %v6390 = vpop.f32.mrf.mxu0
    %v6391 = vpop.f32.mrf.mxu0
    %6392 = vdwg.mxu0
    %v6393 = vsel %vm1411, %v6336, -inf
    %6394 = vmax.xlane.f32.xlu0 %v6393
    %v6395 = vpop.xlane.xlu0 %6394
    %v6396 = vsel %vm1411, %v6388, -inf
    %6397 = vmax.xlane.f32.xlu0 %v6396
    %v6398 = vpop.xlane.xlu0 %6397
    %v6399 = vsub.f32 %v6336, %v6395
    %v6400 = vsub.f32 %v6388, %v6398
    %v6401 = vmul.f32 %v6399, 1.442695
    %v6402 = vpow.pop %v6401
    %v6403 = vmul.f32 %v6400, 1.442695
    %v6404 = vpow.pop %v6403
    %v6405 = vsel %vm1411, %v6402, 0.0
    %6406 = vadd.xlane.f32.xlu0 %v6405
    %v6407 = vpop.xlane.xlu0 %6406
    %v6408 = vsel %vm1411, %v6404, 0.0
    %6409 = vadd.xlane.f32.xlu0 %v6408
    %v6410 = vpop.xlane.xlu0 %6409
    %v6411 = vrcp.pop %v6407
    %v6412 = vrcp.pop %v6410
    %v6413 = vmul.f32 %v6402, %v6411
    %v6414 = vmul.f32 %v6404, %v6412
    %v6415 = vpack.c.bf16 %v6413, %v6413
    %v6416 = vpack.c.bf16 %v6414, %v6414
    %6418 = vrot.lane.b32.xlu0 %v6067, 96
    %v6419 = vpop.permute.xlu0 %6418
    %v6421 = vsel %vm1411, %v6415, 0
    %v6424 = vsel %vm1439, %v6419, 0
    %6426 = vmatprep.subr.bf16.mxu0 0
    %6427 = vmatpush1.bf16.msra.mxu0 0
    %6428 = vmatprep.subr.bf16.mxu0 0
    %6429 = vmatpush1.bf16.msra.mxu0 0
    %6430 = vmatprep.subr.bf16.mxu0 0
    %6431 = vmatpush1.bf16.msra.mxu0 0
    %6432 = vmatprep.subr.bf16.mxu0 0
    %6433 = vmatpush1.bf16.msra.mxu0 0
    %6434 = vmatprep.subr.bf16.mxu0 0
    %6435 = vmatpush1.bf16.msra.mxu0 0
    %6436 = vmatprep.subr.bf16.mxu0 0
    %6437 = vmatpush1.bf16.msra.mxu0 0
    %6438 = vmatprep.subr.bf16.mxu0 0
    %6439 = vmatpush1.bf16.msra.mxu0 0
    %6440 = vmatprep.subr.bf16.mxu0 0
    %6441 = vmatpush1.bf16.msra.mxu0 %v6424
    %6442 = vmatprep.subr.bf16.mxu0 0
    %6443 = vmatpush2.bf16.msra.mxu0 0
    %6444 = vmatprep.subr.bf16.mxu0 0
    %6445 = vmatpush2.bf16.msra.mxu0 0
    %6446 = vmatprep.subr.bf16.mxu0 0
    %6447 = vmatpush2.bf16.msra.mxu0 0
    %6448 = vmatprep.subr.bf16.mxu0 0
    %6449 = vmatpush2.bf16.msra.mxu0 0
    %6450 = vmatprep.subr.bf16.mxu0 0
    %6451 = vmatpush2.bf16.msra.mxu0 0
    %6452 = vmatprep.subr.bf16.mxu0 0
    %6453 = vmatpush2.bf16.msra.mxu0 0
    %6454 = vmatprep.subr.bf16.mxu0 0
    %6455 = vmatpush2.bf16.msra.mxu0 0
    %6456 = vmatprep.subr.bf16.mxu0 0
    %6457 = vmatpush2.bf16.msra.mxu0 0
    %6458 = vmatprep.mubr.bf16.mxu0 0
    %6459 = vmatmul.mubr.bf16.gmra.mxu0 %v6421
    %v6460 = vpop.f32.mrf.mxu0
    %v6461 = vadd.f32 0.0, %v6460
    %v6462 = vpop.f32.mrf.mxu0
    %v6463 = vpop.f32.mrf.mxu0
    %v6464 = vpop.f32.mrf.mxu0
    %6465 = vdwg.mxu0
    %6467 = vrot.lane.b32.xlu0 %v6068, 96
    %v6468 = vpop.permute.xlu0 %6467
    %v6470 = vsel %vm1411, %v6416, 0
    %v6473 = vsel %vm1439, %v6468, 0
    %6475 = vmatprep.subr.bf16.mxu0 0
    %6476 = vmatpush1.bf16.msra.mxu0 0
    %6477 = vmatprep.subr.bf16.mxu0 0
    %6478 = vmatpush1.bf16.msra.mxu0 0
    %6479 = vmatprep.subr.bf16.mxu0 0
    %6480 = vmatpush1.bf16.msra.mxu0 0
    %6481 = vmatprep.subr.bf16.mxu0 0
    %6482 = vmatpush1.bf16.msra.mxu0 0
    %6483 = vmatprep.subr.bf16.mxu0 0
    %6484 = vmatpush1.bf16.msra.mxu0 0
    %6485 = vmatprep.subr.bf16.mxu0 0
    %6486 = vmatpush1.bf16.msra.mxu0 0
    %6487 = vmatprep.subr.bf16.mxu0 0
    %6488 = vmatpush1.bf16.msra.mxu0 0
    %6489 = vmatprep.subr.bf16.mxu0 0
    %6490 = vmatpush1.bf16.msra.mxu0 %v6473
    %6491 = vmatprep.subr.bf16.mxu0 0
    %6492 = vmatpush2.bf16.msra.mxu0 0
    %6493 = vmatprep.subr.bf16.mxu0 0
    %6494 = vmatpush2.bf16.msra.mxu0 0
    %6495 = vmatprep.subr.bf16.mxu0 0
    %6496 = vmatpush2.bf16.msra.mxu0 0
    %6497 = vmatprep.subr.bf16.mxu0 0
    %6498 = vmatpush2.bf16.msra.mxu0 0
    %6499 = vmatprep.subr.bf16.mxu0 0
    %6500 = vmatpush2.bf16.msra.mxu0 0
    %6501 = vmatprep.subr.bf16.mxu0 0
    %6502 = vmatpush2.bf16.msra.mxu0 0
    %6503 = vmatprep.subr.bf16.mxu0 0
    %6504 = vmatpush2.bf16.msra.mxu0 0
    %6505 = vmatprep.subr.bf16.mxu0 0
    %6506 = vmatpush2.bf16.msra.mxu0 0
    %6507 = vmatprep.mubr.bf16.mxu0 0
    %6508 = vmatmul.mubr.bf16.gmra.mxu0 %v6470
    %v6509 = vpop.f32.mrf.mxu0
    %v6510 = vadd.f32 0.0, %v6509
    %v6511 = vpop.f32.mrf.mxu0
    %v6512 = vpop.f32.mrf.mxu0
    %v6513 = vpop.f32.mrf.mxu0
    %6514 = vdwg.mxu0
    %6515 = vrot.lane.b32.xlu0 %v6063, 64
    %v6516 = vpop.permute.xlu0 %6515
    %6517 = vrot.lane.b32.xlu0 %v6065, 64
    %v6518 = vpop.permute.xlu0 %6517
    %v6520 = vsel %vm1318, %v6516, 0
    %v6523 = vsel %vm1318, %v6518, 0
    %6525 = vmatprep.subr.bf16.mxu0 0
    %6526 = vmatpush1.bf16.xpose.msra.mxu0 0
    %6527 = vmatprep.subr.bf16.mxu0 0
    %6528 = vmatpush1.bf16.xpose.msra.mxu0 0
    %6529 = vmatprep.subr.bf16.mxu0 0
    %6530 = vmatpush1.bf16.xpose.msra.mxu0 0
    %6531 = vmatprep.subr.bf16.mxu0 0
    %6532 = vmatpush1.bf16.xpose.msra.mxu0 0
    %6533 = vmatprep.subr.bf16.mxu0 0
    %6534 = vmatpush1.bf16.xpose.msra.mxu0 0
    %6535 = vmatprep.subr.bf16.mxu0 0
    %6536 = vmatpush1.bf16.xpose.msra.mxu0 0
    %6537 = vmatprep.subr.bf16.mxu0 0
    %6538 = vmatpush1.bf16.xpose.msra.mxu0 0
    %6539 = vmatprep.subr.bf16.mxu0 0
    %6540 = vmatpush1.bf16.xpose.msra.mxu0 %v6523
    %6541 = vmatprep.subr.bf16.mxu0 0
    %6542 = vmatpush2.bf16.xpose.msra.mxu0 0
    %6543 = vmatprep.subr.bf16.mxu0 0
    %6544 = vmatpush2.bf16.xpose.msra.mxu0 0
    %6545 = vmatprep.subr.bf16.mxu0 0
    %6546 = vmatpush2.bf16.xpose.msra.mxu0 0
    %6547 = vmatprep.subr.bf16.mxu0 0
    %6548 = vmatpush2.bf16.xpose.msra.mxu0 0
    %6549 = vmatprep.subr.bf16.mxu0 0
    %6550 = vmatpush2.bf16.xpose.msra.mxu0 0
    %6551 = vmatprep.subr.bf16.mxu0 0
    %6552 = vmatpush2.bf16.xpose.msra.mxu0 0
    %6553 = vmatprep.subr.bf16.mxu0 0
    %6554 = vmatpush2.bf16.xpose.msra.mxu0 0
    %6555 = vmatprep.subr.bf16.mxu0 0
    %6556 = vmatpush2.bf16.xpose.msra.mxu0 0
    %6557 = vmatprep.mubr.bf16.mxu0 0
    %6558 = vmatmul.mubr.bf16.gmra.mxu0 %v6520
    %v6559 = vpop.f32.mrf.mxu0
    %v6560 = vadd.f32 %v6074, %v6559
    %v6561 = vpop.f32.mrf.mxu0
    %v6562 = vpop.f32.mrf.mxu0
    %v6563 = vpop.f32.mrf.mxu0
    %6564 = vdwg.mxu0
    %6565 = vrot.lane.b32.xlu0 %v6064, 64
    %v6566 = vpop.permute.xlu0 %6565
    %6567 = vrot.lane.b32.xlu0 %v6066, 64
    %v6568 = vpop.permute.xlu0 %6567
    %v6570 = vsel %vm1318, %v6566, 0
    %v6573 = vsel %vm1318, %v6568, 0
    %6575 = vmatprep.subr.bf16.mxu0 0
    %6576 = vmatpush1.bf16.xpose.msra.mxu0 0
    %6577 = vmatprep.subr.bf16.mxu0 0
    %6578 = vmatpush1.bf16.xpose.msra.mxu0 0
    %6579 = vmatprep.subr.bf16.mxu0 0
    %6580 = vmatpush1.bf16.xpose.msra.mxu0 0
    %6581 = vmatprep.subr.bf16.mxu0 0
    %6582 = vmatpush1.bf16.xpose.msra.mxu0 0
    %6583 = vmatprep.subr.bf16.mxu0 0
    %6584 = vmatpush1.bf16.xpose.msra.mxu0 0
    %6585 = vmatprep.subr.bf16.mxu0 0
    %6586 = vmatpush1.bf16.xpose.msra.mxu0 0
    %6587 = vmatprep.subr.bf16.mxu0 0
    %6588 = vmatpush1.bf16.xpose.msra.mxu0 0
    %6589 = vmatprep.subr.bf16.mxu0 0
    %6590 = vmatpush1.bf16.xpose.msra.mxu0 %v6573
    %6591 = vmatprep.subr.bf16.mxu0 0
    %6592 = vmatpush2.bf16.xpose.msra.mxu0 0
    %6593 = vmatprep.subr.bf16.mxu0 0
    %6594 = vmatpush2.bf16.xpose.msra.mxu0 0
    %6595 = vmatprep.subr.bf16.mxu0 0
    %6596 = vmatpush2.bf16.xpose.msra.mxu0 0
    %6597 = vmatprep.subr.bf16.mxu0 0
    %6598 = vmatpush2.bf16.xpose.msra.mxu0 0
    %6599 = vmatprep.subr.bf16.mxu0 0
    %6600 = vmatpush2.bf16.xpose.msra.mxu0 0
    %6601 = vmatprep.subr.bf16.mxu0 0
    %6602 = vmatpush2.bf16.xpose.msra.mxu0 0
    %6603 = vmatprep.subr.bf16.mxu0 0
    %6604 = vmatpush2.bf16.xpose.msra.mxu0 0
    %6605 = vmatprep.subr.bf16.mxu0 0
    %6606 = vmatpush2.bf16.xpose.msra.mxu0 0
    %6607 = vmatprep.mubr.bf16.mxu0 0
    %6608 = vmatmul.mubr.bf16.gmra.mxu0 %v6570
    %v6609 = vpop.f32.mrf.mxu0
    %v6610 = vadd.f32 %v6078, %v6609
    %v6611 = vpop.f32.mrf.mxu0
    %v6612 = vpop.f32.mrf.mxu0
    %v6613 = vpop.f32.mrf.mxu0
    %6614 = vdwg.mxu0
    %v6615 = vsel %vm1411, %v6560, -inf
    %6616 = vmax.xlane.f32.xlu0 %v6615
    %v6617 = vpop.xlane.xlu0 %6616
    %v6618 = vsel %vm1411, %v6610, -inf
    %6619 = vmax.xlane.f32.xlu0 %v6618
    %v6620 = vpop.xlane.xlu0 %6619
    %v6621 = vsub.f32 %v6560, %v6617
    %v6622 = vsub.f32 %v6610, %v6620
    %v6623 = vmul.f32 %v6621, 1.442695
    %v6624 = vpow.pop %v6623
    %v6625 = vmul.f32 %v6622, 1.442695
    %v6626 = vpow.pop %v6625
    %v6627 = vsel %vm1411, %v6624, 0.0
    %6628 = vadd.xlane.f32.xlu0 %v6627
    %v6629 = vpop.xlane.xlu0 %6628
    %v6630 = vsel %vm1411, %v6626, 0.0
    %6631 = vadd.xlane.f32.xlu0 %v6630
    %v6632 = vpop.xlane.xlu0 %6631
    %v6633 = vrcp.pop %v6629
    %v6634 = vrcp.pop %v6632
    %v6635 = vmul.f32 %v6624, %v6633
    %v6636 = vmul.f32 %v6626, %v6634
    %v6637 = vpack.c.bf16 %v6635, %v6635
    %v6638 = vpack.c.bf16 %v6636, %v6636
    %6639 = vrot.lane.b32.xlu0 %v6067, 64
    %v6640 = vpop.permute.xlu0 %6639
    %v6642 = vsel %vm1411, %v6637, 0
    %v6645 = vsel %vm1439, %v6640, 0
    %6647 = vmatprep.subr.bf16.mxu0 0
    %6648 = vmatpush1.bf16.msra.mxu0 0
    %6649 = vmatprep.subr.bf16.mxu0 0
    %6650 = vmatpush1.bf16.msra.mxu0 0
    %6651 = vmatprep.subr.bf16.mxu0 0
    %6652 = vmatpush1.bf16.msra.mxu0 0
    %6653 = vmatprep.subr.bf16.mxu0 0
    %6654 = vmatpush1.bf16.msra.mxu0 0
    %6655 = vmatprep.subr.bf16.mxu0 0
    %6656 = vmatpush1.bf16.msra.mxu0 0
    %6657 = vmatprep.subr.bf16.mxu0 0
    %6658 = vmatpush1.bf16.msra.mxu0 0
    %6659 = vmatprep.subr.bf16.mxu0 0
    %6660 = vmatpush1.bf16.msra.mxu0 0
    %6661 = vmatprep.subr.bf16.mxu0 0
    %6662 = vmatpush1.bf16.msra.mxu0 %v6645
    %6663 = vmatprep.subr.bf16.mxu0 0
    %6664 = vmatpush2.bf16.msra.mxu0 0
    %6665 = vmatprep.subr.bf16.mxu0 0
    %6666 = vmatpush2.bf16.msra.mxu0 0
    %6667 = vmatprep.subr.bf16.mxu0 0
    %6668 = vmatpush2.bf16.msra.mxu0 0
    %6669 = vmatprep.subr.bf16.mxu0 0
    %6670 = vmatpush2.bf16.msra.mxu0 0
    %6671 = vmatprep.subr.bf16.mxu0 0
    %6672 = vmatpush2.bf16.msra.mxu0 0
    %6673 = vmatprep.subr.bf16.mxu0 0
    %6674 = vmatpush2.bf16.msra.mxu0 0
    %6675 = vmatprep.subr.bf16.mxu0 0
    %6676 = vmatpush2.bf16.msra.mxu0 0
    %6677 = vmatprep.subr.bf16.mxu0 0
    %6678 = vmatpush2.bf16.msra.mxu0 0
    %6679 = vmatprep.mubr.bf16.mxu0 0
    %6680 = vmatmul.mubr.bf16.gmra.mxu0 %v6642
    %v6681 = vpop.f32.mrf.mxu0
    %v6682 = vadd.f32 0.0, %v6681
    %v6683 = vpop.f32.mrf.mxu0
    %v6684 = vpop.f32.mrf.mxu0
    %v6685 = vpop.f32.mrf.mxu0
    %6686 = vdwg.mxu0
    %6687 = vrot.lane.b32.xlu0 %v6068, 64
    %v6688 = vpop.permute.xlu0 %6687
    %v6690 = vsel %vm1411, %v6638, 0
    %v6693 = vsel %vm1439, %v6688, 0
    %6695 = vmatprep.subr.bf16.mxu0 0
    %6696 = vmatpush1.bf16.msra.mxu0 0
    %6697 = vmatprep.subr.bf16.mxu0 0
    %6698 = vmatpush1.bf16.msra.mxu0 0
    %6699 = vmatprep.subr.bf16.mxu0 0
    %6700 = vmatpush1.bf16.msra.mxu0 0
    %6701 = vmatprep.subr.bf16.mxu0 0
    %6702 = vmatpush1.bf16.msra.mxu0 0
    %6703 = vmatprep.subr.bf16.mxu0 0
    %6704 = vmatpush1.bf16.msra.mxu0 0
    %6705 = vmatprep.subr.bf16.mxu0 0
    %6706 = vmatpush1.bf16.msra.mxu0 0
    %6707 = vmatprep.subr.bf16.mxu0 0
    %6708 = vmatpush1.bf16.msra.mxu0 0
    %6709 = vmatprep.subr.bf16.mxu0 0
    %6710 = vmatpush1.bf16.msra.mxu0 %v6693
    %6711 = vmatprep.subr.bf16.mxu0 0
    %6712 = vmatpush2.bf16.msra.mxu0 0
    %6713 = vmatprep.subr.bf16.mxu0 0
    %6714 = vmatpush2.bf16.msra.mxu0 0
    %6715 = vmatprep.subr.bf16.mxu0 0
    %6716 = vmatpush2.bf16.msra.mxu0 0
    %6717 = vmatprep.subr.bf16.mxu0 0
    %6718 = vmatpush2.bf16.msra.mxu0 0
    %6719 = vmatprep.subr.bf16.mxu0 0
    %6720 = vmatpush2.bf16.msra.mxu0 0
    %6721 = vmatprep.subr.bf16.mxu0 0
    %6722 = vmatpush2.bf16.msra.mxu0 0
    %6723 = vmatprep.subr.bf16.mxu0 0
    %6724 = vmatpush2.bf16.msra.mxu0 0
    %6725 = vmatprep.subr.bf16.mxu0 0
    %6726 = vmatpush2.bf16.msra.mxu0 0
    %6727 = vmatprep.mubr.bf16.mxu0 0
    %6728 = vmatmul.mubr.bf16.gmra.mxu0 %v6690
    %v6729 = vpop.f32.mrf.mxu0
    %v6730 = vadd.f32 0.0, %v6729
    %v6731 = vpop.f32.mrf.mxu0
    %v6732 = vpop.f32.mrf.mxu0
    %v6733 = vpop.f32.mrf.mxu0
    %6734 = vdwg.mxu0
    %6735 = vrot.lane.b32.xlu0 %v6063, 32
    %v6736 = vpop.permute.xlu0 %6735
    %6737 = vrot.lane.b32.xlu0 %v6065, 32
    %v6738 = vpop.permute.xlu0 %6737
    %v6740 = vsel %vm1318, %v6736, 0
    %v6743 = vsel %vm1318, %v6738, 0
    %6745 = vmatprep.subr.bf16.mxu0 0
    %6746 = vmatpush1.bf16.xpose.msra.mxu0 0
    %6747 = vmatprep.subr.bf16.mxu0 0
    %6748 = vmatpush1.bf16.xpose.msra.mxu0 0
    %6749 = vmatprep.subr.bf16.mxu0 0
    %6750 = vmatpush1.bf16.xpose.msra.mxu0 0
    %6751 = vmatprep.subr.bf16.mxu0 0
    %6752 = vmatpush1.bf16.xpose.msra.mxu0 0
    %6753 = vmatprep.subr.bf16.mxu0 0
    %6754 = vmatpush1.bf16.xpose.msra.mxu0 0
    %6755 = vmatprep.subr.bf16.mxu0 0
    %6756 = vmatpush1.bf16.xpose.msra.mxu0 0
    %6757 = vmatprep.subr.bf16.mxu0 0
    %6758 = vmatpush1.bf16.xpose.msra.mxu0 0
    %6759 = vmatprep.subr.bf16.mxu0 0
    %6760 = vmatpush1.bf16.xpose.msra.mxu0 %v6743
    %6761 = vmatprep.subr.bf16.mxu0 0
    %6762 = vmatpush2.bf16.xpose.msra.mxu0 0
    %6763 = vmatprep.subr.bf16.mxu0 0
    %6764 = vmatpush2.bf16.xpose.msra.mxu0 0
    %6765 = vmatprep.subr.bf16.mxu0 0
    %6766 = vmatpush2.bf16.xpose.msra.mxu0 0
    %6767 = vmatprep.subr.bf16.mxu0 0
    %6768 = vmatpush2.bf16.xpose.msra.mxu0 0
    %6769 = vmatprep.subr.bf16.mxu0 0
    %6770 = vmatpush2.bf16.xpose.msra.mxu0 0
    %6771 = vmatprep.subr.bf16.mxu0 0
    %6772 = vmatpush2.bf16.xpose.msra.mxu0 0
    %6773 = vmatprep.subr.bf16.mxu0 0
    %6774 = vmatpush2.bf16.xpose.msra.mxu0 0
    %6775 = vmatprep.subr.bf16.mxu0 0
    %6776 = vmatpush2.bf16.xpose.msra.mxu0 0
    %6777 = vmatprep.mubr.bf16.mxu0 0
    %6778 = vmatmul.mubr.bf16.gmra.mxu0 %v6740
    %v6779 = vpop.f32.mrf.mxu0
    %v6780 = vadd.f32 %v6074, %v6779
    %v6781 = vpop.f32.mrf.mxu0
    %v6782 = vpop.f32.mrf.mxu0
    %v6783 = vpop.f32.mrf.mxu0
    %6784 = vdwg.mxu0
    %6785 = vrot.lane.b32.xlu0 %v6064, 32
    %v6786 = vpop.permute.xlu0 %6785
    %6787 = vrot.lane.b32.xlu0 %v6066, 32
    %v6788 = vpop.permute.xlu0 %6787
    %v6790 = vsel %vm1318, %v6786, 0
    %v6793 = vsel %vm1318, %v6788, 0
    %6795 = vmatprep.subr.bf16.mxu0 0
    %6796 = vmatpush1.bf16.xpose.msra.mxu0 0
    %6797 = vmatprep.subr.bf16.mxu0 0
    %6798 = vmatpush1.bf16.xpose.msra.mxu0 0
    %6799 = vmatprep.subr.bf16.mxu0 0
    %6800 = vmatpush1.bf16.xpose.msra.mxu0 0
    %6801 = vmatprep.subr.bf16.mxu0 0
    %6802 = vmatpush1.bf16.xpose.msra.mxu0 0
    %6803 = vmatprep.subr.bf16.mxu0 0
    %6804 = vmatpush1.bf16.xpose.msra.mxu0 0
    %6805 = vmatprep.subr.bf16.mxu0 0
    %6806 = vmatpush1.bf16.xpose.msra.mxu0 0
    %6807 = vmatprep.subr.bf16.mxu0 0
    %6808 = vmatpush1.bf16.xpose.msra.mxu0 0
    %6809 = vmatprep.subr.bf16.mxu0 0
    %6810 = vmatpush1.bf16.xpose.msra.mxu0 %v6793
    %6811 = vmatprep.subr.bf16.mxu0 0
    %6812 = vmatpush2.bf16.xpose.msra.mxu0 0
    %6813 = vmatprep.subr.bf16.mxu0 0
    %6814 = vmatpush2.bf16.xpose.msra.mxu0 0
    %6815 = vmatprep.subr.bf16.mxu0 0
    %6816 = vmatpush2.bf16.xpose.msra.mxu0 0
    %6817 = vmatprep.subr.bf16.mxu0 0
    %6818 = vmatpush2.bf16.xpose.msra.mxu0 0
    %6819 = vmatprep.subr.bf16.mxu0 0
    %6820 = vmatpush2.bf16.xpose.msra.mxu0 0
    %6821 = vmatprep.subr.bf16.mxu0 0
    %6822 = vmatpush2.bf16.xpose.msra.mxu0 0
    %6823 = vmatprep.subr.bf16.mxu0 0
    %6824 = vmatpush2.bf16.xpose.msra.mxu0 0
    %6825 = vmatprep.subr.bf16.mxu0 0
    %6826 = vmatpush2.bf16.xpose.msra.mxu0 0
    %6827 = vmatprep.mubr.bf16.mxu0 0
    %6828 = vmatmul.mubr.bf16.gmra.mxu0 %v6790
    %v6829 = vpop.f32.mrf.mxu0
    %v6830 = vadd.f32 %v6078, %v6829
    %v6831 = vpop.f32.mrf.mxu0
    %v6832 = vpop.f32.mrf.mxu0
    %v6833 = vpop.f32.mrf.mxu0
    %6834 = vdwg.mxu0
    %v6835 = vsel %vm1411, %v6780, -inf
    %6836 = vmax.xlane.f32.xlu0 %v6835
    %v6837 = vpop.xlane.xlu0 %6836
    %v6838 = vsel %vm1411, %v6830, -inf
    %6839 = vmax.xlane.f32.xlu0 %v6838
    %v6840 = vpop.xlane.xlu0 %6839
    %v6841 = vsub.f32 %v6780, %v6837
    %v6842 = vsub.f32 %v6830, %v6840
    %v6843 = vmul.f32 %v6841, 1.442695
    %v6844 = vpow.pop %v6843
    %v6845 = vmul.f32 %v6842, 1.442695
    %v6846 = vpow.pop %v6845
    %v6847 = vsel %vm1411, %v6844, 0.0
    %6848 = vadd.xlane.f32.xlu0 %v6847
    %v6849 = vpop.xlane.xlu0 %6848
    %v6850 = vsel %vm1411, %v6846, 0.0
    %6851 = vadd.xlane.f32.xlu0 %v6850
    %v6852 = vpop.xlane.xlu0 %6851
    %v6853 = vrcp.pop %v6849
    %v6854 = vrcp.pop %v6852
    %v6855 = vmul.f32 %v6844, %v6853
    %v6856 = vmul.f32 %v6846, %v6854
    %v6857 = vpack.c.bf16 %v6855, %v6855
    %v6858 = vpack.c.bf16 %v6856, %v6856
    %6859 = vrot.lane.b32.xlu0 %v6067, 32
    %v6860 = vpop.permute.xlu0 %6859
    %v6862 = vsel %vm1411, %v6857, 0
    %v6865 = vsel %vm1439, %v6860, 0
    %6867 = vmatprep.subr.bf16.mxu0 0
    %6868 = vmatpush1.bf16.msra.mxu0 0
    %6869 = vmatprep.subr.bf16.mxu0 0
    %6870 = vmatpush1.bf16.msra.mxu0 0
    %6871 = vmatprep.subr.bf16.mxu0 0
    %6872 = vmatpush1.bf16.msra.mxu0 0
    %6873 = vmatprep.subr.bf16.mxu0 0
    %6874 = vmatpush1.bf16.msra.mxu0 0
    %6875 = vmatprep.subr.bf16.mxu0 0
    %6876 = vmatpush1.bf16.msra.mxu0 0
    %6877 = vmatprep.subr.bf16.mxu0 0
    %6878 = vmatpush1.bf16.msra.mxu0 0
    %6879 = vmatprep.subr.bf16.mxu0 0
    %6880 = vmatpush1.bf16.msra.mxu0 0
    %6881 = vmatprep.subr.bf16.mxu0 0
    %6882 = vmatpush1.bf16.msra.mxu0 %v6865
    %6883 = vmatprep.subr.bf16.mxu0 0
    %6884 = vmatpush2.bf16.msra.mxu0 0
    %6885 = vmatprep.subr.bf16.mxu0 0
    %6886 = vmatpush2.bf16.msra.mxu0 0
    %6887 = vmatprep.subr.bf16.mxu0 0
    %6888 = vmatpush2.bf16.msra.mxu0 0
    %6889 = vmatprep.subr.bf16.mxu0 0
    %6890 = vmatpush2.bf16.msra.mxu0 0
    %6891 = vmatprep.subr.bf16.mxu0 0
    %6892 = vmatpush2.bf16.msra.mxu0 0
    %6893 = vmatprep.subr.bf16.mxu0 0
    %6894 = vmatpush2.bf16.msra.mxu0 0
    %6895 = vmatprep.subr.bf16.mxu0 0
    %6896 = vmatpush2.bf16.msra.mxu0 0
    %6897 = vmatprep.subr.bf16.mxu0 0
    %6898 = vmatpush2.bf16.msra.mxu0 0
    %6899 = vmatprep.mubr.bf16.mxu0 0
    %6900 = vmatmul.mubr.bf16.gmra.mxu0 %v6862
    %v6901 = vpop.f32.mrf.mxu0
    %v6902 = vadd.f32 0.0, %v6901
    %v6903 = vpop.f32.mrf.mxu0
    %v6904 = vpop.f32.mrf.mxu0
    %v6905 = vpop.f32.mrf.mxu0
    %6906 = vdwg.mxu0
    %6907 = vrot.lane.b32.xlu0 %v6068, 32
    %v6908 = vpop.permute.xlu0 %6907
    %v6910 = vsel %vm1411, %v6858, 0
    %v6913 = vsel %vm1439, %v6908, 0
    %6915 = vmatprep.subr.bf16.mxu0 0
    %6916 = vmatpush1.bf16.msra.mxu0 0
    %6917 = vmatprep.subr.bf16.mxu0 0
    %6918 = vmatpush1.bf16.msra.mxu0 0
    %6919 = vmatprep.subr.bf16.mxu0 0
    %6920 = vmatpush1.bf16.msra.mxu0 0
    %6921 = vmatprep.subr.bf16.mxu0 0
    %6922 = vmatpush1.bf16.msra.mxu0 0
    %6923 = vmatprep.subr.bf16.mxu0 0
    %6924 = vmatpush1.bf16.msra.mxu0 0
    %6925 = vmatprep.subr.bf16.mxu0 0
    %6926 = vmatpush1.bf16.msra.mxu0 0
    %6927 = vmatprep.subr.bf16.mxu0 0
    %6928 = vmatpush1.bf16.msra.mxu0 0
    %6929 = vmatprep.subr.bf16.mxu0 0
    %6930 = vmatpush1.bf16.msra.mxu0 %v6913
    %6931 = vmatprep.subr.bf16.mxu0 0
    %6932 = vmatpush2.bf16.msra.mxu0 0
    %6933 = vmatprep.subr.bf16.mxu0 0
    %6934 = vmatpush2.bf16.msra.mxu0 0
    %6935 = vmatprep.subr.bf16.mxu0 0
    %6936 = vmatpush2.bf16.msra.mxu0 0
    %6937 = vmatprep.subr.bf16.mxu0 0
    %6938 = vmatpush2.bf16.msra.mxu0 0
    %6939 = vmatprep.subr.bf16.mxu0 0
    %6940 = vmatpush2.bf16.msra.mxu0 0
    %6941 = vmatprep.subr.bf16.mxu0 0
    %6942 = vmatpush2.bf16.msra.mxu0 0
    %6943 = vmatprep.subr.bf16.mxu0 0
    %6944 = vmatpush2.bf16.msra.mxu0 0
    %6945 = vmatprep.subr.bf16.mxu0 0
    %6946 = vmatpush2.bf16.msra.mxu0 0
    %6947 = vmatprep.mubr.bf16.mxu0 0
    %6948 = vmatmul.mubr.bf16.gmra.mxu0 %v6910
    %v6949 = vpop.f32.mrf.mxu0
    %v6950 = vadd.f32 0.0, %v6949
    %v6951 = vpop.f32.mrf.mxu0
    %v6952 = vpop.f32.mrf.mxu0
    %v6953 = vpop.f32.mrf.mxu0
    %6954 = vdwg.mxu0
    %6957 = vrot.lane.b32.xlu0 %v6461, 32
    %v6958 = vpop.permute.xlu0 %6957
    %6959 = vrot.lane.b32.xlu0 %v6510, 32
    %v6960 = vpop.permute.xlu0 %6959
    %6965 = vrot.lane.b32.xlu0 %v6682, 64
    %v6966 = vpop.permute.xlu0 %6965
    %6967 = vrot.lane.b32.xlu0 %v6730, 64
    %v6968 = vpop.permute.xlu0 %6967
    %6973 = vrot.lane.b32.xlu0 %v6902, 96
    %v6974 = vpop.permute.xlu0 %6973
    %6975 = vrot.lane.b32.xlu0 %v6950, 96
    %v6976 = vpop.permute.xlu0 %6975
    %v6979 = vsel %vm1318, %v6238, %v6958
    %v6980 = vsel %vm1318, %v6284, %v6960
    %v6981 = vsel %vm2221, %v6979, %v6966
    %v6982 = vsel %vm2221, %v6980, %v6968
    %v6983 = vsel %vm2224, %v6981, %v6974
    %v6984 = vsel %vm2224, %v6982, %v6976
    %v6985 = vld [vmem:[#allocation45] sm:$0xf]
    %v6986 = vld [vmem:[#allocation45 + $0x4] sm:$0xf]
    %v6987 = vld [vmem:[#allocation45 + $0x8] sm:$0xf]
    %v6988 = vld [vmem:[#allocation45 + $0xc] sm:$0xf]
    %v6989 = vld [vmem:[#allocation45 + $0x10] sm:$0xf]
    %v6990 = vld [vmem:[#allocation45 + $0x14] sm:$0xf]
    %v6991 = vld [vmem:[#allocation45 + $0x18] sm:$0xf]
    %v6992 = vld [vmem:[#allocation45 + $0x1c] sm:$0xf]
    %v6993 = vld [vmem:[#allocation45 + $0x20] sm:$0xf]
    %v6994 = vld [vmem:[#allocation45 + $0x24] sm:$0xf]
    %v6995 = vld [vmem:[#allocation45 + $0x28] sm:$0xf]
    %v6996 = vld [vmem:[#allocation45 + $0x2c] sm:$0xf]
    %v6997 = vld [vmem:[#allocation45 + $0x30] sm:$0xf]
    %v6998 = vld [vmem:[#allocation45 + $0x34] sm:$0xf]
    %v6999 = vld [vmem:[#allocation45 + $0x38] sm:$0xf]
    %v7000 = vld [vmem:[#allocation45 + $0x3c] sm:$0xf]
    %v7001 = vpack.c.bf16 %v6984, %v6983
    %v7018 = vunpack.c.l.b16 %v6985
    %v7019 = vunpack.c.l.b16 %v6986
    %v7020 = vunpack.c.l.b16 %v6987
    %v7021 = vunpack.c.l.b16 %v6988
    %v7022 = vunpack.c.l.b16 %v6989
    %v7023 = vunpack.c.l.b16 %v6990
    %v7024 = vunpack.c.l.b16 %v6991
    %v7025 = vunpack.c.l.b16 %v6992
    %v7026 = vunpack.c.l.b16 %v6993
    %v7027 = vunpack.c.l.b16 %v6994
    %v7028 = vunpack.c.l.b16 %v6995
    %v7029 = vunpack.c.l.b16 %v6996
    %v7030 = vunpack.c.l.b16 %v6997
    %v7031 = vunpack.c.l.b16 %v6998
    %v7032 = vunpack.c.l.b16 %v6999
    %v7033 = vunpack.c.l.b16 %v7000
    %v7034 = vpack.c.b16 %v7019, %v7018
    %v7035 = vpack.c.b16 %v7021, %v7020
    %v7036 = vpack.c.b16 %v7023, %v7022
    %v7037 = vpack.c.b16 %v7025, %v7024
    %v7038 = vpack.c.b16 %v7027, %v7026
    %v7039 = vpack.c.b16 %v7029, %v7028
    %v7040 = vpack.c.b16 %v7031, %v7030
    %v7041 = vpack.c.b16 %v7033, %v7032
    %7050 = vmatprep.subr.bf16.mxu0 0
    %7051 = vmatpush1.bf16.msra.mxu0 %v7041
    %7052 = vmatprep.subr.bf16.mxu0 0
    %7053 = vmatpush1.bf16.msra.mxu0 %v7040
    %7054 = vmatprep.subr.bf16.mxu0 0
    %7055 = vmatpush1.bf16.msra.mxu0 %v7039
    %7056 = vmatprep.subr.bf16.mxu0 0
    %7057 = vmatpush1.bf16.msra.mxu0 %v7038
    %7058 = vmatprep.subr.bf16.mxu0 0
    %7059 = vmatpush1.bf16.msra.mxu0 %v7037
    %7060 = vmatprep.subr.bf16.mxu0 0
    %7061 = vmatpush1.bf16.msra.mxu0 %v7036
    %7062 = vmatprep.subr.bf16.mxu0 0
    %7063 = vmatpush1.bf16.msra.mxu0 %v7035
    %7064 = vmatprep.subr.bf16.mxu0 0
    %7065 = vmatpush1.bf16.msra.mxu0 %v7034
    %7066 = vmatprep.subr.bf16.mxu0 0
    %7067 = vmatpush2.bf16.msra.mxu0 0
    %7068 = vmatprep.subr.bf16.mxu0 0
    %7069 = vmatpush2.bf16.msra.mxu0 0
    %7070 = vmatprep.subr.bf16.mxu0 0
    %7071 = vmatpush2.bf16.msra.mxu0 0
    %7072 = vmatprep.subr.bf16.mxu0 0
    %7073 = vmatpush2.bf16.msra.mxu0 0
    %7074 = vmatprep.subr.bf16.mxu0 0
    %7075 = vmatpush2.bf16.msra.mxu0 0
    %7076 = vmatprep.subr.bf16.mxu0 0
    %7077 = vmatpush2.bf16.msra.mxu0 0
    %7078 = vmatprep.subr.bf16.mxu0 0
    %7079 = vmatpush2.bf16.msra.mxu0 0
    %7080 = vmatprep.subr.bf16.mxu0 0
    %7081 = vmatpush2.bf16.msra.mxu0 0
    %7082 = vmatprep.mubr.bf16.mxu0 0
    %7083 = vmatmul.mubr.bf16.gmra.mxu0 %v7001
    %v7084 = vpop.f32.mrf.mxu0
    %v7085 = vadd.f32 0.0, %v7084
    %v7086 = vpop.f32.mrf.mxu0
    %v7087 = vpop.f32.mrf.mxu0
    %v7088 = vadd.f32 0.0, %v7087
    %v7089 = vpop.f32.mrf.mxu0
    %7090 = vdwg.mxu0
    %v7091 = vadd.f32 %v5756, %v7085
    %v7092 = vadd.f32 %v5757, %v7088
    %v7093 = vld [vmem:[#allocation46] sm:$0x1]
    %v7095 = vlaneseq
    %v7096 = vshrl.u32 %v7095, 7
    %v7097 = vsub.s32 0, %v7096
    %v7098 = vrot.slane %v7093, %v7097
    %v7100 = vadd.f32 %v7091, %v7098
    %v7101 = vadd.f32 %v7092, %v7098
    %v7102 = vld [vmem:[#allocation54] sm:$0x1]
    %v7103 = vld [vmem:[#allocation55] sm:$0x1]
    %7104 = vadd.xlane.f32.xlu0 %v7100
    %v7105 = vpop.xlane.xlu0 %7104
    %7106 = vadd.xlane.f32.xlu0 %v7101
    %v7107 = vpop.xlane.xlu0 %7106
    %v7108 = vmul.f32 %v7105, %v1003
    %v7109 = vmul.f32 %v7107, %v1003
    %v7110 = vsub.f32 %v7100, %v7108
    %v7111 = vsub.f32 %v7101, %v7109
    %v7112 = vmul.f32 %v7110, %v7110
    %v7113 = vmul.f32 %v7111, %v7111
    %7114 = vadd.xlane.f32.xlu0 %v7112
    %v7115 = vpop.xlane.xlu0 %7114
    %7116 = vadd.xlane.f32.xlu0 %v7113
    %v7117 = vpop.xlane.xlu0 %7116
    %v7118 = vmul.f32 %v7115, %v1003
    %v7119 = vmul.f32 %v7117, %v1003
    %v7120 = vadd.f32 %v7118, 1e-05
    %v7121 = vadd.f32 %v7119, 1e-05
    %v7122 = vrsqrt.pop %v7120
    %v7123 = vrsqrt.pop %v7121
    %v7124 = vmul.f32 %v7110, %v7122
    %v7125 = vmul.f32 %v7111, %v7123
    %v7127 = vlaneseq
    %v7128 = vshrl.u32 %v7127, 7
    %v7129 = vsub.s32 0, %v7128
    %v7130 = vrot.slane %v7102, %v7129
    %v7132 = vmul.f32 %v7124, %v7130
    %v7133 = vmul.f32 %v7125, %v7130
    %v7135 = vlaneseq
    %v7136 = vshrl.u32 %v7135, 7
    %v7137 = vsub.s32 0, %v7136
    %v7138 = vrot.slane %v7103, %v7137
    %v7140 = vadd.f32 %v7132, %v7138
    %v7141 = vadd.f32 %v7133, %v7138
    %v7142 = vld [vmem:[#allocation57] sm:$0xff]
    %v7143 = vld [vmem:[#allocation57 + $0x8] sm:$0xff]
    %v7144 = vld [vmem:[#allocation57 + $0x10] sm:$0xff]
    %v7145 = vld [vmem:[#allocation57 + $0x18] sm:$0xff]
    %v7146 = vld [vmem:[#allocation57 + $0x20] sm:$0xff]
    %v7147 = vld [vmem:[#allocation57 + $0x28] sm:$0xff]
    %v7148 = vld [vmem:[#allocation57 + $0x30] sm:$0xff]
    %v7149 = vld [vmem:[#allocation57 + $0x38] sm:$0xff]
    %v7150 = vld [vmem:[#allocation57 + $0x40] sm:$0xff]
    %v7151 = vld [vmem:[#allocation57 + $0x48] sm:$0xff]
    %v7152 = vld [vmem:[#allocation57 + $0x50] sm:$0xff]
    %v7153 = vld [vmem:[#allocation57 + $0x58] sm:$0xff]
    %v7154 = vld [vmem:[#allocation57 + $0x60] sm:$0xff]
    %v7155 = vld [vmem:[#allocation57 + $0x68] sm:$0xff]
    %v7156 = vld [vmem:[#allocation57 + $0x70] sm:$0xff]
    %v7157 = vld [vmem:[#allocation57 + $0x78] sm:$0xff]
    %v7158 = vpack.c.bf16 %v7141, %v7140
    %v7159 = vld [vmem:[#allocation58] sm:$0x3]
    %v7161 = vlaneseq
    %v7162 = vshrl.u32 %v7161, 7
    %v7163 = vsub.s32 0, %v7162
    %v7164 = vrot.slane %v7159, %v7163
    %v7165 = vlaneseq
    %v7166 = vshrl.u32 %v7165, 7
    %v7167 = vsub.s32 1, %v7166
    %v7168 = vrot.slane %v7159, %v7167
    %v7187 = vunpack.c.l.b16 %v7142
    %v7188 = vunpack.c.h.b16 %v7142
    %v7189 = vunpack.c.l.b16 %v7143
    %v7190 = vunpack.c.h.b16 %v7143
    %v7191 = vunpack.c.l.b16 %v7144
    %v7192 = vunpack.c.h.b16 %v7144
    %v7193 = vunpack.c.l.b16 %v7145
    %v7194 = vunpack.c.h.b16 %v7145
    %v7195 = vunpack.c.l.b16 %v7146
    %v7196 = vunpack.c.h.b16 %v7146
    %v7197 = vunpack.c.l.b16 %v7147
    %v7198 = vunpack.c.h.b16 %v7147
    %v7199 = vunpack.c.l.b16 %v7148
    %v7200 = vunpack.c.h.b16 %v7148
    %v7201 = vunpack.c.l.b16 %v7149
    %v7202 = vunpack.c.h.b16 %v7149
    %v7203 = vunpack.c.l.b16 %v7150
    %v7204 = vunpack.c.h.b16 %v7150
    %v7205 = vunpack.c.l.b16 %v7151
    %v7206 = vunpack.c.h.b16 %v7151
    %v7207 = vunpack.c.l.b16 %v7152
    %v7208 = vunpack.c.h.b16 %v7152
    %v7209 = vunpack.c.l.b16 %v7153
    %v7210 = vunpack.c.h.b16 %v7153
    %v7211 = vunpack.c.l.b16 %v7154
    %v7212 = vunpack.c.h.b16 %v7154
    %v7213 = vunpack.c.l.b16 %v7155
    %v7214 = vunpack.c.h.b16 %v7155
    %v7215 = vunpack.c.l.b16 %v7156
    %v7216 = vunpack.c.h.b16 %v7156
    %v7217 = vunpack.c.l.b16 %v7157
    %v7218 = vunpack.c.h.b16 %v7157
    %v7219 = vpack.c.b16 %v7189, %v7187
    %v7220 = vpack.c.b16 %v7190, %v7188
    %v7221 = vpack.c.b16 %v7193, %v7191
    %v7222 = vpack.c.b16 %v7194, %v7192
    %v7223 = vpack.c.b16 %v7197, %v7195
    %v7224 = vpack.c.b16 %v7198, %v7196
    %v7225 = vpack.c.b16 %v7201, %v7199
    %v7226 = vpack.c.b16 %v7202, %v7200
    %v7227 = vpack.c.b16 %v7205, %v7203
    %v7228 = vpack.c.b16 %v7206, %v7204
    %v7229 = vpack.c.b16 %v7209, %v7207
    %v7230 = vpack.c.b16 %v7210, %v7208
    %v7231 = vpack.c.b16 %v7213, %v7211
    %v7232 = vpack.c.b16 %v7214, %v7212
    %v7233 = vpack.c.b16 %v7217, %v7215
    %v7234 = vpack.c.b16 %v7218, %v7216
    %7251 = vmatprep.subr.bf16.mxu0 %v7234
    %7252 = vmatpush1.bf16.msra.mxu0 %v7233
    %7253 = vmatprep.subr.bf16.mxu0 %v7232
    %7254 = vmatpush1.bf16.msra.mxu0 %v7231
    %7255 = vmatprep.subr.bf16.mxu0 %v7230
    %7256 = vmatpush1.bf16.msra.mxu0 %v7229
    %7257 = vmatprep.subr.bf16.mxu0 %v7228
    %7258 = vmatpush1.bf16.msra.mxu0 %v7227
    %7259 = vmatprep.subr.bf16.mxu0 %v7226
    %7260 = vmatpush1.bf16.msra.mxu0 %v7225
    %7261 = vmatprep.subr.bf16.mxu0 %v7224
    %7262 = vmatpush1.bf16.msra.mxu0 %v7223
    %7263 = vmatprep.subr.bf16.mxu0 %v7222
    %7264 = vmatpush1.bf16.msra.mxu0 %v7221
    %7265 = vmatprep.subr.bf16.mxu0 %v7220
    %7266 = vmatpush1.bf16.msra.mxu0 %v7219
    %7267 = vmatprep.subr.bf16.mxu0 0
    %7268 = vmatpush2.bf16.msra.mxu0 0
    %7269 = vmatprep.subr.bf16.mxu0 0
    %7270 = vmatpush2.bf16.msra.mxu0 0
    %7271 = vmatprep.subr.bf16.mxu0 0
    %7272 = vmatpush2.bf16.msra.mxu0 0
    %7273 = vmatprep.subr.bf16.mxu0 0
    %7274 = vmatpush2.bf16.msra.mxu0 0
    %7275 = vmatprep.subr.bf16.mxu0 0
    %7276 = vmatpush2.bf16.msra.mxu0 0
    %7277 = vmatprep.subr.bf16.mxu0 0
    %7278 = vmatpush2.bf16.msra.mxu0 0
    %7279 = vmatprep.subr.bf16.mxu0 0
    %7280 = vmatpush2.bf16.msra.mxu0 0
    %7281 = vmatprep.subr.bf16.mxu0 0
    %7282 = vmatpush2.bf16.msra.mxu0 0
    %7283 = vmatprep.mubr.bf16.mxu0 0
    %7284 = vmatmul.mubr.bf16.gmra.mxu0 %v7158
    %v7285 = vpop.f32.mrf.mxu0
    %v7286 = vadd.f32 %v7164, %v7285
    %v7287 = vpop.f32.mrf.mxu0
    %v7288 = vadd.f32 %v7168, %v7287
    %v7289 = vpop.f32.mrf.mxu0
    %v7290 = vadd.f32 %v7164, %v7289
    %v7291 = vpop.f32.mrf.mxu0
    %v7292 = vadd.f32 %v7168, %v7291
    %7293 = vdwg.mxu0
    %v7294 = vmax.f32 %v7286, 0.0
    %v7295 = vmax.f32 %v7288, 0.0
    %v7296 = vmax.f32 %v7290, 0.0
    %v7297 = vmax.f32 %v7292, 0.0
    %v7298 = vld [vmem:[#allocation60] sm:$0xf]
    %v7299 = vld [vmem:[#allocation60 + $0x4] sm:$0xf]
    %v7300 = vld [vmem:[#allocation60 + $0x8] sm:$0xf]
    %v7301 = vld [vmem:[#allocation60 + $0xc] sm:$0xf]
    %v7302 = vld [vmem:[#allocation60 + $0x10] sm:$0xf]
    %v7303 = vld [vmem:[#allocation60 + $0x14] sm:$0xf]
    %v7304 = vld [vmem:[#allocation60 + $0x18] sm:$0xf]
    %v7305 = vld [vmem:[#allocation60 + $0x1c] sm:$0xf]
    %v7306 = vld [vmem:[#allocation60 + $0x20] sm:$0xf]
    %v7307 = vld [vmem:[#allocation60 + $0x24] sm:$0xf]
    %v7308 = vld [vmem:[#allocation60 + $0x28] sm:$0xf]
    %v7309 = vld [vmem:[#allocation60 + $0x2c] sm:$0xf]
    %v7310 = vld [vmem:[#allocation60 + $0x30] sm:$0xf]
    %v7311 = vld [vmem:[#allocation60 + $0x34] sm:$0xf]
    %v7312 = vld [vmem:[#allocation60 + $0x38] sm:$0xf]
    %v7313 = vld [vmem:[#allocation60 + $0x3c] sm:$0xf]
    %v7314 = vld [vmem:[#allocation60 + $0x40] sm:$0xf]
    %v7315 = vld [vmem:[#allocation60 + $0x44] sm:$0xf]
    %v7316 = vld [vmem:[#allocation60 + $0x48] sm:$0xf]
    %v7317 = vld [vmem:[#allocation60 + $0x4c] sm:$0xf]
    %v7318 = vld [vmem:[#allocation60 + $0x50] sm:$0xf]
    %v7319 = vld [vmem:[#allocation60 + $0x54] sm:$0xf]
    %v7320 = vld [vmem:[#allocation60 + $0x58] sm:$0xf]
    %v7321 = vld [vmem:[#allocation60 + $0x5c] sm:$0xf]
    %v7322 = vld [vmem:[#allocation60 + $0x60] sm:$0xf]
    %v7323 = vld [vmem:[#allocation60 + $0x64] sm:$0xf]
    %v7324 = vld [vmem:[#allocation60 + $0x68] sm:$0xf]
    %v7325 = vld [vmem:[#allocation60 + $0x6c] sm:$0xf]
    %v7326 = vld [vmem:[#allocation60 + $0x70] sm:$0xf]
    %v7327 = vld [vmem:[#allocation60 + $0x74] sm:$0xf]
    %v7328 = vld [vmem:[#allocation60 + $0x78] sm:$0xf]
    %v7329 = vld [vmem:[#allocation60 + $0x7c] sm:$0xf]
    %v7330 = vpack.c.bf16 %v7296, %v7294
    %v7331 = vpack.c.bf16 %v7297, %v7295
    %v7364 = vunpack.c.l.b16 %v7298
    %v7365 = vunpack.c.l.b16 %v7299
    %v7366 = vunpack.c.l.b16 %v7300
    %v7367 = vunpack.c.l.b16 %v7301
    %v7368 = vunpack.c.l.b16 %v7302
    %v7369 = vunpack.c.l.b16 %v7303
    %v7370 = vunpack.c.l.b16 %v7304
    %v7371 = vunpack.c.l.b16 %v7305
    %v7372 = vunpack.c.l.b16 %v7306
    %v7373 = vunpack.c.l.b16 %v7307
    %v7374 = vunpack.c.l.b16 %v7308
    %v7375 = vunpack.c.l.b16 %v7309
    %v7376 = vunpack.c.l.b16 %v7310
    %v7377 = vunpack.c.l.b16 %v7311
    %v7378 = vunpack.c.l.b16 %v7312
    %v7379 = vunpack.c.l.b16 %v7313
    %v7380 = vunpack.c.l.b16 %v7314
    %v7381 = vunpack.c.l.b16 %v7315
    %v7382 = vunpack.c.l.b16 %v7316
    %v7383 = vunpack.c.l.b16 %v7317
    %v7384 = vunpack.c.l.b16 %v7318
    %v7385 = vunpack.c.l.b16 %v7319
    %v7386 = vunpack.c.l.b16 %v7320
    %v7387 = vunpack.c.l.b16 %v7321
    %v7388 = vunpack.c.l.b16 %v7322
    %v7389 = vunpack.c.l.b16 %v7323
    %v7390 = vunpack.c.l.b16 %v7324
    %v7391 = vunpack.c.l.b16 %v7325
    %v7392 = vunpack.c.l.b16 %v7326
    %v7393 = vunpack.c.l.b16 %v7327
    %v7394 = vunpack.c.l.b16 %v7328
    %v7395 = vunpack.c.l.b16 %v7329
    %v7396 = vpack.c.b16 %v7365, %v7364
    %v7397 = vpack.c.b16 %v7367, %v7366
    %v7398 = vpack.c.b16 %v7369, %v7368
    %v7399 = vpack.c.b16 %v7371, %v7370
    %v7400 = vpack.c.b16 %v7373, %v7372
    %v7401 = vpack.c.b16 %v7375, %v7374
    %v7402 = vpack.c.b16 %v7377, %v7376
    %v7403 = vpack.c.b16 %v7379, %v7378
    %v7404 = vpack.c.b16 %v7381, %v7380
    %v7405 = vpack.c.b16 %v7383, %v7382
    %v7406 = vpack.c.b16 %v7385, %v7384
    %v7407 = vpack.c.b16 %v7387, %v7386
    %v7408 = vpack.c.b16 %v7389, %v7388
    %v7409 = vpack.c.b16 %v7391, %v7390
    %v7410 = vpack.c.b16 %v7393, %v7392
    %v7411 = vpack.c.b16 %v7395, %v7394
    %7428 = vmatprep.subr.bf16.mxu0 0
    %7429 = vmatpush1.bf16.msra.mxu0 %v7403
    %7430 = vmatprep.subr.bf16.mxu0 0
    %7431 = vmatpush1.bf16.msra.mxu0 %v7402
    %7432 = vmatprep.subr.bf16.mxu0 0
    %7433 = vmatpush1.bf16.msra.mxu0 %v7401
    %7434 = vmatprep.subr.bf16.mxu0 0
    %7435 = vmatpush1.bf16.msra.mxu0 %v7400
    %7436 = vmatprep.subr.bf16.mxu0 0
    %7437 = vmatpush1.bf16.msra.mxu0 %v7399
    %7438 = vmatprep.subr.bf16.mxu0 0
    %7439 = vmatpush1.bf16.msra.mxu0 %v7398
    %7440 = vmatprep.subr.bf16.mxu0 0
    %7441 = vmatpush1.bf16.msra.mxu0 %v7397
    %7442 = vmatprep.subr.bf16.mxu0 0
    %7443 = vmatpush1.bf16.msra.mxu0 %v7396
    %7444 = vmatprep.subr.bf16.mxu0 0
    %7445 = vmatpush2.bf16.msra.mxu0 %v7411
    %7446 = vmatprep.subr.bf16.mxu0 0
    %7447 = vmatpush2.bf16.msra.mxu0 %v7410
    %7448 = vmatprep.subr.bf16.mxu0 0
    %7449 = vmatpush2.bf16.msra.mxu0 %v7409
    %7450 = vmatprep.subr.bf16.mxu0 0
    %7451 = vmatpush2.bf16.msra.mxu0 %v7408
    %7452 = vmatprep.subr.bf16.mxu0 0
    %7453 = vmatpush2.bf16.msra.mxu0 %v7407
    %7454 = vmatprep.subr.bf16.mxu0 0
    %7455 = vmatpush2.bf16.msra.mxu0 %v7406
    %7456 = vmatprep.subr.bf16.mxu0 0
    %7457 = vmatpush2.bf16.msra.mxu0 %v7405
    %7458 = vmatprep.subr.bf16.mxu0 0
    %7459 = vmatpush2.bf16.msra.mxu0 %v7404
    %7460 = vmatprep.mubr.bf16.mxu0 %v7331
    %7461 = vmatmul.mubr.bf16.gmra.mxu0 %v7330
    %v7462 = vpop.f32.mrf.mxu0
    %v7463 = vadd.f32 0.0, %v7462
    %v7464 = vpop.f32.mrf.mxu0
    %v7465 = vpop.f32.mrf.mxu0
    %v7466 = vadd.f32 0.0, %v7465
    %v7467 = vpop.f32.mrf.mxu0
    %7468 = vdwg.mxu0
    %v7469 = vadd.f32 %v7100, %v7463
    %v7470 = vadd.f32 %v7101, %v7466
    %v7471 = vld [vmem:[#allocation61] sm:$0x1]
    %v7473 = vlaneseq
    %v7474 = vshrl.u32 %v7473, 7
    %v7475 = vsub.s32 0, %v7474
    %v7476 = vrot.slane %v7471, %v7475
    %v7478 = vadd.f32 %v7469, %v7476
    %v7479 = vadd.f32 %v7470, %v7476
    %v7480 = vld [vmem:[%s9] sm:$0xff]
    %v7481 = vld [vmem:[%s9 + $0x8] sm:$0xff]
    %v7482 = vld [vmem:[%s9 + $0x10] sm:$0xff]
    %v7483 = vld [vmem:[%s9 + $0x18] sm:$0xff]
    %v7484 = vld [vmem:[%s11] sm:$0xff]
    %v7485 = vld [vmem:[%s11 + $0x8] sm:$0xff]
    %v7486 = vld [vmem:[#allocation75] sm:$0x1]
    %v7487 = vld [vmem:[#allocation76] sm:$0x1]
    %7488 = vadd.xlane.f32.xlu0 %v7478
    %v7489 = vpop.xlane.xlu0 %7488
    %7490 = vadd.xlane.f32.xlu0 %v7479
    %v7491 = vpop.xlane.xlu0 %7490
    %v7492 = vmul.f32 %v7489, %v1003
    %v7493 = vmul.f32 %v7491, %v1003
    %v7494 = vsub.f32 %v7478, %v7492
    %v7495 = vsub.f32 %v7479, %v7493
    %v7496 = vmul.f32 %v7494, %v7494
    %v7497 = vmul.f32 %v7495, %v7495
    %7498 = vadd.xlane.f32.xlu0 %v7496
    %v7499 = vpop.xlane.xlu0 %7498
    %7500 = vadd.xlane.f32.xlu0 %v7497
    %v7501 = vpop.xlane.xlu0 %7500
    %v7502 = vmul.f32 %v7499, %v1003
    %v7503 = vmul.f32 %v7501, %v1003
    %v7504 = vadd.f32 %v7502, 1e-05
    %v7505 = vadd.f32 %v7503, 1e-05
    %v7506 = vrsqrt.pop %v7504
    %v7507 = vrsqrt.pop %v7505
    %v7508 = vmul.f32 %v7494, %v7506
    %v7509 = vmul.f32 %v7495, %v7507
    %v7511 = vlaneseq
    %v7512 = vshrl.u32 %v7511, 7
    %v7513 = vsub.s32 0, %v7512
    %v7514 = vrot.slane %v7486, %v7513
    %v7516 = vmul.f32 %v7508, %v7514
    %v7517 = vmul.f32 %v7509, %v7514
    %v7519 = vlaneseq
    %v7520 = vshrl.u32 %v7519, 7
    %v7521 = vsub.s32 0, %v7520
    %v7522 = vrot.slane %v7487, %v7521
    %v7524 = vadd.f32 %v7516, %v7522
    %v7525 = vadd.f32 %v7517, %v7522
    %v7526 = vld [vmem:[%s101] sm:$0xf]
    %v7527 = vld [vmem:[%s101 + $0x4] sm:$0xf]
    %v7528 = vld [vmem:[%s101 + $0x8] sm:$0xf]
    %v7529 = vld [vmem:[%s101 + $0xc] sm:$0xf]
    %v7530 = vld [vmem:[%s101 + $0x10] sm:$0xf]
    %v7531 = vld [vmem:[%s101 + $0x14] sm:$0xf]
    %v7532 = vld [vmem:[%s101 + $0x18] sm:$0xf]
    %v7533 = vld [vmem:[%s101 + $0x1c] sm:$0xf]
    %v7534 = vld [vmem:[%s101 + $0x20] sm:$0xf]
    %v7535 = vld [vmem:[%s101 + $0x24] sm:$0xf]
    %v7536 = vld [vmem:[%s101 + $0x28] sm:$0xf]
    %v7537 = vld [vmem:[%s101 + $0x2c] sm:$0xf]
    %v7538 = vld [vmem:[%s101 + $0x30] sm:$0xf]
    %v7539 = vld [vmem:[%s101 + $0x34] sm:$0xf]
    %v7540 = vld [vmem:[%s101 + $0x38] sm:$0xf]
    %v7541 = vld [vmem:[%s101 + $0x3c] sm:$0xf]
    %v7542 = vpack.c.bf16 %v7525, %v7524
    %v7543 = vld [vmem:[%s103] sm:$0x1]
    %v7545 = vlaneseq
    %v7546 = vshrl.u32 %v7545, 7
    %v7547 = vsub.s32 0, %v7546
    %v7548 = vrot.slane %v7543, %v7547
    %v7566 = vunpack.c.l.b16 %v7526
    %v7567 = vunpack.c.l.b16 %v7527
    %v7568 = vunpack.c.l.b16 %v7528
    %v7569 = vunpack.c.l.b16 %v7529
    %v7570 = vunpack.c.l.b16 %v7530
    %v7571 = vunpack.c.l.b16 %v7531
    %v7572 = vunpack.c.l.b16 %v7532
    %v7573 = vunpack.c.l.b16 %v7533
    %v7574 = vunpack.c.l.b16 %v7534
    %v7575 = vunpack.c.l.b16 %v7535
    %v7576 = vunpack.c.l.b16 %v7536
    %v7577 = vunpack.c.l.b16 %v7537
    %v7578 = vunpack.c.l.b16 %v7538
    %v7579 = vunpack.c.l.b16 %v7539
    %v7580 = vunpack.c.l.b16 %v7540
    %v7581 = vunpack.c.l.b16 %v7541
    %v7582 = vpack.c.b16 %v7567, %v7566
    %v7583 = vpack.c.b16 %v7569, %v7568
    %v7584 = vpack.c.b16 %v7571, %v7570
    %v7585 = vpack.c.b16 %v7573, %v7572
    %v7586 = vpack.c.b16 %v7575, %v7574
    %v7587 = vpack.c.b16 %v7577, %v7576
    %v7588 = vpack.c.b16 %v7579, %v7578
    %v7589 = vpack.c.b16 %v7581, %v7580
    %7598 = vmatprep.subr.bf16.mxu0 0
    %7599 = vmatpush1.bf16.msra.mxu0 %v7589
    %7600 = vmatprep.subr.bf16.mxu0 0
    %7601 = vmatpush1.bf16.msra.mxu0 %v7588
    %7602 = vmatprep.subr.bf16.mxu0 0
    %7603 = vmatpush1.bf16.msra.mxu0 %v7587
    %7604 = vmatprep.subr.bf16.mxu0 0
    %7605 = vmatpush1.bf16.msra.mxu0 %v7586
    %7606 = vmatprep.subr.bf16.mxu0 0
    %7607 = vmatpush1.bf16.msra.mxu0 %v7585
    %7608 = vmatprep.subr.bf16.mxu0 0
    %7609 = vmatpush1.bf16.msra.mxu0 %v7584
    %7610 = vmatprep.subr.bf16.mxu0 0
    %7611 = vmatpush1.bf16.msra.mxu0 %v7583
    %7612 = vmatprep.subr.bf16.mxu0 0
    %7613 = vmatpush1.bf16.msra.mxu0 %v7582
    %7614 = vmatprep.subr.bf16.mxu0 0
    %7615 = vmatpush2.bf16.msra.mxu0 0
    %7616 = vmatprep.subr.bf16.mxu0 0
    %7617 = vmatpush2.bf16.msra.mxu0 0
    %7618 = vmatprep.subr.bf16.mxu0 0
    %7619 = vmatpush2.bf16.msra.mxu0 0
    %7620 = vmatprep.subr.bf16.mxu0 0
    %7621 = vmatpush2.bf16.msra.mxu0 0
    %7622 = vmatprep.subr.bf16.mxu0 0
    %7623 = vmatpush2.bf16.msra.mxu0 0
    %7624 = vmatprep.subr.bf16.mxu0 0
    %7625 = vmatpush2.bf16.msra.mxu0 0
    %7626 = vmatprep.subr.bf16.mxu0 0
    %7627 = vmatpush2.bf16.msra.mxu0 0
    %7628 = vmatprep.subr.bf16.mxu0 0
    %7629 = vmatpush2.bf16.msra.mxu0 0
    %7630 = vmatprep.mubr.bf16.mxu0 0
    %7631 = vmatmul.mubr.bf16.gmra.mxu0 %v7542
    %v7632 = vpop.f32.mrf.mxu0
    %v7633 = vadd.f32 %v7548, %v7632
    %v7634 = vpop.f32.mrf.mxu0
    %v7635 = vpop.f32.mrf.mxu0
    %v7636 = vadd.f32 %v7548, %v7635
    %v7637 = vpop.f32.mrf.mxu0
    %7638 = vdwg.mxu0
    %v7639 = vld [vmem:[#allocation63] sm:$0xf]
    %v7640 = vld [vmem:[#allocation63 + $0x4] sm:$0xf]
    %v7641 = vld [vmem:[#allocation63 + $0x8] sm:$0xf]
    %v7642 = vld [vmem:[#allocation63 + $0xc] sm:$0xf]
    %v7643 = vld [vmem:[#allocation63 + $0x10] sm:$0xf]
    %v7644 = vld [vmem:[#allocation63 + $0x14] sm:$0xf]
    %v7645 = vld [vmem:[#allocation63 + $0x18] sm:$0xf]
    %v7646 = vld [vmem:[#allocation63 + $0x1c] sm:$0xf]
    %v7647 = vld [vmem:[#allocation63 + $0x20] sm:$0xf]
    %v7648 = vld [vmem:[#allocation63 + $0x24] sm:$0xf]
    %v7649 = vld [vmem:[#allocation63 + $0x28] sm:$0xf]
    %v7650 = vld [vmem:[#allocation63 + $0x2c] sm:$0xf]
    %v7651 = vld [vmem:[#allocation63 + $0x30] sm:$0xf]
    %v7652 = vld [vmem:[#allocation63 + $0x34] sm:$0xf]
    %v7653 = vld [vmem:[#allocation63 + $0x38] sm:$0xf]
    %v7654 = vld [vmem:[#allocation63 + $0x3c] sm:$0xf]
    %v7655 = vpack.c.bf16 %v7636, %v7633
    %v7672 = vunpack.c.l.b16 %v7639
    %v7673 = vunpack.c.l.b16 %v7640
    %v7674 = vunpack.c.l.b16 %v7641
    %v7675 = vunpack.c.l.b16 %v7642
    %v7676 = vunpack.c.l.b16 %v7643
    %v7677 = vunpack.c.l.b16 %v7644
    %v7678 = vunpack.c.l.b16 %v7645
    %v7679 = vunpack.c.l.b16 %v7646
    %v7680 = vunpack.c.l.b16 %v7647
    %v7681 = vunpack.c.l.b16 %v7648
    %v7682 = vunpack.c.l.b16 %v7649
    %v7683 = vunpack.c.l.b16 %v7650
    %v7684 = vunpack.c.l.b16 %v7651
    %v7685 = vunpack.c.l.b16 %v7652
    %v7686 = vunpack.c.l.b16 %v7653
    %v7687 = vunpack.c.l.b16 %v7654
    %v7688 = vpack.c.b16 %v7673, %v7672
    %v7689 = vpack.c.b16 %v7675, %v7674
    %v7690 = vpack.c.b16 %v7677, %v7676
    %v7691 = vpack.c.b16 %v7679, %v7678
    %v7692 = vpack.c.b16 %v7681, %v7680
    %v7693 = vpack.c.b16 %v7683, %v7682
    %v7694 = vpack.c.b16 %v7685, %v7684
    %v7695 = vpack.c.b16 %v7687, %v7686
    %7704 = vmatprep.subr.bf16.mxu0 0
    %7705 = vmatpush1.bf16.msra.mxu0 %v7695
    %7706 = vmatprep.subr.bf16.mxu0 0
    %7707 = vmatpush1.bf16.msra.mxu0 %v7694
    %7708 = vmatprep.subr.bf16.mxu0 0
    %7709 = vmatpush1.bf16.msra.mxu0 %v7693
    %7710 = vmatprep.subr.bf16.mxu0 0
    %7711 = vmatpush1.bf16.msra.mxu0 %v7692
    %7712 = vmatprep.subr.bf16.mxu0 0
    %7713 = vmatpush1.bf16.msra.mxu0 %v7691
    %7714 = vmatprep.subr.bf16.mxu0 0
    %7715 = vmatpush1.bf16.msra.mxu0 %v7690
    %7716 = vmatprep.subr.bf16.mxu0 0
    %7717 = vmatpush1.bf16.msra.mxu0 %v7689
    %7718 = vmatprep.subr.bf16.mxu0 0
    %7719 = vmatpush1.bf16.msra.mxu0 %v7688
    %7720 = vmatprep.subr.bf16.mxu0 0
    %7721 = vmatpush2.bf16.msra.mxu0 0
    %7722 = vmatprep.subr.bf16.mxu0 0
    %7723 = vmatpush2.bf16.msra.mxu0 0
    %7724 = vmatprep.subr.bf16.mxu0 0
    %7725 = vmatpush2.bf16.msra.mxu0 0
    %7726 = vmatprep.subr.bf16.mxu0 0
    %7727 = vmatpush2.bf16.msra.mxu0 0
    %7728 = vmatprep.subr.bf16.mxu0 0
    %7729 = vmatpush2.bf16.msra.mxu0 0
    %7730 = vmatprep.subr.bf16.mxu0 0
    %7731 = vmatpush2.bf16.msra.mxu0 0
    %7732 = vmatprep.subr.bf16.mxu0 0
    %7733 = vmatpush2.bf16.msra.mxu0 0
    %7734 = vmatprep.subr.bf16.mxu0 0
    %7735 = vmatpush2.bf16.msra.mxu0 0
    %7736 = vmatprep.mubr.bf16.mxu0 0
    %7737 = vmatmul.mubr.bf16.gmra.mxu0 %v7655
    %v7738 = vpop.f32.mrf.mxu0
    %v7739 = vadd.f32 0.0, %v7738
    %v7740 = vpop.f32.mrf.mxu0
    %v7741 = vpop.f32.mrf.mxu0
    %v7742 = vadd.f32 0.0, %v7741
    %v7743 = vpop.f32.mrf.mxu0
    %7744 = vdwg.mxu0
    %v7745 = vadd.f32 %v7478, %v7739
    %v7746 = vadd.f32 %v7479, %v7742
    %v7747 = vld [vmem:[#allocation64] sm:$0x1]
    %v7749 = vlaneseq
    %v7750 = vshrl.u32 %v7749, 7
    %v7751 = vsub.s32 0, %v7750
    %v7752 = vrot.slane %v7747, %v7751
    %v7754 = vadd.f32 %v7745, %v7752
    %v7755 = vadd.f32 %v7746, %v7752
    %v7756 = vld [vmem:[#allocation78] sm:$0x1]
    %v7757 = vld [vmem:[#allocation79] sm:$0x1]
    %7758 = vadd.xlane.f32.xlu0 %v7754
    %v7759 = vpop.xlane.xlu0 %7758
    %7760 = vadd.xlane.f32.xlu0 %v7755
    %v7761 = vpop.xlane.xlu0 %7760
    %v7762 = vmul.f32 %v7759, %v1003
    %v7763 = vmul.f32 %v7761, %v1003
    %v7764 = vsub.f32 %v7754, %v7762
    %v7765 = vsub.f32 %v7755, %v7763
    %v7766 = vmul.f32 %v7764, %v7764
    %v7767 = vmul.f32 %v7765, %v7765
    %7768 = vadd.xlane.f32.xlu0 %v7766
    %v7769 = vpop.xlane.xlu0 %7768
    %7770 = vadd.xlane.f32.xlu0 %v7767
    %v7771 = vpop.xlane.xlu0 %7770
    %v7772 = vmul.f32 %v7769, %v1003
    %v7773 = vmul.f32 %v7771, %v1003
    %v7774 = vadd.f32 %v7772, 1e-05
    %v7775 = vadd.f32 %v7773, 1e-05
    %v7776 = vrsqrt.pop %v7774
    %v7777 = vrsqrt.pop %v7775
    %v7778 = vmul.f32 %v7764, %v7776
    %v7779 = vmul.f32 %v7765, %v7777
    %v7781 = vlaneseq
    %v7782 = vshrl.u32 %v7781, 7
    %v7783 = vsub.s32 0, %v7782
    %v7784 = vrot.slane %v7756, %v7783
    %v7786 = vmul.f32 %v7778, %v7784
    %v7787 = vmul.f32 %v7779, %v7784
    %v7789 = vlaneseq
    %v7790 = vshrl.u32 %v7789, 7
    %v7791 = vsub.s32 0, %v7790
    %v7792 = vrot.slane %v7757, %v7791
    %v7794 = vadd.f32 %v7786, %v7792
    %v7795 = vadd.f32 %v7787, %v7792
    %v7796 = vld [vmem:[#allocation66] sm:$0xf]
    %v7797 = vld [vmem:[#allocation66 + $0x4] sm:$0xf]
    %v7798 = vld [vmem:[#allocation66 + $0x8] sm:$0xf]
    %v7799 = vld [vmem:[#allocation66 + $0xc] sm:$0xf]
    %v7800 = vld [vmem:[#allocation66 + $0x10] sm:$0xf]
    %v7801 = vld [vmem:[#allocation66 + $0x14] sm:$0xf]
    %v7802 = vld [vmem:[#allocation66 + $0x18] sm:$0xf]
    %v7803 = vld [vmem:[#allocation66 + $0x1c] sm:$0xf]
    %v7804 = vld [vmem:[#allocation66 + $0x20] sm:$0xf]
    %v7805 = vld [vmem:[#allocation66 + $0x24] sm:$0xf]
    %v7806 = vld [vmem:[#allocation66 + $0x28] sm:$0xf]
    %v7807 = vld [vmem:[#allocation66 + $0x2c] sm:$0xf]
    %v7808 = vld [vmem:[#allocation66 + $0x30] sm:$0xf]
    %v7809 = vld [vmem:[#allocation66 + $0x34] sm:$0xf]
    %v7810 = vld [vmem:[#allocation66 + $0x38] sm:$0xf]
    %v7811 = vld [vmem:[#allocation66 + $0x3c] sm:$0xf]
    %v7812 = vpack.c.bf16 %v7795, %v7794
    %v7813 = vld [vmem:[#allocation67] sm:$0x1]
    %v7815 = vlaneseq
    %v7816 = vshrl.u32 %v7815, 7
    %v7817 = vsub.s32 0, %v7816
    %v7818 = vrot.slane %v7813, %v7817
    %v7836 = vunpack.c.l.b16 %v7796
    %v7837 = vunpack.c.l.b16 %v7797
    %v7838 = vunpack.c.l.b16 %v7798
    %v7839 = vunpack.c.l.b16 %v7799
    %v7840 = vunpack.c.l.b16 %v7800
    %v7841 = vunpack.c.l.b16 %v7801
    %v7842 = vunpack.c.l.b16 %v7802
    %v7843 = vunpack.c.l.b16 %v7803
    %v7844 = vunpack.c.l.b16 %v7804
    %v7845 = vunpack.c.l.b16 %v7805
    %v7846 = vunpack.c.l.b16 %v7806
    %v7847 = vunpack.c.l.b16 %v7807
    %v7848 = vunpack.c.l.b16 %v7808
    %v7849 = vunpack.c.l.b16 %v7809
    %v7850 = vunpack.c.l.b16 %v7810
    %v7851 = vunpack.c.l.b16 %v7811
    %v7852 = vpack.c.b16 %v7837, %v7836
    %v7853 = vpack.c.b16 %v7839, %v7838
    %v7854 = vpack.c.b16 %v7841, %v7840
    %v7855 = vpack.c.b16 %v7843, %v7842
    %v7856 = vpack.c.b16 %v7845, %v7844
    %v7857 = vpack.c.b16 %v7847, %v7846
    %v7858 = vpack.c.b16 %v7849, %v7848
    %v7859 = vpack.c.b16 %v7851, %v7850
    %7868 = vmatprep.subr.bf16.mxu0 0
    %7869 = vmatpush1.bf16.msra.mxu0 %v7859
    %7870 = vmatprep.subr.bf16.mxu0 0
    %7871 = vmatpush1.bf16.msra.mxu0 %v7858
    %7872 = vmatprep.subr.bf16.mxu0 0
    %7873 = vmatpush1.bf16.msra.mxu0 %v7857
    %7874 = vmatprep.subr.bf16.mxu0 0
    %7875 = vmatpush1.bf16.msra.mxu0 %v7856
    %7876 = vmatprep.subr.bf16.mxu0 0
    %7877 = vmatpush1.bf16.msra.mxu0 %v7855
    %7878 = vmatprep.subr.bf16.mxu0 0
    %7879 = vmatpush1.bf16.msra.mxu0 %v7854
    %7880 = vmatprep.subr.bf16.mxu0 0
    %7881 = vmatpush1.bf16.msra.mxu0 %v7853
    %7882 = vmatprep.subr.bf16.mxu0 0
    %7883 = vmatpush1.bf16.msra.mxu0 %v7852
    %7884 = vmatprep.subr.bf16.mxu0 0
    %7885 = vmatpush2.bf16.msra.mxu0 0
    %7886 = vmatprep.subr.bf16.mxu0 0
    %7887 = vmatpush2.bf16.msra.mxu0 0
    %7888 = vmatprep.subr.bf16.mxu0 0
    %7889 = vmatpush2.bf16.msra.mxu0 0
    %7890 = vmatprep.subr.bf16.mxu0 0
    %7891 = vmatpush2.bf16.msra.mxu0 0
    %7892 = vmatprep.subr.bf16.mxu0 0
    %7893 = vmatpush2.bf16.msra.mxu0 0
    %7894 = vmatprep.subr.bf16.mxu0 0
    %7895 = vmatpush2.bf16.msra.mxu0 0
    %7896 = vmatprep.subr.bf16.mxu0 0
    %7897 = vmatpush2.bf16.msra.mxu0 0
    %7898 = vmatprep.subr.bf16.mxu0 0
    %7899 = vmatpush2.bf16.msra.mxu0 0
    %7900 = vmatprep.mubr.bf16.mxu0 0
    %7901 = vmatmul.mubr.bf16.gmra.mxu0 %v7812
    %v7902 = vpop.f32.mrf.mxu0
    %v7903 = vadd.f32 %v7818, %v7902
    %v7904 = vpop.f32.mrf.mxu0
    %v7905 = vpop.f32.mrf.mxu0
    %v7906 = vadd.f32 %v7818, %v7905
    %v7907 = vpop.f32.mrf.mxu0
    %7908 = vdwg.mxu0
    %v7909 = vld [vmem:[#allocation69] sm:$0xff]
    %v7910 = vld [vmem:[#allocation69 + $0x8] sm:$0xff]
    %v7911 = vld [vmem:[#allocation69 + $0x10] sm:$0xff]
    %v7912 = vld [vmem:[#allocation69 + $0x18] sm:$0xff]
    %v7913 = vld [vmem:[#allocation69 + $0x20] sm:$0xff]
    %v7914 = vld [vmem:[#allocation69 + $0x28] sm:$0xff]
    %v7915 = vld [vmem:[#allocation69 + $0x30] sm:$0xff]
    %v7916 = vld [vmem:[#allocation69 + $0x38] sm:$0xff]
    %v7917 = vld [vmem:[#allocation69 + $0x40] sm:$0xff]
    %v7918 = vld [vmem:[#allocation69 + $0x48] sm:$0xff]
    %v7919 = vld [vmem:[#allocation69 + $0x50] sm:$0xff]
    %v7920 = vld [vmem:[#allocation69 + $0x58] sm:$0xff]
    %v7921 = vld [vmem:[#allocation69 + $0x60] sm:$0xff]
    %v7922 = vld [vmem:[#allocation69 + $0x68] sm:$0xff]
    %v7923 = vld [vmem:[#allocation69 + $0x70] sm:$0xff]
    %v7924 = vld [vmem:[#allocation69 + $0x78] sm:$0xff]
    %v7925 = vpack.c.bf16 %v7481, %v7480
    %v7926 = vpack.c.bf16 %v7483, %v7482
    %v7927 = vld [vmem:[#allocation70] sm:$0x3]
    %v7929 = vlaneseq
    %v7930 = vshrl.u32 %v7929, 7
    %v7931 = vsub.s32 0, %v7930
    %v7932 = vrot.slane %v7927, %v7931
    %v7933 = vlaneseq
    %v7934 = vshrl.u32 %v7933, 7
    %v7935 = vsub.s32 1, %v7934
    %v7936 = vrot.slane %v7927, %v7935
    %v7955 = vunpack.c.l.b16 %v7909
    %v7956 = vunpack.c.h.b16 %v7909
    %v7957 = vunpack.c.l.b16 %v7910
    %v7958 = vunpack.c.h.b16 %v7910
    %v7959 = vunpack.c.l.b16 %v7911
    %v7960 = vunpack.c.h.b16 %v7911
    %v7961 = vunpack.c.l.b16 %v7912
    %v7962 = vunpack.c.h.b16 %v7912
    %v7963 = vunpack.c.l.b16 %v7913
    %v7964 = vunpack.c.h.b16 %v7913
    %v7965 = vunpack.c.l.b16 %v7914
    %v7966 = vunpack.c.h.b16 %v7914
    %v7967 = vunpack.c.l.b16 %v7915
    %v7968 = vunpack.c.h.b16 %v7915
    %v7969 = vunpack.c.l.b16 %v7916
    %v7970 = vunpack.c.h.b16 %v7916
    %v7971 = vunpack.c.l.b16 %v7917
    %v7972 = vunpack.c.h.b16 %v7917
    %v7973 = vunpack.c.l.b16 %v7918
    %v7974 = vunpack.c.h.b16 %v7918
    %v7975 = vunpack.c.l.b16 %v7919
    %v7976 = vunpack.c.h.b16 %v7919
    %v7977 = vunpack.c.l.b16 %v7920
    %v7978 = vunpack.c.h.b16 %v7920
    %v7979 = vunpack.c.l.b16 %v7921
    %v7980 = vunpack.c.h.b16 %v7921
    %v7981 = vunpack.c.l.b16 %v7922
    %v7982 = vunpack.c.h.b16 %v7922
    %v7983 = vunpack.c.l.b16 %v7923
    %v7984 = vunpack.c.h.b16 %v7923
    %v7985 = vunpack.c.l.b16 %v7924
    %v7986 = vunpack.c.h.b16 %v7924
    %v7987 = vpack.c.b16 %v7957, %v7955
    %v7988 = vpack.c.b16 %v7958, %v7956
    %v7989 = vpack.c.b16 %v7961, %v7959
    %v7990 = vpack.c.b16 %v7962, %v7960
    %v7991 = vpack.c.b16 %v7965, %v7963
    %v7992 = vpack.c.b16 %v7966, %v7964
    %v7993 = vpack.c.b16 %v7969, %v7967
    %v7994 = vpack.c.b16 %v7970, %v7968
    %v7995 = vpack.c.b16 %v7973, %v7971
    %v7996 = vpack.c.b16 %v7974, %v7972
    %v7997 = vpack.c.b16 %v7977, %v7975
    %v7998 = vpack.c.b16 %v7978, %v7976
    %v7999 = vpack.c.b16 %v7981, %v7979
    %v8000 = vpack.c.b16 %v7982, %v7980
    %v8001 = vpack.c.b16 %v7985, %v7983
    %v8002 = vpack.c.b16 %v7986, %v7984
    %8019 = vmatprep.subr.bf16.mxu0 %v8002
    %8020 = vmatpush1.bf16.msra.mxu0 %v8001
    %8021 = vmatprep.subr.bf16.mxu0 %v8000
    %8022 = vmatpush1.bf16.msra.mxu0 %v7999
    %8023 = vmatprep.subr.bf16.mxu0 %v7998
    %8024 = vmatpush1.bf16.msra.mxu0 %v7997
    %8025 = vmatprep.subr.bf16.mxu0 %v7996
    %8026 = vmatpush1.bf16.msra.mxu0 %v7995
    %8027 = vmatprep.subr.bf16.mxu0 %v7994
    %8028 = vmatpush1.bf16.msra.mxu0 %v7993
    %8029 = vmatprep.subr.bf16.mxu0 %v7992
    %8030 = vmatpush1.bf16.msra.mxu0 %v7991
    %8031 = vmatprep.subr.bf16.mxu0 %v7990
    %8032 = vmatpush1.bf16.msra.mxu0 %v7989
    %8033 = vmatprep.subr.bf16.mxu0 %v7988
    %8034 = vmatpush1.bf16.msra.mxu0 %v7987
    %8035 = vmatprep.subr.bf16.mxu0 0
    %8036 = vmatpush2.bf16.msra.mxu0 0
    %8037 = vmatprep.subr.bf16.mxu0 0
    %8038 = vmatpush2.bf16.msra.mxu0 0
    %8039 = vmatprep.subr.bf16.mxu0 0
    %8040 = vmatpush2.bf16.msra.mxu0 0
    %8041 = vmatprep.subr.bf16.mxu0 0
    %8042 = vmatpush2.bf16.msra.mxu0 0
    %8043 = vmatprep.subr.bf16.mxu0 0
    %8044 = vmatpush2.bf16.msra.mxu0 0
    %8045 = vmatprep.subr.bf16.mxu0 0
    %8046 = vmatpush2.bf16.msra.mxu0 0
    %8047 = vmatprep.subr.bf16.mxu0 0
    %8048 = vmatpush2.bf16.msra.mxu0 0
    %8049 = vmatprep.subr.bf16.mxu0 0
    %8050 = vmatpush2.bf16.msra.mxu0 0
    %8051 = vmatprep.mubr.bf16.mxu0 0
    %8052 = vmatmul.mubr.bf16.gmra.mxu0 %v7925
    %v8053 = vpop.f32.mrf.mxu0
    %v8054 = vadd.f32 %v7932, %v8053
    %v8055 = vpop.f32.mrf.mxu0
    %v8056 = vadd.f32 %v7936, %v8055
    %v8057 = vpop.f32.mrf.mxu0
    %v8058 = vadd.f32 %v7932, %v8057
    %v8059 = vpop.f32.mrf.mxu0
    %v8060 = vadd.f32 %v7936, %v8059
    %8061 = vmatprep.mubr.bf16.mxu0 0
    %8062 = vmatmul.mubr.bf16.gmra.mxu0 %v7926
    %v8063 = vpop.f32.mrf.mxu0
    %v8064 = vadd.f32 %v7932, %v8063
    %v8065 = vpop.f32.mrf.mxu0
    %v8066 = vadd.f32 %v7936, %v8065
    %v8067 = vpop.f32.mrf.mxu0
    %v8068 = vadd.f32 %v7932, %v8067
    %v8069 = vpop.f32.mrf.mxu0
    %v8070 = vadd.f32 %v7936, %v8069
    %8071 = vdwg.mxu0
    %v8072 = vpack.c.bf16 %v7906, %v7903
    %v8073 = vpack.c.bf16 %v8058, %v8054
    %v8074 = vpack.c.bf16 %v8068, %v8064
    %v8075 = vpack.c.bf16 %v8060, %v8056
    %v8076 = vpack.c.bf16 %v8070, %v8066
    %v8078 = vsel %vm1318, %v8072, 0
    %v8081 = vsel %vm1318, %v8073, 0
    %v8084 = vsel %vm1318, %v8074, 0
    %8086 = vmatprep.subr.bf16.mxu0 0
    %8087 = vmatpush1.bf16.xpose.msra.mxu0 0
    %8088 = vmatprep.subr.bf16.mxu0 0
    %8089 = vmatpush1.bf16.xpose.msra.mxu0 0
    %8090 = vmatprep.subr.bf16.mxu0 0
    %8091 = vmatpush1.bf16.xpose.msra.mxu0 0
    %8092 = vmatprep.subr.bf16.mxu0 0
    %8093 = vmatpush1.bf16.xpose.msra.mxu0 0
    %8094 = vmatprep.subr.bf16.mxu0 0
    %8095 = vmatpush1.bf16.xpose.msra.mxu0 0
    %8096 = vmatprep.subr.bf16.mxu0 0
    %8097 = vmatpush1.bf16.xpose.msra.mxu0 0
    %8098 = vmatprep.subr.bf16.mxu0 0
    %8099 = vmatpush1.bf16.xpose.msra.mxu0 %v8084
    %8100 = vmatprep.subr.bf16.mxu0 0
    %8101 = vmatpush1.bf16.xpose.msra.mxu0 %v8081
    %8102 = vmatprep.subr.bf16.mxu0 0
    %8103 = vmatpush2.bf16.xpose.msra.mxu0 0
    %8104 = vmatprep.subr.bf16.mxu0 0
    %8105 = vmatpush2.bf16.xpose.msra.mxu0 0
    %8106 = vmatprep.subr.bf16.mxu0 0
    %8107 = vmatpush2.bf16.xpose.msra.mxu0 0
    %8108 = vmatprep.subr.bf16.mxu0 0
    %8109 = vmatpush2.bf16.xpose.msra.mxu0 0
    %8110 = vmatprep.subr.bf16.mxu0 0
    %8111 = vmatpush2.bf16.xpose.msra.mxu0 0
    %8112 = vmatprep.subr.bf16.mxu0 0
    %8113 = vmatpush2.bf16.xpose.msra.mxu0 0
    %8114 = vmatprep.subr.bf16.mxu0 0
    %8115 = vmatpush2.bf16.xpose.msra.mxu0 0
    %8116 = vmatprep.subr.bf16.mxu0 0
    %8117 = vmatpush2.bf16.xpose.msra.mxu0 0
    %8118 = vmatprep.mubr.bf16.mxu0 0
    %8119 = vmatmul.mubr.bf16.gmra.mxu0 %v8078
    %v8120 = vpop.f32.mrf.mxu0
    %v8121 = vadd.f32 %v7484, %v8120
    %v8122 = vpop.f32.mrf.mxu0
    %v8123 = vpop.f32.mrf.mxu0
    %v8124 = vadd.f32 %v7485, %v8123
    %v8125 = vpop.f32.mrf.mxu0
    %8126 = vdwg.mxu0
    %v8127 = vsel %vm1318, %v8121, -inf
    %8128 = vmax.xlane.f32.xlu0 %v8127
    %v8129 = vpop.xlane.xlu0 %8128
    %v8130 = vsel %vm1318, %v8124, -inf
    %8131 = vmax.xlane.f32.xlu0 %v8130
    %v8132 = vpop.xlane.xlu0 %8131
    %v8133 = vsub.f32 %v8121, %v8129
    %v8134 = vsub.f32 %v8124, %v8132
    %v8135 = vmul.f32 %v8133, 1.442695
    %v8136 = vpow.pop %v8135
    %v8137 = vmul.f32 %v8134, 1.442695
    %v8138 = vpow.pop %v8137
    %v8139 = vsel %vm1318, %v8136, 0.0
    %8140 = vadd.xlane.f32.xlu0 %v8139
    %v8141 = vpop.xlane.xlu0 %8140
    %v8142 = vsel %vm1318, %v8138, 0.0
    %8143 = vadd.xlane.f32.xlu0 %v8142
    %v8144 = vpop.xlane.xlu0 %8143
    %v8145 = vrcp.pop %v8141
    %v8146 = vrcp.pop %v8144
    %v8147 = vmul.f32 %v8136, %v8145
    %v8148 = vmul.f32 %v8138, %v8146
    %v8149 = vpack.c.bf16 %v8148, %v8147
    %v8151 = vsel %vm1318, %v8149, 0
    %8153 = vmatprep.subr.bf16.mxu0 0
    %8154 = vmatpush1.bf16.msra.mxu0 0
    %8155 = vmatprep.subr.bf16.mxu0 0
    %8156 = vmatpush1.bf16.msra.mxu0 0
    %8157 = vmatprep.subr.bf16.mxu0 0
    %8158 = vmatpush1.bf16.msra.mxu0 0
    %8159 = vmatprep.subr.bf16.mxu0 0
    %8160 = vmatpush1.bf16.msra.mxu0 0
    %8161 = vmatprep.subr.bf16.mxu0 0
    %8162 = vmatpush1.bf16.msra.mxu0 0
    %8163 = vmatprep.subr.bf16.mxu0 0
    %8164 = vmatpush1.bf16.msra.mxu0 0
    %8165 = vmatprep.subr.bf16.mxu0 0
    %8166 = vmatpush1.bf16.msra.mxu0 %v8076
    %8167 = vmatprep.subr.bf16.mxu0 0
    %8168 = vmatpush1.bf16.msra.mxu0 %v8075
    %8169 = vmatprep.subr.bf16.mxu0 0
    %8170 = vmatpush2.bf16.msra.mxu0 0
    %8171 = vmatprep.subr.bf16.mxu0 0
    %8172 = vmatpush2.bf16.msra.mxu0 0
    %8173 = vmatprep.subr.bf16.mxu0 0
    %8174 = vmatpush2.bf16.msra.mxu0 0
    %8175 = vmatprep.subr.bf16.mxu0 0
    %8176 = vmatpush2.bf16.msra.mxu0 0
    %8177 = vmatprep.subr.bf16.mxu0 0
    %8178 = vmatpush2.bf16.msra.mxu0 0
    %8179 = vmatprep.subr.bf16.mxu0 0
    %8180 = vmatpush2.bf16.msra.mxu0 0
    %8181 = vmatprep.subr.bf16.mxu0 0
    %8182 = vmatpush2.bf16.msra.mxu0 0
    %8183 = vmatprep.subr.bf16.mxu0 0
    %8184 = vmatpush2.bf16.msra.mxu0 0
    %8185 = vmatprep.mubr.bf16.mxu0 0
    %8186 = vmatmul.mubr.bf16.gmra.mxu0 %v8151
    %v8187 = vpop.f32.mrf.mxu0
    %v8188 = vadd.f32 0.0, %v8187
    %v8189 = vpop.f32.mrf.mxu0
    %v8190 = vpop.f32.mrf.mxu0
    %v8191 = vadd.f32 0.0, %v8190
    %v8192 = vpop.f32.mrf.mxu0
    %8193 = vdwg.mxu0
    %8195 = vrot.lane.b32.xlu0 %v8072, 96
    %v8196 = vpop.permute.xlu0 %8195
    %8199 = vrot.lane.b32.xlu0 %v8073, 96
    %v8200 = vpop.permute.xlu0 %8199
    %8201 = vrot.lane.b32.xlu0 %v8074, 96
    %v8202 = vpop.permute.xlu0 %8201
    %v8204 = vsel %vm1318, %v8196, 0
    %v8207 = vsel %vm1318, %v8200, 0
    %v8210 = vsel %vm1318, %v8202, 0
    %8212 = vmatprep.subr.bf16.mxu0 0
    %8213 = vmatpush1.bf16.xpose.msra.mxu0 0
    %8214 = vmatprep.subr.bf16.mxu0 0
    %8215 = vmatpush1.bf16.xpose.msra.mxu0 0
    %8216 = vmatprep.subr.bf16.mxu0 0
    %8217 = vmatpush1.bf16.xpose.msra.mxu0 0
    %8218 = vmatprep.subr.bf16.mxu0 0
    %8219 = vmatpush1.bf16.xpose.msra.mxu0 0
    %8220 = vmatprep.subr.bf16.mxu0 0
    %8221 = vmatpush1.bf16.xpose.msra.mxu0 0
    %8222 = vmatprep.subr.bf16.mxu0 0
    %8223 = vmatpush1.bf16.xpose.msra.mxu0 0
    %8224 = vmatprep.subr.bf16.mxu0 0
    %8225 = vmatpush1.bf16.xpose.msra.mxu0 %v8210
    %8226 = vmatprep.subr.bf16.mxu0 0
    %8227 = vmatpush1.bf16.xpose.msra.mxu0 %v8207
    %8228 = vmatprep.subr.bf16.mxu0 0
    %8229 = vmatpush2.bf16.xpose.msra.mxu0 0
    %8230 = vmatprep.subr.bf16.mxu0 0
    %8231 = vmatpush2.bf16.xpose.msra.mxu0 0
    %8232 = vmatprep.subr.bf16.mxu0 0
    %8233 = vmatpush2.bf16.xpose.msra.mxu0 0
    %8234 = vmatprep.subr.bf16.mxu0 0
    %8235 = vmatpush2.bf16.xpose.msra.mxu0 0
    %8236 = vmatprep.subr.bf16.mxu0 0
    %8237 = vmatpush2.bf16.xpose.msra.mxu0 0
    %8238 = vmatprep.subr.bf16.mxu0 0
    %8239 = vmatpush2.bf16.xpose.msra.mxu0 0
    %8240 = vmatprep.subr.bf16.mxu0 0
    %8241 = vmatpush2.bf16.xpose.msra.mxu0 0
    %8242 = vmatprep.subr.bf16.mxu0 0
    %8243 = vmatpush2.bf16.xpose.msra.mxu0 0
    %8244 = vmatprep.mubr.bf16.mxu0 0
    %8245 = vmatmul.mubr.bf16.gmra.mxu0 %v8204
    %v8246 = vpop.f32.mrf.mxu0
    %v8247 = vadd.f32 %v7484, %v8246
    %v8248 = vpop.f32.mrf.mxu0
    %v8249 = vpop.f32.mrf.mxu0
    %v8250 = vadd.f32 %v7485, %v8249
    %v8251 = vpop.f32.mrf.mxu0
    %8252 = vdwg.mxu0
    %v8253 = vsel %vm1318, %v8247, -inf
    %8254 = vmax.xlane.f32.xlu0 %v8253
    %v8255 = vpop.xlane.xlu0 %8254
    %v8256 = vsel %vm1318, %v8250, -inf
    %8257 = vmax.xlane.f32.xlu0 %v8256
    %v8258 = vpop.xlane.xlu0 %8257
    %v8259 = vsub.f32 %v8247, %v8255
    %v8260 = vsub.f32 %v8250, %v8258
    %v8261 = vmul.f32 %v8259, 1.442695
    %v8262 = vpow.pop %v8261
    %v8263 = vmul.f32 %v8260, 1.442695
    %v8264 = vpow.pop %v8263
    %v8265 = vsel %vm1318, %v8262, 0.0
    %8266 = vadd.xlane.f32.xlu0 %v8265
    %v8267 = vpop.xlane.xlu0 %8266
    %v8268 = vsel %vm1318, %v8264, 0.0
    %8269 = vadd.xlane.f32.xlu0 %v8268
    %v8270 = vpop.xlane.xlu0 %8269
    %v8271 = vrcp.pop %v8267
    %v8272 = vrcp.pop %v8270
    %v8273 = vmul.f32 %v8262, %v8271
    %v8274 = vmul.f32 %v8264, %v8272
    %v8275 = vpack.c.bf16 %v8274, %v8273
    %8278 = vrot.lane.b32.xlu0 %v8075, 96
    %v8279 = vpop.permute.xlu0 %8278
    %8280 = vrot.lane.b32.xlu0 %v8076, 96
    %v8281 = vpop.permute.xlu0 %8280
    %v8285 = vsel %vm1318, %v8275, 0
    %8287 = vmatprep.subr.bf16.mxu0 0
    %8288 = vmatpush1.bf16.msra.mxu0 0
    %8289 = vmatprep.subr.bf16.mxu0 0
    %8290 = vmatpush1.bf16.msra.mxu0 0
    %8291 = vmatprep.subr.bf16.mxu0 0
    %8292 = vmatpush1.bf16.msra.mxu0 0
    %8293 = vmatprep.subr.bf16.mxu0 0
    %8294 = vmatpush1.bf16.msra.mxu0 0
    %8295 = vmatprep.subr.bf16.mxu0 0
    %8296 = vmatpush1.bf16.msra.mxu0 0
    %8297 = vmatprep.subr.bf16.mxu0 0
    %8298 = vmatpush1.bf16.msra.mxu0 0
    %8299 = vmatprep.subr.bf16.mxu0 0
    %8300 = vmatpush1.bf16.msra.mxu0 %v8281
    %8301 = vmatprep.subr.bf16.mxu0 0
    %8302 = vmatpush1.bf16.msra.mxu0 %v8279
    %8303 = vmatprep.subr.bf16.mxu0 0
    %8304 = vmatpush2.bf16.msra.mxu0 0
    %8305 = vmatprep.subr.bf16.mxu0 0
    %8306 = vmatpush2.bf16.msra.mxu0 0
    %8307 = vmatprep.subr.bf16.mxu0 0
    %8308 = vmatpush2.bf16.msra.mxu0 0
    %8309 = vmatprep.subr.bf16.mxu0 0
    %8310 = vmatpush2.bf16.msra.mxu0 0
    %8311 = vmatprep.subr.bf16.mxu0 0
    %8312 = vmatpush2.bf16.msra.mxu0 0
    %8313 = vmatprep.subr.bf16.mxu0 0
    %8314 = vmatpush2.bf16.msra.mxu0 0
    %8315 = vmatprep.subr.bf16.mxu0 0
    %8316 = vmatpush2.bf16.msra.mxu0 0
    %8317 = vmatprep.subr.bf16.mxu0 0
    %8318 = vmatpush2.bf16.msra.mxu0 0
    %8319 = vmatprep.mubr.bf16.mxu0 0
    %8320 = vmatmul.mubr.bf16.gmra.mxu0 %v8285
    %v8321 = vpop.f32.mrf.mxu0
    %v8322 = vadd.f32 0.0, %v8321
    %v8323 = vpop.f32.mrf.mxu0
    %v8324 = vpop.f32.mrf.mxu0
    %v8325 = vadd.f32 0.0, %v8324
    %v8326 = vpop.f32.mrf.mxu0
    %8327 = vdwg.mxu0
    %8328 = vrot.lane.b32.xlu0 %v8072, 64
    %v8329 = vpop.permute.xlu0 %8328
    %8330 = vrot.lane.b32.xlu0 %v8073, 64
    %v8331 = vpop.permute.xlu0 %8330
    %8332 = vrot.lane.b32.xlu0 %v8074, 64
    %v8333 = vpop.permute.xlu0 %8332
    %v8335 = vsel %vm1318, %v8329, 0
    %v8338 = vsel %vm1318, %v8331, 0
    %v8341 = vsel %vm1318, %v8333, 0
    %8343 = vmatprep.subr.bf16.mxu0 0
    %8344 = vmatpush1.bf16.xpose.msra.mxu0 0
    %8345 = vmatprep.subr.bf16.mxu0 0
    %8346 = vmatpush1.bf16.xpose.msra.mxu0 0
    %8347 = vmatprep.subr.bf16.mxu0 0
    %8348 = vmatpush1.bf16.xpose.msra.mxu0 0
    %8349 = vmatprep.subr.bf16.mxu0 0
    %8350 = vmatpush1.bf16.xpose.msra.mxu0 0
    %8351 = vmatprep.subr.bf16.mxu0 0
    %8352 = vmatpush1.bf16.xpose.msra.mxu0 0
    %8353 = vmatprep.subr.bf16.mxu0 0
    %8354 = vmatpush1.bf16.xpose.msra.mxu0 0
    %8355 = vmatprep.subr.bf16.mxu0 0
    %8356 = vmatpush1.bf16.xpose.msra.mxu0 %v8341
    %8357 = vmatprep.subr.bf16.mxu0 0
    %8358 = vmatpush1.bf16.xpose.msra.mxu0 %v8338
    %8359 = vmatprep.subr.bf16.mxu0 0
    %8360 = vmatpush2.bf16.xpose.msra.mxu0 0
    %8361 = vmatprep.subr.bf16.mxu0 0
    %8362 = vmatpush2.bf16.xpose.msra.mxu0 0
    %8363 = vmatprep.subr.bf16.mxu0 0
    %8364 = vmatpush2.bf16.xpose.msra.mxu0 0
    %8365 = vmatprep.subr.bf16.mxu0 0
    %8366 = vmatpush2.bf16.xpose.msra.mxu0 0
    %8367 = vmatprep.subr.bf16.mxu0 0
    %8368 = vmatpush2.bf16.xpose.msra.mxu0 0
    %8369 = vmatprep.subr.bf16.mxu0 0
    %8370 = vmatpush2.bf16.xpose.msra.mxu0 0
    %8371 = vmatprep.subr.bf16.mxu0 0
    %8372 = vmatpush2.bf16.xpose.msra.mxu0 0
    %8373 = vmatprep.subr.bf16.mxu0 0
    %8374 = vmatpush2.bf16.xpose.msra.mxu0 0
    %8375 = vmatprep.mubr.bf16.mxu0 0
    %8376 = vmatmul.mubr.bf16.gmra.mxu0 %v8335
    %v8377 = vpop.f32.mrf.mxu0
    %v8378 = vadd.f32 %v7484, %v8377
    %v8379 = vpop.f32.mrf.mxu0
    %v8380 = vpop.f32.mrf.mxu0
    %v8381 = vadd.f32 %v7485, %v8380
    %v8382 = vpop.f32.mrf.mxu0
    %8383 = vdwg.mxu0
    %v8384 = vsel %vm1318, %v8378, -inf
    %8385 = vmax.xlane.f32.xlu0 %v8384
    %v8386 = vpop.xlane.xlu0 %8385
    %v8387 = vsel %vm1318, %v8381, -inf
    %8388 = vmax.xlane.f32.xlu0 %v8387
    %v8389 = vpop.xlane.xlu0 %8388
    %v8390 = vsub.f32 %v8378, %v8386
    %v8391 = vsub.f32 %v8381, %v8389
    %v8392 = vmul.f32 %v8390, 1.442695
    %v8393 = vpow.pop %v8392
    %v8394 = vmul.f32 %v8391, 1.442695
    %v8395 = vpow.pop %v8394
    %v8396 = vsel %vm1318, %v8393, 0.0
    %8397 = vadd.xlane.f32.xlu0 %v8396
    %v8398 = vpop.xlane.xlu0 %8397
    %v8399 = vsel %vm1318, %v8395, 0.0
    %8400 = vadd.xlane.f32.xlu0 %v8399
    %v8401 = vpop.xlane.xlu0 %8400
    %v8402 = vrcp.pop %v8398
    %v8403 = vrcp.pop %v8401
    %v8404 = vmul.f32 %v8393, %v8402
    %v8405 = vmul.f32 %v8395, %v8403
    %v8406 = vpack.c.bf16 %v8405, %v8404
    %8407 = vrot.lane.b32.xlu0 %v8075, 64
    %v8408 = vpop.permute.xlu0 %8407
    %8409 = vrot.lane.b32.xlu0 %v8076, 64
    %v8410 = vpop.permute.xlu0 %8409
    %v8414 = vsel %vm1318, %v8406, 0
    %8416 = vmatprep.subr.bf16.mxu0 0
    %8417 = vmatpush1.bf16.msra.mxu0 0
    %8418 = vmatprep.subr.bf16.mxu0 0
    %8419 = vmatpush1.bf16.msra.mxu0 0
    %8420 = vmatprep.subr.bf16.mxu0 0
    %8421 = vmatpush1.bf16.msra.mxu0 0
    %8422 = vmatprep.subr.bf16.mxu0 0
    %8423 = vmatpush1.bf16.msra.mxu0 0
    %8424 = vmatprep.subr.bf16.mxu0 0
    %8425 = vmatpush1.bf16.msra.mxu0 0
    %8426 = vmatprep.subr.bf16.mxu0 0
    %8427 = vmatpush1.bf16.msra.mxu0 0
    %8428 = vmatprep.subr.bf16.mxu0 0
    %8429 = vmatpush1.bf16.msra.mxu0 %v8410
    %8430 = vmatprep.subr.bf16.mxu0 0
    %8431 = vmatpush1.bf16.msra.mxu0 %v8408
    %8432 = vmatprep.subr.bf16.mxu0 0
    %8433 = vmatpush2.bf16.msra.mxu0 0
    %8434 = vmatprep.subr.bf16.mxu0 0
    %8435 = vmatpush2.bf16.msra.mxu0 0
    %8436 = vmatprep.subr.bf16.mxu0 0
    %8437 = vmatpush2.bf16.msra.mxu0 0
    %8438 = vmatprep.subr.bf16.mxu0 0
    %8439 = vmatpush2.bf16.msra.mxu0 0
    %8440 = vmatprep.subr.bf16.mxu0 0
    %8441 = vmatpush2.bf16.msra.mxu0 0
    %8442 = vmatprep.subr.bf16.mxu0 0
    %8443 = vmatpush2.bf16.msra.mxu0 0
    %8444 = vmatprep.subr.bf16.mxu0 0
    %8445 = vmatpush2.bf16.msra.mxu0 0
    %8446 = vmatprep.subr.bf16.mxu0 0
    %8447 = vmatpush2.bf16.msra.mxu0 0
    %8448 = vmatprep.mubr.bf16.mxu0 0
    %8449 = vmatmul.mubr.bf16.gmra.mxu0 %v8414
    %v8450 = vpop.f32.mrf.mxu0
    %v8451 = vadd.f32 0.0, %v8450
    %v8452 = vpop.f32.mrf.mxu0
    %v8453 = vpop.f32.mrf.mxu0
    %v8454 = vadd.f32 0.0, %v8453
    %v8455 = vpop.f32.mrf.mxu0
    %8456 = vdwg.mxu0
    %8457 = vrot.lane.b32.xlu0 %v8072, 32
    %v8458 = vpop.permute.xlu0 %8457
    %8459 = vrot.lane.b32.xlu0 %v8073, 32
    %v8460 = vpop.permute.xlu0 %8459
    %8461 = vrot.lane.b32.xlu0 %v8074, 32
    %v8462 = vpop.permute.xlu0 %8461
    %v8464 = vsel %vm1318, %v8458, 0
    %v8467 = vsel %vm1318, %v8460, 0
    %v8470 = vsel %vm1318, %v8462, 0
    %8472 = vmatprep.subr.bf16.mxu0 0
    %8473 = vmatpush1.bf16.xpose.msra.mxu0 0
    %8474 = vmatprep.subr.bf16.mxu0 0
    %8475 = vmatpush1.bf16.xpose.msra.mxu0 0
    %8476 = vmatprep.subr.bf16.mxu0 0
    %8477 = vmatpush1.bf16.xpose.msra.mxu0 0
    %8478 = vmatprep.subr.bf16.mxu0 0
    %8479 = vmatpush1.bf16.xpose.msra.mxu0 0
    %8480 = vmatprep.subr.bf16.mxu0 0
    %8481 = vmatpush1.bf16.xpose.msra.mxu0 0
    %8482 = vmatprep.subr.bf16.mxu0 0
    %8483 = vmatpush1.bf16.xpose.msra.mxu0 0
    %8484 = vmatprep.subr.bf16.mxu0 0
    %8485 = vmatpush1.bf16.xpose.msra.mxu0 %v8470
    %8486 = vmatprep.subr.bf16.mxu0 0
    %8487 = vmatpush1.bf16.xpose.msra.mxu0 %v8467
    %8488 = vmatprep.subr.bf16.mxu0 0
    %8489 = vmatpush2.bf16.xpose.msra.mxu0 0
    %8490 = vmatprep.subr.bf16.mxu0 0
    %8491 = vmatpush2.bf16.xpose.msra.mxu0 0
    %8492 = vmatprep.subr.bf16.mxu0 0
    %8493 = vmatpush2.bf16.xpose.msra.mxu0 0
    %8494 = vmatprep.subr.bf16.mxu0 0
    %8495 = vmatpush2.bf16.xpose.msra.mxu0 0
    %8496 = vmatprep.subr.bf16.mxu0 0
    %8497 = vmatpush2.bf16.xpose.msra.mxu0 0
    %8498 = vmatprep.subr.bf16.mxu0 0
    %8499 = vmatpush2.bf16.xpose.msra.mxu0 0
    %8500 = vmatprep.subr.bf16.mxu0 0
    %8501 = vmatpush2.bf16.xpose.msra.mxu0 0
    %8502 = vmatprep.subr.bf16.mxu0 0
    %8503 = vmatpush2.bf16.xpose.msra.mxu0 0
    %8504 = vmatprep.mubr.bf16.mxu0 0
    %8505 = vmatmul.mubr.bf16.gmra.mxu0 %v8464
    %v8506 = vpop.f32.mrf.mxu0
    %v8507 = vadd.f32 %v7484, %v8506
    %v8508 = vpop.f32.mrf.mxu0
    %v8509 = vpop.f32.mrf.mxu0
    %v8510 = vadd.f32 %v7485, %v8509
    %v8511 = vpop.f32.mrf.mxu0
    %8512 = vdwg.mxu0
    %v8513 = vsel %vm1318, %v8507, -inf
    %8514 = vmax.xlane.f32.xlu0 %v8513
    %v8515 = vpop.xlane.xlu0 %8514
    %v8516 = vsel %vm1318, %v8510, -inf
    %8517 = vmax.xlane.f32.xlu0 %v8516
    %v8518 = vpop.xlane.xlu0 %8517
    %v8519 = vsub.f32 %v8507, %v8515
    %v8520 = vsub.f32 %v8510, %v8518
    %v8521 = vmul.f32 %v8519, 1.442695
    %v8522 = vpow.pop %v8521
    %v8523 = vmul.f32 %v8520, 1.442695
    %v8524 = vpow.pop %v8523
    %v8525 = vsel %vm1318, %v8522, 0.0
    %8526 = vadd.xlane.f32.xlu0 %v8525
    %v8527 = vpop.xlane.xlu0 %8526
    %v8528 = vsel %vm1318, %v8524, 0.0
    %8529 = vadd.xlane.f32.xlu0 %v8528
    %v8530 = vpop.xlane.xlu0 %8529
    %v8531 = vrcp.pop %v8527
    %v8532 = vrcp.pop %v8530
    %v8533 = vmul.f32 %v8522, %v8531
    %v8534 = vmul.f32 %v8524, %v8532
    %v8535 = vpack.c.bf16 %v8534, %v8533
    %8536 = vrot.lane.b32.xlu0 %v8075, 32
    %v8537 = vpop.permute.xlu0 %8536
    %8538 = vrot.lane.b32.xlu0 %v8076, 32
    %v8539 = vpop.permute.xlu0 %8538
    %v8543 = vsel %vm1318, %v8535, 0
    %8545 = vmatprep.subr.bf16.mxu0 0
    %8546 = vmatpush1.bf16.msra.mxu0 0
    %8547 = vmatprep.subr.bf16.mxu0 0
    %8548 = vmatpush1.bf16.msra.mxu0 0
    %8549 = vmatprep.subr.bf16.mxu0 0
    %8550 = vmatpush1.bf16.msra.mxu0 0
    %8551 = vmatprep.subr.bf16.mxu0 0
    %8552 = vmatpush1.bf16.msra.mxu0 0
    %8553 = vmatprep.subr.bf16.mxu0 0
    %8554 = vmatpush1.bf16.msra.mxu0 0
    %8555 = vmatprep.subr.bf16.mxu0 0
    %8556 = vmatpush1.bf16.msra.mxu0 0
    %8557 = vmatprep.subr.bf16.mxu0 0
    %8558 = vmatpush1.bf16.msra.mxu0 %v8539
    %8559 = vmatprep.subr.bf16.mxu0 0
    %8560 = vmatpush1.bf16.msra.mxu0 %v8537
    %8561 = vmatprep.subr.bf16.mxu0 0
    %8562 = vmatpush2.bf16.msra.mxu0 0
    %8563 = vmatprep.subr.bf16.mxu0 0
    %8564 = vmatpush2.bf16.msra.mxu0 0
    %8565 = vmatprep.subr.bf16.mxu0 0
    %8566 = vmatpush2.bf16.msra.mxu0 0
    %8567 = vmatprep.subr.bf16.mxu0 0
    %8568 = vmatpush2.bf16.msra.mxu0 0
    %8569 = vmatprep.subr.bf16.mxu0 0
    %8570 = vmatpush2.bf16.msra.mxu0 0
    %8571 = vmatprep.subr.bf16.mxu0 0
    %8572 = vmatpush2.bf16.msra.mxu0 0
    %8573 = vmatprep.subr.bf16.mxu0 0
    %8574 = vmatpush2.bf16.msra.mxu0 0
    %8575 = vmatprep.subr.bf16.mxu0 0
    %8576 = vmatpush2.bf16.msra.mxu0 0
    %8577 = vmatprep.mubr.bf16.mxu0 0
    %8578 = vmatmul.mubr.bf16.gmra.mxu0 %v8543
    %v8579 = vpop.f32.mrf.mxu0
    %v8580 = vadd.f32 0.0, %v8579
    %v8581 = vpop.f32.mrf.mxu0
    %v8582 = vpop.f32.mrf.mxu0
    %v8583 = vadd.f32 0.0, %v8582
    %v8584 = vpop.f32.mrf.mxu0
    %8585 = vdwg.mxu0
    %8588 = vrot.lane.b32.xlu0 %v8322, 32
    %v8589 = vpop.permute.xlu0 %8588
    %8590 = vrot.lane.b32.xlu0 %v8325, 32
    %v8591 = vpop.permute.xlu0 %8590
    %8596 = vrot.lane.b32.xlu0 %v8451, 64
    %v8597 = vpop.permute.xlu0 %8596
    %8598 = vrot.lane.b32.xlu0 %v8454, 64
    %v8599 = vpop.permute.xlu0 %8598
    %8604 = vrot.lane.b32.xlu0 %v8580, 96
    %v8605 = vpop.permute.xlu0 %8604
    %8606 = vrot.lane.b32.xlu0 %v8583, 96
    %v8607 = vpop.permute.xlu0 %8606
    %v8610 = vsel %vm1318, %v8188, %v8589
    %v8611 = vsel %vm1318, %v8191, %v8591
    %v8612 = vsel %vm2221, %v8610, %v8597
    %v8613 = vsel %vm2221, %v8611, %v8599
    %v8614 = vsel %vm2224, %v8612, %v8605
    %v8615 = vsel %vm2224, %v8613, %v8607
    %v8616 = vld [vmem:[#allocation72] sm:$0xf]
    %v8617 = vld [vmem:[#allocation72 + $0x4] sm:$0xf]
    %v8618 = vld [vmem:[#allocation72 + $0x8] sm:$0xf]
    %v8619 = vld [vmem:[#allocation72 + $0xc] sm:$0xf]
    %v8620 = vld [vmem:[#allocation72 + $0x10] sm:$0xf]
    %v8621 = vld [vmem:[#allocation72 + $0x14] sm:$0xf]
    %v8622 = vld [vmem:[#allocation72 + $0x18] sm:$0xf]
    %v8623 = vld [vmem:[#allocation72 + $0x1c] sm:$0xf]
    %v8624 = vld [vmem:[#allocation72 + $0x20] sm:$0xf]
    %v8625 = vld [vmem:[#allocation72 + $0x24] sm:$0xf]
    %v8626 = vld [vmem:[#allocation72 + $0x28] sm:$0xf]
    %v8627 = vld [vmem:[#allocation72 + $0x2c] sm:$0xf]
    %v8628 = vld [vmem:[#allocation72 + $0x30] sm:$0xf]
    %v8629 = vld [vmem:[#allocation72 + $0x34] sm:$0xf]
    %v8630 = vld [vmem:[#allocation72 + $0x38] sm:$0xf]
    %v8631 = vld [vmem:[#allocation72 + $0x3c] sm:$0xf]
    %v8632 = vpack.c.bf16 %v8615, %v8614
    %v8649 = vunpack.c.l.b16 %v8616
    %v8650 = vunpack.c.l.b16 %v8617
    %v8651 = vunpack.c.l.b16 %v8618
    %v8652 = vunpack.c.l.b16 %v8619
    %v8653 = vunpack.c.l.b16 %v8620
    %v8654 = vunpack.c.l.b16 %v8621
    %v8655 = vunpack.c.l.b16 %v8622
    %v8656 = vunpack.c.l.b16 %v8623
    %v8657 = vunpack.c.l.b16 %v8624
    %v8658 = vunpack.c.l.b16 %v8625
    %v8659 = vunpack.c.l.b16 %v8626
    %v8660 = vunpack.c.l.b16 %v8627
    %v8661 = vunpack.c.l.b16 %v8628
    %v8662 = vunpack.c.l.b16 %v8629
    %v8663 = vunpack.c.l.b16 %v8630
    %v8664 = vunpack.c.l.b16 %v8631
    %v8665 = vpack.c.b16 %v8650, %v8649
    %v8666 = vpack.c.b16 %v8652, %v8651
    %v8667 = vpack.c.b16 %v8654, %v8653
    %v8668 = vpack.c.b16 %v8656, %v8655
    %v8669 = vpack.c.b16 %v8658, %v8657
    %v8670 = vpack.c.b16 %v8660, %v8659
    %v8671 = vpack.c.b16 %v8662, %v8661
    %v8672 = vpack.c.b16 %v8664, %v8663
    %8681 = vmatprep.subr.bf16.mxu0 0
    %8682 = vmatpush1.bf16.msra.mxu0 %v8672
    %8683 = vmatprep.subr.bf16.mxu0 0
    %8684 = vmatpush1.bf16.msra.mxu0 %v8671
    %8685 = vmatprep.subr.bf16.mxu0 0
    %8686 = vmatpush1.bf16.msra.mxu0 %v8670
    %8687 = vmatprep.subr.bf16.mxu0 0
    %8688 = vmatpush1.bf16.msra.mxu0 %v8669
    %8689 = vmatprep.subr.bf16.mxu0 0
    %8690 = vmatpush1.bf16.msra.mxu0 %v8668
    %8691 = vmatprep.subr.bf16.mxu0 0
    %8692 = vmatpush1.bf16.msra.mxu0 %v8667
    %8693 = vmatprep.subr.bf16.mxu0 0
    %8694 = vmatpush1.bf16.msra.mxu0 %v8666
    %8695 = vmatprep.subr.bf16.mxu0 0
    %8696 = vmatpush1.bf16.msra.mxu0 %v8665
    %8697 = vmatprep.subr.bf16.mxu0 0
    %8698 = vmatpush2.bf16.msra.mxu0 0
    %8699 = vmatprep.subr.bf16.mxu0 0
    %8700 = vmatpush2.bf16.msra.mxu0 0
    %8701 = vmatprep.subr.bf16.mxu0 0
    %8702 = vmatpush2.bf16.msra.mxu0 0
    %8703 = vmatprep.subr.bf16.mxu0 0
    %8704 = vmatpush2.bf16.msra.mxu0 0
    %8705 = vmatprep.subr.bf16.mxu0 0
    %8706 = vmatpush2.bf16.msra.mxu0 0
    %8707 = vmatprep.subr.bf16.mxu0 0
    %8708 = vmatpush2.bf16.msra.mxu0 0
    %8709 = vmatprep.subr.bf16.mxu0 0
    %8710 = vmatpush2.bf16.msra.mxu0 0
    %8711 = vmatprep.subr.bf16.mxu0 0
    %8712 = vmatpush2.bf16.msra.mxu0 0
    %8713 = vmatprep.mubr.bf16.mxu0 0
    %8714 = vmatmul.mubr.bf16.gmra.mxu0 %v8632
    %v8715 = vpop.f32.mrf.mxu0
    %v8716 = vadd.f32 0.0, %v8715
    %v8717 = vpop.f32.mrf.mxu0
    %v8718 = vpop.f32.mrf.mxu0
    %v8719 = vadd.f32 0.0, %v8718
    %v8720 = vpop.f32.mrf.mxu0
    %8721 = vdwg.mxu0
    %v8722 = vadd.f32 %v7754, %v8716
    %v8723 = vadd.f32 %v7755, %v8719
    %v8724 = vld [vmem:[#allocation73] sm:$0x1]
    %v8726 = vlaneseq
    %v8727 = vshrl.u32 %v8726, 7
    %v8728 = vsub.s32 0, %v8727
    %v8729 = vrot.slane %v8724, %v8728
    %v8731 = vadd.f32 %v8722, %v8729
    %v8732 = vadd.f32 %v8723, %v8729
    %v8733 = vld [vmem:[#allocation81] sm:$0x1]
    %v8734 = vld [vmem:[#allocation82] sm:$0x1]
    %8735 = vadd.xlane.f32.xlu0 %v8731
    %v8736 = vpop.xlane.xlu0 %8735
    %8737 = vadd.xlane.f32.xlu0 %v8732
    %v8738 = vpop.xlane.xlu0 %8737
    %v8739 = vmul.f32 %v8736, %v1003
    %v8740 = vmul.f32 %v8738, %v1003
    %v8741 = vsub.f32 %v8731, %v8739
    %v8742 = vsub.f32 %v8732, %v8740
    %v8743 = vmul.f32 %v8741, %v8741
    %v8744 = vmul.f32 %v8742, %v8742
    %8745 = vadd.xlane.f32.xlu0 %v8743
    %v8746 = vpop.xlane.xlu0 %8745
    %8747 = vadd.xlane.f32.xlu0 %v8744
    %v8748 = vpop.xlane.xlu0 %8747
    %v8749 = vmul.f32 %v8746, %v1003
    %v8750 = vmul.f32 %v8748, %v1003
    %v8751 = vadd.f32 %v8749, 1e-05
    %v8752 = vadd.f32 %v8750, 1e-05
    %v8753 = vrsqrt.pop %v8751
    %v8754 = vrsqrt.pop %v8752
    %v8755 = vmul.f32 %v8741, %v8753
    %v8756 = vmul.f32 %v8742, %v8754
    %v8758 = vlaneseq
    %v8759 = vshrl.u32 %v8758, 7
    %v8760 = vsub.s32 0, %v8759
    %v8761 = vrot.slane %v8733, %v8760
    %v8763 = vmul.f32 %v8755, %v8761
    %v8764 = vmul.f32 %v8756, %v8761
    %v8766 = vlaneseq
    %v8767 = vshrl.u32 %v8766, 7
    %v8768 = vsub.s32 0, %v8767
    %v8769 = vrot.slane %v8734, %v8768
    %v8771 = vadd.f32 %v8763, %v8769
    %v8772 = vadd.f32 %v8764, %v8769
    %v8773 = vld [vmem:[#allocation84] sm:$0xff]
    %v8774 = vld [vmem:[#allocation84 + $0x8] sm:$0xff]
    %v8775 = vld [vmem:[#allocation84 + $0x10] sm:$0xff]
    %v8776 = vld [vmem:[#allocation84 + $0x18] sm:$0xff]
    %v8777 = vld [vmem:[#allocation84 + $0x20] sm:$0xff]
    %v8778 = vld [vmem:[#allocation84 + $0x28] sm:$0xff]
    %v8779 = vld [vmem:[#allocation84 + $0x30] sm:$0xff]
    %v8780 = vld [vmem:[#allocation84 + $0x38] sm:$0xff]
    %v8781 = vld [vmem:[#allocation84 + $0x40] sm:$0xff]
    %v8782 = vld [vmem:[#allocation84 + $0x48] sm:$0xff]
    %v8783 = vld [vmem:[#allocation84 + $0x50] sm:$0xff]
    %v8784 = vld [vmem:[#allocation84 + $0x58] sm:$0xff]
    %v8785 = vld [vmem:[#allocation84 + $0x60] sm:$0xff]
    %v8786 = vld [vmem:[#allocation84 + $0x68] sm:$0xff]
    %v8787 = vld [vmem:[#allocation84 + $0x70] sm:$0xff]
    %v8788 = vld [vmem:[#allocation84 + $0x78] sm:$0xff]
    %v8789 = vpack.c.bf16 %v8772, %v8771
    %v8790 = vld [vmem:[#allocation85] sm:$0x3]
    %v8792 = vlaneseq
    %v8793 = vshrl.u32 %v8792, 7
    %v8794 = vsub.s32 0, %v8793
    %v8795 = vrot.slane %v8790, %v8794
    %v8796 = vlaneseq
    %v8797 = vshrl.u32 %v8796, 7
    %v8798 = vsub.s32 1, %v8797
    %v8799 = vrot.slane %v8790, %v8798
    %v8818 = vunpack.c.l.b16 %v8773
    %v8819 = vunpack.c.h.b16 %v8773
    %v8820 = vunpack.c.l.b16 %v8774
    %v8821 = vunpack.c.h.b16 %v8774
    %v8822 = vunpack.c.l.b16 %v8775
    %v8823 = vunpack.c.h.b16 %v8775
    %v8824 = vunpack.c.l.b16 %v8776
    %v8825 = vunpack.c.h.b16 %v8776
    %v8826 = vunpack.c.l.b16 %v8777
    %v8827 = vunpack.c.h.b16 %v8777
    %v8828 = vunpack.c.l.b16 %v8778
    %v8829 = vunpack.c.h.b16 %v8778
    %v8830 = vunpack.c.l.b16 %v8779
    %v8831 = vunpack.c.h.b16 %v8779
    %v8832 = vunpack.c.l.b16 %v8780
    %v8833 = vunpack.c.h.b16 %v8780
    %v8834 = vunpack.c.l.b16 %v8781
    %v8835 = vunpack.c.h.b16 %v8781
    %v8836 = vunpack.c.l.b16 %v8782
    %v8837 = vunpack.c.h.b16 %v8782
    %v8838 = vunpack.c.l.b16 %v8783
    %v8839 = vunpack.c.h.b16 %v8783
    %v8840 = vunpack.c.l.b16 %v8784
    %v8841 = vunpack.c.h.b16 %v8784
    %v8842 = vunpack.c.l.b16 %v8785
    %v8843 = vunpack.c.h.b16 %v8785
    %v8844 = vunpack.c.l.b16 %v8786
    %v8845 = vunpack.c.h.b16 %v8786
    %v8846 = vunpack.c.l.b16 %v8787
    %v8847 = vunpack.c.h.b16 %v8787
    %v8848 = vunpack.c.l.b16 %v8788
    %v8849 = vunpack.c.h.b16 %v8788
    %v8850 = vpack.c.b16 %v8820, %v8818
    %v8851 = vpack.c.b16 %v8821, %v8819
    %v8852 = vpack.c.b16 %v8824, %v8822
    %v8853 = vpack.c.b16 %v8825, %v8823
    %v8854 = vpack.c.b16 %v8828, %v8826
    %v8855 = vpack.c.b16 %v8829, %v8827
    %v8856 = vpack.c.b16 %v8832, %v8830
    %v8857 = vpack.c.b16 %v8833, %v8831
    %v8858 = vpack.c.b16 %v8836, %v8834
    %v8859 = vpack.c.b16 %v8837, %v8835
    %v8860 = vpack.c.b16 %v8840, %v8838
    %v8861 = vpack.c.b16 %v8841, %v8839
    %v8862 = vpack.c.b16 %v8844, %v8842
    %v8863 = vpack.c.b16 %v8845, %v8843
    %v8864 = vpack.c.b16 %v8848, %v8846
    %v8865 = vpack.c.b16 %v8849, %v8847
    %8882 = vmatprep.subr.bf16.mxu0 %v8865
    %8883 = vmatpush1.bf16.msra.mxu0 %v8864
    %8884 = vmatprep.subr.bf16.mxu0 %v8863
    %8885 = vmatpush1.bf16.msra.mxu0 %v8862
    %8886 = vmatprep.subr.bf16.mxu0 %v8861
    %8887 = vmatpush1.bf16.msra.mxu0 %v8860
    %8888 = vmatprep.subr.bf16.mxu0 %v8859
    %8889 = vmatpush1.bf16.msra.mxu0 %v8858
    %8890 = vmatprep.subr.bf16.mxu0 %v8857
    %8891 = vmatpush1.bf16.msra.mxu0 %v8856
    %8892 = vmatprep.subr.bf16.mxu0 %v8855
    %8893 = vmatpush1.bf16.msra.mxu0 %v8854
    %8894 = vmatprep.subr.bf16.mxu0 %v8853
    %8895 = vmatpush1.bf16.msra.mxu0 %v8852
    %8896 = vmatprep.subr.bf16.mxu0 %v8851
    %8897 = vmatpush1.bf16.msra.mxu0 %v8850
    %8898 = vmatprep.subr.bf16.mxu0 0
    %8899 = vmatpush2.bf16.msra.mxu0 0
    %8900 = vmatprep.subr.bf16.mxu0 0
    %8901 = vmatpush2.bf16.msra.mxu0 0
    %8902 = vmatprep.subr.bf16.mxu0 0
    %8903 = vmatpush2.bf16.msra.mxu0 0
    %8904 = vmatprep.subr.bf16.mxu0 0
    %8905 = vmatpush2.bf16.msra.mxu0 0
    %8906 = vmatprep.subr.bf16.mxu0 0
    %8907 = vmatpush2.bf16.msra.mxu0 0
    %8908 = vmatprep.subr.bf16.mxu0 0
    %8909 = vmatpush2.bf16.msra.mxu0 0
    %8910 = vmatprep.subr.bf16.mxu0 0
    %8911 = vmatpush2.bf16.msra.mxu0 0
    %8912 = vmatprep.subr.bf16.mxu0 0
    %8913 = vmatpush2.bf16.msra.mxu0 0
    %8914 = vmatprep.mubr.bf16.mxu0 0
    %8915 = vmatmul.mubr.bf16.gmra.mxu0 %v8789
    %v8916 = vpop.f32.mrf.mxu0
    %v8917 = vadd.f32 %v8795, %v8916
    %v8918 = vpop.f32.mrf.mxu0
    %v8919 = vadd.f32 %v8799, %v8918
    %v8920 = vpop.f32.mrf.mxu0
    %v8921 = vadd.f32 %v8795, %v8920
    %v8922 = vpop.f32.mrf.mxu0
    %v8923 = vadd.f32 %v8799, %v8922
    %8924 = vdwg.mxu0
    %v8925 = vmax.f32 %v8917, 0.0
    %v8926 = vmax.f32 %v8919, 0.0
    %v8927 = vmax.f32 %v8921, 0.0
    %v8928 = vmax.f32 %v8923, 0.0
    %v8929 = vld [vmem:[#allocation87] sm:$0xf]
    %v8930 = vld [vmem:[#allocation87 + $0x4] sm:$0xf]
    %v8931 = vld [vmem:[#allocation87 + $0x8] sm:$0xf]
    %v8932 = vld [vmem:[#allocation87 + $0xc] sm:$0xf]
    %v8933 = vld [vmem:[#allocation87 + $0x10] sm:$0xf]
    %v8934 = vld [vmem:[#allocation87 + $0x14] sm:$0xf]
    %v8935 = vld [vmem:[#allocation87 + $0x18] sm:$0xf]
    %v8936 = vld [vmem:[#allocation87 + $0x1c] sm:$0xf]
    %v8937 = vld [vmem:[#allocation87 + $0x20] sm:$0xf]
    %v8938 = vld [vmem:[#allocation87 + $0x24] sm:$0xf]
    %v8939 = vld [vmem:[#allocation87 + $0x28] sm:$0xf]
    %v8940 = vld [vmem:[#allocation87 + $0x2c] sm:$0xf]
    %v8941 = vld [vmem:[#allocation87 + $0x30] sm:$0xf]
    %v8942 = vld [vmem:[#allocation87 + $0x34] sm:$0xf]
    %v8943 = vld [vmem:[#allocation87 + $0x38] sm:$0xf]
    %v8944 = vld [vmem:[#allocation87 + $0x3c] sm:$0xf]
    %v8945 = vld [vmem:[#allocation87 + $0x40] sm:$0xf]
    %v8946 = vld [vmem:[#allocation87 + $0x44] sm:$0xf]
    %v8947 = vld [vmem:[#allocation87 + $0x48] sm:$0xf]
    %v8948 = vld [vmem:[#allocation87 + $0x4c] sm:$0xf]
    %v8949 = vld [vmem:[#allocation87 + $0x50] sm:$0xf]
    %v8950 = vld [vmem:[#allocation87 + $0x54] sm:$0xf]
    %v8951 = vld [vmem:[#allocation87 + $0x58] sm:$0xf]
    %v8952 = vld [vmem:[#allocation87 + $0x5c] sm:$0xf]
    %v8953 = vld [vmem:[#allocation87 + $0x60] sm:$0xf]
    %v8954 = vld [vmem:[#allocation87 + $0x64] sm:$0xf]
    %v8955 = vld [vmem:[#allocation87 + $0x68] sm:$0xf]
    %v8956 = vld [vmem:[#allocation87 + $0x6c] sm:$0xf]
    %v8957 = vld [vmem:[#allocation87 + $0x70] sm:$0xf]
    %v8958 = vld [vmem:[#allocation87 + $0x74] sm:$0xf]
    %v8959 = vld [vmem:[#allocation87 + $0x78] sm:$0xf]
    %v8960 = vld [vmem:[#allocation87 + $0x7c] sm:$0xf]
    %v8961 = vpack.c.bf16 %v8927, %v8925
    %v8962 = vpack.c.bf16 %v8928, %v8926
    %v8995 = vunpack.c.l.b16 %v8929
    %v8996 = vunpack.c.l.b16 %v8930
    %v8997 = vunpack.c.l.b16 %v8931
    %v8998 = vunpack.c.l.b16 %v8932
    %v8999 = vunpack.c.l.b16 %v8933
    %v9000 = vunpack.c.l.b16 %v8934
    %v9001 = vunpack.c.l.b16 %v8935
    %v9002 = vunpack.c.l.b16 %v8936
    %v9003 = vunpack.c.l.b16 %v8937
    %v9004 = vunpack.c.l.b16 %v8938
    %v9005 = vunpack.c.l.b16 %v8939
    %v9006 = vunpack.c.l.b16 %v8940
    %v9007 = vunpack.c.l.b16 %v8941
    %v9008 = vunpack.c.l.b16 %v8942
    %v9009 = vunpack.c.l.b16 %v8943
    %v9010 = vunpack.c.l.b16 %v8944
    %v9011 = vunpack.c.l.b16 %v8945
    %v9012 = vunpack.c.l.b16 %v8946
    %v9013 = vunpack.c.l.b16 %v8947
    %v9014 = vunpack.c.l.b16 %v8948
    %v9015 = vunpack.c.l.b16 %v8949
    %v9016 = vunpack.c.l.b16 %v8950
    %v9017 = vunpack.c.l.b16 %v8951
    %v9018 = vunpack.c.l.b16 %v8952
    %v9019 = vunpack.c.l.b16 %v8953
    %v9020 = vunpack.c.l.b16 %v8954
    %v9021 = vunpack.c.l.b16 %v8955
    %v9022 = vunpack.c.l.b16 %v8956
    %v9023 = vunpack.c.l.b16 %v8957
    %v9024 = vunpack.c.l.b16 %v8958
    %v9025 = vunpack.c.l.b16 %v8959
    %v9026 = vunpack.c.l.b16 %v8960
    %v9027 = vpack.c.b16 %v8996, %v8995
    %v9028 = vpack.c.b16 %v8998, %v8997
    %v9029 = vpack.c.b16 %v9000, %v8999
    %v9030 = vpack.c.b16 %v9002, %v9001
    %v9031 = vpack.c.b16 %v9004, %v9003
    %v9032 = vpack.c.b16 %v9006, %v9005
    %v9033 = vpack.c.b16 %v9008, %v9007
    %v9034 = vpack.c.b16 %v9010, %v9009
    %v9035 = vpack.c.b16 %v9012, %v9011
    %v9036 = vpack.c.b16 %v9014, %v9013
    %v9037 = vpack.c.b16 %v9016, %v9015
    %v9038 = vpack.c.b16 %v9018, %v9017
    %v9039 = vpack.c.b16 %v9020, %v9019
    %v9040 = vpack.c.b16 %v9022, %v9021
    %v9041 = vpack.c.b16 %v9024, %v9023
    %v9042 = vpack.c.b16 %v9026, %v9025
    %9059 = vmatprep.subr.bf16.mxu0 0
    %9060 = vmatpush1.bf16.msra.mxu0 %v9034
    %9061 = vmatprep.subr.bf16.mxu0 0
    %9062 = vmatpush1.bf16.msra.mxu0 %v9033
    %9063 = vmatprep.subr.bf16.mxu0 0
    %9064 = vmatpush1.bf16.msra.mxu0 %v9032
    %9065 = vmatprep.subr.bf16.mxu0 0
    %9066 = vmatpush1.bf16.msra.mxu0 %v9031
    %9067 = vmatprep.subr.bf16.mxu0 0
    %9068 = vmatpush1.bf16.msra.mxu0 %v9030
    %9069 = vmatprep.subr.bf16.mxu0 0
    %9070 = vmatpush1.bf16.msra.mxu0 %v9029
    %9071 = vmatprep.subr.bf16.mxu0 0
    %9072 = vmatpush1.bf16.msra.mxu0 %v9028
    %9073 = vmatprep.subr.bf16.mxu0 0
    %9074 = vmatpush1.bf16.msra.mxu0 %v9027
    %9075 = vmatprep.subr.bf16.mxu0 0
    %9076 = vmatpush2.bf16.msra.mxu0 %v9042
    %9077 = vmatprep.subr.bf16.mxu0 0
    %9078 = vmatpush2.bf16.msra.mxu0 %v9041
    %9079 = vmatprep.subr.bf16.mxu0 0
    %9080 = vmatpush2.bf16.msra.mxu0 %v9040
    %9081 = vmatprep.subr.bf16.mxu0 0
    %9082 = vmatpush2.bf16.msra.mxu0 %v9039
    %9083 = vmatprep.subr.bf16.mxu0 0
    %9084 = vmatpush2.bf16.msra.mxu0 %v9038
    %9085 = vmatprep.subr.bf16.mxu0 0
    %9086 = vmatpush2.bf16.msra.mxu0 %v9037
    %9087 = vmatprep.subr.bf16.mxu0 0
    %9088 = vmatpush2.bf16.msra.mxu0 %v9036
    %9089 = vmatprep.subr.bf16.mxu0 0
    %9090 = vmatpush2.bf16.msra.mxu0 %v9035
    %9091 = vmatprep.mubr.bf16.mxu0 %v8962
    %9092 = vmatmul.mubr.bf16.gmra.mxu0 %v8961
    %v9093 = vpop.f32.mrf.mxu0
    %v9094 = vadd.f32 0.0, %v9093
    %v9095 = vpop.f32.mrf.mxu0
    %v9096 = vpop.f32.mrf.mxu0
    %v9097 = vadd.f32 0.0, %v9096
    %v9098 = vpop.f32.mrf.mxu0
    %9099 = vdwg.mxu0
    %v9100 = vadd.f32 %v8731, %v9094
    %v9101 = vadd.f32 %v8732, %v9097
    %v9102 = vld [vmem:[#allocation88] sm:$0x1]
    %v9104 = vlaneseq
    %v9105 = vshrl.u32 %v9104, 7
    %v9106 = vsub.s32 0, %v9105
    %v9107 = vrot.slane %v9102, %v9106
    %v9109 = vadd.f32 %v9100, %v9107
    %v9110 = vadd.f32 %v9101, %v9107
    %9111 = vst [vmem:[%s141] sm:$0xff] %v9109
    %9112 = vst [vmem:[%s141 + $0x8] sm:$0xff] %v9110
    // Predicated region
    $region514: #{_lambda_.1} parent=1 // pred_check
      _
    $region515: #{_lambda_.1} parent=1 // pred_check_branch
      %9114 = sbr.rel (0) target = $region517
    $region516: #{_lambda_.1} parent=1 // pred_region
      _
    $region517: #{_lambda_.1} parent=1 // pred_fallthru
      _
    // Predicated region
    $region518: #{_lambda_.1} parent=1 // pred_check
      _
    $region519: #{_lambda_.1} parent=1 // pred_check_branch
      %9116 = sbr.rel (0) target = $region521
    $region520: #{_lambda_.1} parent=1 // pred_region
      _
    $region521: #{_lambda_.1} parent=1 // pred_fallthru
      _
    %9117 = vsyncpa [#allocation3], 1
    %9118 = vsyncpa [#allocation5], 1
    %9119 = vsyncpa [#allocation8], 1
    %9120 = vsyncpa [#allocation11], 1
    %9121 = vsyncpa [#allocation14], 1
    %9122 = vsyncpa [#allocation17], 1
    %9123 = vsyncpa [#allocation20], 1
    %9124 = vsyncpa [#allocation23], 1
    %9125 = vsyncpa [#allocation26], 1
    %9126 = vsyncpa [#allocation29], 1
    %9127 = vsyncpa [#allocation32], 1
    %9128 = vsyncpa [#allocation35], 1
    %9129 = vsyncpa [#allocation38], 1
    %9130 = vsyncpa [#allocation41], 1
    %9131 = vsyncpa [#allocation44], 1
    %9132 = vsyncpa [#allocation47], 1
    %9133 = vsyncpa [#allocation50], 1
    %9134 = vsyncpa [#allocation53], 1
    %9135 = vsyncpa [#allocation56], 1
    %9136 = vsyncpa [#allocation59], 1
    %9137 = vsyncpa [#allocation62], 1
    %9138 = vsyncpa [#allocation65], 1
    %9139 = vsyncpa [#allocation68], 1
    %9140 = vsyncpa [#allocation71], 1
    %9141 = vsyncpa [#allocation74], 1
    %9142 = vsyncpa [#allocation77], 1
    %9143 = vsyncpa [#allocation80], 1
    %9144 = vsyncpa [#allocation83], 1
    %9145 = vsyncpa [#allocation86], 1
    %9146 = vsyncpa [#allocation89], 1

</llo_original>
